<compile_context>
chip_gen: v5e
topology: v5e:2x2
jax: 0.10.0
libtpu: 0.0.40
codegen_flags: <defaults>
</compile_context>

<pallas_src>
import math

import jax
import jax.numpy as jnp
from jax import lax
from jax.experimental import pallas as pl
from jax.experimental.pallas import tpu as pltpu

# ----------------------------- configuration -------------------------------
D = 32           # transformer hidden size (stand-in for 768)
NUM_HEADS = 4
DH = D // NUM_HEADS
MLP = 4 * D
N_LAYERS = 2
OUT = 256        # encoder feature dim (nn.Linear(hidden, 256))
PROJ = 256       # projection head dim
IMG_C, IMG_HW, PATCH = 3, 16, 8
N_PATCH = (IMG_HW // PATCH) ** 2          # 4
S_IMG = N_PATCH + 1                       # 5 real tokens (CLS + patches)
S_IMG_PAD = 8                             # padded to a sublane multiple of 8
S_TXT = 8
VOCAB = 64
LN_EPS_TF = 1e-12                         # ViT / DistilBERT layernorm eps
LN_EPS_HEAD = 1e-5                        # nn.LayerNorm default in ProjectionHead
NEG_INF = -1e9

_VMEM = pl.BlockSpec(memory_space=pltpu.MemorySpace.VMEM)
_CPARAMS = pltpu.CompilerParams(vmem_limit_bytes=32 * 1024 * 1024)


# --------------------------- in-kernel helper math ---------------------------
def _gelu(x):
    c = math.sqrt(2.0 / math.pi)
    return 0.5 * x * (1.0 + jnp.tanh(c * (x + 0.044715 * x * x * x)))


def _layernorm(x, g, b, eps):
    mean = jnp.mean(x, axis=-1, keepdims=True)
    var = jnp.mean((x - mean) ** 2, axis=-1, keepdims=True)
    return (x - mean) * lax.rsqrt(var + eps) * g + b


def _softmax(s):
    s = s - jnp.max(s, axis=-1, keepdims=True)
    p = jnp.exp(s)
    return p * pl.reciprocal(jnp.sum(p, axis=-1, keepdims=True), approx=True)


def _mha(x2, b, s, wqkv, bqkv, wo, bo, bias):
    """Head-batched multi-head attention on a (B*S, D) residual stream.

    Heads are stacked along the leading batch axis (h-major) so scores / softmax /
    context run as single batched ops (no per-head loop); the head merge accumulates
    per-head context through sublane-aligned 8-row blocks of Wo (no lane concat).
    `bias` is an additive key mask broadcastable against the (H*B, S, S) scores,
    built once per encoder (hoisted out of the layer loop).
    """
    qkv = jnp.dot(x2.astype(jnp.bfloat16), wqkv,
                  preferred_element_type=jnp.float32) + bqkv            # (B*S, 3D) f32
    qkv = qkv.reshape(b, s, 3 * D)                                      # tile-aligned (S=8)
    q = jnp.concatenate([qkv[:, :, h * DH:(h + 1) * DH]
                         for h in range(NUM_HEADS)], axis=0)            # (H*B, S, DH)
    k = jnp.concatenate([qkv[:, :, D + h * DH:D + (h + 1) * DH]
                         for h in range(NUM_HEADS)], axis=0)
    v = jnp.concatenate([qkv[:, :, 2 * D + h * DH:2 * D + (h + 1) * DH]
                         for h in range(NUM_HEADS)], axis=0)

    sc = jnp.einsum('bqd,bkd->bqk', q.astype(jnp.bfloat16), k.astype(jnp.bfloat16),
                    preferred_element_type=jnp.float32) * (1.0 / math.sqrt(DH))
    p = _softmax(sc + bias)                                             # one softmax, all heads
    ctx = jnp.einsum('bqk,bkd->bqd', p.astype(jnp.bfloat16), v.astype(jnp.bfloat16),
                     preferred_element_type=jnp.float32)                # (H*B, S, DH)

    out = bo                                                            # (1, D) f32 bias
    for h in range(NUM_HEADS):  # head merge via Wo row-block accumulation (no concat)
        ctx_h = ctx[h * b:(h + 1) * b].reshape(b * s, DH)
        out = out + jnp.dot(ctx_h.astype(jnp.bfloat16), wo[h * DH:(h + 1) * DH, :],
                            preferred_element_type=jnp.float32)
    return out                                                          # (B*S, D) f32


def _ffn(x2, w1, b1, w2, b2):
    h = _gelu(jnp.dot(x2.astype(jnp.bfloat16), w1,
                      preferred_element_type=jnp.float32) + b1)
    return jnp.dot(h.astype(jnp.bfloat16), w2, preferred_element_type=jnp.float32) + b2


def _projection_head(x, w1, b1, w2, b2, g, be):
    projected = jnp.dot(x.astype(jnp.bfloat16), w1,
                        preferred_element_type=jnp.float32) + b1
    h = _gelu(projected)
    y = jnp.dot(h.astype(jnp.bfloat16), w2, preferred_element_type=jnp.float32) + b2
    # dropout(p=0.1) is identity in eval mode
    y = y + projected
    return _layernorm(y, g, be, LN_EPS_HEAD)


# ------------------------------ fused kernels -------------------------------
def _image_encoder_kernel(patches_ref, patch_w_ref, patch_b_ref, cls_ref, pos_ref,
                          ln1_g_ref, ln1_b_ref, wqkv_ref, bqkv_ref, wo_ref, bo_ref,
                          ln2_g_ref, ln2_b_ref, w1_ref, b1_ref, w2_ref, b2_ref,
                          lnf_g_ref, lnf_b_ref, fc_w_ref, fc_b_ref,
                          pw1_ref, pb1_ref, pw2_ref, pb2_ref, pg_ref, pbe_ref, o_ref):
    b = patches_ref.shape[0] // N_PATCH
    s = S_IMG_PAD

    # patch embedding (== Conv2d(kernel=stride=P) unrolled into one matmul)
    emb = jnp.dot(patches_ref[...].astype(jnp.bfloat16), patch_w_ref[...],
                  preferred_element_type=jnp.float32) + patch_b_ref[...]     # (B*NP, D)
    emb = emb.reshape(b, N_PATCH, D)
    cls = jnp.broadcast_to(cls_ref[...].reshape(1, 1, D), (b, 1, D))
    pad = jnp.zeros((b, s - 1 - N_PATCH, D), jnp.float32)
    x = jnp.concatenate([cls, emb, pad], axis=1) + pos_ref[...][None, :, :]  # (B, 8, D)
    x2 = x.reshape(b * s, D)                                                  # 2-D residual stream

    # key mask for the (never-real) pad rows, built once and hoisted out of the loop
    kpos = lax.broadcasted_iota(jnp.int32, (1, 1, s), 2)
    bias = jnp.where(kpos < S_IMG, 0.0, NEG_INF).astype(jnp.float32)          # (1, 1, S)

    for l in range(N_LAYERS):          # pre-LN ViT blocks
        h = _layernorm(x2, ln1_g_ref[l], ln1_b_ref[l], LN_EPS_TF)
        x2 = x2 + _mha(h, b, s, wqkv_ref[l], bqkv_ref[l], wo_ref[l], bo_ref[l], bias)
        h = _layernorm(x2, ln2_g_ref[l], ln2_b_ref[l], LN_EPS_TF)
        x2 = x2 + _ffn(h, w1_ref[l], b1_ref[l], w2_ref[l], b2_ref[l])

    # final LN on CLS rows only (LN is per-row: select-then-LN == LN-then-select)
    cls_feat = _layernorm(x2.reshape(b, s, D)[:, 0, :],
                          lnf_g_ref[...], lnf_b_ref[...], LN_EPS_TF)
    feat = jnp.dot(cls_feat.astype(jnp.bfloat16), fc_w_ref[...],
                   preferred_element_type=jnp.float32) + fc_b_ref[...]        # (B, 256)
    # fused (weight-shared) projection head -> no third pallas_call
    o_ref[...] = _projection_head(feat, pw1_ref[...], pb1_ref[...], pw2_ref[...],
                                  pb2_ref[...], pg_ref[...], pbe_ref[...]).astype(o_ref.dtype)


def _text_encoder_kernel(x_ref, mask_ref, emb_ln_g_ref, emb_ln_b_ref,
                         ln1_g_ref, ln1_b_ref, wqkv_ref, bqkv_ref, wo_ref, bo_ref,
                         ln2_g_ref, ln2_b_ref, w1_ref, b1_ref, w2_ref, b2_ref,
                         fc_w_ref, fc_b_ref,
                         pw1_ref, pb1_ref, pw2_ref, pb2_ref, pg_ref, pbe_ref, o_ref):
    b, s, d = x_ref.shape
    x2 = _layernorm(x_ref[...].astype(jnp.float32).reshape(b * s, d),
                    emb_ln_g_ref[...], emb_ln_b_ref[...], LN_EPS_TF)          # (B*S, D)

    # additive key mask from the (B, S) attention mask, broadcast ONCE to the
    # head-stacked (H*B, 1, S) layout (h-major) and hoisted out of the layer loop
    key_bias = (1.0 - mask_ref[...].astype(jnp.float32)) * NEG_INF            # (B, S)
    bias = jnp.broadcast_to(key_bias[None, :, None, :],
                            (NUM_HEADS, b, 1, s)).reshape(NUM_HEADS * b, 1, s)

    for l in range(N_LAYERS):          # post-LN DistilBERT blocks
        a = _mha(x2, b, s, wqkv_ref[l], bqkv_ref[l], wo_ref[l], bo_ref[l], bias)
        x2 = _layernorm(x2 + a, ln1_g_ref[l], ln1_b_ref[l], LN_EPS_TF)
        f = _ffn(x2, w1_ref[l], b1_ref[l], w2_ref[l], b2_ref[l])
        x2 = _layernorm(x2 + f, ln2_g_ref[l], ln2_b_ref[l], LN_EPS_TF)

    cls_feat = x2.reshape(b, s, d)[:, 0, :]                                   # last_hidden_state[:, 0, :]
    feat = jnp.dot(cls_feat.astype(jnp.bfloat16), fc_w_ref[...],
                   preferred_element_type=jnp.float32) + fc_b_ref[...]        # (B, 256)
    o_ref[...] = _projection_head(feat, pw1_ref[...], pb1_ref[...], pw2_ref[...],
                                  pb2_ref[...], pg_ref[...], pbe_ref[...]).astype(o_ref.dtype)


# ------------------------------ kernel wrappers ------------------------------
def image_encoder_and_project(images, p_img, p_proj):
    B = images.shape[0]
    # NCHW -> (B*num_patches, C*P*P) patch rows (one-time XLA glue; exact conv equivalent)
    patches = images.reshape(B, IMG_C, IMG_HW // PATCH, PATCH, IMG_HW // PATCH, PATCH)
    patches = patches.transpose(0, 2, 4, 1, 3, 5).reshape(B * N_PATCH, IMG_C * PATCH * PATCH)
    pos = jnp.pad(p_img["pos"], ((0, S_IMG_PAD - S_IMG), (0, 0)))   # pad pos to S=8
    L = p_img["layers"]
    return pl.pallas_call(
        _image_encoder_kernel,
        out_shape=jax.ShapeDtypeStruct((B, PROJ), jnp.float32),
        in_specs=[_VMEM] * 27,
        out_specs=_VMEM,
        compiler_params=_CPARAMS,
    )(patches, p_img["patch_w"], p_img["patch_b"], p_img["cls"], pos,
      L["ln1_g"], L["ln1_b"], L["wqkv"], L["bqkv"], L["wo"], L["bo"],
      L["ln2_g"], L["ln2_b"], L["w1"], L["b1"], L["w2"], L["b2"],
      p_img["ln_g"], p_img["ln_b"], p_img["fc_w"], p_img["fc_b"],
      p_proj["w1"], p_proj["b1"], p_proj["w2"], p_proj["b2"],
      p_proj["ln_g"], p_proj["ln_b"])


def text_encoder_and_project(input_ids, attention_mask, p_txt, p_proj):
    B, S = input_ids.shape
    # token gather (embedding lookup) kept as JAX glue; position add folded in here
    x = jnp.take(p_txt["tok_emb"], input_ids, axis=0) + p_txt["pos_emb"][None, :S, :]
    L = p_txt["layers"]
    return pl.pallas_call(
        _text_encoder_kernel,
        out_shape=jax.ShapeDtypeStruct((B, PROJ), jnp.float32),
        in_specs=[_VMEM] * 24,
        out_specs=_VMEM,
        compiler_params=_CPARAMS,
    )(x, attention_mask.astype(jnp.float32),
      p_txt["emb_ln_g"], p_txt["emb_ln_b"],
      L["ln1_g"], L["ln1_b"], L["wqkv"], L["bqkv"], L["wo"], L["bo"],
      L["ln2_g"], L["ln2_b"], L["w1"], L["b1"], L["w2"], L["b2"],
      p_txt["fc_w"], p_txt["fc_b"],
      p_proj["w1"], p_proj["b1"], p_proj["w2"], p_proj["b2"],
      p_proj["ln_g"], p_proj["ln_b"])


@jax.jit
def clip_forward(images, input_ids, attention_mask, params):
    # TODO(synk): on v7x run the two independent encoder kernels on separate TensorCores
    #             (pl.core_map over pltpu.create_tensorcore_mesh); skipped at toy scale.
    image_projection = image_encoder_and_project(images, params["image"], params["proj"])
    text_projection = text_encoder_and_project(input_ids, attention_mask,
                                               params["text"], params["proj"])
    return image_projection, text_projection


# ------------------------------ parameter init ------------------------------
def make_params():
    keys = iter(jax.random.split(jax.random.PRNGKey(0), 256))

    def w(shape, dtype=jnp.bfloat16, scale=0.02):
        # matmul weights stored in bf16 (MXU-native operand dtype on v6e/v7x, halves the
        # VMEM/HBM footprint); accumulation stays f32 via preferred_element_type.
        return (jax.random.normal(next(keys), shape, jnp.float32) * scale).astype(dtype)

    def stacked_layers():
        # per-layer weights stacked along a leading layer axis, biases kept 2-D per layer
        return {
            "ln1_g": jnp.ones((N_LAYERS, 1, D), jnp.float32),
            "ln1_b": jnp.zeros((N_LAYERS, 1, D), jnp.float32),
            "wqkv": w((N_LAYERS, D, 3 * D)),
            "bqkv": jnp.zeros((N_LAYERS, 1, 3 * D), jnp.float32),
            "wo": w((N_LAYERS, D, D)),
            "bo": jnp.zeros((N_LAYERS, 1, D), jnp.float32),
            "ln2_g": jnp.ones((N_LAYERS, 1, D), jnp.float32),
            "ln2_b": jnp.zeros((N_LAYERS, 1, D), jnp.float32),
            "w1": w((N_LAYERS, D, MLP)),
            "b1": jnp.zeros((N_LAYERS, 1, MLP), jnp.float32),
            "w2": w((N_LAYERS, MLP, D)),
            "b2": jnp.zeros((N_LAYERS, 1, D), jnp.float32),
        }

    image = {"patch_w": w((IMG_C * PATCH * PATCH, D)),
             "patch_b": jnp.zeros((1, D), jnp.float32),
             "cls": w((1, D), jnp.float32), "pos": w((S_IMG, D), jnp.float32),
             "layers": stacked_layers(),
             "ln_g": jnp.ones((1, D), jnp.float32), "ln_b": jnp.zeros((1, D), jnp.float32),
             "fc_w": w((D, OUT)), "fc_b": jnp.zeros((1, OUT), jnp.float32)}

    text = {"tok_emb": w((VOCAB, D), jnp.float32), "pos_emb": w((S_TXT, D), jnp.float32),
            "emb_ln_g": jnp.ones((1, D), jnp.float32),
            "emb_ln_b": jnp.zeros((1, D), jnp.float32),
            "layers": stacked_layers(),
            "fc_w": w((D, OUT)), "fc_b": jnp.zeros((1, OUT), jnp.float32)}

    proj = {"w1": w((OUT, PROJ)), "b1": jnp.zeros((1, PROJ), jnp.float32),
            "w2": w((PROJ, PROJ)), "b2": jnp.zeros((1, PROJ), jnp.float32),
            "ln_g": jnp.ones((1, PROJ), jnp.float32),
            "ln_b": jnp.zeros((1, PROJ), jnp.float32)}

    return {"image": image, "text": text, "proj": proj}


# ----------------------------------- main ------------------------------------
if __name__ == "__main__":
    params = make_params()

    k_img, k_ids = jax.random.split(jax.random.PRNGKey(0), 2)
    B = 2
    images = jax.random.normal(k_img, (B, IMG_C, IMG_HW, IMG_HW), jnp.float32)   # NCHW
    input_ids = jax.random.randint(k_ids, (B, S_TXT), 0, VOCAB, jnp.int32)
    # second sequence has 2 padding tokens at the end
    attention_mask = (jnp.arange(S_TXT)[None, :]
                      < jnp.array([[S_TXT], [S_TXT - 2]])).astype(jnp.float32)

    img_proj, txt_proj = clip_forward(images, input_ids, attention_mask, params)
    jax.block_until_ready((img_proj, txt_proj))

    assert img_proj.shape == (B, PROJ) and txt_proj.shape == (B, PROJ)
    assert bool(jnp.all(jnp.isfinite(img_proj))) and bool(jnp.all(jnp.isfinite(txt_proj)))
    print("KERNEL_OK")
</pallas_src>

<mosaic_0001>
module attributes {stable_mosaic.version = 11 : i64} {
  func.func @_text_encoder_kernel(%arg0: memref<2x8x32xf32, #tpu.memory_space<vmem>>, %arg1: memref<2x8xf32, #tpu.memory_space<vmem>>, %arg2: memref<1x32xf32, #tpu.memory_space<vmem>>, %arg3: memref<1x32xf32, #tpu.memory_space<vmem>>, %arg4: memref<2x1x32xf32, #tpu.memory_space<vmem>>, %arg5: memref<2x1x32xf32, #tpu.memory_space<vmem>>, %arg6: memref<2x32x96xbf16, #tpu.memory_space<vmem>>, %arg7: memref<2x1x96xf32, #tpu.memory_space<vmem>>, %arg8: memref<2x32x32xbf16, #tpu.memory_space<vmem>>, %arg9: memref<2x1x32xf32, #tpu.memory_space<vmem>>, %arg10: memref<2x1x32xf32, #tpu.memory_space<vmem>>, %arg11: memref<2x1x32xf32, #tpu.memory_space<vmem>>, %arg12: memref<2x32x128xbf16, #tpu.memory_space<vmem>>, %arg13: memref<2x1x128xf32, #tpu.memory_space<vmem>>, %arg14: memref<2x128x32xbf16, #tpu.memory_space<vmem>>, %arg15: memref<2x1x32xf32, #tpu.memory_space<vmem>>, %arg16: memref<32x256xbf16, #tpu.memory_space<vmem>>, %arg17: memref<1x256xf32, #tpu.memory_space<vmem>>, %arg18: memref<256x256xbf16, #tpu.memory_space<vmem>>, %arg19: memref<1x256xf32, #tpu.memory_space<vmem>>, %arg20: memref<256x256xbf16, #tpu.memory_space<vmem>>, %arg21: memref<1x256xf32, #tpu.memory_space<vmem>>, %arg22: memref<1x256xf32, #tpu.memory_space<vmem>>, %arg23: memref<1x256xf32, #tpu.memory_space<vmem>>, %arg24: memref<2x256xf32, #tpu.memory_space<vmem>>) attributes {dimension_semantics = [], scalar_prefetch = 0 : i64, scratch_operands = 0 : i64, tpu.core_type = #tpu.core_type<tc>} {
    %c0 = arith.constant 0 : index
    %c0_0 = arith.constant 0 : index
    %c0_1 = arith.constant 0 : index
    %0 = vector.load %arg0[%c0, %c0_0, %c0_1] : memref<2x8x32xf32, #tpu.memory_space<vmem>>, vector<2x8x32xf32>
    %1 = vector.shape_cast %0 : vector<2x8x32xf32> to vector<16x32xf32>
    %c0_2 = arith.constant 0 : index
    %c0_3 = arith.constant 0 : index
    %2 = vector.load %arg2[%c0_2, %c0_3] : memref<1x32xf32, #tpu.memory_space<vmem>>, vector<1x32xf32>
    %c0_4 = arith.constant 0 : index
    %c0_5 = arith.constant 0 : index
    %3 = vector.load %arg3[%c0_4, %c0_5] : memref<1x32xf32, #tpu.memory_space<vmem>>, vector<1x32xf32>
    %cst = arith.constant dense<0.000000e+00> : vector<16xf32>
    %4 = vector.multi_reduction <add>, %1, %cst [1] : vector<16x32xf32> to vector<16xf32>
    %5 = vector.shape_cast %4 : vector<16xf32> to vector<16x1xf32>
    %cst_6 = arith.constant 3.200000e+01 : f32
    %6 = vector.broadcast %cst_6 : f32 to vector<16x1xf32>
    %7 = arith.divf %5, %6 : vector<16x1xf32>
    %8 = vector.broadcast %7 : vector<16x1xf32> to vector<16x32xf32>
    %9 = arith.subf %1, %8 : vector<16x32xf32>
    %10 = arith.mulf %9, %9 : vector<16x32xf32>
    %cst_7 = arith.constant dense<0.000000e+00> : vector<16xf32>
    %11 = vector.multi_reduction <add>, %10, %cst_7 [1] : vector<16x32xf32> to vector<16xf32>
    %12 = vector.shape_cast %11 : vector<16xf32> to vector<16x1xf32>
    %cst_8 = arith.constant 3.200000e+01 : f32
    %13 = vector.broadcast %cst_8 : f32 to vector<16x1xf32>
    %14 = arith.divf %12, %13 : vector<16x1xf32>
    %15 = vector.broadcast %7 : vector<16x1xf32> to vector<16x32xf32>
    %16 = arith.subf %1, %15 : vector<16x32xf32>
    %cst_9 = arith.constant 9.99999996E-13 : f32
    %17 = vector.broadcast %cst_9 : f32 to vector<16x1xf32>
    %18 = arith.addf %14, %17 : vector<16x1xf32>
    %19 = math.rsqrt %18 : vector<16x1xf32>
    %20 = vector.broadcast %19 : vector<16x1xf32> to vector<16x32xf32>
    %21 = arith.mulf %16, %20 : vector<16x32xf32>
    %22 = vector.broadcast %2 : vector<1x32xf32> to vector<16x32xf32>
    %23 = arith.mulf %21, %22 : vector<16x32xf32>
    %24 = vector.broadcast %3 : vector<1x32xf32> to vector<16x32xf32>
    %25 = arith.addf %23, %24 : vector<16x32xf32>
    %c0_10 = arith.constant 0 : index
    %c0_11 = arith.constant 0 : index
    %26 = vector.load %arg1[%c0_10, %c0_11] : memref<2x8xf32, #tpu.memory_space<vmem>>, vector<2x8xf32>
    %cst_12 = arith.constant 1.000000e+00 : f32
    %27 = vector.broadcast %cst_12 : f32 to vector<2x8xf32>
    %28 = arith.subf %27, %26 : vector<2x8xf32>
    %cst_13 = arith.constant -1.000000e+09 : f32
    %29 = vector.broadcast %cst_13 : f32 to vector<2x8xf32>
    %30 = arith.mulf %28, %29 : vector<2x8xf32>
    %31 = vector.shape_cast %30 : vector<2x8xf32> to vector<1x2x1x8xf32>
    %32 = vector.shape_cast %31 : vector<1x2x1x8xf32> to vector<1x2x1x8xf32>
    %33 = vector.broadcast %32 : vector<1x2x1x8xf32> to vector<4x2x1x8xf32>
    %34 = vector.shape_cast %33 : vector<4x2x1x8xf32> to vector<8x1x8xf32>
    %c0_14 = arith.constant 0 : index
    %c0_15 = arith.constant 0 : index
    %c0_16 = arith.constant 0 : index
    %35 = vector.load %arg6[%c0_14, %c0_15, %c0_16] : memref<2x32x96xbf16, #tpu.memory_space<vmem>>, vector<1x32x96xbf16>
    %36 = vector.shape_cast %35 : vector<1x32x96xbf16> to vector<32x96xbf16>
    %c0_17 = arith.constant 0 : index
    %c0_18 = arith.constant 0 : index
    %c0_19 = arith.constant 0 : index
    %37 = vector.load %arg7[%c0_17, %c0_18, %c0_19] : memref<2x1x96xf32, #tpu.memory_space<vmem>>, vector<1x1x96xf32>
    %38 = vector.shape_cast %37 : vector<1x1x96xf32> to vector<1x96xf32>
    %c0_20 = arith.constant 0 : index
    %c0_21 = arith.constant 0 : index
    %c0_22 = arith.constant 0 : index
    %39 = vector.load %arg8[%c0_20, %c0_21, %c0_22] : memref<2x32x32xbf16, #tpu.memory_space<vmem>>, vector<1x32x32xbf16>
    %40 = vector.shape_cast %39 : vector<1x32x32xbf16> to vector<32x32xbf16>
    %c0_23 = arith.constant 0 : index
    %c0_24 = arith.constant 0 : index
    %c0_25 = arith.constant 0 : index
    %41 = vector.load %arg9[%c0_23, %c0_24, %c0_25] : memref<2x1x32xf32, #tpu.memory_space<vmem>>, vector<1x1x32xf32>
    %42 = vector.shape_cast %41 : vector<1x1x32xf32> to vector<1x32xf32>
    %43 = arith.truncf %25 : vector<16x32xf32> to vector<16x32xbf16>
    %cst_26 = arith.constant dense<0.000000e+00> : vector<16x96xf32>
    %44 = tpu.matmul %43, %36, %cst_26 {dimension_numbers = #tpu.dot_dimension_numbers<[1], [0], [0], [1], [0, 0, 1, 1], [], []>} : vector<16x32xbf16>, vector<32x96xbf16>, vector<16x96xf32> -> vector<16x96xf32>
    %45 = vector.broadcast %38 : vector<1x96xf32> to vector<16x96xf32>
    %46 = arith.addf %44, %45 : vector<16x96xf32>
    %47 = vector.shape_cast %46 : vector<16x96xf32> to vector<2x8x96xf32>
    %48 = vector.extract_strided_slice %47 {offsets = [0, 0, 0], sizes = [2, 8, 8], strides = [1, 1, 1]} : vector<2x8x96xf32> to vector<2x8x8xf32>
    %49 = vector.extract_strided_slice %47 {offsets = [0, 0, 8], sizes = [2, 8, 8], strides = [1, 1, 1]} : vector<2x8x96xf32> to vector<2x8x8xf32>
    %50 = vector.extract_strided_slice %47 {offsets = [0, 0, 16], sizes = [2, 8, 8], strides = [1, 1, 1]} : vector<2x8x96xf32> to vector<2x8x8xf32>
    %51 = vector.extract_strided_slice %47 {offsets = [0, 0, 24], sizes = [2, 8, 8], strides = [1, 1, 1]} : vector<2x8x96xf32> to vector<2x8x8xf32>
    %52 = tpu.concatenate %48, %49, %50, %51 in 0 : vector<2x8x8xf32>, vector<2x8x8xf32>, vector<2x8x8xf32>, vector<2x8x8xf32> -> vector<8x8x8xf32>
    %53 = vector.extract_strided_slice %47 {offsets = [0, 0, 32], sizes = [2, 8, 8], strides = [1, 1, 1]} : vector<2x8x96xf32> to vector<2x8x8xf32>
    %54 = vector.extract_strided_slice %47 {offsets = [0, 0, 40], sizes = [2, 8, 8], strides = [1, 1, 1]} : vector<2x8x96xf32> to vector<2x8x8xf32>
    %55 = vector.extract_strided_slice %47 {offsets = [0, 0, 48], sizes = [2, 8, 8], strides = [1, 1, 1]} : vector<2x8x96xf32> to vector<2x8x8xf32>
    %56 = vector.extract_strided_slice %47 {offsets = [0, 0, 56], sizes = [2, 8, 8], strides = [1, 1, 1]} : vector<2x8x96xf32> to vector<2x8x8xf32>
    %57 = tpu.concatenate %53, %54, %55, %56 in 0 : vector<2x8x8xf32>, vector<2x8x8xf32>, vector<2x8x8xf32>, vector<2x8x8xf32> -> vector<8x8x8xf32>
    %58 = vector.extract_strided_slice %47 {offsets = [0, 0, 64], sizes = [2, 8, 8], strides = [1, 1, 1]} : vector<2x8x96xf32> to vector<2x8x8xf32>
    %59 = vector.extract_strided_slice %47 {offsets = [0, 0, 72], sizes = [2, 8, 8], strides = [1, 1, 1]} : vector<2x8x96xf32> to vector<2x8x8xf32>
    %60 = vector.extract_strided_slice %47 {offsets = [0, 0, 80], sizes = [2, 8, 8], strides = [1, 1, 1]} : vector<2x8x96xf32> to vector<2x8x8xf32>
    %61 = vector.extract_strided_slice %47 {offsets = [0, 0, 88], sizes = [2, 8, 8], strides = [1, 1, 1]} : vector<2x8x96xf32> to vector<2x8x8xf32>
    %62 = tpu.concatenate %58, %59, %60, %61 in 0 : vector<2x8x8xf32>, vector<2x8x8xf32>, vector<2x8x8xf32>, vector<2x8x8xf32> -> vector<8x8x8xf32>
    %63 = arith.truncf %52 : vector<8x8x8xf32> to vector<8x8x8xbf16>
    %64 = arith.truncf %57 : vector<8x8x8xf32> to vector<8x8x8xbf16>
    "tpu.trace_start"() <{level = 10 : i32, message = "bqd,bkd->bqk"}> : () -> ()
    %cst_27 = arith.constant dense<0.000000e+00> : vector<8x8x8xf32>
    %65 = tpu.matmul %63, %64, %cst_27 {dimension_numbers = #tpu.dot_dimension_numbers<[2], [2], [1], [1], [0, 0, 0, 1, 1, 1], [0], [0]>} : vector<8x8x8xbf16>, vector<8x8x8xbf16>, vector<8x8x8xf32> -> vector<8x8x8xf32>
    "tpu.trace_stop"() : () -> ()
    %cst_28 = arith.constant 0.353553385 : f32
    %66 = vector.broadcast %cst_28 : f32 to vector<8x8x8xf32>
    %67 = arith.mulf %65, %66 : vector<8x8x8xf32>
    %68 = vector.broadcast %34 : vector<8x1x8xf32> to vector<8x8x8xf32>
    %69 = arith.addf %67, %68 : vector<8x8x8xf32>
    %cst_29 = arith.constant dense<0xFF800000> : vector<8x8xf32>
    %70 = vector.multi_reduction <maximumf>, %69, %cst_29 [2] : vector<8x8x8xf32> to vector<8x8xf32>
    %71 = vector.shape_cast %70 : vector<8x8xf32> to vector<8x8x1xf32>
    %72 = vector.broadcast %71 : vector<8x8x1xf32> to vector<8x8x8xf32>
    %73 = arith.subf %69, %72 : vector<8x8x8xf32>
    %74 = math.exp %73 : vector<8x8x8xf32>
    %cst_30 = arith.constant dense<0.000000e+00> : vector<8x8xf32>
    %75 = vector.multi_reduction <add>, %74, %cst_30 [2] : vector<8x8x8xf32> to vector<8x8xf32>
    %76 = vector.shape_cast %75 : vector<8x8xf32> to vector<8x8x1xf32>
    %77 = tpu.reciprocal %76 {approx = true} : vector<8x8x1xf32> -> vector<8x8x1xf32>
    %78 = vector.broadcast %77 : vector<8x8x1xf32> to vector<8x8x8xf32>
    %79 = arith.mulf %74, %78 : vector<8x8x8xf32>
    %80 = arith.truncf %79 : vector<8x8x8xf32> to vector<8x8x8xbf16>
    %81 = arith.truncf %62 : vector<8x8x8xf32> to vector<8x8x8xbf16>
    "tpu.trace_start"() <{level = 10 : i32, message = "bqk,bkd->bqd"}> : () -> ()
    %cst_31 = arith.constant dense<0.000000e+00> : vector<8x8x8xf32>
    %82 = tpu.matmul %80, %81, %cst_31 {dimension_numbers = #tpu.dot_dimension_numbers<[2], [1], [1], [2], [0, 0, 0, 1, 1, 2], [0], [0]>} : vector<8x8x8xbf16>, vector<8x8x8xbf16>, vector<8x8x8xf32> -> vector<8x8x8xf32>
    "tpu.trace_stop"() : () -> ()
    %83 = vector.extract_strided_slice %82 {offsets = [0, 0, 0], sizes = [2, 8, 8], strides = [1, 1, 1]} : vector<8x8x8xf32> to vector<2x8x8xf32>
    %84 = vector.shape_cast %83 : vector<2x8x8xf32> to vector<16x8xf32>
    %85 = arith.truncf %84 : vector<16x8xf32> to vector<16x8xbf16>
    %86 = vector.extract_strided_slice %40 {offsets = [0, 0], sizes = [8, 32], strides = [1, 1]} : vector<32x32xbf16> to vector<8x32xbf16>
    %cst_32 = arith.constant dense<0.000000e+00> : vector<16x32xf32>
    %87 = tpu.matmul %85, %86, %cst_32 {dimension_numbers = #tpu.dot_dimension_numbers<[1], [0], [0], [1], [0, 0, 1, 1], [], []>} : vector<16x8xbf16>, vector<8x32xbf16>, vector<16x32xf32> -> vector<16x32xf32>
    %88 = vector.broadcast %42 : vector<1x32xf32> to vector<16x32xf32>
    %89 = arith.addf %88, %87 : vector<16x32xf32>
    %90 = vector.extract_strided_slice %82 {offsets = [2, 0, 0], sizes = [2, 8, 8], strides = [1, 1, 1]} : vector<8x8x8xf32> to vector<2x8x8xf32>
    %91 = vector.shape_cast %90 : vector<2x8x8xf32> to vector<16x8xf32>
    %92 = arith.truncf %91 : vector<16x8xf32> to vector<16x8xbf16>
    %93 = vector.extract_strided_slice %40 {offsets = [8, 0], sizes = [8, 32], strides = [1, 1]} : vector<32x32xbf16> to vector<8x32xbf16>
    %cst_33 = arith.constant dense<0.000000e+00> : vector<16x32xf32>
    %94 = tpu.matmul %92, %93, %cst_33 {dimension_numbers = #tpu.dot_dimension_numbers<[1], [0], [0], [1], [0, 0, 1, 1], [], []>} : vector<16x8xbf16>, vector<8x32xbf16>, vector<16x32xf32> -> vector<16x32xf32>
    %95 = arith.addf %89, %94 : vector<16x32xf32>
    %96 = vector.extract_strided_slice %82 {offsets = [4, 0, 0], sizes = [2, 8, 8], strides = [1, 1, 1]} : vector<8x8x8xf32> to vector<2x8x8xf32>
    %97 = vector.shape_cast %96 : vector<2x8x8xf32> to vector<16x8xf32>
    %98 = arith.truncf %97 : vector<16x8xf32> to vector<16x8xbf16>
    %99 = vector.extract_strided_slice %40 {offsets = [16, 0], sizes = [8, 32], strides = [1, 1]} : vector<32x32xbf16> to vector<8x32xbf16>
    %cst_34 = arith.constant dense<0.000000e+00> : vector<16x32xf32>
    %100 = tpu.matmul %98, %99, %cst_34 {dimension_numbers = #tpu.dot_dimension_numbers<[1], [0], [0], [1], [0, 0, 1, 1], [], []>} : vector<16x8xbf16>, vector<8x32xbf16>, vector<16x32xf32> -> vector<16x32xf32>
    %101 = arith.addf %95, %100 : vector<16x32xf32>
    %102 = vector.extract_strided_slice %82 {offsets = [6, 0, 0], sizes = [2, 8, 8], strides = [1, 1, 1]} : vector<8x8x8xf32> to vector<2x8x8xf32>
    %103 = vector.shape_cast %102 : vector<2x8x8xf32> to vector<16x8xf32>
    %104 = arith.truncf %103 : vector<16x8xf32> to vector<16x8xbf16>
    %105 = vector.extract_strided_slice %40 {offsets = [24, 0], sizes = [8, 32], strides = [1, 1]} : vector<32x32xbf16> to vector<8x32xbf16>
    %cst_35 = arith.constant dense<0.000000e+00> : vector<16x32xf32>
    %106 = tpu.matmul %104, %105, %cst_35 {dimension_numbers = #tpu.dot_dimension_numbers<[1], [0], [0], [1], [0, 0, 1, 1], [], []>} : vector<16x8xbf16>, vector<8x32xbf16>, vector<16x32xf32> -> vector<16x32xf32>
    %107 = arith.addf %101, %106 : vector<16x32xf32>
    %108 = arith.addf %25, %107 : vector<16x32xf32>
    %c0_36 = arith.constant 0 : index
    %c0_37 = arith.constant 0 : index
    %c0_38 = arith.constant 0 : index
    %109 = vector.load %arg4[%c0_36, %c0_37, %c0_38] : memref<2x1x32xf32, #tpu.memory_space<vmem>>, vector<1x1x32xf32>
    %110 = vector.shape_cast %109 : vector<1x1x32xf32> to vector<1x32xf32>
    %c0_39 = arith.constant 0 : index
    %c0_40 = arith.constant 0 : index
    %c0_41 = arith.constant 0 : index
    %111 = vector.load %arg5[%c0_39, %c0_40, %c0_41] : memref<2x1x32xf32, #tpu.memory_space<vmem>>, vector<1x1x32xf32>
    %112 = vector.shape_cast %111 : vector<1x1x32xf32> to vector<1x32xf32>
    %cst_42 = arith.constant dense<0.000000e+00> : vector<16xf32>
    %113 = vector.multi_reduction <add>, %108, %cst_42 [1] : vector<16x32xf32> to vector<16xf32>
    %114 = vector.shape_cast %113 : vector<16xf32> to vector<16x1xf32>
    %cst_43 = arith.constant 3.200000e+01 : f32
    %115 = vector.broadcast %cst_43 : f32 to vector<16x1xf32>
    %116 = arith.divf %114, %115 : vector<16x1xf32>
    %117 = vector.broadcast %116 : vector<16x1xf32> to vector<16x32xf32>
    %118 = arith.subf %108, %117 : vector<16x32xf32>
    %119 = arith.mulf %118, %118 : vector<16x32xf32>
    %cst_44 = arith.constant dense<0.000000e+00> : vector<16xf32>
    %120 = vector.multi_reduction <add>, %119, %cst_44 [1] : vector<16x32xf32> to vector<16xf32>
    %121 = vector.shape_cast %120 : vector<16xf32> to vector<16x1xf32>
    %cst_45 = arith.constant 3.200000e+01 : f32
    %122 = vector.broadcast %cst_45 : f32 to vector<16x1xf32>
    %123 = arith.divf %121, %122 : vector<16x1xf32>
    %124 = vector.broadcast %116 : vector<16x1xf32> to vector<16x32xf32>
    %125 = arith.subf %108, %124 : vector<16x32xf32>
    %cst_46 = arith.constant 9.99999996E-13 : f32
    %126 = vector.broadcast %cst_46 : f32 to vector<16x1xf32>
    %127 = arith.addf %123, %126 : vector<16x1xf32>
    %128 = math.rsqrt %127 : vector<16x1xf32>
    %129 = vector.broadcast %128 : vector<16x1xf32> to vector<16x32xf32>
    %130 = arith.mulf %125, %129 : vector<16x32xf32>
    %131 = vector.broadcast %110 : vector<1x32xf32> to vector<16x32xf32>
    %132 = arith.mulf %130, %131 : vector<16x32xf32>
    %133 = vector.broadcast %112 : vector<1x32xf32> to vector<16x32xf32>
    %134 = arith.addf %132, %133 : vector<16x32xf32>
    %c0_47 = arith.constant 0 : index
    %c0_48 = arith.constant 0 : index
    %c0_49 = arith.constant 0 : index
    %135 = vector.load %arg12[%c0_47, %c0_48, %c0_49] : memref<2x32x128xbf16, #tpu.memory_space<vmem>>, vector<1x32x128xbf16>
    %136 = vector.shape_cast %135 : vector<1x32x128xbf16> to vector<32x128xbf16>
    %c0_50 = arith.constant 0 : index
    %c0_51 = arith.constant 0 : index
    %c0_52 = arith.constant 0 : index
    %137 = vector.load %arg13[%c0_50, %c0_51, %c0_52] : memref<2x1x128xf32, #tpu.memory_space<vmem>>, vector<1x1x128xf32>
    %138 = vector.shape_cast %137 : vector<1x1x128xf32> to vector<1x128xf32>
    %c0_53 = arith.constant 0 : index
    %c0_54 = arith.constant 0 : index
    %c0_55 = arith.constant 0 : index
    %139 = vector.load %arg14[%c0_53, %c0_54, %c0_55] : memref<2x128x32xbf16, #tpu.memory_space<vmem>>, vector<1x128x32xbf16>
    %140 = vector.shape_cast %139 : vector<1x128x32xbf16> to vector<128x32xbf16>
    %c0_56 = arith.constant 0 : index
    %c0_57 = arith.constant 0 : index
    %c0_58 = arith.constant 0 : index
    %141 = vector.load %arg15[%c0_56, %c0_57, %c0_58] : memref<2x1x32xf32, #tpu.memory_space<vmem>>, vector<1x1x32xf32>
    %142 = vector.shape_cast %141 : vector<1x1x32xf32> to vector<1x32xf32>
    %143 = arith.truncf %134 : vector<16x32xf32> to vector<16x32xbf16>
    %cst_59 = arith.constant dense<0.000000e+00> : vector<16x128xf32>
    %144 = tpu.matmul %143, %136, %cst_59 {dimension_numbers = #tpu.dot_dimension_numbers<[1], [0], [0], [1], [0, 0, 1, 1], [], []>} : vector<16x32xbf16>, vector<32x128xbf16>, vector<16x128xf32> -> vector<16x128xf32>
    %145 = vector.broadcast %138 : vector<1x128xf32> to vector<16x128xf32>
    %146 = arith.addf %144, %145 : vector<16x128xf32>
    %cst_60 = arith.constant 5.000000e-01 : f32
    %147 = vector.broadcast %cst_60 : f32 to vector<16x128xf32>
    %148 = arith.mulf %147, %146 : vector<16x128xf32>
    %cst_61 = arith.constant 4.471500e-02 : f32
    %149 = vector.broadcast %cst_61 : f32 to vector<16x128xf32>
    %150 = arith.mulf %149, %146 : vector<16x128xf32>
    %151 = arith.mulf %150, %146 : vector<16x128xf32>
    %152 = arith.mulf %151, %146 : vector<16x128xf32>
    %153 = arith.addf %146, %152 : vector<16x128xf32>
    %cst_62 = arith.constant 0.797884583 : f32
    %154 = vector.broadcast %cst_62 : f32 to vector<16x128xf32>
    %155 = arith.mulf %154, %153 : vector<16x128xf32>
    %156 = math.tanh %155 : vector<16x128xf32>
    %cst_63 = arith.constant 1.000000e+00 : f32
    %157 = vector.broadcast %cst_63 : f32 to vector<16x128xf32>
    %158 = arith.addf %157, %156 : vector<16x128xf32>
    %159 = arith.mulf %148, %158 : vector<16x128xf32>
    %160 = arith.truncf %159 : vector<16x128xf32> to vector<16x128xbf16>
    %cst_64 = arith.constant dense<0.000000e+00> : vector<16x32xf32>
    %161 = tpu.matmul %160, %140, %cst_64 {dimension_numbers = #tpu.dot_dimension_numbers<[1], [0], [0], [1], [0, 0, 1, 1], [], []>} : vector<16x128xbf16>, vector<128x32xbf16>, vector<16x32xf32> -> vector<16x32xf32>
    %162 = vector.broadcast %142 : vector<1x32xf32> to vector<16x32xf32>
    %163 = arith.addf %161, %162 : vector<16x32xf32>
    %164 = arith.addf %134, %163 : vector<16x32xf32>
    %c0_65 = arith.constant 0 : index
    %c0_66 = arith.constant 0 : index
    %c0_67 = arith.constant 0 : index
    %165 = vector.load %arg10[%c0_65, %c0_66, %c0_67] : memref<2x1x32xf32, #tpu.memory_space<vmem>>, vector<1x1x32xf32>
    %166 = vector.shape_cast %165 : vector<1x1x32xf32> to vector<1x32xf32>
    %c0_68 = arith.constant 0 : index
    %c0_69 = arith.constant 0 : index
    %c0_70 = arith.constant 0 : index
    %167 = vector.load %arg11[%c0_68, %c0_69, %c0_70] : memref<2x1x32xf32, #tpu.memory_space<vmem>>, vector<1x1x32xf32>
    %168 = vector.shape_cast %167 : vector<1x1x32xf32> to vector<1x32xf32>
    %cst_71 = arith.constant dense<0.000000e+00> : vector<16xf32>
    %169 = vector.multi_reduction <add>, %164, %cst_71 [1] : vector<16x32xf32> to vector<16xf32>
    %170 = vector.shape_cast %169 : vector<16xf32> to vector<16x1xf32>
    %cst_72 = arith.constant 3.200000e+01 : f32
    %171 = vector.broadcast %cst_72 : f32 to vector<16x1xf32>
    %172 = arith.divf %170, %171 : vector<16x1xf32>
    %173 = vector.broadcast %172 : vector<16x1xf32> to vector<16x32xf32>
    %174 = arith.subf %164, %173 : vector<16x32xf32>
    %175 = arith.mulf %174, %174 : vector<16x32xf32>
    %cst_73 = arith.constant dense<0.000000e+00> : vector<16xf32>
    %176 = vector.multi_reduction <add>, %175, %cst_73 [1] : vector<16x32xf32> to vector<16xf32>
    %177 = vector.shape_cast %176 : vector<16xf32> to vector<16x1xf32>
    %cst_74 = arith.constant 3.200000e+01 : f32
    %178 = vector.broadcast %cst_74 : f32 to vector<16x1xf32>
    %179 = arith.divf %177, %178 : vector<16x1xf32>
    %180 = vector.broadcast %172 : vector<16x1xf32> to vector<16x32xf32>
    %181 = arith.subf %164, %180 : vector<16x32xf32>
    %cst_75 = arith.constant 9.99999996E-13 : f32
    %182 = vector.broadcast %cst_75 : f32 to vector<16x1xf32>
    %183 = arith.addf %179, %182 : vector<16x1xf32>
    %184 = math.rsqrt %183 : vector<16x1xf32>
    %185 = vector.broadcast %184 : vector<16x1xf32> to vector<16x32xf32>
    %186 = arith.mulf %181, %185 : vector<16x32xf32>
    %187 = vector.broadcast %166 : vector<1x32xf32> to vector<16x32xf32>
    %188 = arith.mulf %186, %187 : vector<16x32xf32>
    %189 = vector.broadcast %168 : vector<1x32xf32> to vector<16x32xf32>
    %190 = arith.addf %188, %189 : vector<16x32xf32>
    %c1 = arith.constant 1 : index
    %c0_76 = arith.constant 0 : index
    %c0_77 = arith.constant 0 : index
    %191 = vector.load %arg6[%c1, %c0_76, %c0_77] : memref<2x32x96xbf16, #tpu.memory_space<vmem>>, vector<1x32x96xbf16>
    %192 = vector.shape_cast %191 : vector<1x32x96xbf16> to vector<32x96xbf16>
    %c1_78 = arith.constant 1 : index
    %c0_79 = arith.constant 0 : index
    %c0_80 = arith.constant 0 : index
    %193 = vector.load %arg7[%c1_78, %c0_79, %c0_80] : memref<2x1x96xf32, #tpu.memory_space<vmem>>, vector<1x1x96xf32>
    %194 = vector.shape_cast %193 : vector<1x1x96xf32> to vector<1x96xf32>
    %c1_81 = arith.constant 1 : index
    %c0_82 = arith.constant 0 : index
    %c0_83 = arith.constant 0 : index
    %195 = vector.load %arg8[%c1_81, %c0_82, %c0_83] : memref<2x32x32xbf16, #tpu.memory_space<vmem>>, vector<1x32x32xbf16>
    %196 = vector.shape_cast %195 : vector<1x32x32xbf16> to vector<32x32xbf16>
    %c1_84 = arith.constant 1 : index
    %c0_85 = arith.constant 0 : index
    %c0_86 = arith.constant 0 : index
    %197 = vector.load %arg9[%c1_84, %c0_85, %c0_86] : memref<2x1x32xf32, #tpu.memory_space<vmem>>, vector<1x1x32xf32>
    %198 = vector.shape_cast %197 : vector<1x1x32xf32> to vector<1x32xf32>
    %199 = arith.truncf %190 : vector<16x32xf32> to vector<16x32xbf16>
    %cst_87 = arith.constant dense<0.000000e+00> : vector<16x96xf32>
    %200 = tpu.matmul %199, %192, %cst_87 {dimension_numbers = #tpu.dot_dimension_numbers<[1], [0], [0], [1], [0, 0, 1, 1], [], []>} : vector<16x32xbf16>, vector<32x96xbf16>, vector<16x96xf32> -> vector<16x96xf32>
    %201 = vector.broadcast %194 : vector<1x96xf32> to vector<16x96xf32>
    %202 = arith.addf %200, %201 : vector<16x96xf32>
    %203 = vector.shape_cast %202 : vector<16x96xf32> to vector<2x8x96xf32>
    %204 = vector.extract_strided_slice %203 {offsets = [0, 0, 0], sizes = [2, 8, 8], strides = [1, 1, 1]} : vector<2x8x96xf32> to vector<2x8x8xf32>
    %205 = vector.extract_strided_slice %203 {offsets = [0, 0, 8], sizes = [2, 8, 8], strides = [1, 1, 1]} : vector<2x8x96xf32> to vector<2x8x8xf32>
    %206 = vector.extract_strided_slice %203 {offsets = [0, 0, 16], sizes = [2, 8, 8], strides = [1, 1, 1]} : vector<2x8x96xf32> to vector<2x8x8xf32>
    %207 = vector.extract_strided_slice %203 {offsets = [0, 0, 24], sizes = [2, 8, 8], strides = [1, 1, 1]} : vector<2x8x96xf32> to vector<2x8x8xf32>
    %208 = tpu.concatenate %204, %205, %206, %207 in 0 : vector<2x8x8xf32>, vector<2x8x8xf32>, vector<2x8x8xf32>, vector<2x8x8xf32> -> vector<8x8x8xf32>
    %209 = vector.extract_strided_slice %203 {offsets = [0, 0, 32], sizes = [2, 8, 8], strides = [1, 1, 1]} : vector<2x8x96xf32> to vector<2x8x8xf32>
    %210 = vector.extract_strided_slice %203 {offsets = [0, 0, 40], sizes = [2, 8, 8], strides = [1, 1, 1]} : vector<2x8x96xf32> to vector<2x8x8xf32>
    %211 = vector.extract_strided_slice %203 {offsets = [0, 0, 48], sizes = [2, 8, 8], strides = [1, 1, 1]} : vector<2x8x96xf32> to vector<2x8x8xf32>
    %212 = vector.extract_strided_slice %203 {offsets = [0, 0, 56], sizes = [2, 8, 8], strides = [1, 1, 1]} : vector<2x8x96xf32> to vector<2x8x8xf32>
    %213 = tpu.concatenate %209, %210, %211, %212 in 0 : vector<2x8x8xf32>, vector<2x8x8xf32>, vector<2x8x8xf32>, vector<2x8x8xf32> -> vector<8x8x8xf32>
    %214 = vector.extract_strided_slice %203 {offsets = [0, 0, 64], sizes = [2, 8, 8], strides = [1, 1, 1]} : vector<2x8x96xf32> to vector<2x8x8xf32>
    %215 = vector.extract_strided_slice %203 {offsets = [0, 0, 72], sizes = [2, 8, 8], strides = [1, 1, 1]} : vector<2x8x96xf32> to vector<2x8x8xf32>
    %216 = vector.extract_strided_slice %203 {offsets = [0, 0, 80], sizes = [2, 8, 8], strides = [1, 1, 1]} : vector<2x8x96xf32> to vector<2x8x8xf32>
    %217 = vector.extract_strided_slice %203 {offsets = [0, 0, 88], sizes = [2, 8, 8], strides = [1, 1, 1]} : vector<2x8x96xf32> to vector<2x8x8xf32>
    %218 = tpu.concatenate %214, %215, %216, %217 in 0 : vector<2x8x8xf32>, vector<2x8x8xf32>, vector<2x8x8xf32>, vector<2x8x8xf32> -> vector<8x8x8xf32>
    %219 = arith.truncf %208 : vector<8x8x8xf32> to vector<8x8x8xbf16>
    %220 = arith.truncf %213 : vector<8x8x8xf32> to vector<8x8x8xbf16>
    "tpu.trace_start"() <{level = 10 : i32, message = "bqd,bkd->bqk"}> : () -> ()
    %cst_88 = arith.constant dense<0.000000e+00> : vector<8x8x8xf32>
    %221 = tpu.matmul %219, %220, %cst_88 {dimension_numbers = #tpu.dot_dimension_numbers<[2], [2], [1], [1], [0, 0, 0, 1, 1, 1], [0], [0]>} : vector<8x8x8xbf16>, vector<8x8x8xbf16>, vector<8x8x8xf32> -> vector<8x8x8xf32>
    "tpu.trace_stop"() : () -> ()
    %cst_89 = arith.constant 0.353553385 : f32
    %222 = vector.broadcast %cst_89 : f32 to vector<8x8x8xf32>
    %223 = arith.mulf %221, %222 : vector<8x8x8xf32>
    %224 = vector.broadcast %34 : vector<8x1x8xf32> to vector<8x8x8xf32>
    %225 = arith.addf %223, %224 : vector<8x8x8xf32>
    %cst_90 = arith.constant dense<0xFF800000> : vector<8x8xf32>
    %226 = vector.multi_reduction <maximumf>, %225, %cst_90 [2] : vector<8x8x8xf32> to vector<8x8xf32>
    %227 = vector.shape_cast %226 : vector<8x8xf32> to vector<8x8x1xf32>
    %228 = vector.broadcast %227 : vector<8x8x1xf32> to vector<8x8x8xf32>
    %229 = arith.subf %225, %228 : vector<8x8x8xf32>
    %230 = math.exp %229 : vector<8x8x8xf32>
    %cst_91 = arith.constant dense<0.000000e+00> : vector<8x8xf32>
    %231 = vector.multi_reduction <add>, %230, %cst_91 [2] : vector<8x8x8xf32> to vector<8x8xf32>
    %232 = vector.shape_cast %231 : vector<8x8xf32> to vector<8x8x1xf32>
    %233 = tpu.reciprocal %232 {approx = true} : vector<8x8x1xf32> -> vector<8x8x1xf32>
    %234 = vector.broadcast %233 : vector<8x8x1xf32> to vector<8x8x8xf32>
    %235 = arith.mulf %230, %234 : vector<8x8x8xf32>
    %236 = arith.truncf %235 : vector<8x8x8xf32> to vector<8x8x8xbf16>
    %237 = arith.truncf %218 : vector<8x8x8xf32> to vector<8x8x8xbf16>
    "tpu.trace_start"() <{level = 10 : i32, message = "bqk,bkd->bqd"}> : () -> ()
    %cst_92 = arith.constant dense<0.000000e+00> : vector<8x8x8xf32>
    %238 = tpu.matmul %236, %237, %cst_92 {dimension_numbers = #tpu.dot_dimension_numbers<[2], [1], [1], [2], [0, 0, 0, 1, 1, 2], [0], [0]>} : vector<8x8x8xbf16>, vector<8x8x8xbf16>, vector<8x8x8xf32> -> vector<8x8x8xf32>
    "tpu.trace_stop"() : () -> ()
    %239 = vector.extract_strided_slice %238 {offsets = [0, 0, 0], sizes = [2, 8, 8], strides = [1, 1, 1]} : vector<8x8x8xf32> to vector<2x8x8xf32>
    %240 = vector.shape_cast %239 : vector<2x8x8xf32> to vector<16x8xf32>
    %241 = arith.truncf %240 : vector<16x8xf32> to vector<16x8xbf16>
    %242 = vector.extract_strided_slice %196 {offsets = [0, 0], sizes = [8, 32], strides = [1, 1]} : vector<32x32xbf16> to vector<8x32xbf16>
    %cst_93 = arith.constant dense<0.000000e+00> : vector<16x32xf32>
    %243 = tpu.matmul %241, %242, %cst_93 {dimension_numbers = #tpu.dot_dimension_numbers<[1], [0], [0], [1], [0, 0, 1, 1], [], []>} : vector<16x8xbf16>, vector<8x32xbf16>, vector<16x32xf32> -> vector<16x32xf32>
    %244 = vector.broadcast %198 : vector<1x32xf32> to vector<16x32xf32>
    %245 = arith.addf %244, %243 : vector<16x32xf32>
    %246 = vector.extract_strided_slice %238 {offsets = [2, 0, 0], sizes = [2, 8, 8], strides = [1, 1, 1]} : vector<8x8x8xf32> to vector<2x8x8xf32>
    %247 = vector.shape_cast %246 : vector<2x8x8xf32> to vector<16x8xf32>
    %248 = arith.truncf %247 : vector<16x8xf32> to vector<16x8xbf16>
    %249 = vector.extract_strided_slice %196 {offsets = [8, 0], sizes = [8, 32], strides = [1, 1]} : vector<32x32xbf16> to vector<8x32xbf16>
    %cst_94 = arith.constant dense<0.000000e+00> : vector<16x32xf32>
    %250 = tpu.matmul %248, %249, %cst_94 {dimension_numbers = #tpu.dot_dimension_numbers<[1], [0], [0], [1], [0, 0, 1, 1], [], []>} : vector<16x8xbf16>, vector<8x32xbf16>, vector<16x32xf32> -> vector<16x32xf32>
    %251 = arith.addf %245, %250 : vector<16x32xf32>
    %252 = vector.extract_strided_slice %238 {offsets = [4, 0, 0], sizes = [2, 8, 8], strides = [1, 1, 1]} : vector<8x8x8xf32> to vector<2x8x8xf32>
    %253 = vector.shape_cast %252 : vector<2x8x8xf32> to vector<16x8xf32>
    %254 = arith.truncf %253 : vector<16x8xf32> to vector<16x8xbf16>
    %255 = vector.extract_strided_slice %196 {offsets = [16, 0], sizes = [8, 32], strides = [1, 1]} : vector<32x32xbf16> to vector<8x32xbf16>
    %cst_95 = arith.constant dense<0.000000e+00> : vector<16x32xf32>
    %256 = tpu.matmul %254, %255, %cst_95 {dimension_numbers = #tpu.dot_dimension_numbers<[1], [0], [0], [1], [0, 0, 1, 1], [], []>} : vector<16x8xbf16>, vector<8x32xbf16>, vector<16x32xf32> -> vector<16x32xf32>
    %257 = arith.addf %251, %256 : vector<16x32xf32>
    %258 = vector.extract_strided_slice %238 {offsets = [6, 0, 0], sizes = [2, 8, 8], strides = [1, 1, 1]} : vector<8x8x8xf32> to vector<2x8x8xf32>
    %259 = vector.shape_cast %258 : vector<2x8x8xf32> to vector<16x8xf32>
    %260 = arith.truncf %259 : vector<16x8xf32> to vector<16x8xbf16>
    %261 = vector.extract_strided_slice %196 {offsets = [24, 0], sizes = [8, 32], strides = [1, 1]} : vector<32x32xbf16> to vector<8x32xbf16>
    %cst_96 = arith.constant dense<0.000000e+00> : vector<16x32xf32>
    %262 = tpu.matmul %260, %261, %cst_96 {dimension_numbers = #tpu.dot_dimension_numbers<[1], [0], [0], [1], [0, 0, 1, 1], [], []>} : vector<16x8xbf16>, vector<8x32xbf16>, vector<16x32xf32> -> vector<16x32xf32>
    %263 = arith.addf %257, %262 : vector<16x32xf32>
    %264 = arith.addf %190, %263 : vector<16x32xf32>
    %c1_97 = arith.constant 1 : index
    %c0_98 = arith.constant 0 : index
    %c0_99 = arith.constant 0 : index
    %265 = vector.load %arg4[%c1_97, %c0_98, %c0_99] : memref<2x1x32xf32, #tpu.memory_space<vmem>>, vector<1x1x32xf32>
    %266 = vector.shape_cast %265 : vector<1x1x32xf32> to vector<1x32xf32>
    %c1_100 = arith.constant 1 : index
    %c0_101 = arith.constant 0 : index
    %c0_102 = arith.constant 0 : index
    %267 = vector.load %arg5[%c1_100, %c0_101, %c0_102] : memref<2x1x32xf32, #tpu.memory_space<vmem>>, vector<1x1x32xf32>
    %268 = vector.shape_cast %267 : vector<1x1x32xf32> to vector<1x32xf32>
    %cst_103 = arith.constant dense<0.000000e+00> : vector<16xf32>
    %269 = vector.multi_reduction <add>, %264, %cst_103 [1] : vector<16x32xf32> to vector<16xf32>
    %270 = vector.shape_cast %269 : vector<16xf32> to vector<16x1xf32>
    %cst_104 = arith.constant 3.200000e+01 : f32
    %271 = vector.broadcast %cst_104 : f32 to vector<16x1xf32>
    %272 = arith.divf %270, %271 : vector<16x1xf32>
    %273 = vector.broadcast %272 : vector<16x1xf32> to vector<16x32xf32>
    %274 = arith.subf %264, %273 : vector<16x32xf32>
    %275 = arith.mulf %274, %274 : vector<16x32xf32>
    %cst_105 = arith.constant dense<0.000000e+00> : vector<16xf32>
    %276 = vector.multi_reduction <add>, %275, %cst_105 [1] : vector<16x32xf32> to vector<16xf32>
    %277 = vector.shape_cast %276 : vector<16xf32> to vector<16x1xf32>
    %cst_106 = arith.constant 3.200000e+01 : f32
    %278 = vector.broadcast %cst_106 : f32 to vector<16x1xf32>
    %279 = arith.divf %277, %278 : vector<16x1xf32>
    %280 = vector.broadcast %272 : vector<16x1xf32> to vector<16x32xf32>
    %281 = arith.subf %264, %280 : vector<16x32xf32>
    %cst_107 = arith.constant 9.99999996E-13 : f32
    %282 = vector.broadcast %cst_107 : f32 to vector<16x1xf32>
    %283 = arith.addf %279, %282 : vector<16x1xf32>
    %284 = math.rsqrt %283 : vector<16x1xf32>
    %285 = vector.broadcast %284 : vector<16x1xf32> to vector<16x32xf32>
    %286 = arith.mulf %281, %285 : vector<16x32xf32>
    %287 = vector.broadcast %266 : vector<1x32xf32> to vector<16x32xf32>
    %288 = arith.mulf %286, %287 : vector<16x32xf32>
    %289 = vector.broadcast %268 : vector<1x32xf32> to vector<16x32xf32>
    %290 = arith.addf %288, %289 : vector<16x32xf32>
    %c1_108 = arith.constant 1 : index
    %c0_109 = arith.constant 0 : index
    %c0_110 = arith.constant 0 : index
    %291 = vector.load %arg12[%c1_108, %c0_109, %c0_110] : memref<2x32x128xbf16, #tpu.memory_space<vmem>>, vector<1x32x128xbf16>
    %292 = vector.shape_cast %291 : vector<1x32x128xbf16> to vector<32x128xbf16>
    %c1_111 = arith.constant 1 : index
    %c0_112 = arith.constant 0 : index
    %c0_113 = arith.constant 0 : index
    %293 = vector.load %arg13[%c1_111, %c0_112, %c0_113] : memref<2x1x128xf32, #tpu.memory_space<vmem>>, vector<1x1x128xf32>
    %294 = vector.shape_cast %293 : vector<1x1x128xf32> to vector<1x128xf32>
    %c1_114 = arith.constant 1 : index
    %c0_115 = arith.constant 0 : index
    %c0_116 = arith.constant 0 : index
    %295 = vector.load %arg14[%c1_114, %c0_115, %c0_116] : memref<2x128x32xbf16, #tpu.memory_space<vmem>>, vector<1x128x32xbf16>
    %296 = vector.shape_cast %295 : vector<1x128x32xbf16> to vector<128x32xbf16>
    %c1_117 = arith.constant 1 : index
    %c0_118 = arith.constant 0 : index
    %c0_119 = arith.constant 0 : index
    %297 = vector.load %arg15[%c1_117, %c0_118, %c0_119] : memref<2x1x32xf32, #tpu.memory_space<vmem>>, vector<1x1x32xf32>
    %298 = vector.shape_cast %297 : vector<1x1x32xf32> to vector<1x32xf32>
    %299 = arith.truncf %290 : vector<16x32xf32> to vector<16x32xbf16>
    %cst_120 = arith.constant dense<0.000000e+00> : vector<16x128xf32>
    %300 = tpu.matmul %299, %292, %cst_120 {dimension_numbers = #tpu.dot_dimension_numbers<[1], [0], [0], [1], [0, 0, 1, 1], [], []>} : vector<16x32xbf16>, vector<32x128xbf16>, vector<16x128xf32> -> vector<16x128xf32>
    %301 = vector.broadcast %294 : vector<1x128xf32> to vector<16x128xf32>
    %302 = arith.addf %300, %301 : vector<16x128xf32>
    %cst_121 = arith.constant 5.000000e-01 : f32
    %303 = vector.broadcast %cst_121 : f32 to vector<16x128xf32>
    %304 = arith.mulf %303, %302 : vector<16x128xf32>
    %cst_122 = arith.constant 4.471500e-02 : f32
    %305 = vector.broadcast %cst_122 : f32 to vector<16x128xf32>
    %306 = arith.mulf %305, %302 : vector<16x128xf32>
    %307 = arith.mulf %306, %302 : vector<16x128xf32>
    %308 = arith.mulf %307, %302 : vector<16x128xf32>
    %309 = arith.addf %302, %308 : vector<16x128xf32>
    %cst_123 = arith.constant 0.797884583 : f32
    %310 = vector.broadcast %cst_123 : f32 to vector<16x128xf32>
    %311 = arith.mulf %310, %309 : vector<16x128xf32>
    %312 = math.tanh %311 : vector<16x128xf32>
    %cst_124 = arith.constant 1.000000e+00 : f32
    %313 = vector.broadcast %cst_124 : f32 to vector<16x128xf32>
    %314 = arith.addf %313, %312 : vector<16x128xf32>
    %315 = arith.mulf %304, %314 : vector<16x128xf32>
    %316 = arith.truncf %315 : vector<16x128xf32> to vector<16x128xbf16>
    %cst_125 = arith.constant dense<0.000000e+00> : vector<16x32xf32>
    %317 = tpu.matmul %316, %296, %cst_125 {dimension_numbers = #tpu.dot_dimension_numbers<[1], [0], [0], [1], [0, 0, 1, 1], [], []>} : vector<16x128xbf16>, vector<128x32xbf16>, vector<16x32xf32> -> vector<16x32xf32>
    %318 = vector.broadcast %298 : vector<1x32xf32> to vector<16x32xf32>
    %319 = arith.addf %317, %318 : vector<16x32xf32>
    %320 = arith.addf %290, %319 : vector<16x32xf32>
    %c1_126 = arith.constant 1 : index
    %c0_127 = arith.constant 0 : index
    %c0_128 = arith.constant 0 : index
    %321 = vector.load %arg10[%c1_126, %c0_127, %c0_128] : memref<2x1x32xf32, #tpu.memory_space<vmem>>, vector<1x1x32xf32>
    %322 = vector.shape_cast %321 : vector<1x1x32xf32> to vector<1x32xf32>
    %c1_129 = arith.constant 1 : index
    %c0_130 = arith.constant 0 : index
    %c0_131 = arith.constant 0 : index
    %323 = vector.load %arg11[%c1_129, %c0_130, %c0_131] : memref<2x1x32xf32, #tpu.memory_space<vmem>>, vector<1x1x32xf32>
    %324 = vector.shape_cast %323 : vector<1x1x32xf32> to vector<1x32xf32>
    %cst_132 = arith.constant dense<0.000000e+00> : vector<16xf32>
    %325 = vector.multi_reduction <add>, %320, %cst_132 [1] : vector<16x32xf32> to vector<16xf32>
    %326 = vector.shape_cast %325 : vector<16xf32> to vector<16x1xf32>
    %cst_133 = arith.constant 3.200000e+01 : f32
    %327 = vector.broadcast %cst_133 : f32 to vector<16x1xf32>
    %328 = arith.divf %326, %327 : vector<16x1xf32>
    %329 = vector.broadcast %328 : vector<16x1xf32> to vector<16x32xf32>
    %330 = arith.subf %320, %329 : vector<16x32xf32>
    %331 = arith.mulf %330, %330 : vector<16x32xf32>
    %cst_134 = arith.constant dense<0.000000e+00> : vector<16xf32>
    %332 = vector.multi_reduction <add>, %331, %cst_134 [1] : vector<16x32xf32> to vector<16xf32>
    %333 = vector.shape_cast %332 : vector<16xf32> to vector<16x1xf32>
    %cst_135 = arith.constant 3.200000e+01 : f32
    %334 = vector.broadcast %cst_135 : f32 to vector<16x1xf32>
    %335 = arith.divf %333, %334 : vector<16x1xf32>
    %336 = vector.broadcast %328 : vector<16x1xf32> to vector<16x32xf32>
    %337 = arith.subf %320, %336 : vector<16x32xf32>
    %cst_136 = arith.constant 9.99999996E-13 : f32
    %338 = vector.broadcast %cst_136 : f32 to vector<16x1xf32>
    %339 = arith.addf %335, %338 : vector<16x1xf32>
    %340 = math.rsqrt %339 : vector<16x1xf32>
    %341 = vector.broadcast %340 : vector<16x1xf32> to vector<16x32xf32>
    %342 = arith.mulf %337, %341 : vector<16x32xf32>
    %343 = vector.broadcast %322 : vector<1x32xf32> to vector<16x32xf32>
    %344 = arith.mulf %342, %343 : vector<16x32xf32>
    %345 = vector.broadcast %324 : vector<1x32xf32> to vector<16x32xf32>
    %346 = arith.addf %344, %345 : vector<16x32xf32>
    %347 = vector.shape_cast %346 : vector<16x32xf32> to vector<2x8x32xf32>
    %348 = vector.extract_strided_slice %347 {offsets = [0, 0, 0], sizes = [2, 1, 32], strides = [1, 1, 1]} : vector<2x8x32xf32> to vector<2x1x32xf32>
    %349 = vector.shape_cast %348 : vector<2x1x32xf32> to vector<2x32xf32>
    %350 = arith.truncf %349 : vector<2x32xf32> to vector<2x32xbf16>
    %c0_137 = arith.constant 0 : index
    %c0_138 = arith.constant 0 : index
    %351 = vector.load %arg16[%c0_137, %c0_138] : memref<32x256xbf16, #tpu.memory_space<vmem>>, vector<32x256xbf16>
    %cst_139 = arith.constant dense<0.000000e+00> : vector<2x256xf32>
    %352 = tpu.matmul %350, %351, %cst_139 {dimension_numbers = #tpu.dot_dimension_numbers<[1], [0], [0], [1], [0, 0, 1, 1], [], []>} : vector<2x32xbf16>, vector<32x256xbf16>, vector<2x256xf32> -> vector<2x256xf32>
    %c0_140 = arith.constant 0 : index
    %c0_141 = arith.constant 0 : index
    %353 = vector.load %arg17[%c0_140, %c0_141] : memref<1x256xf32, #tpu.memory_space<vmem>>, vector<1x256xf32>
    %354 = vector.broadcast %353 : vector<1x256xf32> to vector<2x256xf32>
    %355 = arith.addf %352, %354 : vector<2x256xf32>
    %c0_142 = arith.constant 0 : index
    %c0_143 = arith.constant 0 : index
    %356 = vector.load %arg18[%c0_142, %c0_143] : memref<256x256xbf16, #tpu.memory_space<vmem>>, vector<256x256xbf16>
    %c0_144 = arith.constant 0 : index
    %c0_145 = arith.constant 0 : index
    %357 = vector.load %arg19[%c0_144, %c0_145] : memref<1x256xf32, #tpu.memory_space<vmem>>, vector<1x256xf32>
    %c0_146 = arith.constant 0 : index
    %c0_147 = arith.constant 0 : index
    %358 = vector.load %arg20[%c0_146, %c0_147] : memref<256x256xbf16, #tpu.memory_space<vmem>>, vector<256x256xbf16>
    %c0_148 = arith.constant 0 : index
    %c0_149 = arith.constant 0 : index
    %359 = vector.load %arg21[%c0_148, %c0_149] : memref<1x256xf32, #tpu.memory_space<vmem>>, vector<1x256xf32>
    %c0_150 = arith.constant 0 : index
    %c0_151 = arith.constant 0 : index
    %360 = vector.load %arg22[%c0_150, %c0_151] : memref<1x256xf32, #tpu.memory_space<vmem>>, vector<1x256xf32>
    %c0_152 = arith.constant 0 : index
    %c0_153 = arith.constant 0 : index
    %361 = vector.load %arg23[%c0_152, %c0_153] : memref<1x256xf32, #tpu.memory_space<vmem>>, vector<1x256xf32>
    %362 = arith.truncf %355 : vector<2x256xf32> to vector<2x256xbf16>
    %cst_154 = arith.constant dense<0.000000e+00> : vector<2x256xf32>
    %363 = tpu.matmul %362, %356, %cst_154 {dimension_numbers = #tpu.dot_dimension_numbers<[1], [0], [0], [1], [0, 0, 1, 1], [], []>} : vector<2x256xbf16>, vector<256x256xbf16>, vector<2x256xf32> -> vector<2x256xf32>
    %364 = vector.broadcast %357 : vector<1x256xf32> to vector<2x256xf32>
    %365 = arith.addf %363, %364 : vector<2x256xf32>
    %cst_155 = arith.constant 5.000000e-01 : f32
    %366 = vector.broadcast %cst_155 : f32 to vector<2x256xf32>
    %367 = arith.mulf %366, %365 : vector<2x256xf32>
    %cst_156 = arith.constant 4.471500e-02 : f32
    %368 = vector.broadcast %cst_156 : f32 to vector<2x256xf32>
    %369 = arith.mulf %368, %365 : vector<2x256xf32>
    %370 = arith.mulf %369, %365 : vector<2x256xf32>
    %371 = arith.mulf %370, %365 : vector<2x256xf32>
    %372 = arith.addf %365, %371 : vector<2x256xf32>
    %cst_157 = arith.constant 0.797884583 : f32
    %373 = vector.broadcast %cst_157 : f32 to vector<2x256xf32>
    %374 = arith.mulf %373, %372 : vector<2x256xf32>
    %375 = math.tanh %374 : vector<2x256xf32>
    %cst_158 = arith.constant 1.000000e+00 : f32
    %376 = vector.broadcast %cst_158 : f32 to vector<2x256xf32>
    %377 = arith.addf %376, %375 : vector<2x256xf32>
    %378 = arith.mulf %367, %377 : vector<2x256xf32>
    %379 = arith.truncf %378 : vector<2x256xf32> to vector<2x256xbf16>
    %cst_159 = arith.constant dense<0.000000e+00> : vector<2x256xf32>
    %380 = tpu.matmul %379, %358, %cst_159 {dimension_numbers = #tpu.dot_dimension_numbers<[1], [0], [0], [1], [0, 0, 1, 1], [], []>} : vector<2x256xbf16>, vector<256x256xbf16>, vector<2x256xf32> -> vector<2x256xf32>
    %381 = vector.broadcast %359 : vector<1x256xf32> to vector<2x256xf32>
    %382 = arith.addf %380, %381 : vector<2x256xf32>
    %383 = arith.addf %382, %365 : vector<2x256xf32>
    %cst_160 = arith.constant dense<0.000000e+00> : vector<2xf32>
    %384 = vector.multi_reduction <add>, %383, %cst_160 [1] : vector<2x256xf32> to vector<2xf32>
    %385 = vector.shape_cast %384 : vector<2xf32> to vector<2x1xf32>
    %cst_161 = arith.constant 2.560000e+02 : f32
    %386 = vector.broadcast %cst_161 : f32 to vector<2x1xf32>
    %387 = arith.divf %385, %386 : vector<2x1xf32>
    %388 = vector.broadcast %387 : vector<2x1xf32> to vector<2x256xf32>
    %389 = arith.subf %383, %388 : vector<2x256xf32>
    %390 = arith.mulf %389, %389 : vector<2x256xf32>
    %cst_162 = arith.constant dense<0.000000e+00> : vector<2xf32>
    %391 = vector.multi_reduction <add>, %390, %cst_162 [1] : vector<2x256xf32> to vector<2xf32>
    %392 = vector.shape_cast %391 : vector<2xf32> to vector<2x1xf32>
    %cst_163 = arith.constant 2.560000e+02 : f32
    %393 = vector.broadcast %cst_163 : f32 to vector<2x1xf32>
    %394 = arith.divf %392, %393 : vector<2x1xf32>
    %395 = vector.broadcast %387 : vector<2x1xf32> to vector<2x256xf32>
    %396 = arith.subf %383, %395 : vector<2x256xf32>
    %cst_164 = arith.constant 9.99999974E-6 : f32
    %397 = vector.broadcast %cst_164 : f32 to vector<2x1xf32>
    %398 = arith.addf %394, %397 : vector<2x1xf32>
    %399 = math.rsqrt %398 : vector<2x1xf32>
    %400 = vector.broadcast %399 : vector<2x1xf32> to vector<2x256xf32>
    %401 = arith.mulf %396, %400 : vector<2x256xf32>
    %402 = vector.broadcast %360 : vector<1x256xf32> to vector<2x256xf32>
    %403 = arith.mulf %401, %402 : vector<2x256xf32>
    %404 = vector.broadcast %361 : vector<1x256xf32> to vector<2x256xf32>
    %405 = arith.addf %403, %404 : vector<2x256xf32>
    %c0_165 = arith.constant 0 : index
    %c0_166 = arith.constant 0 : index
    %406 = vector.load %arg24[%c0_165, %c0_166] : memref<2x256xf32, #tpu.memory_space<vmem>>, vector<2x256xf32>
    tpu.vector_store %arg24[%c0_165, %c0_166], %405 {strides = array<i32>} : memref<2x256xf32, #tpu.memory_space<vmem>>, vector<2x256xf32>,
    return
  }
}

module attributes {stable_mosaic.version = 11 : i64} {
  func.func @_image_encoder_kernel(%arg0: memref<8x192xf32, #tpu.memory_space<vmem>>, %arg1: memref<192x32xbf16, #tpu.memory_space<vmem>>, %arg2: memref<1x32xf32, #tpu.memory_space<vmem>>, %arg3: memref<1x32xf32, #tpu.memory_space<vmem>>, %arg4: memref<8x32xf32, #tpu.memory_space<vmem>>, %arg5: memref<2x1x32xf32, #tpu.memory_space<vmem>>, %arg6: memref<2x1x32xf32, #tpu.memory_space<vmem>>, %arg7: memref<2x32x96xbf16, #tpu.memory_space<vmem>>, %arg8: memref<2x1x96xf32, #tpu.memory_space<vmem>>, %arg9: memref<2x32x32xbf16, #tpu.memory_space<vmem>>, %arg10: memref<2x1x32xf32, #tpu.memory_space<vmem>>, %arg11: memref<2x1x32xf32, #tpu.memory_space<vmem>>, %arg12: memref<2x1x32xf32, #tpu.memory_space<vmem>>, %arg13: memref<2x32x128xbf16, #tpu.memory_space<vmem>>, %arg14: memref<2x1x128xf32, #tpu.memory_space<vmem>>, %arg15: memref<2x128x32xbf16, #tpu.memory_space<vmem>>, %arg16: memref<2x1x32xf32, #tpu.memory_space<vmem>>, %arg17: memref<1x32xf32, #tpu.memory_space<vmem>>, %arg18: memref<1x32xf32, #tpu.memory_space<vmem>>, %arg19: memref<32x256xbf16, #tpu.memory_space<vmem>>, %arg20: memref<1x256xf32, #tpu.memory_space<vmem>>, %arg21: memref<256x256xbf16, #tpu.memory_space<vmem>>, %arg22: memref<1x256xf32, #tpu.memory_space<vmem>>, %arg23: memref<256x256xbf16, #tpu.memory_space<vmem>>, %arg24: memref<1x256xf32, #tpu.memory_space<vmem>>, %arg25: memref<1x256xf32, #tpu.memory_space<vmem>>, %arg26: memref<1x256xf32, #tpu.memory_space<vmem>>, %arg27: memref<2x256xf32, #tpu.memory_space<vmem>>) attributes {dimension_semantics = [], scalar_prefetch = 0 : i64, scratch_operands = 0 : i64, tpu.core_type = #tpu.core_type<tc>} {
    %c0 = arith.constant 0 : index
    %c0_0 = arith.constant 0 : index
    %0 = vector.load %arg0[%c0, %c0_0] : memref<8x192xf32, #tpu.memory_space<vmem>>, vector<8x192xf32>
    %1 = arith.truncf %0 : vector<8x192xf32> to vector<8x192xbf16>
    %c0_1 = arith.constant 0 : index
    %c0_2 = arith.constant 0 : index
    %2 = vector.load %arg1[%c0_1, %c0_2] : memref<192x32xbf16, #tpu.memory_space<vmem>>, vector<192x32xbf16>
    %cst = arith.constant dense<0.000000e+00> : vector<8x32xf32>
    %3 = tpu.matmul %1, %2, %cst {dimension_numbers = #tpu.dot_dimension_numbers<[1], [0], [0], [1], [0, 0, 1, 1], [], []>} : vector<8x192xbf16>, vector<192x32xbf16>, vector<8x32xf32> -> vector<8x32xf32>
    %c0_3 = arith.constant 0 : index
    %c0_4 = arith.constant 0 : index
    %4 = vector.load %arg2[%c0_3, %c0_4] : memref<1x32xf32, #tpu.memory_space<vmem>>, vector<1x32xf32>
    %5 = vector.broadcast %4 : vector<1x32xf32> to vector<8x32xf32>
    %6 = arith.addf %3, %5 : vector<8x32xf32>
    %7 = vector.shape_cast %6 : vector<8x32xf32> to vector<2x4x32xf32>
    %c0_5 = arith.constant 0 : index
    %c0_6 = arith.constant 0 : index
    %8 = vector.load %arg3[%c0_5, %c0_6] : memref<1x32xf32, #tpu.memory_space<vmem>>, vector<1x32xf32>
    %9 = vector.shape_cast %8 : vector<1x32xf32> to vector<1x1x32xf32>
    %10 = vector.shape_cast %9 : vector<1x1x32xf32> to vector<1x1x32xf32>
    %11 = vector.broadcast %10 : vector<1x1x32xf32> to vector<2x1x32xf32>
    %cst_7 = arith.constant 0.000000e+00 : f32
    %12 = vector.broadcast %cst_7 : f32 to vector<2x3x32xf32>
    %13 = tpu.concatenate %11, %7, %12 in 1 : vector<2x1x32xf32>, vector<2x4x32xf32>, vector<2x3x32xf32> -> vector<2x8x32xf32>
    %c0_8 = arith.constant 0 : index
    %c0_9 = arith.constant 0 : index
    %14 = vector.load %arg4[%c0_8, %c0_9] : memref<8x32xf32, #tpu.memory_space<vmem>>, vector<8x32xf32>
    %15 = vector.shape_cast %14 : vector<8x32xf32> to vector<1x8x32xf32>
    %16 = vector.broadcast %15 : vector<1x8x32xf32> to vector<2x8x32xf32>
    %17 = arith.addf %13, %16 : vector<2x8x32xf32>
    %18 = vector.shape_cast %17 : vector<2x8x32xf32> to vector<16x32xf32>
    %19 = tpu.iota {dimensions = array<i32: 2>} : vector<1x1x8xi32>
    %c5_i32 = arith.constant 5 : i32
    %20 = vector.broadcast %c5_i32 : i32 to vector<1x1x8xi32>
    %21 = arith.cmpi slt, %19, %20 : vector<1x1x8xi32>
    %cst_10 = arith.constant 0.000000e+00 : f32
    %cst_11 = arith.constant -1.000000e+09 : f32
    %22 = vector.broadcast %cst_10 : f32 to vector<1x1x8xf32>
    %23 = vector.broadcast %cst_11 : f32 to vector<1x1x8xf32>
    %24 = arith.select %21, %22, %23 : vector<1x1x8xi1>, vector<1x1x8xf32>
    %c0_12 = arith.constant 0 : index
    %c0_13 = arith.constant 0 : index
    %c0_14 = arith.constant 0 : index
    %25 = vector.load %arg5[%c0_12, %c0_13, %c0_14] : memref<2x1x32xf32, #tpu.memory_space<vmem>>, vector<1x1x32xf32>
    %26 = vector.shape_cast %25 : vector<1x1x32xf32> to vector<1x32xf32>
    %c0_15 = arith.constant 0 : index
    %c0_16 = arith.constant 0 : index
    %c0_17 = arith.constant 0 : index
    %27 = vector.load %arg6[%c0_15, %c0_16, %c0_17] : memref<2x1x32xf32, #tpu.memory_space<vmem>>, vector<1x1x32xf32>
    %28 = vector.shape_cast %27 : vector<1x1x32xf32> to vector<1x32xf32>
    %cst_18 = arith.constant dense<0.000000e+00> : vector<16xf32>
    %29 = vector.multi_reduction <add>, %18, %cst_18 [1] : vector<16x32xf32> to vector<16xf32>
    %30 = vector.shape_cast %29 : vector<16xf32> to vector<16x1xf32>
    %cst_19 = arith.constant 3.200000e+01 : f32
    %31 = vector.broadcast %cst_19 : f32 to vector<16x1xf32>
    %32 = arith.divf %30, %31 : vector<16x1xf32>
    %33 = vector.broadcast %32 : vector<16x1xf32> to vector<16x32xf32>
    %34 = arith.subf %18, %33 : vector<16x32xf32>
    %35 = arith.mulf %34, %34 : vector<16x32xf32>
    %cst_20 = arith.constant dense<0.000000e+00> : vector<16xf32>
    %36 = vector.multi_reduction <add>, %35, %cst_20 [1] : vector<16x32xf32> to vector<16xf32>
    %37 = vector.shape_cast %36 : vector<16xf32> to vector<16x1xf32>
    %cst_21 = arith.constant 3.200000e+01 : f32
    %38 = vector.broadcast %cst_21 : f32 to vector<16x1xf32>
    %39 = arith.divf %37, %38 : vector<16x1xf32>
    %40 = vector.broadcast %32 : vector<16x1xf32> to vector<16x32xf32>
    %41 = arith.subf %18, %40 : vector<16x32xf32>
    %cst_22 = arith.constant 9.99999996E-13 : f32
    %42 = vector.broadcast %cst_22 : f32 to vector<16x1xf32>
    %43 = arith.addf %39, %42 : vector<16x1xf32>
    %44 = math.rsqrt %43 : vector<16x1xf32>
    %45 = vector.broadcast %44 : vector<16x1xf32> to vector<16x32xf32>
    %46 = arith.mulf %41, %45 : vector<16x32xf32>
    %47 = vector.broadcast %26 : vector<1x32xf32> to vector<16x32xf32>
    %48 = arith.mulf %46, %47 : vector<16x32xf32>
    %49 = vector.broadcast %28 : vector<1x32xf32> to vector<16x32xf32>
    %50 = arith.addf %48, %49 : vector<16x32xf32>
    %c0_23 = arith.constant 0 : index
    %c0_24 = arith.constant 0 : index
    %c0_25 = arith.constant 0 : index
    %51 = vector.load %arg7[%c0_23, %c0_24, %c0_25] : memref<2x32x96xbf16, #tpu.memory_space<vmem>>, vector<1x32x96xbf16>
    %52 = vector.shape_cast %51 : vector<1x32x96xbf16> to vector<32x96xbf16>
    %c0_26 = arith.constant 0 : index
    %c0_27 = arith.constant 0 : index
    %c0_28 = arith.constant 0 : index
    %53 = vector.load %arg8[%c0_26, %c0_27, %c0_28] : memref<2x1x96xf32, #tpu.memory_space<vmem>>, vector<1x1x96xf32>
    %54 = vector.shape_cast %53 : vector<1x1x96xf32> to vector<1x96xf32>
    %c0_29 = arith.constant 0 : index
    %c0_30 = arith.constant 0 : index
    %c0_31 = arith.constant 0 : index
    %55 = vector.load %arg9[%c0_29, %c0_30, %c0_31] : memref<2x32x32xbf16, #tpu.memory_space<vmem>>, vector<1x32x32xbf16>
    %56 = vector.shape_cast %55 : vector<1x32x32xbf16> to vector<32x32xbf16>
    %c0_32 = arith.constant 0 : index
    %c0_33 = arith.constant 0 : index
    %c0_34 = arith.constant 0 : index
    %57 = vector.load %arg10[%c0_32, %c0_33, %c0_34] : memref<2x1x32xf32, #tpu.memory_space<vmem>>, vector<1x1x32xf32>
    %58 = vector.shape_cast %57 : vector<1x1x32xf32> to vector<1x32xf32>
    %59 = arith.truncf %50 : vector<16x32xf32> to vector<16x32xbf16>
    %cst_35 = arith.constant dense<0.000000e+00> : vector<16x96xf32>
    %60 = tpu.matmul %59, %52, %cst_35 {dimension_numbers = #tpu.dot_dimension_numbers<[1], [0], [0], [1], [0, 0, 1, 1], [], []>} : vector<16x32xbf16>, vector<32x96xbf16>, vector<16x96xf32> -> vector<16x96xf32>
    %61 = vector.broadcast %54 : vector<1x96xf32> to vector<16x96xf32>
    %62 = arith.addf %60, %61 : vector<16x96xf32>
    %63 = vector.shape_cast %62 : vector<16x96xf32> to vector<2x8x96xf32>
    %64 = vector.extract_strided_slice %63 {offsets = [0, 0, 0], sizes = [2, 8, 8], strides = [1, 1, 1]} : vector<2x8x96xf32> to vector<2x8x8xf32>
    %65 = vector.extract_strided_slice %63 {offsets = [0, 0, 8], sizes = [2, 8, 8], strides = [1, 1, 1]} : vector<2x8x96xf32> to vector<2x8x8xf32>
    %66 = vector.extract_strided_slice %63 {offsets = [0, 0, 16], sizes = [2, 8, 8], strides = [1, 1, 1]} : vector<2x8x96xf32> to vector<2x8x8xf32>
    %67 = vector.extract_strided_slice %63 {offsets = [0, 0, 24], sizes = [2, 8, 8], strides = [1, 1, 1]} : vector<2x8x96xf32> to vector<2x8x8xf32>
    %68 = tpu.concatenate %64, %65, %66, %67 in 0 : vector<2x8x8xf32>, vector<2x8x8xf32>, vector<2x8x8xf32>, vector<2x8x8xf32> -> vector<8x8x8xf32>
    %69 = vector.extract_strided_slice %63 {offsets = [0, 0, 32], sizes = [2, 8, 8], strides = [1, 1, 1]} : vector<2x8x96xf32> to vector<2x8x8xf32>
    %70 = vector.extract_strided_slice %63 {offsets = [0, 0, 40], sizes = [2, 8, 8], strides = [1, 1, 1]} : vector<2x8x96xf32> to vector<2x8x8xf32>
    %71 = vector.extract_strided_slice %63 {offsets = [0, 0, 48], sizes = [2, 8, 8], strides = [1, 1, 1]} : vector<2x8x96xf32> to vector<2x8x8xf32>
    %72 = vector.extract_strided_slice %63 {offsets = [0, 0, 56], sizes = [2, 8, 8], strides = [1, 1, 1]} : vector<2x8x96xf32> to vector<2x8x8xf32>
    %73 = tpu.concatenate %69, %70, %71, %72 in 0 : vector<2x8x8xf32>, vector<2x8x8xf32>, vector<2x8x8xf32>, vector<2x8x8xf32> -> vector<8x8x8xf32>
    %74 = vector.extract_strided_slice %63 {offsets = [0, 0, 64], sizes = [2, 8, 8], strides = [1, 1, 1]} : vector<2x8x96xf32> to vector<2x8x8xf32>
    %75 = vector.extract_strided_slice %63 {offsets = [0, 0, 72], sizes = [2, 8, 8], strides = [1, 1, 1]} : vector<2x8x96xf32> to vector<2x8x8xf32>
    %76 = vector.extract_strided_slice %63 {offsets = [0, 0, 80], sizes = [2, 8, 8], strides = [1, 1, 1]} : vector<2x8x96xf32> to vector<2x8x8xf32>
    %77 = vector.extract_strided_slice %63 {offsets = [0, 0, 88], sizes = [2, 8, 8], strides = [1, 1, 1]} : vector<2x8x96xf32> to vector<2x8x8xf32>
    %78 = tpu.concatenate %74, %75, %76, %77 in 0 : vector<2x8x8xf32>, vector<2x8x8xf32>, vector<2x8x8xf32>, vector<2x8x8xf32> -> vector<8x8x8xf32>
    %79 = arith.truncf %68 : vector<8x8x8xf32> to vector<8x8x8xbf16>
    %80 = arith.truncf %73 : vector<8x8x8xf32> to vector<8x8x8xbf16>
    "tpu.trace_start"() <{level = 10 : i32, message = "bqd,bkd->bqk"}> : () -> ()
    %cst_36 = arith.constant dense<0.000000e+00> : vector<8x8x8xf32>
    %81 = tpu.matmul %79, %80, %cst_36 {dimension_numbers = #tpu.dot_dimension_numbers<[2], [2], [1], [1], [0, 0, 0, 1, 1, 1], [0], [0]>} : vector<8x8x8xbf16>, vector<8x8x8xbf16>, vector<8x8x8xf32> -> vector<8x8x8xf32>
    "tpu.trace_stop"() : () -> ()
    %cst_37 = arith.constant 0.353553385 : f32
    %82 = vector.broadcast %cst_37 : f32 to vector<8x8x8xf32>
    %83 = arith.mulf %81, %82 : vector<8x8x8xf32>
    %84 = vector.broadcast %24 : vector<1x1x8xf32> to vector<8x8x8xf32>
    %85 = arith.addf %83, %84 : vector<8x8x8xf32>
    %cst_38 = arith.constant dense<0xFF800000> : vector<8x8xf32>
    %86 = vector.multi_reduction <maximumf>, %85, %cst_38 [2] : vector<8x8x8xf32> to vector<8x8xf32>
    %87 = vector.shape_cast %86 : vector<8x8xf32> to vector<8x8x1xf32>
    %88 = vector.broadcast %87 : vector<8x8x1xf32> to vector<8x8x8xf32>
    %89 = arith.subf %85, %88 : vector<8x8x8xf32>
    %90 = math.exp %89 : vector<8x8x8xf32>
    %cst_39 = arith.constant dense<0.000000e+00> : vector<8x8xf32>
    %91 = vector.multi_reduction <add>, %90, %cst_39 [2] : vector<8x8x8xf32> to vector<8x8xf32>
    %92 = vector.shape_cast %91 : vector<8x8xf32> to vector<8x8x1xf32>
    %93 = tpu.reciprocal %92 {approx = true} : vector<8x8x1xf32> -> vector<8x8x1xf32>
    %94 = vector.broadcast %93 : vector<8x8x1xf32> to vector<8x8x8xf32>
    %95 = arith.mulf %90, %94 : vector<8x8x8xf32>
    %96 = arith.truncf %95 : vector<8x8x8xf32> to vector<8x8x8xbf16>
    %97 = arith.truncf %78 : vector<8x8x8xf32> to vector<8x8x8xbf16>
    "tpu.trace_start"() <{level = 10 : i32, message = "bqk,bkd->bqd"}> : () -> ()
    %cst_40 = arith.constant dense<0.000000e+00> : vector<8x8x8xf32>
    %98 = tpu.matmul %96, %97, %cst_40 {dimension_numbers = #tpu.dot_dimension_numbers<[2], [1], [1], [2], [0, 0, 0, 1, 1, 2], [0], [0]>} : vector<8x8x8xbf16>, vector<8x8x8xbf16>, vector<8x8x8xf32> -> vector<8x8x8xf32>
    "tpu.trace_stop"() : () -> ()
    %99 = vector.extract_strided_slice %98 {offsets = [0, 0, 0], sizes = [2, 8, 8], strides = [1, 1, 1]} : vector<8x8x8xf32> to vector<2x8x8xf32>
    %100 = vector.shape_cast %99 : vector<2x8x8xf32> to vector<16x8xf32>
    %101 = arith.truncf %100 : vector<16x8xf32> to vector<16x8xbf16>
    %102 = vector.extract_strided_slice %56 {offsets = [0, 0], sizes = [8, 32], strides = [1, 1]} : vector<32x32xbf16> to vector<8x32xbf16>
    %cst_41 = arith.constant dense<0.000000e+00> : vector<16x32xf32>
    %103 = tpu.matmul %101, %102, %cst_41 {dimension_numbers = #tpu.dot_dimension_numbers<[1], [0], [0], [1], [0, 0, 1, 1], [], []>} : vector<16x8xbf16>, vector<8x32xbf16>, vector<16x32xf32> -> vector<16x32xf32>
    %104 = vector.broadcast %58 : vector<1x32xf32> to vector<16x32xf32>
    %105 = arith.addf %104, %103 : vector<16x32xf32>
    %106 = vector.extract_strided_slice %98 {offsets = [2, 0, 0], sizes = [2, 8, 8], strides = [1, 1, 1]} : vector<8x8x8xf32> to vector<2x8x8xf32>
    %107 = vector.shape_cast %106 : vector<2x8x8xf32> to vector<16x8xf32>
    %108 = arith.truncf %107 : vector<16x8xf32> to vector<16x8xbf16>
    %109 = vector.extract_strided_slice %56 {offsets = [8, 0], sizes = [8, 32], strides = [1, 1]} : vector<32x32xbf16> to vector<8x32xbf16>
    %cst_42 = arith.constant dense<0.000000e+00> : vector<16x32xf32>
    %110 = tpu.matmul %108, %109, %cst_42 {dimension_numbers = #tpu.dot_dimension_numbers<[1], [0], [0], [1], [0, 0, 1, 1], [], []>} : vector<16x8xbf16>, vector<8x32xbf16>, vector<16x32xf32> -> vector<16x32xf32>
    %111 = arith.addf %105, %110 : vector<16x32xf32>
    %112 = vector.extract_strided_slice %98 {offsets = [4, 0, 0], sizes = [2, 8, 8], strides = [1, 1, 1]} : vector<8x8x8xf32> to vector<2x8x8xf32>
    %113 = vector.shape_cast %112 : vector<2x8x8xf32> to vector<16x8xf32>
    %114 = arith.truncf %113 : vector<16x8xf32> to vector<16x8xbf16>
    %115 = vector.extract_strided_slice %56 {offsets = [16, 0], sizes = [8, 32], strides = [1, 1]} : vector<32x32xbf16> to vector<8x32xbf16>
    %cst_43 = arith.constant dense<0.000000e+00> : vector<16x32xf32>
    %116 = tpu.matmul %114, %115, %cst_43 {dimension_numbers = #tpu.dot_dimension_numbers<[1], [0], [0], [1], [0, 0, 1, 1], [], []>} : vector<16x8xbf16>, vector<8x32xbf16>, vector<16x32xf32> -> vector<16x32xf32>
    %117 = arith.addf %111, %116 : vector<16x32xf32>
    %118 = vector.extract_strided_slice %98 {offsets = [6, 0, 0], sizes = [2, 8, 8], strides = [1, 1, 1]} : vector<8x8x8xf32> to vector<2x8x8xf32>
    %119 = vector.shape_cast %118 : vector<2x8x8xf32> to vector<16x8xf32>
    %120 = arith.truncf %119 : vector<16x8xf32> to vector<16x8xbf16>
    %121 = vector.extract_strided_slice %56 {offsets = [24, 0], sizes = [8, 32], strides = [1, 1]} : vector<32x32xbf16> to vector<8x32xbf16>
    %cst_44 = arith.constant dense<0.000000e+00> : vector<16x32xf32>
    %122 = tpu.matmul %120, %121, %cst_44 {dimension_numbers = #tpu.dot_dimension_numbers<[1], [0], [0], [1], [0, 0, 1, 1], [], []>} : vector<16x8xbf16>, vector<8x32xbf16>, vector<16x32xf32> -> vector<16x32xf32>
    %123 = arith.addf %117, %122 : vector<16x32xf32>
    %124 = arith.addf %18, %123 : vector<16x32xf32>
    %c0_45 = arith.constant 0 : index
    %c0_46 = arith.constant 0 : index
    %c0_47 = arith.constant 0 : index
    %125 = vector.load %arg11[%c0_45, %c0_46, %c0_47] : memref<2x1x32xf32, #tpu.memory_space<vmem>>, vector<1x1x32xf32>
    %126 = vector.shape_cast %125 : vector<1x1x32xf32> to vector<1x32xf32>
    %c0_48 = arith.constant 0 : index
    %c0_49 = arith.constant 0 : index
    %c0_50 = arith.constant 0 : index
    %127 = vector.load %arg12[%c0_48, %c0_49, %c0_50] : memref<2x1x32xf32, #tpu.memory_space<vmem>>, vector<1x1x32xf32>
    %128 = vector.shape_cast %127 : vector<1x1x32xf32> to vector<1x32xf32>
    %cst_51 = arith.constant dense<0.000000e+00> : vector<16xf32>
    %129 = vector.multi_reduction <add>, %124, %cst_51 [1] : vector<16x32xf32> to vector<16xf32>
    %130 = vector.shape_cast %129 : vector<16xf32> to vector<16x1xf32>
    %cst_52 = arith.constant 3.200000e+01 : f32
    %131 = vector.broadcast %cst_52 : f32 to vector<16x1xf32>
    %132 = arith.divf %130, %131 : vector<16x1xf32>
    %133 = vector.broadcast %132 : vector<16x1xf32> to vector<16x32xf32>
    %134 = arith.subf %124, %133 : vector<16x32xf32>
    %135 = arith.mulf %134, %134 : vector<16x32xf32>
    %cst_53 = arith.constant dense<0.000000e+00> : vector<16xf32>
    %136 = vector.multi_reduction <add>, %135, %cst_53 [1] : vector<16x32xf32> to vector<16xf32>
    %137 = vector.shape_cast %136 : vector<16xf32> to vector<16x1xf32>
    %cst_54 = arith.constant 3.200000e+01 : f32
    %138 = vector.broadcast %cst_54 : f32 to vector<16x1xf32>
    %139 = arith.divf %137, %138 : vector<16x1xf32>
    %140 = vector.broadcast %132 : vector<16x1xf32> to vector<16x32xf32>
    %141 = arith.subf %124, %140 : vector<16x32xf32>
    %cst_55 = arith.constant 9.99999996E-13 : f32
    %142 = vector.broadcast %cst_55 : f32 to vector<16x1xf32>
    %143 = arith.addf %139, %142 : vector<16x1xf32>
    %144 = math.rsqrt %143 : vector<16x1xf32>
    %145 = vector.broadcast %144 : vector<16x1xf32> to vector<16x32xf32>
    %146 = arith.mulf %141, %145 : vector<16x32xf32>
    %147 = vector.broadcast %126 : vector<1x32xf32> to vector<16x32xf32>
    %148 = arith.mulf %146, %147 : vector<16x32xf32>
    %149 = vector.broadcast %128 : vector<1x32xf32> to vector<16x32xf32>
    %150 = arith.addf %148, %149 : vector<16x32xf32>
    %c0_56 = arith.constant 0 : index
    %c0_57 = arith.constant 0 : index
    %c0_58 = arith.constant 0 : index
    %151 = vector.load %arg13[%c0_56, %c0_57, %c0_58] : memref<2x32x128xbf16, #tpu.memory_space<vmem>>, vector<1x32x128xbf16>
    %152 = vector.shape_cast %151 : vector<1x32x128xbf16> to vector<32x128xbf16>
    %c0_59 = arith.constant 0 : index
    %c0_60 = arith.constant 0 : index
    %c0_61 = arith.constant 0 : index
    %153 = vector.load %arg14[%c0_59, %c0_60, %c0_61] : memref<2x1x128xf32, #tpu.memory_space<vmem>>, vector<1x1x128xf32>
    %154 = vector.shape_cast %153 : vector<1x1x128xf32> to vector<1x128xf32>
    %c0_62 = arith.constant 0 : index
    %c0_63 = arith.constant 0 : index
    %c0_64 = arith.constant 0 : index
    %155 = vector.load %arg15[%c0_62, %c0_63, %c0_64] : memref<2x128x32xbf16, #tpu.memory_space<vmem>>, vector<1x128x32xbf16>
    %156 = vector.shape_cast %155 : vector<1x128x32xbf16> to vector<128x32xbf16>
    %c0_65 = arith.constant 0 : index
    %c0_66 = arith.constant 0 : index
    %c0_67 = arith.constant 0 : index
    %157 = vector.load %arg16[%c0_65, %c0_66, %c0_67] : memref<2x1x32xf32, #tpu.memory_space<vmem>>, vector<1x1x32xf32>
    %158 = vector.shape_cast %157 : vector<1x1x32xf32> to vector<1x32xf32>
    %159 = arith.truncf %150 : vector<16x32xf32> to vector<16x32xbf16>
    %cst_68 = arith.constant dense<0.000000e+00> : vector<16x128xf32>
    %160 = tpu.matmul %159, %152, %cst_68 {dimension_numbers = #tpu.dot_dimension_numbers<[1], [0], [0], [1], [0, 0, 1, 1], [], []>} : vector<16x32xbf16>, vector<32x128xbf16>, vector<16x128xf32> -> vector<16x128xf32>
    %161 = vector.broadcast %154 : vector<1x128xf32> to vector<16x128xf32>
    %162 = arith.addf %160, %161 : vector<16x128xf32>
    %cst_69 = arith.constant 5.000000e-01 : f32
    %163 = vector.broadcast %cst_69 : f32 to vector<16x128xf32>
    %164 = arith.mulf %163, %162 : vector<16x128xf32>
    %cst_70 = arith.constant 4.471500e-02 : f32
    %165 = vector.broadcast %cst_70 : f32 to vector<16x128xf32>
    %166 = arith.mulf %165, %162 : vector<16x128xf32>
    %167 = arith.mulf %166, %162 : vector<16x128xf32>
    %168 = arith.mulf %167, %162 : vector<16x128xf32>
    %169 = arith.addf %162, %168 : vector<16x128xf32>
    %cst_71 = arith.constant 0.797884583 : f32
    %170 = vector.broadcast %cst_71 : f32 to vector<16x128xf32>
    %171 = arith.mulf %170, %169 : vector<16x128xf32>
    %172 = math.tanh %171 : vector<16x128xf32>
    %cst_72 = arith.constant 1.000000e+00 : f32
    %173 = vector.broadcast %cst_72 : f32 to vector<16x128xf32>
    %174 = arith.addf %173, %172 : vector<16x128xf32>
    %175 = arith.mulf %164, %174 : vector<16x128xf32>
    %176 = arith.truncf %175 : vector<16x128xf32> to vector<16x128xbf16>
    %cst_73 = arith.constant dense<0.000000e+00> : vector<16x32xf32>
    %177 = tpu.matmul %176, %156, %cst_73 {dimension_numbers = #tpu.dot_dimension_numbers<[1], [0], [0], [1], [0, 0, 1, 1], [], []>} : vector<16x128xbf16>, vector<128x32xbf16>, vector<16x32xf32> -> vector<16x32xf32>
    %178 = vector.broadcast %158 : vector<1x32xf32> to vector<16x32xf32>
    %179 = arith.addf %177, %178 : vector<16x32xf32>
    %180 = arith.addf %124, %179 : vector<16x32xf32>
    %c1 = arith.constant 1 : index
    %c0_74 = arith.constant 0 : index
    %c0_75 = arith.constant 0 : index
    %181 = vector.load %arg5[%c1, %c0_74, %c0_75] : memref<2x1x32xf32, #tpu.memory_space<vmem>>, vector<1x1x32xf32>
    %182 = vector.shape_cast %181 : vector<1x1x32xf32> to vector<1x32xf32>
    %c1_76 = arith.constant 1 : index
    %c0_77 = arith.constant 0 : index
    %c0_78 = arith.constant 0 : index
    %183 = vector.load %arg6[%c1_76, %c0_77, %c0_78] : memref<2x1x32xf32, #tpu.memory_space<vmem>>, vector<1x1x32xf32>
    %184 = vector.shape_cast %183 : vector<1x1x32xf32> to vector<1x32xf32>
    %cst_79 = arith.constant dense<0.000000e+00> : vector<16xf32>
    %185 = vector.multi_reduction <add>, %180, %cst_79 [1] : vector<16x32xf32> to vector<16xf32>
    %186 = vector.shape_cast %185 : vector<16xf32> to vector<16x1xf32>
    %cst_80 = arith.constant 3.200000e+01 : f32
    %187 = vector.broadcast %cst_80 : f32 to vector<16x1xf32>
    %188 = arith.divf %186, %187 : vector<16x1xf32>
    %189 = vector.broadcast %188 : vector<16x1xf32> to vector<16x32xf32>
    %190 = arith.subf %180, %189 : vector<16x32xf32>
    %191 = arith.mulf %190, %190 : vector<16x32xf32>
    %cst_81 = arith.constant dense<0.000000e+00> : vector<16xf32>
    %192 = vector.multi_reduction <add>, %191, %cst_81 [1] : vector<16x32xf32> to vector<16xf32>
    %193 = vector.shape_cast %192 : vector<16xf32> to vector<16x1xf32>
    %cst_82 = arith.constant 3.200000e+01 : f32
    %194 = vector.broadcast %cst_82 : f32 to vector<16x1xf32>
    %195 = arith.divf %193, %194 : vector<16x1xf32>
    %196 = vector.broadcast %188 : vector<16x1xf32> to vector<16x32xf32>
    %197 = arith.subf %180, %196 : vector<16x32xf32>
    %cst_83 = arith.constant 9.99999996E-13 : f32
    %198 = vector.broadcast %cst_83 : f32 to vector<16x1xf32>
    %199 = arith.addf %195, %198 : vector<16x1xf32>
    %200 = math.rsqrt %199 : vector<16x1xf32>
    %201 = vector.broadcast %200 : vector<16x1xf32> to vector<16x32xf32>
    %202 = arith.mulf %197, %201 : vector<16x32xf32>
    %203 = vector.broadcast %182 : vector<1x32xf32> to vector<16x32xf32>
    %204 = arith.mulf %202, %203 : vector<16x32xf32>
    %205 = vector.broadcast %184 : vector<1x32xf32> to vector<16x32xf32>
    %206 = arith.addf %204, %205 : vector<16x32xf32>
    %c1_84 = arith.constant 1 : index
    %c0_85 = arith.constant 0 : index
    %c0_86 = arith.constant 0 : index
    %207 = vector.load %arg7[%c1_84, %c0_85, %c0_86] : memref<2x32x96xbf16, #tpu.memory_space<vmem>>, vector<1x32x96xbf16>
    %208 = vector.shape_cast %207 : vector<1x32x96xbf16> to vector<32x96xbf16>
    %c1_87 = arith.constant 1 : index
    %c0_88 = arith.constant 0 : index
    %c0_89 = arith.constant 0 : index
    %209 = vector.load %arg8[%c1_87, %c0_88, %c0_89] : memref<2x1x96xf32, #tpu.memory_space<vmem>>, vector<1x1x96xf32>
    %210 = vector.shape_cast %209 : vector<1x1x96xf32> to vector<1x96xf32>
    %c1_90 = arith.constant 1 : index
    %c0_91 = arith.constant 0 : index
    %c0_92 = arith.constant 0 : index
    %211 = vector.load %arg9[%c1_90, %c0_91, %c0_92] : memref<2x32x32xbf16, #tpu.memory_space<vmem>>, vector<1x32x32xbf16>
    %212 = vector.shape_cast %211 : vector<1x32x32xbf16> to vector<32x32xbf16>
    %c1_93 = arith.constant 1 : index
    %c0_94 = arith.constant 0 : index
    %c0_95 = arith.constant 0 : index
    %213 = vector.load %arg10[%c1_93, %c0_94, %c0_95] : memref<2x1x32xf32, #tpu.memory_space<vmem>>, vector<1x1x32xf32>
    %214 = vector.shape_cast %213 : vector<1x1x32xf32> to vector<1x32xf32>
    %215 = arith.truncf %206 : vector<16x32xf32> to vector<16x32xbf16>
    %cst_96 = arith.constant dense<0.000000e+00> : vector<16x96xf32>
    %216 = tpu.matmul %215, %208, %cst_96 {dimension_numbers = #tpu.dot_dimension_numbers<[1], [0], [0], [1], [0, 0, 1, 1], [], []>} : vector<16x32xbf16>, vector<32x96xbf16>, vector<16x96xf32> -> vector<16x96xf32>
    %217 = vector.broadcast %210 : vector<1x96xf32> to vector<16x96xf32>
    %218 = arith.addf %216, %217 : vector<16x96xf32>
    %219 = vector.shape_cast %218 : vector<16x96xf32> to vector<2x8x96xf32>
    %220 = vector.extract_strided_slice %219 {offsets = [0, 0, 0], sizes = [2, 8, 8], strides = [1, 1, 1]} : vector<2x8x96xf32> to vector<2x8x8xf32>
    %221 = vector.extract_strided_slice %219 {offsets = [0, 0, 8], sizes = [2, 8, 8], strides = [1, 1, 1]} : vector<2x8x96xf32> to vector<2x8x8xf32>
    %222 = vector.extract_strided_slice %219 {offsets = [0, 0, 16], sizes = [2, 8, 8], strides = [1, 1, 1]} : vector<2x8x96xf32> to vector<2x8x8xf32>
    %223 = vector.extract_strided_slice %219 {offsets = [0, 0, 24], sizes = [2, 8, 8], strides = [1, 1, 1]} : vector<2x8x96xf32> to vector<2x8x8xf32>
    %224 = tpu.concatenate %220, %221, %222, %223 in 0 : vector<2x8x8xf32>, vector<2x8x8xf32>, vector<2x8x8xf32>, vector<2x8x8xf32> -> vector<8x8x8xf32>
    %225 = vector.extract_strided_slice %219 {offsets = [0, 0, 32], sizes = [2, 8, 8], strides = [1, 1, 1]} : vector<2x8x96xf32> to vector<2x8x8xf32>
    %226 = vector.extract_strided_slice %219 {offsets = [0, 0, 40], sizes = [2, 8, 8], strides = [1, 1, 1]} : vector<2x8x96xf32> to vector<2x8x8xf32>
    %227 = vector.extract_strided_slice %219 {offsets = [0, 0, 48], sizes = [2, 8, 8], strides = [1, 1, 1]} : vector<2x8x96xf32> to vector<2x8x8xf32>
    %228 = vector.extract_strided_slice %219 {offsets = [0, 0, 56], sizes = [2, 8, 8], strides = [1, 1, 1]} : vector<2x8x96xf32> to vector<2x8x8xf32>
    %229 = tpu.concatenate %225, %226, %227, %228 in 0 : vector<2x8x8xf32>, vector<2x8x8xf32>, vector<2x8x8xf32>, vector<2x8x8xf32> -> vector<8x8x8xf32>
    %230 = vector.extract_strided_slice %219 {offsets = [0, 0, 64], sizes = [2, 8, 8], strides = [1, 1, 1]} : vector<2x8x96xf32> to vector<2x8x8xf32>
    %231 = vector.extract_strided_slice %219 {offsets = [0, 0, 72], sizes = [2, 8, 8], strides = [1, 1, 1]} : vector<2x8x96xf32> to vector<2x8x8xf32>
    %232 = vector.extract_strided_slice %219 {offsets = [0, 0, 80], sizes = [2, 8, 8], strides = [1, 1, 1]} : vector<2x8x96xf32> to vector<2x8x8xf32>
    %233 = vector.extract_strided_slice %219 {offsets = [0, 0, 88], sizes = [2, 8, 8], strides = [1, 1, 1]} : vector<2x8x96xf32> to vector<2x8x8xf32>
    %234 = tpu.concatenate %230, %231, %232, %233 in 0 : vector<2x8x8xf32>, vector<2x8x8xf32>, vector<2x8x8xf32>, vector<2x8x8xf32> -> vector<8x8x8xf32>
    %235 = arith.truncf %224 : vector<8x8x8xf32> to vector<8x8x8xbf16>
    %236 = arith.truncf %229 : vector<8x8x8xf32> to vector<8x8x8xbf16>
    "tpu.trace_start"() <{level = 10 : i32, message = "bqd,bkd->bqk"}> : () -> ()
    %cst_97 = arith.constant dense<0.000000e+00> : vector<8x8x8xf32>
    %237 = tpu.matmul %235, %236, %cst_97 {dimension_numbers = #tpu.dot_dimension_numbers<[2], [2], [1], [1], [0, 0, 0, 1, 1, 1], [0], [0]>} : vector<8x8x8xbf16>, vector<8x8x8xbf16>, vector<8x8x8xf32> -> vector<8x8x8xf32>
    "tpu.trace_stop"() : () -> ()
    %cst_98 = arith.constant 0.353553385 : f32
    %238 = vector.broadcast %cst_98 : f32 to vector<8x8x8xf32>
    %239 = arith.mulf %237, %238 : vector<8x8x8xf32>
    %240 = vector.broadcast %24 : vector<1x1x8xf32> to vector<8x8x8xf32>
    %241 = arith.addf %239, %240 : vector<8x8x8xf32>
    %cst_99 = arith.constant dense<0xFF800000> : vector<8x8xf32>
    %242 = vector.multi_reduction <maximumf>, %241, %cst_99 [2] : vector<8x8x8xf32> to vector<8x8xf32>
    %243 = vector.shape_cast %242 : vector<8x8xf32> to vector<8x8x1xf32>
    %244 = vector.broadcast %243 : vector<8x8x1xf32> to vector<8x8x8xf32>
    %245 = arith.subf %241, %244 : vector<8x8x8xf32>
    %246 = math.exp %245 : vector<8x8x8xf32>
    %cst_100 = arith.constant dense<0.000000e+00> : vector<8x8xf32>
    %247 = vector.multi_reduction <add>, %246, %cst_100 [2] : vector<8x8x8xf32> to vector<8x8xf32>
    %248 = vector.shape_cast %247 : vector<8x8xf32> to vector<8x8x1xf32>
    %249 = tpu.reciprocal %248 {approx = true} : vector<8x8x1xf32> -> vector<8x8x1xf32>
    %250 = vector.broadcast %249 : vector<8x8x1xf32> to vector<8x8x8xf32>
    %251 = arith.mulf %246, %250 : vector<8x8x8xf32>
    %252 = arith.truncf %251 : vector<8x8x8xf32> to vector<8x8x8xbf16>
    %253 = arith.truncf %234 : vector<8x8x8xf32> to vector<8x8x8xbf16>
    "tpu.trace_start"() <{level = 10 : i32, message = "bqk,bkd->bqd"}> : () -> ()
    %cst_101 = arith.constant dense<0.000000e+00> : vector<8x8x8xf32>
    %254 = tpu.matmul %252, %253, %cst_101 {dimension_numbers = #tpu.dot_dimension_numbers<[2], [1], [1], [2], [0, 0, 0, 1, 1, 2], [0], [0]>} : vector<8x8x8xbf16>, vector<8x8x8xbf16>, vector<8x8x8xf32> -> vector<8x8x8xf32>
    "tpu.trace_stop"() : () -> ()
    %255 = vector.extract_strided_slice %254 {offsets = [0, 0, 0], sizes = [2, 8, 8], strides = [1, 1, 1]} : vector<8x8x8xf32> to vector<2x8x8xf32>
    %256 = vector.shape_cast %255 : vector<2x8x8xf32> to vector<16x8xf32>
    %257 = arith.truncf %256 : vector<16x8xf32> to vector<16x8xbf16>
    %258 = vector.extract_strided_slice %212 {offsets = [0, 0], sizes = [8, 32], strides = [1, 1]} : vector<32x32xbf16> to vector<8x32xbf16>
    %cst_102 = arith.constant dense<0.000000e+00> : vector<16x32xf32>
    %259 = tpu.matmul %257, %258, %cst_102 {dimension_numbers = #tpu.dot_dimension_numbers<[1], [0], [0], [1], [0, 0, 1, 1], [], []>} : vector<16x8xbf16>, vector<8x32xbf16>, vector<16x32xf32> -> vector<16x32xf32>
    %260 = vector.broadcast %214 : vector<1x32xf32> to vector<16x32xf32>
    %261 = arith.addf %260, %259 : vector<16x32xf32>
    %262 = vector.extract_strided_slice %254 {offsets = [2, 0, 0], sizes = [2, 8, 8], strides = [1, 1, 1]} : vector<8x8x8xf32> to vector<2x8x8xf32>
    %263 = vector.shape_cast %262 : vector<2x8x8xf32> to vector<16x8xf32>
    %264 = arith.truncf %263 : vector<16x8xf32> to vector<16x8xbf16>
    %265 = vector.extract_strided_slice %212 {offsets = [8, 0], sizes = [8, 32], strides = [1, 1]} : vector<32x32xbf16> to vector<8x32xbf16>
    %cst_103 = arith.constant dense<0.000000e+00> : vector<16x32xf32>
    %266 = tpu.matmul %264, %265, %cst_103 {dimension_numbers = #tpu.dot_dimension_numbers<[1], [0], [0], [1], [0, 0, 1, 1], [], []>} : vector<16x8xbf16>, vector<8x32xbf16>, vector<16x32xf32> -> vector<16x32xf32>
    %267 = arith.addf %261, %266 : vector<16x32xf32>
    %268 = vector.extract_strided_slice %254 {offsets = [4, 0, 0], sizes = [2, 8, 8], strides = [1, 1, 1]} : vector<8x8x8xf32> to vector<2x8x8xf32>
    %269 = vector.shape_cast %268 : vector<2x8x8xf32> to vector<16x8xf32>
    %270 = arith.truncf %269 : vector<16x8xf32> to vector<16x8xbf16>
    %271 = vector.extract_strided_slice %212 {offsets = [16, 0], sizes = [8, 32], strides = [1, 1]} : vector<32x32xbf16> to vector<8x32xbf16>
    %cst_104 = arith.constant dense<0.000000e+00> : vector<16x32xf32>
    %272 = tpu.matmul %270, %271, %cst_104 {dimension_numbers = #tpu.dot_dimension_numbers<[1], [0], [0], [1], [0, 0, 1, 1], [], []>} : vector<16x8xbf16>, vector<8x32xbf16>, vector<16x32xf32> -> vector<16x32xf32>
    %273 = arith.addf %267, %272 : vector<16x32xf32>
    %274 = vector.extract_strided_slice %254 {offsets = [6, 0, 0], sizes = [2, 8, 8], strides = [1, 1, 1]} : vector<8x8x8xf32> to vector<2x8x8xf32>
    %275 = vector.shape_cast %274 : vector<2x8x8xf32> to vector<16x8xf32>
    %276 = arith.truncf %275 : vector<16x8xf32> to vector<16x8xbf16>
    %277 = vector.extract_strided_slice %212 {offsets = [24, 0], sizes = [8, 32], strides = [1, 1]} : vector<32x32xbf16> to vector<8x32xbf16>
    %cst_105 = arith.constant dense<0.000000e+00> : vector<16x32xf32>
    %278 = tpu.matmul %276, %277, %cst_105 {dimension_numbers = #tpu.dot_dimension_numbers<[1], [0], [0], [1], [0, 0, 1, 1], [], []>} : vector<16x8xbf16>, vector<8x32xbf16>, vector<16x32xf32> -> vector<16x32xf32>
    %279 = arith.addf %273, %278 : vector<16x32xf32>
    %280 = arith.addf %180, %279 : vector<16x32xf32>
    %c1_106 = arith.constant 1 : index
    %c0_107 = arith.constant 0 : index
    %c0_108 = arith.constant 0 : index
    %281 = vector.load %arg11[%c1_106, %c0_107, %c0_108] : memref<2x1x32xf32, #tpu.memory_space<vmem>>, vector<1x1x32xf32>
    %282 = vector.shape_cast %281 : vector<1x1x32xf32> to vector<1x32xf32>
    %c1_109 = arith.constant 1 : index
    %c0_110 = arith.constant 0 : index
    %c0_111 = arith.constant 0 : index
    %283 = vector.load %arg12[%c1_109, %c0_110, %c0_111] : memref<2x1x32xf32, #tpu.memory_space<vmem>>, vector<1x1x32xf32>
    %284 = vector.shape_cast %283 : vector<1x1x32xf32> to vector<1x32xf32>
    %cst_112 = arith.constant dense<0.000000e+00> : vector<16xf32>
    %285 = vector.multi_reduction <add>, %280, %cst_112 [1] : vector<16x32xf32> to vector<16xf32>
    %286 = vector.shape_cast %285 : vector<16xf32> to vector<16x1xf32>
    %cst_113 = arith.constant 3.200000e+01 : f32
    %287 = vector.broadcast %cst_113 : f32 to vector<16x1xf32>
    %288 = arith.divf %286, %287 : vector<16x1xf32>
    %289 = vector.broadcast %288 : vector<16x1xf32> to vector<16x32xf32>
    %290 = arith.subf %280, %289 : vector<16x32xf32>
    %291 = arith.mulf %290, %290 : vector<16x32xf32>
    %cst_114 = arith.constant dense<0.000000e+00> : vector<16xf32>
    %292 = vector.multi_reduction <add>, %291, %cst_114 [1] : vector<16x32xf32> to vector<16xf32>
    %293 = vector.shape_cast %292 : vector<16xf32> to vector<16x1xf32>
    %cst_115 = arith.constant 3.200000e+01 : f32
    %294 = vector.broadcast %cst_115 : f32 to vector<16x1xf32>
    %295 = arith.divf %293, %294 : vector<16x1xf32>
    %296 = vector.broadcast %288 : vector<16x1xf32> to vector<16x32xf32>
    %297 = arith.subf %280, %296 : vector<16x32xf32>
    %cst_116 = arith.constant 9.99999996E-13 : f32
    %298 = vector.broadcast %cst_116 : f32 to vector<16x1xf32>
    %299 = arith.addf %295, %298 : vector<16x1xf32>
    %300 = math.rsqrt %299 : vector<16x1xf32>
    %301 = vector.broadcast %300 : vector<16x1xf32> to vector<16x32xf32>
    %302 = arith.mulf %297, %301 : vector<16x32xf32>
    %303 = vector.broadcast %282 : vector<1x32xf32> to vector<16x32xf32>
    %304 = arith.mulf %302, %303 : vector<16x32xf32>
    %305 = vector.broadcast %284 : vector<1x32xf32> to vector<16x32xf32>
    %306 = arith.addf %304, %305 : vector<16x32xf32>
    %c1_117 = arith.constant 1 : index
    %c0_118 = arith.constant 0 : index
    %c0_119 = arith.constant 0 : index
    %307 = vector.load %arg13[%c1_117, %c0_118, %c0_119] : memref<2x32x128xbf16, #tpu.memory_space<vmem>>, vector<1x32x128xbf16>
    %308 = vector.shape_cast %307 : vector<1x32x128xbf16> to vector<32x128xbf16>
    %c1_120 = arith.constant 1 : index
    %c0_121 = arith.constant 0 : index
    %c0_122 = arith.constant 0 : index
    %309 = vector.load %arg14[%c1_120, %c0_121, %c0_122] : memref<2x1x128xf32, #tpu.memory_space<vmem>>, vector<1x1x128xf32>
    %310 = vector.shape_cast %309 : vector<1x1x128xf32> to vector<1x128xf32>
    %c1_123 = arith.constant 1 : index
    %c0_124 = arith.constant 0 : index
    %c0_125 = arith.constant 0 : index
    %311 = vector.load %arg15[%c1_123, %c0_124, %c0_125] : memref<2x128x32xbf16, #tpu.memory_space<vmem>>, vector<1x128x32xbf16>
    %312 = vector.shape_cast %311 : vector<1x128x32xbf16> to vector<128x32xbf16>
    %c1_126 = arith.constant 1 : index
    %c0_127 = arith.constant 0 : index
    %c0_128 = arith.constant 0 : index
    %313 = vector.load %arg16[%c1_126, %c0_127, %c0_128] : memref<2x1x32xf32, #tpu.memory_space<vmem>>, vector<1x1x32xf32>
    %314 = vector.shape_cast %313 : vector<1x1x32xf32> to vector<1x32xf32>
    %315 = arith.truncf %306 : vector<16x32xf32> to vector<16x32xbf16>
    %cst_129 = arith.constant dense<0.000000e+00> : vector<16x128xf32>
    %316 = tpu.matmul %315, %308, %cst_129 {dimension_numbers = #tpu.dot_dimension_numbers<[1], [0], [0], [1], [0, 0, 1, 1], [], []>} : vector<16x32xbf16>, vector<32x128xbf16>, vector<16x128xf32> -> vector<16x128xf32>
    %317 = vector.broadcast %310 : vector<1x128xf32> to vector<16x128xf32>
    %318 = arith.addf %316, %317 : vector<16x128xf32>
    %cst_130 = arith.constant 5.000000e-01 : f32
    %319 = vector.broadcast %cst_130 : f32 to vector<16x128xf32>
    %320 = arith.mulf %319, %318 : vector<16x128xf32>
    %cst_131 = arith.constant 4.471500e-02 : f32
    %321 = vector.broadcast %cst_131 : f32 to vector<16x128xf32>
    %322 = arith.mulf %321, %318 : vector<16x128xf32>
    %323 = arith.mulf %322, %318 : vector<16x128xf32>
    %324 = arith.mulf %323, %318 : vector<16x128xf32>
    %325 = arith.addf %318, %324 : vector<16x128xf32>
    %cst_132 = arith.constant 0.797884583 : f32
    %326 = vector.broadcast %cst_132 : f32 to vector<16x128xf32>
    %327 = arith.mulf %326, %325 : vector<16x128xf32>
    %328 = math.tanh %327 : vector<16x128xf32>
    %cst_133 = arith.constant 1.000000e+00 : f32
    %329 = vector.broadcast %cst_133 : f32 to vector<16x128xf32>
    %330 = arith.addf %329, %328 : vector<16x128xf32>
    %331 = arith.mulf %320, %330 : vector<16x128xf32>
    %332 = arith.truncf %331 : vector<16x128xf32> to vector<16x128xbf16>
    %cst_134 = arith.constant dense<0.000000e+00> : vector<16x32xf32>
    %333 = tpu.matmul %332, %312, %cst_134 {dimension_numbers = #tpu.dot_dimension_numbers<[1], [0], [0], [1], [0, 0, 1, 1], [], []>} : vector<16x128xbf16>, vector<128x32xbf16>, vector<16x32xf32> -> vector<16x32xf32>
    %334 = vector.broadcast %314 : vector<1x32xf32> to vector<16x32xf32>
    %335 = arith.addf %333, %334 : vector<16x32xf32>
    %336 = arith.addf %280, %335 : vector<16x32xf32>
    %337 = vector.shape_cast %336 : vector<16x32xf32> to vector<2x8x32xf32>
    %338 = vector.extract_strided_slice %337 {offsets = [0, 0, 0], sizes = [2, 1, 32], strides = [1, 1, 1]} : vector<2x8x32xf32> to vector<2x1x32xf32>
    %339 = vector.shape_cast %338 : vector<2x1x32xf32> to vector<2x32xf32>
    %c0_135 = arith.constant 0 : index
    %c0_136 = arith.constant 0 : index
    %340 = vector.load %arg17[%c0_135, %c0_136] : memref<1x32xf32, #tpu.memory_space<vmem>>, vector<1x32xf32>
    %c0_137 = arith.constant 0 : index
    %c0_138 = arith.constant 0 : index
    %341 = vector.load %arg18[%c0_137, %c0_138] : memref<1x32xf32, #tpu.memory_space<vmem>>, vector<1x32xf32>
    %cst_139 = arith.constant dense<0.000000e+00> : vector<2xf32>
    %342 = vector.multi_reduction <add>, %339, %cst_139 [1] : vector<2x32xf32> to vector<2xf32>
    %343 = vector.shape_cast %342 : vector<2xf32> to vector<2x1xf32>
    %cst_140 = arith.constant 3.200000e+01 : f32
    %344 = vector.broadcast %cst_140 : f32 to vector<2x1xf32>
    %345 = arith.divf %343, %344 : vector<2x1xf32>
    %346 = vector.broadcast %345 : vector<2x1xf32> to vector<2x32xf32>
    %347 = arith.subf %339, %346 : vector<2x32xf32>
    %348 = arith.mulf %347, %347 : vector<2x32xf32>
    %cst_141 = arith.constant dense<0.000000e+00> : vector<2xf32>
    %349 = vector.multi_reduction <add>, %348, %cst_141 [1] : vector<2x32xf32> to vector<2xf32>
    %350 = vector.shape_cast %349 : vector<2xf32> to vector<2x1xf32>
    %cst_142 = arith.constant 3.200000e+01 : f32
    %351 = vector.broadcast %cst_142 : f32 to vector<2x1xf32>
    %352 = arith.divf %350, %351 : vector<2x1xf32>
    %353 = vector.broadcast %345 : vector<2x1xf32> to vector<2x32xf32>
    %354 = arith.subf %339, %353 : vector<2x32xf32>
    %cst_143 = arith.constant 9.99999996E-13 : f32
    %355 = vector.broadcast %cst_143 : f32 to vector<2x1xf32>
    %356 = arith.addf %352, %355 : vector<2x1xf32>
    %357 = math.rsqrt %356 : vector<2x1xf32>
    %358 = vector.broadcast %357 : vector<2x1xf32> to vector<2x32xf32>
    %359 = arith.mulf %354, %358 : vector<2x32xf32>
    %360 = vector.broadcast %340 : vector<1x32xf32> to vector<2x32xf32>
    %361 = arith.mulf %359, %360 : vector<2x32xf32>
    %362 = vector.broadcast %341 : vector<1x32xf32> to vector<2x32xf32>
    %363 = arith.addf %361, %362 : vector<2x32xf32>
    %364 = arith.truncf %363 : vector<2x32xf32> to vector<2x32xbf16>
    %c0_144 = arith.constant 0 : index
    %c0_145 = arith.constant 0 : index
    %365 = vector.load %arg19[%c0_144, %c0_145] : memref<32x256xbf16, #tpu.memory_space<vmem>>, vector<32x256xbf16>
    %cst_146 = arith.constant dense<0.000000e+00> : vector<2x256xf32>
    %366 = tpu.matmul %364, %365, %cst_146 {dimension_numbers = #tpu.dot_dimension_numbers<[1], [0], [0], [1], [0, 0, 1, 1], [], []>} : vector<2x32xbf16>, vector<32x256xbf16>, vector<2x256xf32> -> vector<2x256xf32>
    %c0_147 = arith.constant 0 : index
    %c0_148 = arith.constant 0 : index
    %367 = vector.load %arg20[%c0_147, %c0_148] : memref<1x256xf32, #tpu.memory_space<vmem>>, vector<1x256xf32>
    %368 = vector.broadcast %367 : vector<1x256xf32> to vector<2x256xf32>
    %369 = arith.addf %366, %368 : vector<2x256xf32>
    %c0_149 = arith.constant 0 : index
    %c0_150 = arith.constant 0 : index
    %370 = vector.load %arg21[%c0_149, %c0_150] : memref<256x256xbf16, #tpu.memory_space<vmem>>, vector<256x256xbf16>
    %c0_151 = arith.constant 0 : index
    %c0_152 = arith.constant 0 : index
    %371 = vector.load %arg22[%c0_151, %c0_152] : memref<1x256xf32, #tpu.memory_space<vmem>>, vector<1x256xf32>
    %c0_153 = arith.constant 0 : index
    %c0_154 = arith.constant 0 : index
    %372 = vector.load %arg23[%c0_153, %c0_154] : memref<256x256xbf16, #tpu.memory_space<vmem>>, vector<256x256xbf16>
    %c0_155 = arith.constant 0 : index
    %c0_156 = arith.constant 0 : index
    %373 = vector.load %arg24[%c0_155, %c0_156] : memref<1x256xf32, #tpu.memory_space<vmem>>, vector<1x256xf32>
    %c0_157 = arith.constant 0 : index
    %c0_158 = arith.constant 0 : index
    %374 = vector.load %arg25[%c0_157, %c0_158] : memref<1x256xf32, #tpu.memory_space<vmem>>, vector<1x256xf32>
    %c0_159 = arith.constant 0 : index
    %c0_160 = arith.constant 0 : index
    %375 = vector.load %arg26[%c0_159, %c0_160] : memref<1x256xf32, #tpu.memory_space<vmem>>, vector<1x256xf32>
    %376 = arith.truncf %369 : vector<2x256xf32> to vector<2x256xbf16>
    %cst_161 = arith.constant dense<0.000000e+00> : vector<2x256xf32>
    %377 = tpu.matmul %376, %370, %cst_161 {dimension_numbers = #tpu.dot_dimension_numbers<[1], [0], [0], [1], [0, 0, 1, 1], [], []>} : vector<2x256xbf16>, vector<256x256xbf16>, vector<2x256xf32> -> vector<2x256xf32>
    %378 = vector.broadcast %371 : vector<1x256xf32> to vector<2x256xf32>
    %379 = arith.addf %377, %378 : vector<2x256xf32>
    %cst_162 = arith.constant 5.000000e-01 : f32
    %380 = vector.broadcast %cst_162 : f32 to vector<2x256xf32>
    %381 = arith.mulf %380, %379 : vector<2x256xf32>
    %cst_163 = arith.constant 4.471500e-02 : f32
    %382 = vector.broadcast %cst_163 : f32 to vector<2x256xf32>
    %383 = arith.mulf %382, %379 : vector<2x256xf32>
    %384 = arith.mulf %383, %379 : vector<2x256xf32>
    %385 = arith.mulf %384, %379 : vector<2x256xf32>
    %386 = arith.addf %379, %385 : vector<2x256xf32>
    %cst_164 = arith.constant 0.797884583 : f32
    %387 = vector.broadcast %cst_164 : f32 to vector<2x256xf32>
    %388 = arith.mulf %387, %386 : vector<2x256xf32>
    %389 = math.tanh %388 : vector<2x256xf32>
    %cst_165 = arith.constant 1.000000e+00 : f32
    %390 = vector.broadcast %cst_165 : f32 to vector<2x256xf32>
    %391 = arith.addf %390, %389 : vector<2x256xf32>
    %392 = arith.mulf %381, %391 : vector<2x256xf32>
    %393 = arith.truncf %392 : vector<2x256xf32> to vector<2x256xbf16>
    %cst_166 = arith.constant dense<0.000000e+00> : vector<2x256xf32>
    %394 = tpu.matmul %393, %372, %cst_166 {dimension_numbers = #tpu.dot_dimension_numbers<[1], [0], [0], [1], [0, 0, 1, 1], [], []>} : vector<2x256xbf16>, vector<256x256xbf16>, vector<2x256xf32> -> vector<2x256xf32>
    %395 = vector.broadcast %373 : vector<1x256xf32> to vector<2x256xf32>
    %396 = arith.addf %394, %395 : vector<2x256xf32>
    %397 = arith.addf %396, %379 : vector<2x256xf32>
    %cst_167 = arith.constant dense<0.000000e+00> : vector<2xf32>
    %398 = vector.multi_reduction <add>, %397, %cst_167 [1] : vector<2x256xf32> to vector<2xf32>
    %399 = vector.shape_cast %398 : vector<2xf32> to vector<2x1xf32>
    %cst_168 = arith.constant 2.560000e+02 : f32
    %400 = vector.broadcast %cst_168 : f32 to vector<2x1xf32>
    %401 = arith.divf %399, %400 : vector<2x1xf32>
    %402 = vector.broadcast %401 : vector<2x1xf32> to vector<2x256xf32>
    %403 = arith.subf %397, %402 : vector<2x256xf32>
    %404 = arith.mulf %403, %403 : vector<2x256xf32>
    %cst_169 = arith.constant dense<0.000000e+00> : vector<2xf32>
    %405 = vector.multi_reduction <add>, %404, %cst_169 [1] : vector<2x256xf32> to vector<2xf32>
    %406 = vector.shape_cast %405 : vector<2xf32> to vector<2x1xf32>
    %cst_170 = arith.constant 2.560000e+02 : f32
    %407 = vector.broadcast %cst_170 : f32 to vector<2x1xf32>
    %408 = arith.divf %406, %407 : vector<2x1xf32>
    %409 = vector.broadcast %401 : vector<2x1xf32> to vector<2x256xf32>
    %410 = arith.subf %397, %409 : vector<2x256xf32>
    %cst_171 = arith.constant 9.99999974E-6 : f32
    %411 = vector.broadcast %cst_171 : f32 to vector<2x1xf32>
    %412 = arith.addf %408, %411 : vector<2x1xf32>
    %413 = math.rsqrt %412 : vector<2x1xf32>
    %414 = vector.broadcast %413 : vector<2x1xf32> to vector<2x256xf32>
    %415 = arith.mulf %410, %414 : vector<2x256xf32>
    %416 = vector.broadcast %374 : vector<1x256xf32> to vector<2x256xf32>
    %417 = arith.mulf %415, %416 : vector<2x256xf32>
    %418 = vector.broadcast %375 : vector<1x256xf32> to vector<2x256xf32>
    %419 = arith.addf %417, %418 : vector<2x256xf32>
    %c0_172 = arith.constant 0 : index
    %c0_173 = arith.constant 0 : index
    %420 = vector.load %arg27[%c0_172, %c0_173] : memref<2x256xf32, #tpu.memory_space<vmem>>, vector<2x256xf32>
    tpu.vector_store %arg27[%c0_172, %c0_173], %419 {strides = array<i32>} : memref<2x256xf32, #tpu.memory_space<vmem>>, vector<2x256xf32>,
    return
  }
}

</mosaic_0001>

<llo_original>
// kernel: clip_forward.3
$region0: #{clip_forward.3}
  #allocation0 [shape = 'u32[]', space=smem, size = 0x4, offset = 0x4, fixed_abs, tag = 'smem constant byte address 0x4 - core index']
  #allocation1 [shape = 'u32[72,128]{1,0:T(1,128)}', space=vmem, size = 0x9000, scoped, tag = 'internal scratch']
  %s0 = inlined_call_operand.vmem [shape: f32[2,8,32], index: 0, kind: input, shape index: {}]
  %s1 = inlined_call_operand.vmem [shape: f32[2,8], index: 1, kind: input, shape index: {}]
  %s2 = inlined_call_operand.vmem [shape: f32[1,32], index: 2, kind: input, shape index: {}]
  %s3 = inlined_call_operand.vmem [shape: f32[1,32], index: 3, kind: input, shape index: {}]
  %s4 = inlined_call_operand.vmem [shape: f32[2,1,32], index: 4, kind: input, shape index: {}]
  %s5 = inlined_call_operand.vmem [shape: f32[2,1,32], index: 5, kind: input, shape index: {}]
  %s6 = inlined_call_operand.vmem [shape: bf16[2,32,96], index: 6, kind: input, shape index: {}]
  %s7 = inlined_call_operand.vmem [shape: f32[2,1,96], index: 7, kind: input, shape index: {}]
  %s8 = inlined_call_operand.vmem [shape: bf16[2,32,32], index: 8, kind: input, shape index: {}]
  %s9 = inlined_call_operand.vmem [shape: f32[2,1,32], index: 9, kind: input, shape index: {}]
  %s10 = inlined_call_operand.vmem [shape: f32[2,1,32], index: 10, kind: input, shape index: {}]
  %s11 = inlined_call_operand.vmem [shape: f32[2,1,32], index: 11, kind: input, shape index: {}]
  %s12 = inlined_call_operand.vmem [shape: bf16[2,32,128], index: 12, kind: input, shape index: {}]
  %s13 = inlined_call_operand.vmem [shape: f32[2,1,128], index: 13, kind: input, shape index: {}]
  %s14 = inlined_call_operand.vmem [shape: bf16[2,128,32], index: 14, kind: input, shape index: {}]
  %s15 = inlined_call_operand.vmem [shape: f32[2,1,32], index: 15, kind: input, shape index: {}]
  %s16 = inlined_call_operand.vmem [shape: bf16[32,256], index: 16, kind: input, shape index: {}]
  %s17 = inlined_call_operand.vmem [shape: f32[1,256], index: 17, kind: input, shape index: {}]
  %s18 = inlined_call_operand.vmem [shape: bf16[256,256], index: 18, kind: input, shape index: {}]
  %s19 = inlined_call_operand.vmem [shape: f32[1,256], index: 19, kind: input, shape index: {}]
  %s20 = inlined_call_operand.vmem [shape: bf16[256,256], index: 20, kind: input, shape index: {}]
  %s21 = inlined_call_operand.vmem [shape: f32[1,256], index: 21, kind: input, shape index: {}]
  %s22 = inlined_call_operand.vmem [shape: f32[1,256], index: 22, kind: input, shape index: {}]
  %s23 = inlined_call_operand.vmem [shape: f32[1,256], index: 23, kind: input, shape index: {}]
  %s24 = inlined_call_operand.hbm [shape: f32[2,256], index: 24, kind: output, shape index: {}]
  %s25 = sld [smem:[#allocation0]]
  $region106: #{clip_forward.3} parent=0
    _
  %s27 = ssub.s32 1, %s25
  %s28 = scalar_select 0, %s27, %s25
  $region1: #{clip_forward.3} parent=0
    #allocation2 [shape = 'u8[2048]{0}', space=vmem, size = 0x800, scoped, tag = 'output window, operand 0, single buffered']
    #allocation3 [shape = 's32[1]{0}', space=sflag, size = 0x4, scoped, tag = 'scoped memory for clip_forward.3']
    %29 = vsyncpa [#allocation3], 0
    // Predicated region
    $region2: #{clip_forward.3} parent=1 // pred_check
      _
    $region3: #{clip_forward.3} parent=1 // pred_check_branch
      %31 = sbr.rel (0) target = $region5
    $region4: #{clip_forward.3} parent=1 // pred_region
      _
    $region5: #{clip_forward.3} parent=1 // pred_fallthru
      _
    // Predicated region
    $region6: #{clip_forward.3} parent=1 // pred_check
      _
    $region7: #{clip_forward.3} parent=1 // pred_check_branch
      %33 = sbr.rel (0) target = $region9
    $region8: #{clip_forward.3} parent=1 // pred_region
      _
    $region9: #{clip_forward.3} parent=1 // pred_fallthru
      _
    // Predicated region
    $region10: #{clip_forward.3} parent=1 // pred_check
      _
    $region11: #{clip_forward.3} parent=1 // pred_check_branch
      %35 = sbr.rel (0) target = $region13
    $region12: #{clip_forward.3} parent=1 // pred_region
      _
    $region13: #{clip_forward.3} parent=1 // pred_fallthru
      _
    // Predicated region
    $region14: #{clip_forward.3} parent=1 // pred_check
      _
    $region15: #{clip_forward.3} parent=1 // pred_check_branch
      %37 = sbr.rel (0) target = $region17
    $region16: #{clip_forward.3} parent=1 // pred_region
      _
    $region17: #{clip_forward.3} parent=1 // pred_fallthru
      _
    // Predicated region
    $region18: #{clip_forward.3} parent=1 // pred_check
      _
    $region19: #{clip_forward.3} parent=1 // pred_check_branch
      %39 = sbr.rel (0) target = $region21
    $region20: #{clip_forward.3} parent=1 // pred_region
      _
    $region21: #{clip_forward.3} parent=1 // pred_fallthru
      _
    // Predicated region
    $region22: #{clip_forward.3} parent=1 // pred_check
      _
    $region23: #{clip_forward.3} parent=1 // pred_check_branch
      %41 = sbr.rel (0) target = $region25
    $region24: #{clip_forward.3} parent=1 // pred_region
      _
    $region25: #{clip_forward.3} parent=1 // pred_fallthru
      _
    // Predicated region
    $region26: #{clip_forward.3} parent=1 // pred_check
      _
    $region27: #{clip_forward.3} parent=1 // pred_check_branch
      %43 = sbr.rel (0) target = $region29
    $region28: #{clip_forward.3} parent=1 // pred_region
      _
    $region29: #{clip_forward.3} parent=1 // pred_fallthru
      _
    // Predicated region
    $region30: #{clip_forward.3} parent=1 // pred_check
      _
    $region31: #{clip_forward.3} parent=1 // pred_check_branch
      %45 = sbr.rel (0) target = $region33
    $region32: #{clip_forward.3} parent=1 // pred_region
      _
    $region33: #{clip_forward.3} parent=1 // pred_fallthru
      _
    // Predicated region
    $region34: #{clip_forward.3} parent=1 // pred_check
      _
    $region35: #{clip_forward.3} parent=1 // pred_check_branch
      %47 = sbr.rel (0) target = $region37
    $region36: #{clip_forward.3} parent=1 // pred_region
      _
    $region37: #{clip_forward.3} parent=1 // pred_fallthru
      _
    // Predicated region
    $region38: #{clip_forward.3} parent=1 // pred_check
      _
    $region39: #{clip_forward.3} parent=1 // pred_check_branch
      %49 = sbr.rel (0) target = $region41
    $region40: #{clip_forward.3} parent=1 // pred_region
      _
    $region41: #{clip_forward.3} parent=1 // pred_fallthru
      _
    // Predicated region
    $region42: #{clip_forward.3} parent=1 // pred_check
      _
    $region43: #{clip_forward.3} parent=1 // pred_check_branch
      %51 = sbr.rel (0) target = $region45
    $region44: #{clip_forward.3} parent=1 // pred_region
      _
    $region45: #{clip_forward.3} parent=1 // pred_fallthru
      _
    // Predicated region
    $region46: #{clip_forward.3} parent=1 // pred_check
      _
    $region47: #{clip_forward.3} parent=1 // pred_check_branch
      %53 = sbr.rel (0) target = $region49
    $region48: #{clip_forward.3} parent=1 // pred_region
      _
    $region49: #{clip_forward.3} parent=1 // pred_fallthru
      _
    // Predicated region
    $region50: #{clip_forward.3} parent=1 // pred_check
      _
    $region51: #{clip_forward.3} parent=1 // pred_check_branch
      %55 = sbr.rel (0) target = $region53
    $region52: #{clip_forward.3} parent=1 // pred_region
      _
    $region53: #{clip_forward.3} parent=1 // pred_fallthru
      _
    // Predicated region
    $region54: #{clip_forward.3} parent=1 // pred_check
      _
    $region55: #{clip_forward.3} parent=1 // pred_check_branch
      %57 = sbr.rel (0) target = $region57
    $region56: #{clip_forward.3} parent=1 // pred_region
      _
    $region57: #{clip_forward.3} parent=1 // pred_fallthru
      _
    // Predicated region
    $region58: #{clip_forward.3} parent=1 // pred_check
      _
    $region59: #{clip_forward.3} parent=1 // pred_check_branch
      %59 = sbr.rel (0) target = $region61
    $region60: #{clip_forward.3} parent=1 // pred_region
      _
    $region61: #{clip_forward.3} parent=1 // pred_fallthru
      _
    // Predicated region
    $region62: #{clip_forward.3} parent=1 // pred_check
      _
    $region63: #{clip_forward.3} parent=1 // pred_check_branch
      %61 = sbr.rel (0) target = $region65
    $region64: #{clip_forward.3} parent=1 // pred_region
      _
    $region65: #{clip_forward.3} parent=1 // pred_fallthru
      _
    // Predicated region
    $region66: #{clip_forward.3} parent=1 // pred_check
      _
    $region67: #{clip_forward.3} parent=1 // pred_check_branch
      %63 = sbr.rel (0) target = $region69
    $region68: #{clip_forward.3} parent=1 // pred_region
      _
    $region69: #{clip_forward.3} parent=1 // pred_fallthru
      _
    // Predicated region
    $region70: #{clip_forward.3} parent=1 // pred_check
      _
    $region71: #{clip_forward.3} parent=1 // pred_check_branch
      %65 = sbr.rel (0) target = $region73
    $region72: #{clip_forward.3} parent=1 // pred_region
      _
    $region73: #{clip_forward.3} parent=1 // pred_fallthru
      _
    // Predicated region
    $region74: #{clip_forward.3} parent=1 // pred_check
      _
    $region75: #{clip_forward.3} parent=1 // pred_check_branch
      %67 = sbr.rel (0) target = $region77
    $region76: #{clip_forward.3} parent=1 // pred_region
      _
    $region77: #{clip_forward.3} parent=1 // pred_fallthru
      _
    // Predicated region
    $region78: #{clip_forward.3} parent=1 // pred_check
      _
    $region79: #{clip_forward.3} parent=1 // pred_check_branch
      %69 = sbr.rel (0) target = $region81
    $region80: #{clip_forward.3} parent=1 // pred_region
      _
    $region81: #{clip_forward.3} parent=1 // pred_fallthru
      _
    // Predicated region
    $region82: #{clip_forward.3} parent=1 // pred_check
      _
    $region83: #{clip_forward.3} parent=1 // pred_check_branch
      %71 = sbr.rel (0) target = $region85
    $region84: #{clip_forward.3} parent=1 // pred_region
      _
    $region85: #{clip_forward.3} parent=1 // pred_fallthru
      _
    // Predicated region
    $region86: #{clip_forward.3} parent=1 // pred_check
      _
    $region87: #{clip_forward.3} parent=1 // pred_check_branch
      %73 = sbr.rel (0) target = $region89
    $region88: #{clip_forward.3} parent=1 // pred_region
      _
    $region89: #{clip_forward.3} parent=1 // pred_fallthru
      _
    // Predicated region
    $region90: #{clip_forward.3} parent=1 // pred_check
      _
    $region91: #{clip_forward.3} parent=1 // pred_check_branch
      %75 = sbr.rel (0) target = $region93
    $region92: #{clip_forward.3} parent=1 // pred_region
      _
    $region93: #{clip_forward.3} parent=1 // pred_fallthru
      _
    // Predicated region
    $region94: #{clip_forward.3} parent=1 // pred_check
      _
    $region95: #{clip_forward.3} parent=1 // pred_check_branch
      %77 = sbr.rel (0) target = $region97
    $region96: #{clip_forward.3} parent=1 // pred_region
      _
    $region97: #{clip_forward.3} parent=1 // pred_fallthru
      _
    %v79 = vld [vmem:[%s0] sm:$0xff]
    %v80 = vld [vmem:[%s0 + $0x8] sm:$0xff]
    %v81 = vld [vmem:[%s2] sm:$0x1]
    %v82 = vld [vmem:[%s3] sm:$0x1]
    %vm83 = vcmask 261120
    %v84 = vsel %vm83, %v79, 0.0
    %85 = vadd.xlane.f32.xlu0 %v84
    %v86 = vpop.xlane.xlu0 %85
    %v87 = vsel %vm83, %v80, 0.0
    %88 = vadd.xlane.f32.xlu0 %v87
    %v89 = vpop.xlane.xlu0 %88
    %v90 = vrcp.pop 32.0
    %v91 = vmul.f32 32.0, %v90
    %v92 = vsub.f32 1.0, %v91
    %v93 = vmul.f32 %v90, %v92
    %v94 = vadd.f32 %v90, %v93
    %vm95 = vweird.f32 %v90
    %v96 = vsel %vm95, %v90, %v94
    %v97 = vmul.f32 %v86, %v96
    %v98 = vmul.f32 %v89, %v96
    %v99 = vsub.f32 %v79, %v97
    %v100 = vsub.f32 %v80, %v98
    %v101 = vmul.f32 %v99, %v99
    %v102 = vmul.f32 %v100, %v100
    %v103 = vsel %vm83, %v101, 0.0
    %104 = vadd.xlane.f32.xlu0 %v103
    %v105 = vpop.xlane.xlu0 %104
    %v106 = vsel %vm83, %v102, 0.0
    %107 = vadd.xlane.f32.xlu0 %v106
    %v108 = vpop.xlane.xlu0 %107
    %v109 = vmul.f32 %v105, %v96
    %v110 = vmul.f32 %v108, %v96
    %v111 = vadd.f32 %v109, 1e-12
    %v112 = vadd.f32 %v110, 1e-12
    %v113 = vrsqrt.pop %v111
    %v114 = vmul.f32 %v113, %v111
    %v115 = vmul.f32 %v114, %v113
    %v116 = vmul.f32 0.5, %v115
    %v117 = vsub.f32 1.5, %v116
    %v118 = vmul.f32 %v113, %v117
    %vm119 = vweird.f32 %v111
    %vm120 = vweird.f32 %v113
    %vm121 = vmor %vm119, %vm120
    %v122 = vsel %vm121, %v113, %v118
    %v123 = vrsqrt.pop %v112
    %v124 = vmul.f32 %v123, %v112
    %v125 = vmul.f32 %v124, %v123
    %v126 = vmul.f32 0.5, %v125
    %v127 = vsub.f32 1.5, %v126
    %v128 = vmul.f32 %v123, %v127
    %vm129 = vweird.f32 %v112
    %vm130 = vweird.f32 %v123
    %vm131 = vmor %vm129, %vm130
    %v132 = vsel %vm131, %v123, %v128
    %v133 = vmul.f32 %v99, %v122
    %v134 = vmul.f32 %v100, %v132
    %v136 = vperm.slane %v81, 0
    %v138 = vmul.f32 %v133, %v136
    %v139 = vmul.f32 %v134, %v136
    %v141 = vperm.slane %v82, 0
    %v143 = vadd.f32 %v138, %v141
    %v144 = vadd.f32 %v139, %v141
    %v145 = vld [vmem:[%s1] sm:$0x3]
    %v146 = vsub.f32 1.0, %v145
    %v147 = vmul.f32 %v146, -1e+09
    %v149 = vrot.slane %v147, 1
    %v150 = vld [vmem:[%s6] sm:$0xf]
    %v151 = vld [vmem:[%s6 + $0x4] sm:$0xf]
    %v152 = vld [vmem:[%s6 + $0x8] sm:$0xf]
    %v153 = vld [vmem:[%s6 + $0xc] sm:$0xf]
    %v154 = vld [vmem:[%s7] sm:$0x1]
    %v155 = vld [vmem:[%s8] sm:$0xf]
    %v156 = vld [vmem:[%s8 + $0x4] sm:$0xf]
    %v157 = vld [vmem:[%s8 + $0x8] sm:$0xf]
    %v158 = vld [vmem:[%s8 + $0xc] sm:$0xf]
    %v159 = vld [vmem:[%s9] sm:$0x1]
    %v160 = vpack.c.bf16 %v144, %v143
    %v162 = vperm.slane %v154, 0
    %v168 = vunpack.c.l.b16 %v150
    %v169 = vunpack.c.l.b16 %v151
    %v170 = vunpack.c.l.b16 %v152
    %v171 = vunpack.c.l.b16 %v153
    %v172 = vpack.c.b16 %v169, %v168
    %v173 = vpack.c.b16 %v171, %v170
    %v177 = vsel %vm83, %v160, 0
    %179 = vmatpush.bf16.msra.mxu0 0
    %180 = vmatpush.bf16.msra.mxu0 0
    %181 = vmatpush.bf16.msra.mxu0 0
    %182 = vmatpush.bf16.msra.mxu0 0
    %183 = vmatpush.bf16.msra.mxu0 0
    %184 = vmatpush.bf16.msra.mxu0 0
    %185 = vmatpush.bf16.msra.mxu0 %v173
    %186 = vmatpush.bf16.msra.mxu0 %v172
    %187 = vmatmul.bf16.gmra.mxu0 %v177
    %v188 = vpop.f32.mrf.mxu0
    %v189 = vadd.f32 %v162, %v188
    %v190 = vpop.f32.mrf.mxu0
    %v191 = vadd.f32 %v162, %v190
    %192 = vdwg.mxu0
    %195 = vrot.lane.b32.xlu0 %v189, 120
    %v196 = vpop.permute.xlu0 %195
    %197 = vrot.lane.b32.xlu0 %v191, 120
    %v198 = vpop.permute.xlu0 %197
    %201 = vrot.lane.b32.xlu0 %v189, 112
    %v202 = vpop.permute.xlu0 %201
    %203 = vrot.lane.b32.xlu0 %v191, 112
    %v204 = vpop.permute.xlu0 %203
    %207 = vrot.lane.b32.xlu0 %v189, 104
    %v208 = vpop.permute.xlu0 %207
    %209 = vrot.lane.b32.xlu0 %v191, 104
    %v210 = vpop.permute.xlu0 %209
    %v213 = vpack.c.bf16 %v189, %v189
    %v214 = vpack.c.bf16 %v191, %v191
    %v215 = vpack.c.bf16 %v196, %v196
    %v216 = vpack.c.bf16 %v198, %v198
    %v217 = vpack.c.bf16 %v202, %v202
    %v218 = vpack.c.bf16 %v204, %v204
    %v219 = vpack.c.bf16 %v208, %v208
    %v220 = vpack.c.bf16 %v210, %v210
    %v222 = vunpack.c.l.b16 %v213
    %v223 = vpack.c.b16 %v222, %v222
    %224 = vrot.lane.b32.xlu0 %v223, 96
    %v225 = vpop.permute.xlu0 %224
    %vm226 = vcmask 64512
    %v228 = vsel %vm226, %v213, 0
    %v231 = vsel %vm226, %v225, 0
    %233 = vmatpush.bf16.xpose.msra.mxu0 0
    %234 = vmatpush.bf16.xpose.msra.mxu0 0
    %235 = vmatpush.bf16.xpose.msra.mxu0 0
    %236 = vmatpush.bf16.xpose.msra.mxu0 0
    %237 = vmatpush.bf16.xpose.msra.mxu0 0
    %238 = vmatpush.bf16.xpose.msra.mxu0 0
    %239 = vmatpush.bf16.xpose.msra.mxu0 0
    %240 = vmatpush.bf16.xpose.msra.mxu0 %v231
    %241 = vmatmul.bf16.gmra.mxu0 %v228
    %v242 = vpop.f32.mrf.mxu0
    %v243 = vadd.f32 0.0, %v242
    %v244 = vpop.f32.mrf.mxu0
    %245 = vdwg.mxu0
    %v247 = vunpack.c.l.b16 %v214
    %v248 = vpack.c.b16 %v247, %v247
    %249 = vrot.lane.b32.xlu0 %v248, 96
    %v250 = vpop.permute.xlu0 %249
    %v252 = vsel %vm226, %v214, 0
    %v255 = vsel %vm226, %v250, 0
    %257 = vmatpush.bf16.xpose.msra.mxu0 0
    %258 = vmatpush.bf16.xpose.msra.mxu0 0
    %259 = vmatpush.bf16.xpose.msra.mxu0 0
    %260 = vmatpush.bf16.xpose.msra.mxu0 0
    %261 = vmatpush.bf16.xpose.msra.mxu0 0
    %262 = vmatpush.bf16.xpose.msra.mxu0 0
    %263 = vmatpush.bf16.xpose.msra.mxu0 0
    %264 = vmatpush.bf16.xpose.msra.mxu0 %v255
    %265 = vmatmul.bf16.gmra.mxu0 %v252
    %v266 = vpop.f32.mrf.mxu0
    %v267 = vadd.f32 0.0, %v266
    %v268 = vpop.f32.mrf.mxu0
    %269 = vdwg.mxu0
    %v271 = vunpack.c.l.b16 %v215
    %v272 = vpack.c.b16 %v271, %v271
    %273 = vrot.lane.b32.xlu0 %v272, 96
    %v274 = vpop.permute.xlu0 %273
    %v276 = vsel %vm226, %v215, 0
    %v279 = vsel %vm226, %v274, 0
    %281 = vmatpush.bf16.xpose.msra.mxu0 0
    %282 = vmatpush.bf16.xpose.msra.mxu0 0
    %283 = vmatpush.bf16.xpose.msra.mxu0 0
    %284 = vmatpush.bf16.xpose.msra.mxu0 0
    %285 = vmatpush.bf16.xpose.msra.mxu0 0
    %286 = vmatpush.bf16.xpose.msra.mxu0 0
    %287 = vmatpush.bf16.xpose.msra.mxu0 0
    %288 = vmatpush.bf16.xpose.msra.mxu0 %v279
    %289 = vmatmul.bf16.gmra.mxu0 %v276
    %v290 = vpop.f32.mrf.mxu0
    %v291 = vadd.f32 0.0, %v290
    %v292 = vpop.f32.mrf.mxu0
    %293 = vdwg.mxu0
    %v295 = vunpack.c.l.b16 %v216
    %v296 = vpack.c.b16 %v295, %v295
    %297 = vrot.lane.b32.xlu0 %v296, 96
    %v298 = vpop.permute.xlu0 %297
    %v300 = vsel %vm226, %v216, 0
    %v303 = vsel %vm226, %v298, 0
    %305 = vmatpush.bf16.xpose.msra.mxu0 0
    %306 = vmatpush.bf16.xpose.msra.mxu0 0
    %307 = vmatpush.bf16.xpose.msra.mxu0 0
    %308 = vmatpush.bf16.xpose.msra.mxu0 0
    %309 = vmatpush.bf16.xpose.msra.mxu0 0
    %310 = vmatpush.bf16.xpose.msra.mxu0 0
    %311 = vmatpush.bf16.xpose.msra.mxu0 0
    %312 = vmatpush.bf16.xpose.msra.mxu0 %v303
    %313 = vmatmul.bf16.gmra.mxu0 %v300
    %v314 = vpop.f32.mrf.mxu0
    %v315 = vadd.f32 0.0, %v314
    %v316 = vpop.f32.mrf.mxu0
    %317 = vdwg.mxu0
    %v319 = vunpack.c.l.b16 %v217
    %v320 = vpack.c.b16 %v319, %v319
    %321 = vrot.lane.b32.xlu0 %v320, 96
    %v322 = vpop.permute.xlu0 %321
    %v324 = vsel %vm226, %v217, 0
    %v327 = vsel %vm226, %v322, 0
    %329 = vmatpush.bf16.xpose.msra.mxu0 0
    %330 = vmatpush.bf16.xpose.msra.mxu0 0
    %331 = vmatpush.bf16.xpose.msra.mxu0 0
    %332 = vmatpush.bf16.xpose.msra.mxu0 0
    %333 = vmatpush.bf16.xpose.msra.mxu0 0
    %334 = vmatpush.bf16.xpose.msra.mxu0 0
    %335 = vmatpush.bf16.xpose.msra.mxu0 0
    %336 = vmatpush.bf16.xpose.msra.mxu0 %v327
    %337 = vmatmul.bf16.gmra.mxu0 %v324
    %v338 = vpop.f32.mrf.mxu0
    %v339 = vadd.f32 0.0, %v338
    %v340 = vpop.f32.mrf.mxu0
    %341 = vdwg.mxu0
    %v343 = vunpack.c.l.b16 %v218
    %v344 = vpack.c.b16 %v343, %v343
    %345 = vrot.lane.b32.xlu0 %v344, 96
    %v346 = vpop.permute.xlu0 %345
    %v348 = vsel %vm226, %v218, 0
    %v351 = vsel %vm226, %v346, 0
    %353 = vmatpush.bf16.xpose.msra.mxu0 0
    %354 = vmatpush.bf16.xpose.msra.mxu0 0
    %355 = vmatpush.bf16.xpose.msra.mxu0 0
    %356 = vmatpush.bf16.xpose.msra.mxu0 0
    %357 = vmatpush.bf16.xpose.msra.mxu0 0
    %358 = vmatpush.bf16.xpose.msra.mxu0 0
    %359 = vmatpush.bf16.xpose.msra.mxu0 0
    %360 = vmatpush.bf16.xpose.msra.mxu0 %v351
    %361 = vmatmul.bf16.gmra.mxu0 %v348
    %v362 = vpop.f32.mrf.mxu0
    %v363 = vadd.f32 0.0, %v362
    %v364 = vpop.f32.mrf.mxu0
    %365 = vdwg.mxu0
    %v367 = vunpack.c.l.b16 %v219
    %v368 = vpack.c.b16 %v367, %v367
    %369 = vrot.lane.b32.xlu0 %v368, 96
    %v370 = vpop.permute.xlu0 %369
    %v372 = vsel %vm226, %v219, 0
    %v375 = vsel %vm226, %v370, 0
    %377 = vmatpush.bf16.xpose.msra.mxu0 0
    %378 = vmatpush.bf16.xpose.msra.mxu0 0
    %379 = vmatpush.bf16.xpose.msra.mxu0 0
    %380 = vmatpush.bf16.xpose.msra.mxu0 0
    %381 = vmatpush.bf16.xpose.msra.mxu0 0
    %382 = vmatpush.bf16.xpose.msra.mxu0 0
    %383 = vmatpush.bf16.xpose.msra.mxu0 0
    %384 = vmatpush.bf16.xpose.msra.mxu0 %v375
    %385 = vmatmul.bf16.gmra.mxu0 %v372
    %v386 = vpop.f32.mrf.mxu0
    %v387 = vadd.f32 0.0, %v386
    %v388 = vpop.f32.mrf.mxu0
    %389 = vdwg.mxu0
    %v391 = vunpack.c.l.b16 %v220
    %v392 = vpack.c.b16 %v391, %v391
    %393 = vrot.lane.b32.xlu0 %v392, 96
    %v394 = vpop.permute.xlu0 %393
    %v396 = vsel %vm226, %v220, 0
    %v399 = vsel %vm226, %v394, 0
    %401 = vmatpush.bf16.xpose.msra.mxu0 0
    %402 = vmatpush.bf16.xpose.msra.mxu0 0
    %403 = vmatpush.bf16.xpose.msra.mxu0 0
    %404 = vmatpush.bf16.xpose.msra.mxu0 0
    %405 = vmatpush.bf16.xpose.msra.mxu0 0
    %406 = vmatpush.bf16.xpose.msra.mxu0 0
    %407 = vmatpush.bf16.xpose.msra.mxu0 0
    %408 = vmatpush.bf16.xpose.msra.mxu0 %v399
    %409 = vmatmul.bf16.gmra.mxu0 %v396
    %v410 = vpop.f32.mrf.mxu0
    %v411 = vadd.f32 0.0, %v410
    %v412 = vpop.f32.mrf.mxu0
    %413 = vdwg.mxu0
    %v414 = vmul.f32 %v243, 0.35355338
    %v415 = vmul.f32 %v267, 0.35355338
    %v416 = vmul.f32 %v291, 0.35355338
    %v417 = vmul.f32 %v315, 0.35355338
    %v418 = vmul.f32 %v339, 0.35355338
    %v419 = vmul.f32 %v363, 0.35355338
    %v420 = vmul.f32 %v387, 0.35355338
    %v421 = vmul.f32 %v411, 0.35355338
    %v422 = vperm.slane %v147, 0
    %v423 = vperm.slane %v149, 0
    %v426 = vadd.f32 %v414, %v422
    %v427 = vadd.f32 %v415, %v423
    %v428 = vadd.f32 %v416, %v422
    %v429 = vadd.f32 %v417, %v423
    %v430 = vadd.f32 %v418, %v422
    %v431 = vadd.f32 %v419, %v423
    %v432 = vadd.f32 %v420, %v422
    %v433 = vadd.f32 %v421, %v423
    %v434 = vsel %vm226, %v426, -inf
    %435 = vmax.xlane.f32.xlu0 %v434
    %v436 = vpop.xlane.xlu0 %435
    %v437 = vsel %vm226, %v427, -inf
    %438 = vmax.xlane.f32.xlu0 %v437
    %v439 = vpop.xlane.xlu0 %438
    %v440 = vsel %vm226, %v428, -inf
    %441 = vmax.xlane.f32.xlu0 %v440
    %v442 = vpop.xlane.xlu0 %441
    %v443 = vsel %vm226, %v429, -inf
    %444 = vmax.xlane.f32.xlu0 %v443
    %v445 = vpop.xlane.xlu0 %444
    %v446 = vsel %vm226, %v430, -inf
    %447 = vmax.xlane.f32.xlu0 %v446
    %v448 = vpop.xlane.xlu0 %447
    %v449 = vsel %vm226, %v431, -inf
    %450 = vmax.xlane.f32.xlu0 %v449
    %v451 = vpop.xlane.xlu0 %450
    %v452 = vsel %vm226, %v432, -inf
    %453 = vmax.xlane.f32.xlu0 %v452
    %v454 = vpop.xlane.xlu0 %453
    %v455 = vsel %vm226, %v433, -inf
    %456 = vmax.xlane.f32.xlu0 %v455
    %v457 = vpop.xlane.xlu0 %456
    %v458 = vsub.f32 %v426, %v436
    %v459 = vsub.f32 %v427, %v439
    %v460 = vsub.f32 %v428, %v442
    %v461 = vsub.f32 %v429, %v445
    %v462 = vsub.f32 %v430, %v448
    %v463 = vsub.f32 %v431, %v451
    %v464 = vsub.f32 %v432, %v454
    %v465 = vsub.f32 %v433, %v457
    %v466 = vmul.f32 %v458, 1.442695
    %v467 = vpow.pop %v466
    %v468 = vmul.f32 %v459, 1.442695
    %v469 = vpow.pop %v468
    %v470 = vmul.f32 %v460, 1.442695
    %v471 = vpow.pop %v470
    %v472 = vmul.f32 %v461, 1.442695
    %v473 = vpow.pop %v472
    %v474 = vmul.f32 %v462, 1.442695
    %v475 = vpow.pop %v474
    %v476 = vmul.f32 %v463, 1.442695
    %v477 = vpow.pop %v476
    %v478 = vmul.f32 %v464, 1.442695
    %v479 = vpow.pop %v478
    %v480 = vmul.f32 %v465, 1.442695
    %v481 = vpow.pop %v480
    %v482 = vsel %vm226, %v467, 0.0
    %483 = vadd.xlane.f32.xlu0 %v482
    %v484 = vpop.xlane.xlu0 %483
    %v485 = vsel %vm226, %v469, 0.0
    %486 = vadd.xlane.f32.xlu0 %v485
    %v487 = vpop.xlane.xlu0 %486
    %v488 = vsel %vm226, %v471, 0.0
    %489 = vadd.xlane.f32.xlu0 %v488
    %v490 = vpop.xlane.xlu0 %489
    %v491 = vsel %vm226, %v473, 0.0
    %492 = vadd.xlane.f32.xlu0 %v491
    %v493 = vpop.xlane.xlu0 %492
    %v494 = vsel %vm226, %v475, 0.0
    %495 = vadd.xlane.f32.xlu0 %v494
    %v496 = vpop.xlane.xlu0 %495
    %v497 = vsel %vm226, %v477, 0.0
    %498 = vadd.xlane.f32.xlu0 %v497
    %v499 = vpop.xlane.xlu0 %498
    %v500 = vsel %vm226, %v479, 0.0
    %501 = vadd.xlane.f32.xlu0 %v500
    %v502 = vpop.xlane.xlu0 %501
    %v503 = vsel %vm226, %v481, 0.0
    %504 = vadd.xlane.f32.xlu0 %v503
    %v505 = vpop.xlane.xlu0 %504
    %v506 = vrcp.pop %v484
    %v507 = vrcp.pop %v487
    %v508 = vrcp.pop %v490
    %v509 = vrcp.pop %v493
    %v510 = vrcp.pop %v496
    %v511 = vrcp.pop %v499
    %v512 = vrcp.pop %v502
    %v513 = vrcp.pop %v505
    %v514 = vmul.f32 %v467, %v506
    %v515 = vmul.f32 %v469, %v507
    %v516 = vmul.f32 %v471, %v508
    %v517 = vmul.f32 %v473, %v509
    %v518 = vmul.f32 %v475, %v510
    %v519 = vmul.f32 %v477, %v511
    %v520 = vmul.f32 %v479, %v512
    %v521 = vmul.f32 %v481, %v513
    %v522 = vpack.c.bf16 %v514, %v514
    %v523 = vpack.c.bf16 %v515, %v515
    %v524 = vpack.c.bf16 %v516, %v516
    %v525 = vpack.c.bf16 %v517, %v517
    %v526 = vpack.c.bf16 %v518, %v518
    %v527 = vpack.c.bf16 %v519, %v519
    %v528 = vpack.c.bf16 %v520, %v520
    %v529 = vpack.c.bf16 %v521, %v521
    %530 = vrot.lane.b32.xlu0 %v223, 64
    %v531 = vpop.permute.xlu0 %530
    %v533 = vsel %vm226, %v522, 0
    %vm535 = vcmask 1043456
    %v537 = vsel %vm535, %v531, 0
    %539 = vmatpush.bf16.msra.mxu0 0
    %540 = vmatpush.bf16.msra.mxu0 0
    %541 = vmatpush.bf16.msra.mxu0 0
    %542 = vmatpush.bf16.msra.mxu0 0
    %543 = vmatpush.bf16.msra.mxu0 0
    %544 = vmatpush.bf16.msra.mxu0 0
    %545 = vmatpush.bf16.msra.mxu0 0
    %546 = vmatpush.bf16.msra.mxu0 %v537
    %547 = vmatmul.bf16.gmra.mxu0 %v533
    %v548 = vpop.f32.mrf.mxu0
    %v549 = vadd.f32 0.0, %v548
    %v550 = vpop.f32.mrf.mxu0
    %551 = vdwg.mxu0
    %552 = vrot.lane.b32.xlu0 %v248, 64
    %v553 = vpop.permute.xlu0 %552
    %v555 = vsel %vm226, %v523, 0
    %v558 = vsel %vm535, %v553, 0
    %560 = vmatpush.bf16.msra.mxu0 0
    %561 = vmatpush.bf16.msra.mxu0 0
    %562 = vmatpush.bf16.msra.mxu0 0
    %563 = vmatpush.bf16.msra.mxu0 0
    %564 = vmatpush.bf16.msra.mxu0 0
    %565 = vmatpush.bf16.msra.mxu0 0
    %566 = vmatpush.bf16.msra.mxu0 0
    %567 = vmatpush.bf16.msra.mxu0 %v558
    %568 = vmatmul.bf16.gmra.mxu0 %v555
    %v569 = vpop.f32.mrf.mxu0
    %v570 = vadd.f32 0.0, %v569
    %v571 = vpop.f32.mrf.mxu0
    %572 = vdwg.mxu0
    %573 = vrot.lane.b32.xlu0 %v272, 64
    %v574 = vpop.permute.xlu0 %573
    %v576 = vsel %vm226, %v524, 0
    %v579 = vsel %vm535, %v574, 0
    %581 = vmatpush.bf16.msra.mxu0 0
    %582 = vmatpush.bf16.msra.mxu0 0
    %583 = vmatpush.bf16.msra.mxu0 0
    %584 = vmatpush.bf16.msra.mxu0 0
    %585 = vmatpush.bf16.msra.mxu0 0
    %586 = vmatpush.bf16.msra.mxu0 0
    %587 = vmatpush.bf16.msra.mxu0 0
    %588 = vmatpush.bf16.msra.mxu0 %v579
    %589 = vmatmul.bf16.gmra.mxu0 %v576
    %v590 = vpop.f32.mrf.mxu0
    %v591 = vadd.f32 0.0, %v590
    %v592 = vpop.f32.mrf.mxu0
    %593 = vdwg.mxu0
    %594 = vrot.lane.b32.xlu0 %v296, 64
    %v595 = vpop.permute.xlu0 %594
    %v597 = vsel %vm226, %v525, 0
    %v600 = vsel %vm535, %v595, 0
    %602 = vmatpush.bf16.msra.mxu0 0
    %603 = vmatpush.bf16.msra.mxu0 0
    %604 = vmatpush.bf16.msra.mxu0 0
    %605 = vmatpush.bf16.msra.mxu0 0
    %606 = vmatpush.bf16.msra.mxu0 0
    %607 = vmatpush.bf16.msra.mxu0 0
    %608 = vmatpush.bf16.msra.mxu0 0
    %609 = vmatpush.bf16.msra.mxu0 %v600
    %610 = vmatmul.bf16.gmra.mxu0 %v597
    %v611 = vpop.f32.mrf.mxu0
    %v612 = vadd.f32 0.0, %v611
    %v613 = vpop.f32.mrf.mxu0
    %614 = vdwg.mxu0
    %615 = vrot.lane.b32.xlu0 %v320, 64
    %v616 = vpop.permute.xlu0 %615
    %v618 = vsel %vm226, %v526, 0
    %v621 = vsel %vm535, %v616, 0
    %623 = vmatpush.bf16.msra.mxu0 0
    %624 = vmatpush.bf16.msra.mxu0 0
    %625 = vmatpush.bf16.msra.mxu0 0
    %626 = vmatpush.bf16.msra.mxu0 0
    %627 = vmatpush.bf16.msra.mxu0 0
    %628 = vmatpush.bf16.msra.mxu0 0
    %629 = vmatpush.bf16.msra.mxu0 0
    %630 = vmatpush.bf16.msra.mxu0 %v621
    %631 = vmatmul.bf16.gmra.mxu0 %v618
    %v632 = vpop.f32.mrf.mxu0
    %v633 = vadd.f32 0.0, %v632
    %v634 = vpop.f32.mrf.mxu0
    %635 = vdwg.mxu0
    %636 = vrot.lane.b32.xlu0 %v344, 64
    %v637 = vpop.permute.xlu0 %636
    %v639 = vsel %vm226, %v527, 0
    %v642 = vsel %vm535, %v637, 0
    %644 = vmatpush.bf16.msra.mxu0 0
    %645 = vmatpush.bf16.msra.mxu0 0
    %646 = vmatpush.bf16.msra.mxu0 0
    %647 = vmatpush.bf16.msra.mxu0 0
    %648 = vmatpush.bf16.msra.mxu0 0
    %649 = vmatpush.bf16.msra.mxu0 0
    %650 = vmatpush.bf16.msra.mxu0 0
    %651 = vmatpush.bf16.msra.mxu0 %v642
    %652 = vmatmul.bf16.gmra.mxu0 %v639
    %v653 = vpop.f32.mrf.mxu0
    %v654 = vadd.f32 0.0, %v653
    %v655 = vpop.f32.mrf.mxu0
    %656 = vdwg.mxu0
    %657 = vrot.lane.b32.xlu0 %v368, 64
    %v658 = vpop.permute.xlu0 %657
    %v660 = vsel %vm226, %v528, 0
    %v663 = vsel %vm535, %v658, 0
    %665 = vmatpush.bf16.msra.mxu0 0
    %666 = vmatpush.bf16.msra.mxu0 0
    %667 = vmatpush.bf16.msra.mxu0 0
    %668 = vmatpush.bf16.msra.mxu0 0
    %669 = vmatpush.bf16.msra.mxu0 0
    %670 = vmatpush.bf16.msra.mxu0 0
    %671 = vmatpush.bf16.msra.mxu0 0
    %672 = vmatpush.bf16.msra.mxu0 %v663
    %673 = vmatmul.bf16.gmra.mxu0 %v660
    %v674 = vpop.f32.mrf.mxu0
    %v675 = vadd.f32 0.0, %v674
    %v676 = vpop.f32.mrf.mxu0
    %677 = vdwg.mxu0
    %678 = vrot.lane.b32.xlu0 %v392, 64
    %v679 = vpop.permute.xlu0 %678
    %v681 = vsel %vm226, %v529, 0
    %v684 = vsel %vm535, %v679, 0
    %686 = vmatpush.bf16.msra.mxu0 0
    %687 = vmatpush.bf16.msra.mxu0 0
    %688 = vmatpush.bf16.msra.mxu0 0
    %689 = vmatpush.bf16.msra.mxu0 0
    %690 = vmatpush.bf16.msra.mxu0 0
    %691 = vmatpush.bf16.msra.mxu0 0
    %692 = vmatpush.bf16.msra.mxu0 0
    %693 = vmatpush.bf16.msra.mxu0 %v684
    %694 = vmatmul.bf16.gmra.mxu0 %v681
    %v695 = vpop.f32.mrf.mxu0
    %v696 = vadd.f32 0.0, %v695
    %v697 = vpop.f32.mrf.mxu0
    %698 = vdwg.mxu0
    %v699 = vpack.c.bf16 %v570, %v549
    %v701 = vsel %vm226, %v699, 0
    %v704 = vsel %vm535, %v155, 0
    %706 = vmatpush.bf16.msra.mxu0 0
    %707 = vmatpush.bf16.msra.mxu0 0
    %708 = vmatpush.bf16.msra.mxu0 0
    %709 = vmatpush.bf16.msra.mxu0 0
    %710 = vmatpush.bf16.msra.mxu0 0
    %711 = vmatpush.bf16.msra.mxu0 0
    %712 = vmatpush.bf16.msra.mxu0 0
    %713 = vmatpush.bf16.msra.mxu0 %v704
    %714 = vmatmul.bf16.gmra.mxu0 %v701
    %v715 = vpop.f32.mrf.mxu0
    %v716 = vadd.f32 0.0, %v715
    %v717 = vpop.f32.mrf.mxu0
    %v718 = vadd.f32 0.0, %v717
    %719 = vdwg.mxu0
    %v721 = vperm.slane %v159, 0
    %v723 = vadd.f32 %v721, %v716
    %v724 = vadd.f32 %v721, %v718
    %v725 = vpack.c.bf16 %v612, %v591
    %v727 = vsel %vm226, %v725, 0
    %v730 = vsel %vm535, %v156, 0
    %732 = vmatpush.bf16.msra.mxu0 0
    %733 = vmatpush.bf16.msra.mxu0 0
    %734 = vmatpush.bf16.msra.mxu0 0
    %735 = vmatpush.bf16.msra.mxu0 0
    %736 = vmatpush.bf16.msra.mxu0 0
    %737 = vmatpush.bf16.msra.mxu0 0
    %738 = vmatpush.bf16.msra.mxu0 0
    %739 = vmatpush.bf16.msra.mxu0 %v730
    %740 = vmatmul.bf16.gmra.mxu0 %v727
    %v741 = vpop.f32.mrf.mxu0
    %v742 = vadd.f32 0.0, %v741
    %v743 = vpop.f32.mrf.mxu0
    %v744 = vadd.f32 0.0, %v743
    %745 = vdwg.mxu0
    %v746 = vadd.f32 %v723, %v742
    %v747 = vadd.f32 %v724, %v744
    %v748 = vpack.c.bf16 %v654, %v633
    %v750 = vsel %vm226, %v748, 0
    %v753 = vsel %vm535, %v157, 0
    %755 = vmatpush.bf16.msra.mxu0 0
    %756 = vmatpush.bf16.msra.mxu0 0
    %757 = vmatpush.bf16.msra.mxu0 0
    %758 = vmatpush.bf16.msra.mxu0 0
    %759 = vmatpush.bf16.msra.mxu0 0
    %760 = vmatpush.bf16.msra.mxu0 0
    %761 = vmatpush.bf16.msra.mxu0 0
    %762 = vmatpush.bf16.msra.mxu0 %v753
    %763 = vmatmul.bf16.gmra.mxu0 %v750
    %v764 = vpop.f32.mrf.mxu0
    %v765 = vadd.f32 0.0, %v764
    %v766 = vpop.f32.mrf.mxu0
    %v767 = vadd.f32 0.0, %v766
    %768 = vdwg.mxu0
    %v769 = vadd.f32 %v746, %v765
    %v770 = vadd.f32 %v747, %v767
    %v771 = vpack.c.bf16 %v696, %v675
    %v773 = vsel %vm226, %v771, 0
    %v776 = vsel %vm535, %v158, 0
    %778 = vmatpush.bf16.msra.mxu0 0
    %779 = vmatpush.bf16.msra.mxu0 0
    %780 = vmatpush.bf16.msra.mxu0 0
    %781 = vmatpush.bf16.msra.mxu0 0
    %782 = vmatpush.bf16.msra.mxu0 0
    %783 = vmatpush.bf16.msra.mxu0 0
    %784 = vmatpush.bf16.msra.mxu0 0
    %785 = vmatpush.bf16.msra.mxu0 %v776
    %786 = vmatmul.bf16.gmra.mxu0 %v773
    %v787 = vpop.f32.mrf.mxu0
    %v788 = vadd.f32 0.0, %v787
    %v789 = vpop.f32.mrf.mxu0
    %v790 = vadd.f32 0.0, %v789
    %791 = vdwg.mxu0
    %v792 = vadd.f32 %v769, %v788
    %v793 = vadd.f32 %v770, %v790
    %v794 = vadd.f32 %v143, %v792
    %v795 = vadd.f32 %v144, %v793
    %v796 = vld [vmem:[%s4] sm:$0x1]
    %v797 = vld [vmem:[%s5] sm:$0x1]
    %v798 = vsel %vm83, %v794, 0.0
    %799 = vadd.xlane.f32.xlu0 %v798
    %v800 = vpop.xlane.xlu0 %799
    %v801 = vsel %vm83, %v795, 0.0
    %802 = vadd.xlane.f32.xlu0 %v801
    %v803 = vpop.xlane.xlu0 %802
    %v804 = vmul.f32 %v800, %v96
    %v805 = vmul.f32 %v803, %v96
    %v806 = vsub.f32 %v794, %v804
    %v807 = vsub.f32 %v795, %v805
    %v808 = vmul.f32 %v806, %v806
    %v809 = vmul.f32 %v807, %v807
    %v810 = vsel %vm83, %v808, 0.0
    %811 = vadd.xlane.f32.xlu0 %v810
    %v812 = vpop.xlane.xlu0 %811
    %v813 = vsel %vm83, %v809, 0.0
    %814 = vadd.xlane.f32.xlu0 %v813
    %v815 = vpop.xlane.xlu0 %814
    %v816 = vmul.f32 %v812, %v96
    %v817 = vmul.f32 %v815, %v96
    %v818 = vadd.f32 %v816, 1e-12
    %v819 = vadd.f32 %v817, 1e-12
    %v820 = vrsqrt.pop %v818
    %v821 = vmul.f32 %v820, %v818
    %v822 = vmul.f32 %v821, %v820
    %v823 = vmul.f32 0.5, %v822
    %v824 = vsub.f32 1.5, %v823
    %v825 = vmul.f32 %v820, %v824
    %vm826 = vweird.f32 %v818
    %vm827 = vweird.f32 %v820
    %vm828 = vmor %vm826, %vm827
    %v829 = vsel %vm828, %v820, %v825
    %v830 = vrsqrt.pop %v819
    %v831 = vmul.f32 %v830, %v819
    %v832 = vmul.f32 %v831, %v830
    %v833 = vmul.f32 0.5, %v832
    %v834 = vsub.f32 1.5, %v833
    %v835 = vmul.f32 %v830, %v834
    %vm836 = vweird.f32 %v819
    %vm837 = vweird.f32 %v830
    %vm838 = vmor %vm836, %vm837
    %v839 = vsel %vm838, %v830, %v835
    %v840 = vmul.f32 %v806, %v829
    %v841 = vmul.f32 %v807, %v839
    %v843 = vperm.slane %v796, 0
    %v845 = vmul.f32 %v840, %v843
    %v846 = vmul.f32 %v841, %v843
    %v848 = vperm.slane %v797, 0
    %v850 = vadd.f32 %v845, %v848
    %v851 = vadd.f32 %v846, %v848
    %v852 = vld [vmem:[%s12] sm:$0xf]
    %v853 = vld [vmem:[%s12 + $0x4] sm:$0xf]
    %v854 = vld [vmem:[%s12 + $0x8] sm:$0xf]
    %v855 = vld [vmem:[%s12 + $0xc] sm:$0xf]
    %v856 = vld [vmem:[%s13] sm:$0x1]
    %v857 = vld [vmem:[%s14] sm:$0xf]
    %v858 = vld [vmem:[%s14 + $0x4] sm:$0xf]
    %v859 = vld [vmem:[%s14 + $0x8] sm:$0xf]
    %v860 = vld [vmem:[%s14 + $0xc] sm:$0xf]
    %v861 = vld [vmem:[%s14 + $0x10] sm:$0xf]
    %v862 = vld [vmem:[%s14 + $0x14] sm:$0xf]
    %v863 = vld [vmem:[%s14 + $0x18] sm:$0xf]
    %v864 = vld [vmem:[%s14 + $0x1c] sm:$0xf]
    %v865 = vld [vmem:[%s14 + $0x20] sm:$0xf]
    %v866 = vld [vmem:[%s14 + $0x24] sm:$0xf]
    %v867 = vld [vmem:[%s14 + $0x28] sm:$0xf]
    %v868 = vld [vmem:[%s14 + $0x2c] sm:$0xf]
    %v869 = vld [vmem:[%s14 + $0x30] sm:$0xf]
    %v870 = vld [vmem:[%s14 + $0x34] sm:$0xf]
    %v871 = vld [vmem:[%s14 + $0x38] sm:$0xf]
    %v872 = vld [vmem:[%s14 + $0x3c] sm:$0xf]
    %v873 = vld [vmem:[%s15] sm:$0x1]
    %v874 = vpack.c.bf16 %v851, %v850
    %v876 = vperm.slane %v856, 0
    %v882 = vunpack.c.l.b16 %v852
    %v883 = vunpack.c.l.b16 %v853
    %v884 = vunpack.c.l.b16 %v854
    %v885 = vunpack.c.l.b16 %v855
    %v886 = vpack.c.b16 %v883, %v882
    %v887 = vpack.c.b16 %v885, %v884
    %v891 = vsel %vm83, %v874, 0
    %893 = vmatpush.bf16.msra.mxu0 0
    %894 = vmatpush.bf16.msra.mxu0 0
    %895 = vmatpush.bf16.msra.mxu0 0
    %896 = vmatpush.bf16.msra.mxu0 0
    %897 = vmatpush.bf16.msra.mxu0 0
    %898 = vmatpush.bf16.msra.mxu0 0
    %899 = vmatpush.bf16.msra.mxu0 %v887
    %900 = vmatpush.bf16.msra.mxu0 %v886
    %901 = vmatmul.bf16.gmra.mxu0 %v891
    %v902 = vpop.f32.mrf.mxu0
    %v903 = vadd.f32 %v876, %v902
    %v904 = vpop.f32.mrf.mxu0
    %v905 = vadd.f32 %v876, %v904
    %906 = vdwg.mxu0
    %v907 = vmul.f32 %v903, 0.5
    %v908 = vmul.f32 %v905, 0.5
    %v909 = vmul.f32 %v903, 0.044715
    %v910 = vmul.f32 %v905, 0.044715
    %v911 = vmul.f32 %v909, %v903
    %v912 = vmul.f32 %v910, %v905
    %v913 = vmul.f32 %v911, %v903
    %v914 = vmul.f32 %v912, %v905
    %v915 = vadd.f32 %v903, %v913
    %v916 = vadd.f32 %v905, %v914
    %v917 = vmul.f32 %v915, 0.7978846
    %v918 = vmul.f32 %v916, 0.7978846
    %v919 = vtanh.pop %v917
    %v920 = vtanh.pop %v918
    %v921 = vadd.f32 %v919, 1.0
    %v922 = vadd.f32 %v920, 1.0
    %v923 = vmul.f32 %v907, %v921
    %v924 = vmul.f32 %v908, %v922
    %v925 = vpack.c.bf16 %v924, %v923
    %v927 = vperm.slane %v873, 0
    %v945 = vunpack.c.l.b16 %v857
    %v946 = vunpack.c.l.b16 %v858
    %v947 = vunpack.c.l.b16 %v859
    %v948 = vunpack.c.l.b16 %v860
    %v949 = vunpack.c.l.b16 %v861
    %v950 = vunpack.c.l.b16 %v862
    %v951 = vunpack.c.l.b16 %v863
    %v952 = vunpack.c.l.b16 %v864
    %v953 = vunpack.c.l.b16 %v865
    %v954 = vunpack.c.l.b16 %v866
    %v955 = vunpack.c.l.b16 %v867
    %v956 = vunpack.c.l.b16 %v868
    %v957 = vunpack.c.l.b16 %v869
    %v958 = vunpack.c.l.b16 %v870
    %v959 = vunpack.c.l.b16 %v871
    %v960 = vunpack.c.l.b16 %v872
    %v961 = vpack.c.b16 %v946, %v945
    %v962 = vpack.c.b16 %v948, %v947
    %v963 = vpack.c.b16 %v950, %v949
    %v964 = vpack.c.b16 %v952, %v951
    %v965 = vpack.c.b16 %v954, %v953
    %v966 = vpack.c.b16 %v956, %v955
    %v967 = vpack.c.b16 %v958, %v957
    %v968 = vpack.c.b16 %v960, %v959
    %977 = vmatpush.bf16.msra.mxu0 %v968
    %978 = vmatpush.bf16.msra.mxu0 %v967
    %979 = vmatpush.bf16.msra.mxu0 %v966
    %980 = vmatpush.bf16.msra.mxu0 %v965
    %981 = vmatpush.bf16.msra.mxu0 %v964
    %982 = vmatpush.bf16.msra.mxu0 %v963
    %983 = vmatpush.bf16.msra.mxu0 %v962
    %984 = vmatpush.bf16.msra.mxu0 %v961
    %985 = vmatmul.bf16.gmra.mxu0 %v925
    %v986 = vpop.f32.mrf.mxu0
    %v987 = vadd.f32 %v927, %v986
    %v988 = vpop.f32.mrf.mxu0
    %v989 = vadd.f32 %v927, %v988
    %990 = vdwg.mxu0
    %v991 = vadd.f32 %v850, %v987
    %v992 = vadd.f32 %v851, %v989
    %v993 = vld [vmem:[%s10] sm:$0x1]
    %v994 = vld [vmem:[%s11] sm:$0x1]
    %v995 = vsel %vm83, %v991, 0.0
    %996 = vadd.xlane.f32.xlu0 %v995
    %v997 = vpop.xlane.xlu0 %996
    %v998 = vsel %vm83, %v992, 0.0
    %999 = vadd.xlane.f32.xlu0 %v998
    %v1000 = vpop.xlane.xlu0 %999
    %v1001 = vmul.f32 %v997, %v96
    %v1002 = vmul.f32 %v1000, %v96
    %v1003 = vsub.f32 %v991, %v1001
    %v1004 = vsub.f32 %v992, %v1002
    %v1005 = vmul.f32 %v1003, %v1003
    %v1006 = vmul.f32 %v1004, %v1004
    %v1007 = vsel %vm83, %v1005, 0.0
    %1008 = vadd.xlane.f32.xlu0 %v1007
    %v1009 = vpop.xlane.xlu0 %1008
    %v1010 = vsel %vm83, %v1006, 0.0
    %1011 = vadd.xlane.f32.xlu0 %v1010
    %v1012 = vpop.xlane.xlu0 %1011
    %v1013 = vmul.f32 %v1009, %v96
    %v1014 = vmul.f32 %v1012, %v96
    %v1015 = vadd.f32 %v1013, 1e-12
    %v1016 = vadd.f32 %v1014, 1e-12
    %v1017 = vrsqrt.pop %v1015
    %v1018 = vmul.f32 %v1017, %v1015
    %v1019 = vmul.f32 %v1018, %v1017
    %v1020 = vmul.f32 0.5, %v1019
    %v1021 = vsub.f32 1.5, %v1020
    %v1022 = vmul.f32 %v1017, %v1021
    %vm1023 = vweird.f32 %v1015
    %vm1024 = vweird.f32 %v1017
    %vm1025 = vmor %vm1023, %vm1024
    %v1026 = vsel %vm1025, %v1017, %v1022
    %v1027 = vrsqrt.pop %v1016
    %v1028 = vmul.f32 %v1027, %v1016
    %v1029 = vmul.f32 %v1028, %v1027
    %v1030 = vmul.f32 0.5, %v1029
    %v1031 = vsub.f32 1.5, %v1030
    %v1032 = vmul.f32 %v1027, %v1031
    %vm1033 = vweird.f32 %v1016
    %vm1034 = vweird.f32 %v1027
    %vm1035 = vmor %vm1033, %vm1034
    %v1036 = vsel %vm1035, %v1027, %v1032
    %v1037 = vmul.f32 %v1003, %v1026
    %v1038 = vmul.f32 %v1004, %v1036
    %v1040 = vperm.slane %v993, 0
    %v1042 = vmul.f32 %v1037, %v1040
    %v1043 = vmul.f32 %v1038, %v1040
    %v1045 = vperm.slane %v994, 0
    %v1047 = vadd.f32 %v1042, %v1045
    %v1048 = vadd.f32 %v1043, %v1045
    %s1049 = scalar_lea.vmem %s6, 16
    %v1050 = vld [vmem:[%s1049] sm:$0xf]
    %v1051 = vld [vmem:[%s1049 + $0x4] sm:$0xf]
    %v1052 = vld [vmem:[%s1049 + $0x8] sm:$0xf]
    %v1053 = vld [vmem:[%s1049 + $0xc] sm:$0xf]
    %s1054 = scalar_lea.vmem %s7, 1
    %v1055 = vld [vmem:[%s1054] sm:$0x1]
    %s1056 = scalar_lea.vmem %s8, 16
    %v1057 = vld [vmem:[%s1056] sm:$0xf]
    %v1058 = vld [vmem:[%s1056 + $0x4] sm:$0xf]
    %v1059 = vld [vmem:[%s1056 + $0x8] sm:$0xf]
    %v1060 = vld [vmem:[%s1056 + $0xc] sm:$0xf]
    %s1061 = scalar_lea.vmem %s9, 1
    %v1062 = vld [vmem:[%s1061] sm:$0x1]
    %v1063 = vpack.c.bf16 %v1048, %v1047
    %v1065 = vperm.slane %v1055, 0
    %v1071 = vunpack.c.l.b16 %v1050
    %v1072 = vunpack.c.l.b16 %v1051
    %v1073 = vunpack.c.l.b16 %v1052
    %v1074 = vunpack.c.l.b16 %v1053
    %v1075 = vpack.c.b16 %v1072, %v1071
    %v1076 = vpack.c.b16 %v1074, %v1073
    %v1080 = vsel %vm83, %v1063, 0
    %1082 = vmatpush.bf16.msra.mxu0 0
    %1083 = vmatpush.bf16.msra.mxu0 0
    %1084 = vmatpush.bf16.msra.mxu0 0
    %1085 = vmatpush.bf16.msra.mxu0 0
    %1086 = vmatpush.bf16.msra.mxu0 0
    %1087 = vmatpush.bf16.msra.mxu0 0
    %1088 = vmatpush.bf16.msra.mxu0 %v1076
    %1089 = vmatpush.bf16.msra.mxu0 %v1075
    %1090 = vmatmul.bf16.gmra.mxu0 %v1080
    %v1091 = vpop.f32.mrf.mxu0
    %v1092 = vadd.f32 %v1065, %v1091
    %v1093 = vpop.f32.mrf.mxu0
    %v1094 = vadd.f32 %v1065, %v1093
    %1095 = vdwg.mxu0
    %1098 = vrot.lane.b32.xlu0 %v1092, 120
    %v1099 = vpop.permute.xlu0 %1098
    %1100 = vrot.lane.b32.xlu0 %v1094, 120
    %v1101 = vpop.permute.xlu0 %1100
    %1104 = vrot.lane.b32.xlu0 %v1092, 112
    %v1105 = vpop.permute.xlu0 %1104
    %1106 = vrot.lane.b32.xlu0 %v1094, 112
    %v1107 = vpop.permute.xlu0 %1106
    %1110 = vrot.lane.b32.xlu0 %v1092, 104
    %v1111 = vpop.permute.xlu0 %1110
    %1112 = vrot.lane.b32.xlu0 %v1094, 104
    %v1113 = vpop.permute.xlu0 %1112
    %v1116 = vpack.c.bf16 %v1092, %v1092
    %v1117 = vpack.c.bf16 %v1094, %v1094
    %v1118 = vpack.c.bf16 %v1099, %v1099
    %v1119 = vpack.c.bf16 %v1101, %v1101
    %v1120 = vpack.c.bf16 %v1105, %v1105
    %v1121 = vpack.c.bf16 %v1107, %v1107
    %v1122 = vpack.c.bf16 %v1111, %v1111
    %v1123 = vpack.c.bf16 %v1113, %v1113
    %v1125 = vunpack.c.l.b16 %v1116
    %v1126 = vpack.c.b16 %v1125, %v1125
    %1127 = vrot.lane.b32.xlu0 %v1126, 96
    %v1128 = vpop.permute.xlu0 %1127
    %v1130 = vsel %vm226, %v1116, 0
    %v1133 = vsel %vm226, %v1128, 0
    %1135 = vmatpush.bf16.xpose.msra.mxu0 0
    %1136 = vmatpush.bf16.xpose.msra.mxu0 0
    %1137 = vmatpush.bf16.xpose.msra.mxu0 0
    %1138 = vmatpush.bf16.xpose.msra.mxu0 0
    %1139 = vmatpush.bf16.xpose.msra.mxu0 0
    %1140 = vmatpush.bf16.xpose.msra.mxu0 0
    %1141 = vmatpush.bf16.xpose.msra.mxu0 0
    %1142 = vmatpush.bf16.xpose.msra.mxu0 %v1133
    %1143 = vmatmul.bf16.gmra.mxu0 %v1130
    %v1144 = vpop.f32.mrf.mxu0
    %v1145 = vadd.f32 0.0, %v1144
    %v1146 = vpop.f32.mrf.mxu0
    %1147 = vdwg.mxu0
    %v1149 = vunpack.c.l.b16 %v1117
    %v1150 = vpack.c.b16 %v1149, %v1149
    %1151 = vrot.lane.b32.xlu0 %v1150, 96
    %v1152 = vpop.permute.xlu0 %1151
    %v1154 = vsel %vm226, %v1117, 0
    %v1157 = vsel %vm226, %v1152, 0
    %1159 = vmatpush.bf16.xpose.msra.mxu0 0
    %1160 = vmatpush.bf16.xpose.msra.mxu0 0
    %1161 = vmatpush.bf16.xpose.msra.mxu0 0
    %1162 = vmatpush.bf16.xpose.msra.mxu0 0
    %1163 = vmatpush.bf16.xpose.msra.mxu0 0
    %1164 = vmatpush.bf16.xpose.msra.mxu0 0
    %1165 = vmatpush.bf16.xpose.msra.mxu0 0
    %1166 = vmatpush.bf16.xpose.msra.mxu0 %v1157
    %1167 = vmatmul.bf16.gmra.mxu0 %v1154
    %v1168 = vpop.f32.mrf.mxu0
    %v1169 = vadd.f32 0.0, %v1168
    %v1170 = vpop.f32.mrf.mxu0
    %1171 = vdwg.mxu0
    %v1173 = vunpack.c.l.b16 %v1118
    %v1174 = vpack.c.b16 %v1173, %v1173
    %1175 = vrot.lane.b32.xlu0 %v1174, 96
    %v1176 = vpop.permute.xlu0 %1175
    %v1178 = vsel %vm226, %v1118, 0
    %v1181 = vsel %vm226, %v1176, 0
    %1183 = vmatpush.bf16.xpose.msra.mxu0 0
    %1184 = vmatpush.bf16.xpose.msra.mxu0 0
    %1185 = vmatpush.bf16.xpose.msra.mxu0 0
    %1186 = vmatpush.bf16.xpose.msra.mxu0 0
    %1187 = vmatpush.bf16.xpose.msra.mxu0 0
    %1188 = vmatpush.bf16.xpose.msra.mxu0 0
    %1189 = vmatpush.bf16.xpose.msra.mxu0 0
    %1190 = vmatpush.bf16.xpose.msra.mxu0 %v1181
    %1191 = vmatmul.bf16.gmra.mxu0 %v1178
    %v1192 = vpop.f32.mrf.mxu0
    %v1193 = vadd.f32 0.0, %v1192
    %v1194 = vpop.f32.mrf.mxu0
    %1195 = vdwg.mxu0
    %v1197 = vunpack.c.l.b16 %v1119
    %v1198 = vpack.c.b16 %v1197, %v1197
    %1199 = vrot.lane.b32.xlu0 %v1198, 96
    %v1200 = vpop.permute.xlu0 %1199
    %v1202 = vsel %vm226, %v1119, 0
    %v1205 = vsel %vm226, %v1200, 0
    %1207 = vmatpush.bf16.xpose.msra.mxu0 0
    %1208 = vmatpush.bf16.xpose.msra.mxu0 0
    %1209 = vmatpush.bf16.xpose.msra.mxu0 0
    %1210 = vmatpush.bf16.xpose.msra.mxu0 0
    %1211 = vmatpush.bf16.xpose.msra.mxu0 0
    %1212 = vmatpush.bf16.xpose.msra.mxu0 0
    %1213 = vmatpush.bf16.xpose.msra.mxu0 0
    %1214 = vmatpush.bf16.xpose.msra.mxu0 %v1205
    %1215 = vmatmul.bf16.gmra.mxu0 %v1202
    %v1216 = vpop.f32.mrf.mxu0
    %v1217 = vadd.f32 0.0, %v1216
    %v1218 = vpop.f32.mrf.mxu0
    %1219 = vdwg.mxu0
    %v1221 = vunpack.c.l.b16 %v1120
    %v1222 = vpack.c.b16 %v1221, %v1221
    %1223 = vrot.lane.b32.xlu0 %v1222, 96
    %v1224 = vpop.permute.xlu0 %1223
    %v1226 = vsel %vm226, %v1120, 0
    %v1229 = vsel %vm226, %v1224, 0
    %1231 = vmatpush.bf16.xpose.msra.mxu0 0
    %1232 = vmatpush.bf16.xpose.msra.mxu0 0
    %1233 = vmatpush.bf16.xpose.msra.mxu0 0
    %1234 = vmatpush.bf16.xpose.msra.mxu0 0
    %1235 = vmatpush.bf16.xpose.msra.mxu0 0
    %1236 = vmatpush.bf16.xpose.msra.mxu0 0
    %1237 = vmatpush.bf16.xpose.msra.mxu0 0
    %1238 = vmatpush.bf16.xpose.msra.mxu0 %v1229
    %1239 = vmatmul.bf16.gmra.mxu0 %v1226
    %v1240 = vpop.f32.mrf.mxu0
    %v1241 = vadd.f32 0.0, %v1240
    %v1242 = vpop.f32.mrf.mxu0
    %1243 = vdwg.mxu0
    %v1245 = vunpack.c.l.b16 %v1121
    %v1246 = vpack.c.b16 %v1245, %v1245
    %1247 = vrot.lane.b32.xlu0 %v1246, 96
    %v1248 = vpop.permute.xlu0 %1247
    %v1250 = vsel %vm226, %v1121, 0
    %v1253 = vsel %vm226, %v1248, 0
    %1255 = vmatpush.bf16.xpose.msra.mxu0 0
    %1256 = vmatpush.bf16.xpose.msra.mxu0 0
    %1257 = vmatpush.bf16.xpose.msra.mxu0 0
    %1258 = vmatpush.bf16.xpose.msra.mxu0 0
    %1259 = vmatpush.bf16.xpose.msra.mxu0 0
    %1260 = vmatpush.bf16.xpose.msra.mxu0 0
    %1261 = vmatpush.bf16.xpose.msra.mxu0 0
    %1262 = vmatpush.bf16.xpose.msra.mxu0 %v1253
    %1263 = vmatmul.bf16.gmra.mxu0 %v1250
    %v1264 = vpop.f32.mrf.mxu0
    %v1265 = vadd.f32 0.0, %v1264
    %v1266 = vpop.f32.mrf.mxu0
    %1267 = vdwg.mxu0
    %v1269 = vunpack.c.l.b16 %v1122
    %v1270 = vpack.c.b16 %v1269, %v1269
    %1271 = vrot.lane.b32.xlu0 %v1270, 96
    %v1272 = vpop.permute.xlu0 %1271
    %v1274 = vsel %vm226, %v1122, 0
    %v1277 = vsel %vm226, %v1272, 0
    %1279 = vmatpush.bf16.xpose.msra.mxu0 0
    %1280 = vmatpush.bf16.xpose.msra.mxu0 0
    %1281 = vmatpush.bf16.xpose.msra.mxu0 0
    %1282 = vmatpush.bf16.xpose.msra.mxu0 0
    %1283 = vmatpush.bf16.xpose.msra.mxu0 0
    %1284 = vmatpush.bf16.xpose.msra.mxu0 0
    %1285 = vmatpush.bf16.xpose.msra.mxu0 0
    %1286 = vmatpush.bf16.xpose.msra.mxu0 %v1277
    %1287 = vmatmul.bf16.gmra.mxu0 %v1274
    %v1288 = vpop.f32.mrf.mxu0
    %v1289 = vadd.f32 0.0, %v1288
    %v1290 = vpop.f32.mrf.mxu0
    %1291 = vdwg.mxu0
    %v1293 = vunpack.c.l.b16 %v1123
    %v1294 = vpack.c.b16 %v1293, %v1293
    %1295 = vrot.lane.b32.xlu0 %v1294, 96
    %v1296 = vpop.permute.xlu0 %1295
    %v1298 = vsel %vm226, %v1123, 0
    %v1301 = vsel %vm226, %v1296, 0
    %1303 = vmatpush.bf16.xpose.msra.mxu0 0
    %1304 = vmatpush.bf16.xpose.msra.mxu0 0
    %1305 = vmatpush.bf16.xpose.msra.mxu0 0
    %1306 = vmatpush.bf16.xpose.msra.mxu0 0
    %1307 = vmatpush.bf16.xpose.msra.mxu0 0
    %1308 = vmatpush.bf16.xpose.msra.mxu0 0
    %1309 = vmatpush.bf16.xpose.msra.mxu0 0
    %1310 = vmatpush.bf16.xpose.msra.mxu0 %v1301
    %1311 = vmatmul.bf16.gmra.mxu0 %v1298
    %v1312 = vpop.f32.mrf.mxu0
    %v1313 = vadd.f32 0.0, %v1312
    %v1314 = vpop.f32.mrf.mxu0
    %1315 = vdwg.mxu0
    %v1316 = vmul.f32 %v1145, 0.35355338
    %v1317 = vmul.f32 %v1169, 0.35355338
    %v1318 = vmul.f32 %v1193, 0.35355338
    %v1319 = vmul.f32 %v1217, 0.35355338
    %v1320 = vmul.f32 %v1241, 0.35355338
    %v1321 = vmul.f32 %v1265, 0.35355338
    %v1322 = vmul.f32 %v1289, 0.35355338
    %v1323 = vmul.f32 %v1313, 0.35355338
    %v1324 = vadd.f32 %v1316, %v422
    %v1325 = vadd.f32 %v1317, %v423
    %v1326 = vadd.f32 %v1318, %v422
    %v1327 = vadd.f32 %v1319, %v423
    %v1328 = vadd.f32 %v1320, %v422
    %v1329 = vadd.f32 %v1321, %v423
    %v1330 = vadd.f32 %v1322, %v422
    %v1331 = vadd.f32 %v1323, %v423
    %v1332 = vsel %vm226, %v1324, -inf
    %1333 = vmax.xlane.f32.xlu0 %v1332
    %v1334 = vpop.xlane.xlu0 %1333
    %v1335 = vsel %vm226, %v1325, -inf
    %1336 = vmax.xlane.f32.xlu0 %v1335
    %v1337 = vpop.xlane.xlu0 %1336
    %v1338 = vsel %vm226, %v1326, -inf
    %1339 = vmax.xlane.f32.xlu0 %v1338
    %v1340 = vpop.xlane.xlu0 %1339
    %v1341 = vsel %vm226, %v1327, -inf
    %1342 = vmax.xlane.f32.xlu0 %v1341
    %v1343 = vpop.xlane.xlu0 %1342
    %v1344 = vsel %vm226, %v1328, -inf
    %1345 = vmax.xlane.f32.xlu0 %v1344
    %v1346 = vpop.xlane.xlu0 %1345
    %v1347 = vsel %vm226, %v1329, -inf
    %1348 = vmax.xlane.f32.xlu0 %v1347
    %v1349 = vpop.xlane.xlu0 %1348
    %v1350 = vsel %vm226, %v1330, -inf
    %1351 = vmax.xlane.f32.xlu0 %v1350
    %v1352 = vpop.xlane.xlu0 %1351
    %v1353 = vsel %vm226, %v1331, -inf
    %1354 = vmax.xlane.f32.xlu0 %v1353
    %v1355 = vpop.xlane.xlu0 %1354
    %v1356 = vsub.f32 %v1324, %v1334
    %v1357 = vsub.f32 %v1325, %v1337
    %v1358 = vsub.f32 %v1326, %v1340
    %v1359 = vsub.f32 %v1327, %v1343
    %v1360 = vsub.f32 %v1328, %v1346
    %v1361 = vsub.f32 %v1329, %v1349
    %v1362 = vsub.f32 %v1330, %v1352
    %v1363 = vsub.f32 %v1331, %v1355
    %v1364 = vmul.f32 %v1356, 1.442695
    %v1365 = vpow.pop %v1364
    %v1366 = vmul.f32 %v1357, 1.442695
    %v1367 = vpow.pop %v1366
    %v1368 = vmul.f32 %v1358, 1.442695
    %v1369 = vpow.pop %v1368
    %v1370 = vmul.f32 %v1359, 1.442695
    %v1371 = vpow.pop %v1370
    %v1372 = vmul.f32 %v1360, 1.442695
    %v1373 = vpow.pop %v1372
    %v1374 = vmul.f32 %v1361, 1.442695
    %v1375 = vpow.pop %v1374
    %v1376 = vmul.f32 %v1362, 1.442695
    %v1377 = vpow.pop %v1376
    %v1378 = vmul.f32 %v1363, 1.442695
    %v1379 = vpow.pop %v1378
    %v1380 = vsel %vm226, %v1365, 0.0
    %1381 = vadd.xlane.f32.xlu0 %v1380
    %v1382 = vpop.xlane.xlu0 %1381
    %v1383 = vsel %vm226, %v1367, 0.0
    %1384 = vadd.xlane.f32.xlu0 %v1383
    %v1385 = vpop.xlane.xlu0 %1384
    %v1386 = vsel %vm226, %v1369, 0.0
    %1387 = vadd.xlane.f32.xlu0 %v1386
    %v1388 = vpop.xlane.xlu0 %1387
    %v1389 = vsel %vm226, %v1371, 0.0
    %1390 = vadd.xlane.f32.xlu0 %v1389
    %v1391 = vpop.xlane.xlu0 %1390
    %v1392 = vsel %vm226, %v1373, 0.0
    %1393 = vadd.xlane.f32.xlu0 %v1392
    %v1394 = vpop.xlane.xlu0 %1393
    %v1395 = vsel %vm226, %v1375, 0.0
    %1396 = vadd.xlane.f32.xlu0 %v1395
    %v1397 = vpop.xlane.xlu0 %1396
    %v1398 = vsel %vm226, %v1377, 0.0
    %1399 = vadd.xlane.f32.xlu0 %v1398
    %v1400 = vpop.xlane.xlu0 %1399
    %v1401 = vsel %vm226, %v1379, 0.0
    %1402 = vadd.xlane.f32.xlu0 %v1401
    %v1403 = vpop.xlane.xlu0 %1402
    %v1404 = vrcp.pop %v1382
    %v1405 = vrcp.pop %v1385
    %v1406 = vrcp.pop %v1388
    %v1407 = vrcp.pop %v1391
    %v1408 = vrcp.pop %v1394
    %v1409 = vrcp.pop %v1397
    %v1410 = vrcp.pop %v1400
    %v1411 = vrcp.pop %v1403
    %v1412 = vmul.f32 %v1365, %v1404
    %v1413 = vmul.f32 %v1367, %v1405
    %v1414 = vmul.f32 %v1369, %v1406
    %v1415 = vmul.f32 %v1371, %v1407
    %v1416 = vmul.f32 %v1373, %v1408
    %v1417 = vmul.f32 %v1375, %v1409
    %v1418 = vmul.f32 %v1377, %v1410
    %v1419 = vmul.f32 %v1379, %v1411
    %v1420 = vpack.c.bf16 %v1412, %v1412
    %v1421 = vpack.c.bf16 %v1413, %v1413
    %v1422 = vpack.c.bf16 %v1414, %v1414
    %v1423 = vpack.c.bf16 %v1415, %v1415
    %v1424 = vpack.c.bf16 %v1416, %v1416
    %v1425 = vpack.c.bf16 %v1417, %v1417
    %v1426 = vpack.c.bf16 %v1418, %v1418
    %v1427 = vpack.c.bf16 %v1419, %v1419
    %1428 = vrot.lane.b32.xlu0 %v1126, 64
    %v1429 = vpop.permute.xlu0 %1428
    %v1431 = vsel %vm226, %v1420, 0
    %v1434 = vsel %vm535, %v1429, 0
    %1436 = vmatpush.bf16.msra.mxu0 0
    %1437 = vmatpush.bf16.msra.mxu0 0
    %1438 = vmatpush.bf16.msra.mxu0 0
    %1439 = vmatpush.bf16.msra.mxu0 0
    %1440 = vmatpush.bf16.msra.mxu0 0
    %1441 = vmatpush.bf16.msra.mxu0 0
    %1442 = vmatpush.bf16.msra.mxu0 0
    %1443 = vmatpush.bf16.msra.mxu0 %v1434
    %1444 = vmatmul.bf16.gmra.mxu0 %v1431
    %v1445 = vpop.f32.mrf.mxu0
    %v1446 = vadd.f32 0.0, %v1445
    %v1447 = vpop.f32.mrf.mxu0
    %1448 = vdwg.mxu0
    %1449 = vrot.lane.b32.xlu0 %v1150, 64
    %v1450 = vpop.permute.xlu0 %1449
    %v1452 = vsel %vm226, %v1421, 0
    %v1455 = vsel %vm535, %v1450, 0
    %1457 = vmatpush.bf16.msra.mxu0 0
    %1458 = vmatpush.bf16.msra.mxu0 0
    %1459 = vmatpush.bf16.msra.mxu0 0
    %1460 = vmatpush.bf16.msra.mxu0 0
    %1461 = vmatpush.bf16.msra.mxu0 0
    %1462 = vmatpush.bf16.msra.mxu0 0
    %1463 = vmatpush.bf16.msra.mxu0 0
    %1464 = vmatpush.bf16.msra.mxu0 %v1455
    %1465 = vmatmul.bf16.gmra.mxu0 %v1452
    %v1466 = vpop.f32.mrf.mxu0
    %v1467 = vadd.f32 0.0, %v1466
    %v1468 = vpop.f32.mrf.mxu0
    %1469 = vdwg.mxu0
    %1470 = vrot.lane.b32.xlu0 %v1174, 64
    %v1471 = vpop.permute.xlu0 %1470
    %v1473 = vsel %vm226, %v1422, 0
    %v1476 = vsel %vm535, %v1471, 0
    %1478 = vmatpush.bf16.msra.mxu0 0
    %1479 = vmatpush.bf16.msra.mxu0 0
    %1480 = vmatpush.bf16.msra.mxu0 0
    %1481 = vmatpush.bf16.msra.mxu0 0
    %1482 = vmatpush.bf16.msra.mxu0 0
    %1483 = vmatpush.bf16.msra.mxu0 0
    %1484 = vmatpush.bf16.msra.mxu0 0
    %1485 = vmatpush.bf16.msra.mxu0 %v1476
    %1486 = vmatmul.bf16.gmra.mxu0 %v1473
    %v1487 = vpop.f32.mrf.mxu0
    %v1488 = vadd.f32 0.0, %v1487
    %v1489 = vpop.f32.mrf.mxu0
    %1490 = vdwg.mxu0
    %1491 = vrot.lane.b32.xlu0 %v1198, 64
    %v1492 = vpop.permute.xlu0 %1491
    %v1494 = vsel %vm226, %v1423, 0
    %v1497 = vsel %vm535, %v1492, 0
    %1499 = vmatpush.bf16.msra.mxu0 0
    %1500 = vmatpush.bf16.msra.mxu0 0
    %1501 = vmatpush.bf16.msra.mxu0 0
    %1502 = vmatpush.bf16.msra.mxu0 0
    %1503 = vmatpush.bf16.msra.mxu0 0
    %1504 = vmatpush.bf16.msra.mxu0 0
    %1505 = vmatpush.bf16.msra.mxu0 0
    %1506 = vmatpush.bf16.msra.mxu0 %v1497
    %1507 = vmatmul.bf16.gmra.mxu0 %v1494
    %v1508 = vpop.f32.mrf.mxu0
    %v1509 = vadd.f32 0.0, %v1508
    %v1510 = vpop.f32.mrf.mxu0
    %1511 = vdwg.mxu0
    %1512 = vrot.lane.b32.xlu0 %v1222, 64
    %v1513 = vpop.permute.xlu0 %1512
    %v1515 = vsel %vm226, %v1424, 0
    %v1518 = vsel %vm535, %v1513, 0
    %1520 = vmatpush.bf16.msra.mxu0 0
    %1521 = vmatpush.bf16.msra.mxu0 0
    %1522 = vmatpush.bf16.msra.mxu0 0
    %1523 = vmatpush.bf16.msra.mxu0 0
    %1524 = vmatpush.bf16.msra.mxu0 0
    %1525 = vmatpush.bf16.msra.mxu0 0
    %1526 = vmatpush.bf16.msra.mxu0 0
    %1527 = vmatpush.bf16.msra.mxu0 %v1518
    %1528 = vmatmul.bf16.gmra.mxu0 %v1515
    %v1529 = vpop.f32.mrf.mxu0
    %v1530 = vadd.f32 0.0, %v1529
    %v1531 = vpop.f32.mrf.mxu0
    %1532 = vdwg.mxu0
    %1533 = vrot.lane.b32.xlu0 %v1246, 64
    %v1534 = vpop.permute.xlu0 %1533
    %v1536 = vsel %vm226, %v1425, 0
    %v1539 = vsel %vm535, %v1534, 0
    %1541 = vmatpush.bf16.msra.mxu0 0
    %1542 = vmatpush.bf16.msra.mxu0 0
    %1543 = vmatpush.bf16.msra.mxu0 0
    %1544 = vmatpush.bf16.msra.mxu0 0
    %1545 = vmatpush.bf16.msra.mxu0 0
    %1546 = vmatpush.bf16.msra.mxu0 0
    %1547 = vmatpush.bf16.msra.mxu0 0
    %1548 = vmatpush.bf16.msra.mxu0 %v1539
    %1549 = vmatmul.bf16.gmra.mxu0 %v1536
    %v1550 = vpop.f32.mrf.mxu0
    %v1551 = vadd.f32 0.0, %v1550
    %v1552 = vpop.f32.mrf.mxu0
    %1553 = vdwg.mxu0
    %1554 = vrot.lane.b32.xlu0 %v1270, 64
    %v1555 = vpop.permute.xlu0 %1554
    %v1557 = vsel %vm226, %v1426, 0
    %v1560 = vsel %vm535, %v1555, 0
    %1562 = vmatpush.bf16.msra.mxu0 0
    %1563 = vmatpush.bf16.msra.mxu0 0
    %1564 = vmatpush.bf16.msra.mxu0 0
    %1565 = vmatpush.bf16.msra.mxu0 0
    %1566 = vmatpush.bf16.msra.mxu0 0
    %1567 = vmatpush.bf16.msra.mxu0 0
    %1568 = vmatpush.bf16.msra.mxu0 0
    %1569 = vmatpush.bf16.msra.mxu0 %v1560
    %1570 = vmatmul.bf16.gmra.mxu0 %v1557
    %v1571 = vpop.f32.mrf.mxu0
    %v1572 = vadd.f32 0.0, %v1571
    %v1573 = vpop.f32.mrf.mxu0
    %1574 = vdwg.mxu0
    %1575 = vrot.lane.b32.xlu0 %v1294, 64
    %v1576 = vpop.permute.xlu0 %1575
    %v1578 = vsel %vm226, %v1427, 0
    %v1581 = vsel %vm535, %v1576, 0
    %1583 = vmatpush.bf16.msra.mxu0 0
    %1584 = vmatpush.bf16.msra.mxu0 0
    %1585 = vmatpush.bf16.msra.mxu0 0
    %1586 = vmatpush.bf16.msra.mxu0 0
    %1587 = vmatpush.bf16.msra.mxu0 0
    %1588 = vmatpush.bf16.msra.mxu0 0
    %1589 = vmatpush.bf16.msra.mxu0 0
    %1590 = vmatpush.bf16.msra.mxu0 %v1581
    %1591 = vmatmul.bf16.gmra.mxu0 %v1578
    %v1592 = vpop.f32.mrf.mxu0
    %v1593 = vadd.f32 0.0, %v1592
    %v1594 = vpop.f32.mrf.mxu0
    %1595 = vdwg.mxu0
    %v1596 = vpack.c.bf16 %v1467, %v1446
    %v1598 = vsel %vm226, %v1596, 0
    %v1601 = vsel %vm535, %v1057, 0
    %1603 = vmatpush.bf16.msra.mxu0 0
    %1604 = vmatpush.bf16.msra.mxu0 0
    %1605 = vmatpush.bf16.msra.mxu0 0
    %1606 = vmatpush.bf16.msra.mxu0 0
    %1607 = vmatpush.bf16.msra.mxu0 0
    %1608 = vmatpush.bf16.msra.mxu0 0
    %1609 = vmatpush.bf16.msra.mxu0 0
    %1610 = vmatpush.bf16.msra.mxu0 %v1601
    %1611 = vmatmul.bf16.gmra.mxu0 %v1598
    %v1612 = vpop.f32.mrf.mxu0
    %v1613 = vadd.f32 0.0, %v1612
    %v1614 = vpop.f32.mrf.mxu0
    %v1615 = vadd.f32 0.0, %v1614
    %1616 = vdwg.mxu0
    %v1618 = vperm.slane %v1062, 0
    %v1620 = vadd.f32 %v1618, %v1613
    %v1621 = vadd.f32 %v1618, %v1615
    %v1622 = vpack.c.bf16 %v1509, %v1488
    %v1624 = vsel %vm226, %v1622, 0
    %v1627 = vsel %vm535, %v1058, 0
    %1629 = vmatpush.bf16.msra.mxu0 0
    %1630 = vmatpush.bf16.msra.mxu0 0
    %1631 = vmatpush.bf16.msra.mxu0 0
    %1632 = vmatpush.bf16.msra.mxu0 0
    %1633 = vmatpush.bf16.msra.mxu0 0
    %1634 = vmatpush.bf16.msra.mxu0 0
    %1635 = vmatpush.bf16.msra.mxu0 0
    %1636 = vmatpush.bf16.msra.mxu0 %v1627
    %1637 = vmatmul.bf16.gmra.mxu0 %v1624
    %v1638 = vpop.f32.mrf.mxu0
    %v1639 = vadd.f32 0.0, %v1638
    %v1640 = vpop.f32.mrf.mxu0
    %v1641 = vadd.f32 0.0, %v1640
    %1642 = vdwg.mxu0
    %v1643 = vadd.f32 %v1620, %v1639
    %v1644 = vadd.f32 %v1621, %v1641
    %v1645 = vpack.c.bf16 %v1551, %v1530
    %v1647 = vsel %vm226, %v1645, 0
    %v1650 = vsel %vm535, %v1059, 0
    %1652 = vmatpush.bf16.msra.mxu0 0
    %1653 = vmatpush.bf16.msra.mxu0 0
    %1654 = vmatpush.bf16.msra.mxu0 0
    %1655 = vmatpush.bf16.msra.mxu0 0
    %1656 = vmatpush.bf16.msra.mxu0 0
    %1657 = vmatpush.bf16.msra.mxu0 0
    %1658 = vmatpush.bf16.msra.mxu0 0
    %1659 = vmatpush.bf16.msra.mxu0 %v1650
    %1660 = vmatmul.bf16.gmra.mxu0 %v1647
    %v1661 = vpop.f32.mrf.mxu0
    %v1662 = vadd.f32 0.0, %v1661
    %v1663 = vpop.f32.mrf.mxu0
    %v1664 = vadd.f32 0.0, %v1663
    %1665 = vdwg.mxu0
    %v1666 = vadd.f32 %v1643, %v1662
    %v1667 = vadd.f32 %v1644, %v1664
    %v1668 = vpack.c.bf16 %v1593, %v1572
    %v1670 = vsel %vm226, %v1668, 0
    %v1673 = vsel %vm535, %v1060, 0
    %1675 = vmatpush.bf16.msra.mxu0 0
    %1676 = vmatpush.bf16.msra.mxu0 0
    %1677 = vmatpush.bf16.msra.mxu0 0
    %1678 = vmatpush.bf16.msra.mxu0 0
    %1679 = vmatpush.bf16.msra.mxu0 0
    %1680 = vmatpush.bf16.msra.mxu0 0
    %1681 = vmatpush.bf16.msra.mxu0 0
    %1682 = vmatpush.bf16.msra.mxu0 %v1673
    %1683 = vmatmul.bf16.gmra.mxu0 %v1670
    %v1684 = vpop.f32.mrf.mxu0
    %v1685 = vadd.f32 0.0, %v1684
    %v1686 = vpop.f32.mrf.mxu0
    %v1687 = vadd.f32 0.0, %v1686
    %1688 = vdwg.mxu0
    %v1689 = vadd.f32 %v1666, %v1685
    %v1690 = vadd.f32 %v1667, %v1687
    %v1691 = vadd.f32 %v1047, %v1689
    %v1692 = vadd.f32 %v1048, %v1690
    %s1693 = scalar_lea.vmem %s4, 1
    %v1694 = vld [vmem:[%s1693] sm:$0x1]
    %s1695 = scalar_lea.vmem %s5, 1
    %v1696 = vld [vmem:[%s1695] sm:$0x1]
    %v1697 = vsel %vm83, %v1691, 0.0
    %1698 = vadd.xlane.f32.xlu0 %v1697
    %v1699 = vpop.xlane.xlu0 %1698
    %v1700 = vsel %vm83, %v1692, 0.0
    %1701 = vadd.xlane.f32.xlu0 %v1700
    %v1702 = vpop.xlane.xlu0 %1701
    %v1703 = vmul.f32 %v1699, %v96
    %v1704 = vmul.f32 %v1702, %v96
    %v1705 = vsub.f32 %v1691, %v1703
    %v1706 = vsub.f32 %v1692, %v1704
    %v1707 = vmul.f32 %v1705, %v1705
    %v1708 = vmul.f32 %v1706, %v1706
    %v1709 = vsel %vm83, %v1707, 0.0
    %1710 = vadd.xlane.f32.xlu0 %v1709
    %v1711 = vpop.xlane.xlu0 %1710
    %v1712 = vsel %vm83, %v1708, 0.0
    %1713 = vadd.xlane.f32.xlu0 %v1712
    %v1714 = vpop.xlane.xlu0 %1713
    %v1715 = vmul.f32 %v1711, %v96
    %v1716 = vmul.f32 %v1714, %v96
    %v1717 = vadd.f32 %v1715, 1e-12
    %v1718 = vadd.f32 %v1716, 1e-12
    %v1719 = vrsqrt.pop %v1717
    %v1720 = vmul.f32 %v1719, %v1717
    %v1721 = vmul.f32 %v1720, %v1719
    %v1722 = vmul.f32 0.5, %v1721
    %v1723 = vsub.f32 1.5, %v1722
    %v1724 = vmul.f32 %v1719, %v1723
    %vm1725 = vweird.f32 %v1717
    %vm1726 = vweird.f32 %v1719
    %vm1727 = vmor %vm1725, %vm1726
    %v1728 = vsel %vm1727, %v1719, %v1724
    %v1729 = vrsqrt.pop %v1718
    %v1730 = vmul.f32 %v1729, %v1718
    %v1731 = vmul.f32 %v1730, %v1729
    %v1732 = vmul.f32 0.5, %v1731
    %v1733 = vsub.f32 1.5, %v1732
    %v1734 = vmul.f32 %v1729, %v1733
    %vm1735 = vweird.f32 %v1718
    %vm1736 = vweird.f32 %v1729
    %vm1737 = vmor %vm1735, %vm1736
    %v1738 = vsel %vm1737, %v1729, %v1734
    %v1739 = vmul.f32 %v1705, %v1728
    %v1740 = vmul.f32 %v1706, %v1738
    %v1742 = vperm.slane %v1694, 0
    %v1744 = vmul.f32 %v1739, %v1742
    %v1745 = vmul.f32 %v1740, %v1742
    %v1747 = vperm.slane %v1696, 0
    %v1749 = vadd.f32 %v1744, %v1747
    %v1750 = vadd.f32 %v1745, %v1747
    %s1751 = scalar_lea.vmem %s12, 16
    %v1752 = vld [vmem:[%s1751] sm:$0xf]
    %v1753 = vld [vmem:[%s1751 + $0x4] sm:$0xf]
    %v1754 = vld [vmem:[%s1751 + $0x8] sm:$0xf]
    %v1755 = vld [vmem:[%s1751 + $0xc] sm:$0xf]
    %s1756 = scalar_lea.vmem %s13, 1
    %v1757 = vld [vmem:[%s1756] sm:$0x1]
    %s1758 = scalar_lea.vmem %s14, 64
    %v1759 = vld [vmem:[%s1758] sm:$0xf]
    %v1760 = vld [vmem:[%s1758 + $0x4] sm:$0xf]
    %v1761 = vld [vmem:[%s1758 + $0x8] sm:$0xf]
    %v1762 = vld [vmem:[%s1758 + $0xc] sm:$0xf]
    %v1763 = vld [vmem:[%s1758 + $0x10] sm:$0xf]
    %v1764 = vld [vmem:[%s1758 + $0x14] sm:$0xf]
    %v1765 = vld [vmem:[%s1758 + $0x18] sm:$0xf]
    %v1766 = vld [vmem:[%s1758 + $0x1c] sm:$0xf]
    %v1767 = vld [vmem:[%s1758 + $0x20] sm:$0xf]
    %v1768 = vld [vmem:[%s1758 + $0x24] sm:$0xf]
    %v1769 = vld [vmem:[%s1758 + $0x28] sm:$0xf]
    %v1770 = vld [vmem:[%s1758 + $0x2c] sm:$0xf]
    %v1771 = vld [vmem:[%s1758 + $0x30] sm:$0xf]
    %v1772 = vld [vmem:[%s1758 + $0x34] sm:$0xf]
    %v1773 = vld [vmem:[%s1758 + $0x38] sm:$0xf]
    %v1774 = vld [vmem:[%s1758 + $0x3c] sm:$0xf]
    %s1775 = scalar_lea.vmem %s15, 1
    %v1776 = vld [vmem:[%s1775] sm:$0x1]
    %v1777 = vpack.c.bf16 %v1750, %v1749
    %v1779 = vperm.slane %v1757, 0
    %v1785 = vunpack.c.l.b16 %v1752
    %v1786 = vunpack.c.l.b16 %v1753
    %v1787 = vunpack.c.l.b16 %v1754
    %v1788 = vunpack.c.l.b16 %v1755
    %v1789 = vpack.c.b16 %v1786, %v1785
    %v1790 = vpack.c.b16 %v1788, %v1787
    %v1794 = vsel %vm83, %v1777, 0
    %1796 = vmatpush.bf16.msra.mxu0 0
    %1797 = vmatpush.bf16.msra.mxu0 0
    %1798 = vmatpush.bf16.msra.mxu0 0
    %1799 = vmatpush.bf16.msra.mxu0 0
    %1800 = vmatpush.bf16.msra.mxu0 0
    %1801 = vmatpush.bf16.msra.mxu0 0
    %1802 = vmatpush.bf16.msra.mxu0 %v1790
    %1803 = vmatpush.bf16.msra.mxu0 %v1789
    %1804 = vmatmul.bf16.gmra.mxu0 %v1794
    %v1805 = vpop.f32.mrf.mxu0
    %v1806 = vadd.f32 %v1779, %v1805
    %v1807 = vpop.f32.mrf.mxu0
    %v1808 = vadd.f32 %v1779, %v1807
    %1809 = vdwg.mxu0
    %v1810 = vmul.f32 %v1806, 0.5
    %v1811 = vmul.f32 %v1808, 0.5
    %v1812 = vmul.f32 %v1806, 0.044715
    %v1813 = vmul.f32 %v1808, 0.044715
    %v1814 = vmul.f32 %v1812, %v1806
    %v1815 = vmul.f32 %v1813, %v1808
    %v1816 = vmul.f32 %v1814, %v1806
    %v1817 = vmul.f32 %v1815, %v1808
    %v1818 = vadd.f32 %v1806, %v1816
    %v1819 = vadd.f32 %v1808, %v1817
    %v1820 = vmul.f32 %v1818, 0.7978846
    %v1821 = vmul.f32 %v1819, 0.7978846
    %v1822 = vtanh.pop %v1820
    %v1823 = vtanh.pop %v1821
    %v1824 = vadd.f32 %v1822, 1.0
    %v1825 = vadd.f32 %v1823, 1.0
    %v1826 = vmul.f32 %v1810, %v1824
    %v1827 = vmul.f32 %v1811, %v1825
    %v1828 = vpack.c.bf16 %v1827, %v1826
    %v1830 = vperm.slane %v1776, 0
    %v1848 = vunpack.c.l.b16 %v1759
    %v1849 = vunpack.c.l.b16 %v1760
    %v1850 = vunpack.c.l.b16 %v1761
    %v1851 = vunpack.c.l.b16 %v1762
    %v1852 = vunpack.c.l.b16 %v1763
    %v1853 = vunpack.c.l.b16 %v1764
    %v1854 = vunpack.c.l.b16 %v1765
    %v1855 = vunpack.c.l.b16 %v1766
    %v1856 = vunpack.c.l.b16 %v1767
    %v1857 = vunpack.c.l.b16 %v1768
    %v1858 = vunpack.c.l.b16 %v1769
    %v1859 = vunpack.c.l.b16 %v1770
    %v1860 = vunpack.c.l.b16 %v1771
    %v1861 = vunpack.c.l.b16 %v1772
    %v1862 = vunpack.c.l.b16 %v1773
    %v1863 = vunpack.c.l.b16 %v1774
    %v1864 = vpack.c.b16 %v1849, %v1848
    %v1865 = vpack.c.b16 %v1851, %v1850
    %v1866 = vpack.c.b16 %v1853, %v1852
    %v1867 = vpack.c.b16 %v1855, %v1854
    %v1868 = vpack.c.b16 %v1857, %v1856
    %v1869 = vpack.c.b16 %v1859, %v1858
    %v1870 = vpack.c.b16 %v1861, %v1860
    %v1871 = vpack.c.b16 %v1863, %v1862
    %1880 = vmatpush.bf16.msra.mxu0 %v1871
    %1881 = vmatpush.bf16.msra.mxu0 %v1870
    %1882 = vmatpush.bf16.msra.mxu0 %v1869
    %1883 = vmatpush.bf16.msra.mxu0 %v1868
    %1884 = vmatpush.bf16.msra.mxu0 %v1867
    %1885 = vmatpush.bf16.msra.mxu0 %v1866
    %1886 = vmatpush.bf16.msra.mxu0 %v1865
    %1887 = vmatpush.bf16.msra.mxu0 %v1864
    %1888 = vmatmul.bf16.gmra.mxu0 %v1828
    %v1889 = vpop.f32.mrf.mxu0
    %v1890 = vadd.f32 %v1830, %v1889
    %v1891 = vpop.f32.mrf.mxu0
    %v1892 = vadd.f32 %v1830, %v1891
    %1893 = vdwg.mxu0
    %v1894 = vadd.f32 %v1749, %v1890
    %v1895 = vadd.f32 %v1750, %v1892
    %s1896 = scalar_lea.vmem %s10, 1
    %v1897 = vld [vmem:[%s1896] sm:$0x1]
    %s1898 = scalar_lea.vmem %s11, 1
    %v1899 = vld [vmem:[%s1898] sm:$0x1]
    %v1900 = vsel %vm83, %v1894, 0.0
    %1901 = vadd.xlane.f32.xlu0 %v1900
    %v1902 = vpop.xlane.xlu0 %1901
    %v1903 = vsel %vm83, %v1895, 0.0
    %1904 = vadd.xlane.f32.xlu0 %v1903
    %v1905 = vpop.xlane.xlu0 %1904
    %v1906 = vmul.f32 %v1902, %v96
    %v1907 = vmul.f32 %v1905, %v96
    %v1908 = vsub.f32 %v1894, %v1906
    %v1909 = vsub.f32 %v1895, %v1907
    %v1910 = vmul.f32 %v1908, %v1908
    %v1911 = vmul.f32 %v1909, %v1909
    %v1912 = vsel %vm83, %v1910, 0.0
    %1913 = vadd.xlane.f32.xlu0 %v1912
    %v1914 = vpop.xlane.xlu0 %1913
    %v1915 = vsel %vm83, %v1911, 0.0
    %1916 = vadd.xlane.f32.xlu0 %v1915
    %v1917 = vpop.xlane.xlu0 %1916
    %v1918 = vmul.f32 %v1914, %v96
    %v1919 = vmul.f32 %v1917, %v96
    %v1920 = vadd.f32 %v1918, 1e-12
    %v1921 = vadd.f32 %v1919, 1e-12
    %v1922 = vrsqrt.pop %v1920
    %v1923 = vmul.f32 %v1922, %v1920
    %v1924 = vmul.f32 %v1923, %v1922
    %v1925 = vmul.f32 0.5, %v1924
    %v1926 = vsub.f32 1.5, %v1925
    %v1927 = vmul.f32 %v1922, %v1926
    %vm1928 = vweird.f32 %v1920
    %vm1929 = vweird.f32 %v1922
    %vm1930 = vmor %vm1928, %vm1929
    %v1931 = vsel %vm1930, %v1922, %v1927
    %v1932 = vrsqrt.pop %v1921
    %v1933 = vmul.f32 %v1932, %v1921
    %v1934 = vmul.f32 %v1933, %v1932
    %v1935 = vmul.f32 0.5, %v1934
    %v1936 = vsub.f32 1.5, %v1935
    %v1937 = vmul.f32 %v1932, %v1936
    %vm1938 = vweird.f32 %v1921
    %vm1939 = vweird.f32 %v1932
    %vm1940 = vmor %vm1938, %vm1939
    %v1941 = vsel %vm1940, %v1932, %v1937
    %v1942 = vmul.f32 %v1908, %v1931
    %v1943 = vmul.f32 %v1909, %v1941
    %v1945 = vperm.slane %v1897, 0
    %v1947 = vmul.f32 %v1942, %v1945
    %v1948 = vmul.f32 %v1943, %v1945
    %v1950 = vperm.slane %v1899, 0
    %v1952 = vadd.f32 %v1947, %v1950
    %v1953 = vadd.f32 %v1948, %v1950
    %v1954 = vpack.c.bf16 %v1952, %v1952
    %v1955 = vpack.c.bf16 %v1953, %v1953
    %v1956 = vld [vmem:[%s16] sm:$0xff]
    %v1957 = vld [vmem:[%s16 + $0x8] sm:$0xff]
    %v1958 = vld [vmem:[%s16 + $0x10] sm:$0xff]
    %v1959 = vld [vmem:[%s16 + $0x18] sm:$0xff]
    %v1960 = vld [vmem:[%s17] sm:$0x3]
    %v1962 = vperm.slane %v1960, 0
    %v1963 = vperm.slane %v1960, 1
    %v1968 = vunpack.c.l.b16 %v1954
    %v1969 = vunpack.c.l.b16 %v1955
    %v1970 = vrot.slane %v1969, 7
    %vm1971 = vcmask 1041409
    %v1972 = vsel %vm1971, %v1970, %v1968
    %v1973 = vpack.c.b16 %v1972, %v1972
    %v1978 = vunpack.c.l.b16 %v1956
    %v1979 = vunpack.c.h.b16 %v1956
    %v1980 = vunpack.c.l.b16 %v1957
    %v1981 = vunpack.c.h.b16 %v1957
    %v1982 = vunpack.c.l.b16 %v1958
    %v1983 = vunpack.c.h.b16 %v1958
    %v1984 = vunpack.c.l.b16 %v1959
    %v1985 = vunpack.c.h.b16 %v1959
    %v1986 = vpack.c.b16 %v1980, %v1978
    %v1987 = vpack.c.b16 %v1981, %v1979
    %v1988 = vpack.c.b16 %v1984, %v1982
    %v1989 = vpack.c.b16 %v1985, %v1983
    %v1995 = vsel %vm83, %v1973, 0
    %1997 = vmatpush.bf16.msra.mxu0 0
    %1998 = vmatpush.bf16.msra.mxu0 0
    %1999 = vmatpush.bf16.msra.mxu0 0
    %2000 = vmatpush.bf16.msra.mxu0 0
    %2001 = vmatpush.bf16.msra.mxu0 0
    %2002 = vmatpush.bf16.msra.mxu0 0
    %2003 = vmatpush.bf16.msra.mxu0 %v1988
    %2004 = vmatpush.bf16.msra.mxu0 %v1986
    %2005 = vmatmul.bf16.gmra.mxu0 %v1995
    %v2006 = vpop.f32.mrf.mxu0
    %v2007 = vadd.f32 %v1962, %v2006
    %v2008 = vpop.f32.mrf.mxu0
    %2009 = vdwg.mxu0
    %2010 = vmatpush.bf16.msra.mxu0 0
    %2011 = vmatpush.bf16.msra.mxu0 0
    %2012 = vmatpush.bf16.msra.mxu0 0
    %2013 = vmatpush.bf16.msra.mxu0 0
    %2014 = vmatpush.bf16.msra.mxu0 0
    %2015 = vmatpush.bf16.msra.mxu0 0
    %2016 = vmatpush.bf16.msra.mxu0 %v1989
    %2017 = vmatpush.bf16.msra.mxu0 %v1987
    %2018 = vmatmul.bf16.gmra.mxu0 %v1995
    %v2019 = vpop.f32.mrf.mxu0
    %v2020 = vadd.f32 %v1963, %v2019
    %v2021 = vpop.f32.mrf.mxu0
    %2022 = vdwg.mxu0
    %v2023 = vld [vmem:[%s18] sm:$0xff]
    %v2024 = vld [vmem:[%s18 + $0x8] sm:$0xff]
    %v2025 = vld [vmem:[%s18 + $0x10] sm:$0xff]
    %v2026 = vld [vmem:[%s18 + $0x18] sm:$0xff]
    %v2027 = vld [vmem:[%s18 + $0x20] sm:$0xff]
    %v2028 = vld [vmem:[%s18 + $0x28] sm:$0xff]
    %v2029 = vld [vmem:[%s18 + $0x30] sm:$0xff]
    %v2030 = vld [vmem:[%s18 + $0x38] sm:$0xff]
    %v2031 = vld [vmem:[%s18 + $0x40] sm:$0xff]
    %v2032 = vld [vmem:[%s18 + $0x48] sm:$0xff]
    %v2033 = vld [vmem:[%s18 + $0x50] sm:$0xff]
    %v2034 = vld [vmem:[%s18 + $0x58] sm:$0xff]
    %v2035 = vld [vmem:[%s18 + $0x60] sm:$0xff]
    %v2036 = vld [vmem:[%s18 + $0x68] sm:$0xff]
    %v2037 = vld [vmem:[%s18 + $0x70] sm:$0xff]
    %v2038 = vld [vmem:[%s18 + $0x78] sm:$0xff]
    %v2039 = vld [vmem:[%s18 + $0x80] sm:$0xff]
    %v2040 = vld [vmem:[%s18 + $0x88] sm:$0xff]
    %v2041 = vld [vmem:[%s18 + $0x90] sm:$0xff]
    %v2042 = vld [vmem:[%s18 + $0x98] sm:$0xff]
    %v2043 = vld [vmem:[%s18 + $0xa0] sm:$0xff]
    %v2044 = vld [vmem:[%s18 + $0xa8] sm:$0xff]
    %v2045 = vld [vmem:[%s18 + $0xb0] sm:$0xff]
    %v2046 = vld [vmem:[%s18 + $0xb8] sm:$0xff]
    %v2047 = vld [vmem:[%s18 + $0xc0] sm:$0xff]
    %v2048 = vld [vmem:[%s18 + $0xc8] sm:$0xff]
    %v2049 = vld [vmem:[%s18 + $0xd0] sm:$0xff]
    %v2050 = vld [vmem:[%s18 + $0xd8] sm:$0xff]
    %v2051 = vld [vmem:[%s18 + $0xe0] sm:$0xff]
    %v2052 = vld [vmem:[%s18 + $0xe8] sm:$0xff]
    %v2053 = vld [vmem:[%s18 + $0xf0] sm:$0xff]
    %v2054 = vld [vmem:[%s18 + $0xf8] sm:$0xff]
    %v2055 = vld [vmem:[%s19] sm:$0x3]
    %v2056 = vld [vmem:[%s20] sm:$0xff]
    %v2057 = vld [vmem:[%s20 + $0x8] sm:$0xff]
    %v2058 = vld [vmem:[%s20 + $0x10] sm:$0xff]
    %v2059 = vld [vmem:[%s20 + $0x18] sm:$0xff]
    %v2060 = vld [vmem:[%s20 + $0x20] sm:$0xff]
    %v2061 = vld [vmem:[%s20 + $0x28] sm:$0xff]
    %v2062 = vld [vmem:[%s20 + $0x30] sm:$0xff]
    %v2063 = vld [vmem:[%s20 + $0x38] sm:$0xff]
    %v2064 = vld [vmem:[%s20 + $0x40] sm:$0xff]
    %v2065 = vld [vmem:[%s20 + $0x48] sm:$0xff]
    %v2066 = vld [vmem:[%s20 + $0x50] sm:$0xff]
    %v2067 = vld [vmem:[%s20 + $0x58] sm:$0xff]
    %v2068 = vld [vmem:[%s20 + $0x60] sm:$0xff]
    %v2069 = vld [vmem:[%s20 + $0x68] sm:$0xff]
    %v2070 = vld [vmem:[%s20 + $0x70] sm:$0xff]
    %v2071 = vld [vmem:[%s20 + $0x78] sm:$0xff]
    %v2072 = vld [vmem:[%s20 + $0x80] sm:$0xff]
    %v2073 = vld [vmem:[%s20 + $0x88] sm:$0xff]
    %v2074 = vld [vmem:[%s20 + $0x90] sm:$0xff]
    %v2075 = vld [vmem:[%s20 + $0x98] sm:$0xff]
    %v2076 = vld [vmem:[%s20 + $0xa0] sm:$0xff]
    %v2077 = vld [vmem:[%s20 + $0xa8] sm:$0xff]
    %v2078 = vld [vmem:[%s20 + $0xb0] sm:$0xff]
    %v2079 = vld [vmem:[%s20 + $0xb8] sm:$0xff]
    %v2080 = vld [vmem:[%s20 + $0xc0] sm:$0xff]
    %v2081 = vld [vmem:[%s20 + $0xc8] sm:$0xff]
    %v2082 = vld [vmem:[%s20 + $0xd0] sm:$0xff]
    %v2083 = vld [vmem:[%s20 + $0xd8] sm:$0xff]
    %v2084 = vld [vmem:[%s20 + $0xe0] sm:$0xff]
    %v2085 = vld [vmem:[%s20 + $0xe8] sm:$0xff]
    %v2086 = vld [vmem:[%s20 + $0xf0] sm:$0xff]
    %v2087 = vld [vmem:[%s20 + $0xf8] sm:$0xff]
    %v2088 = vld [vmem:[%s21] sm:$0x3]
    %v2089 = vld [vmem:[%s22] sm:$0x3]
    %v2090 = vld [vmem:[%s23] sm:$0x3]
    %v2091 = vpack.c.bf16 %v2007, %v2007
    %v2092 = vpack.c.bf16 %v2020, %v2020
    %v2094 = vperm.slane %v2055, 0
    %v2095 = vperm.slane %v2055, 1
    %v2130 = vunpack.c.l.b16 %v2023
    %v2131 = vunpack.c.h.b16 %v2023
    %v2132 = vunpack.c.l.b16 %v2024
    %v2133 = vunpack.c.h.b16 %v2024
    %v2134 = vunpack.c.l.b16 %v2025
    %v2135 = vunpack.c.h.b16 %v2025
    %v2136 = vunpack.c.l.b16 %v2026
    %v2137 = vunpack.c.h.b16 %v2026
    %v2138 = vunpack.c.l.b16 %v2027
    %v2139 = vunpack.c.h.b16 %v2027
    %v2140 = vunpack.c.l.b16 %v2028
    %v2141 = vunpack.c.h.b16 %v2028
    %v2142 = vunpack.c.l.b16 %v2029
    %v2143 = vunpack.c.h.b16 %v2029
    %v2144 = vunpack.c.l.b16 %v2030
    %v2145 = vunpack.c.h.b16 %v2030
    %v2146 = vunpack.c.l.b16 %v2031
    %v2147 = vunpack.c.h.b16 %v2031
    %v2148 = vunpack.c.l.b16 %v2032
    %v2149 = vunpack.c.h.b16 %v2032
    %v2150 = vunpack.c.l.b16 %v2033
    %v2151 = vunpack.c.h.b16 %v2033
    %v2152 = vunpack.c.l.b16 %v2034
    %v2153 = vunpack.c.h.b16 %v2034
    %v2154 = vunpack.c.l.b16 %v2035
    %v2155 = vunpack.c.h.b16 %v2035
    %v2156 = vunpack.c.l.b16 %v2036
    %v2157 = vunpack.c.h.b16 %v2036
    %v2158 = vunpack.c.l.b16 %v2037
    %v2159 = vunpack.c.h.b16 %v2037
    %v2160 = vunpack.c.l.b16 %v2038
    %v2161 = vunpack.c.h.b16 %v2038
    %v2162 = vunpack.c.l.b16 %v2039
    %v2163 = vunpack.c.h.b16 %v2039
    %v2164 = vunpack.c.l.b16 %v2040
    %v2165 = vunpack.c.h.b16 %v2040
    %v2166 = vunpack.c.l.b16 %v2041
    %v2167 = vunpack.c.h.b16 %v2041
    %v2168 = vunpack.c.l.b16 %v2042
    %v2169 = vunpack.c.h.b16 %v2042
    %v2170 = vunpack.c.l.b16 %v2043
    %v2171 = vunpack.c.h.b16 %v2043
    %v2172 = vunpack.c.l.b16 %v2044
    %v2173 = vunpack.c.h.b16 %v2044
    %v2174 = vunpack.c.l.b16 %v2045
    %v2175 = vunpack.c.h.b16 %v2045
    %v2176 = vunpack.c.l.b16 %v2046
    %v2177 = vunpack.c.h.b16 %v2046
    %v2178 = vunpack.c.l.b16 %v2047
    %v2179 = vunpack.c.h.b16 %v2047
    %v2180 = vunpack.c.l.b16 %v2048
    %v2181 = vunpack.c.h.b16 %v2048
    %v2182 = vunpack.c.l.b16 %v2049
    %v2183 = vunpack.c.h.b16 %v2049
    %v2184 = vunpack.c.l.b16 %v2050
    %v2185 = vunpack.c.h.b16 %v2050
    %v2186 = vunpack.c.l.b16 %v2051
    %v2187 = vunpack.c.h.b16 %v2051
    %v2188 = vunpack.c.l.b16 %v2052
    %v2189 = vunpack.c.h.b16 %v2052
    %v2190 = vunpack.c.l.b16 %v2053
    %v2191 = vunpack.c.h.b16 %v2053
    %v2192 = vunpack.c.l.b16 %v2054
    %v2193 = vunpack.c.h.b16 %v2054
    %v2194 = vpack.c.b16 %v2132, %v2130
    %v2195 = vpack.c.b16 %v2133, %v2131
    %v2196 = vpack.c.b16 %v2136, %v2134
    %v2197 = vpack.c.b16 %v2137, %v2135
    %v2198 = vpack.c.b16 %v2140, %v2138
    %v2199 = vpack.c.b16 %v2141, %v2139
    %v2200 = vpack.c.b16 %v2144, %v2142
    %v2201 = vpack.c.b16 %v2145, %v2143
    %v2202 = vpack.c.b16 %v2148, %v2146
    %v2203 = vpack.c.b16 %v2149, %v2147
    %v2204 = vpack.c.b16 %v2152, %v2150
    %v2205 = vpack.c.b16 %v2153, %v2151
    %v2206 = vpack.c.b16 %v2156, %v2154
    %v2207 = vpack.c.b16 %v2157, %v2155
    %v2208 = vpack.c.b16 %v2160, %v2158
    %v2209 = vpack.c.b16 %v2161, %v2159
    %v2210 = vpack.c.b16 %v2164, %v2162
    %v2211 = vpack.c.b16 %v2165, %v2163
    %v2212 = vpack.c.b16 %v2168, %v2166
    %v2213 = vpack.c.b16 %v2169, %v2167
    %v2214 = vpack.c.b16 %v2172, %v2170
    %v2215 = vpack.c.b16 %v2173, %v2171
    %v2216 = vpack.c.b16 %v2176, %v2174
    %v2217 = vpack.c.b16 %v2177, %v2175
    %v2218 = vpack.c.b16 %v2180, %v2178
    %v2219 = vpack.c.b16 %v2181, %v2179
    %v2220 = vpack.c.b16 %v2184, %v2182
    %v2221 = vpack.c.b16 %v2185, %v2183
    %v2222 = vpack.c.b16 %v2188, %v2186
    %v2223 = vpack.c.b16 %v2189, %v2187
    %v2224 = vpack.c.b16 %v2192, %v2190
    %v2225 = vpack.c.b16 %v2193, %v2191
    %2258 = vmatpush.bf16.msra.mxu0 %v2208
    %2259 = vmatpush.bf16.msra.mxu0 %v2206
    %2260 = vmatpush.bf16.msra.mxu0 %v2204
    %2261 = vmatpush.bf16.msra.mxu0 %v2202
    %2262 = vmatpush.bf16.msra.mxu0 %v2200
    %2263 = vmatpush.bf16.msra.mxu0 %v2198
    %2264 = vmatpush.bf16.msra.mxu0 %v2196
    %2265 = vmatpush.bf16.msra.mxu0 %v2194
    %2266 = vmatmul.bf16.gmra.mxu0 %v2091
    %v2267 = vpop.f32.mrf.mxu0
    %v2268 = vadd.f32 %v2094, %v2267
    %v2269 = vpop.f32.mrf.mxu0
    %2270 = vdwg.mxu0
    %2271 = vmatpush.bf16.msra.mxu0 %v2224
    %2272 = vmatpush.bf16.msra.mxu0 %v2222
    %2273 = vmatpush.bf16.msra.mxu0 %v2220
    %2274 = vmatpush.bf16.msra.mxu0 %v2218
    %2275 = vmatpush.bf16.msra.mxu0 %v2216
    %2276 = vmatpush.bf16.msra.mxu0 %v2214
    %2277 = vmatpush.bf16.msra.mxu0 %v2212
    %2278 = vmatpush.bf16.msra.mxu0 %v2210
    %2279 = vmatmul.bf16.gmra.mxu0 %v2092
    %v2280 = vpop.f32.mrf.mxu0
    %v2281 = vadd.f32 %v2268, %v2280
    %v2282 = vpop.f32.mrf.mxu0
    %2283 = vdwg.mxu0
    %2284 = vmatpush.bf16.msra.mxu0 %v2209
    %2285 = vmatpush.bf16.msra.mxu0 %v2207
    %2286 = vmatpush.bf16.msra.mxu0 %v2205
    %2287 = vmatpush.bf16.msra.mxu0 %v2203
    %2288 = vmatpush.bf16.msra.mxu0 %v2201
    %2289 = vmatpush.bf16.msra.mxu0 %v2199
    %2290 = vmatpush.bf16.msra.mxu0 %v2197
    %2291 = vmatpush.bf16.msra.mxu0 %v2195
    %2292 = vmatmul.bf16.gmra.mxu0 %v2091
    %v2293 = vpop.f32.mrf.mxu0
    %v2294 = vadd.f32 %v2095, %v2293
    %v2295 = vpop.f32.mrf.mxu0
    %2296 = vdwg.mxu0
    %2297 = vmatpush.bf16.msra.mxu0 %v2225
    %2298 = vmatpush.bf16.msra.mxu0 %v2223
    %2299 = vmatpush.bf16.msra.mxu0 %v2221
    %2300 = vmatpush.bf16.msra.mxu0 %v2219
    %2301 = vmatpush.bf16.msra.mxu0 %v2217
    %2302 = vmatpush.bf16.msra.mxu0 %v2215
    %2303 = vmatpush.bf16.msra.mxu0 %v2213
    %2304 = vmatpush.bf16.msra.mxu0 %v2211
    %2305 = vmatmul.bf16.gmra.mxu0 %v2092
    %v2306 = vpop.f32.mrf.mxu0
    %v2307 = vadd.f32 %v2294, %v2306
    %v2308 = vpop.f32.mrf.mxu0
    %2309 = vdwg.mxu0
    %v2310 = vmul.f32 %v2281, 0.5
    %v2311 = vmul.f32 %v2307, 0.5
    %v2312 = vmul.f32 %v2281, 0.044715
    %v2313 = vmul.f32 %v2307, 0.044715
    %v2314 = vmul.f32 %v2312, %v2281
    %v2315 = vmul.f32 %v2313, %v2307
    %v2316 = vmul.f32 %v2314, %v2281
    %v2317 = vmul.f32 %v2315, %v2307
    %v2318 = vadd.f32 %v2281, %v2316
    %v2319 = vadd.f32 %v2307, %v2317
    %v2320 = vmul.f32 %v2318, 0.7978846
    %v2321 = vmul.f32 %v2319, 0.7978846
    %v2322 = vtanh.pop %v2320
    %v2323 = vtanh.pop %v2321
    %v2324 = vadd.f32 %v2322, 1.0
    %v2325 = vadd.f32 %v2323, 1.0
    %v2326 = vmul.f32 %v2310, %v2324
    %v2327 = vmul.f32 %v2311, %v2325
    %v2328 = vpack.c.bf16 %v2326, %v2326
    %v2329 = vpack.c.bf16 %v2327, %v2327
    %v2331 = vperm.slane %v2088, 0
    %v2332 = vperm.slane %v2088, 1
    %v2367 = vunpack.c.l.b16 %v2056
    %v2368 = vunpack.c.h.b16 %v2056
    %v2369 = vunpack.c.l.b16 %v2057
    %v2370 = vunpack.c.h.b16 %v2057
    %v2371 = vunpack.c.l.b16 %v2058
    %v2372 = vunpack.c.h.b16 %v2058
    %v2373 = vunpack.c.l.b16 %v2059
    %v2374 = vunpack.c.h.b16 %v2059
    %v2375 = vunpack.c.l.b16 %v2060
    %v2376 = vunpack.c.h.b16 %v2060
    %v2377 = vunpack.c.l.b16 %v2061
    %v2378 = vunpack.c.h.b16 %v2061
    %v2379 = vunpack.c.l.b16 %v2062
    %v2380 = vunpack.c.h.b16 %v2062
    %v2381 = vunpack.c.l.b16 %v2063
    %v2382 = vunpack.c.h.b16 %v2063
    %v2383 = vunpack.c.l.b16 %v2064
    %v2384 = vunpack.c.h.b16 %v2064
    %v2385 = vunpack.c.l.b16 %v2065
    %v2386 = vunpack.c.h.b16 %v2065
    %v2387 = vunpack.c.l.b16 %v2066
    %v2388 = vunpack.c.h.b16 %v2066
    %v2389 = vunpack.c.l.b16 %v2067
    %v2390 = vunpack.c.h.b16 %v2067
    %v2391 = vunpack.c.l.b16 %v2068
    %v2392 = vunpack.c.h.b16 %v2068
    %v2393 = vunpack.c.l.b16 %v2069
    %v2394 = vunpack.c.h.b16 %v2069
    %v2395 = vunpack.c.l.b16 %v2070
    %v2396 = vunpack.c.h.b16 %v2070
    %v2397 = vunpack.c.l.b16 %v2071
    %v2398 = vunpack.c.h.b16 %v2071
    %v2399 = vunpack.c.l.b16 %v2072
    %v2400 = vunpack.c.h.b16 %v2072
    %v2401 = vunpack.c.l.b16 %v2073
    %v2402 = vunpack.c.h.b16 %v2073
    %v2403 = vunpack.c.l.b16 %v2074
    %v2404 = vunpack.c.h.b16 %v2074
    %v2405 = vunpack.c.l.b16 %v2075
    %v2406 = vunpack.c.h.b16 %v2075
    %v2407 = vunpack.c.l.b16 %v2076
    %v2408 = vunpack.c.h.b16 %v2076
    %v2409 = vunpack.c.l.b16 %v2077
    %v2410 = vunpack.c.h.b16 %v2077
    %v2411 = vunpack.c.l.b16 %v2078
    %v2412 = vunpack.c.h.b16 %v2078
    %v2413 = vunpack.c.l.b16 %v2079
    %v2414 = vunpack.c.h.b16 %v2079
    %v2415 = vunpack.c.l.b16 %v2080
    %v2416 = vunpack.c.h.b16 %v2080
    %v2417 = vunpack.c.l.b16 %v2081
    %v2418 = vunpack.c.h.b16 %v2081
    %v2419 = vunpack.c.l.b16 %v2082
    %v2420 = vunpack.c.h.b16 %v2082
    %v2421 = vunpack.c.l.b16 %v2083
    %v2422 = vunpack.c.h.b16 %v2083
    %v2423 = vunpack.c.l.b16 %v2084
    %v2424 = vunpack.c.h.b16 %v2084
    %v2425 = vunpack.c.l.b16 %v2085
    %v2426 = vunpack.c.h.b16 %v2085
    %v2427 = vunpack.c.l.b16 %v2086
    %v2428 = vunpack.c.h.b16 %v2086
    %v2429 = vunpack.c.l.b16 %v2087
    %v2430 = vunpack.c.h.b16 %v2087
    %v2431 = vpack.c.b16 %v2369, %v2367
    %v2432 = vpack.c.b16 %v2370, %v2368
    %v2433 = vpack.c.b16 %v2373, %v2371
    %v2434 = vpack.c.b16 %v2374, %v2372
    %v2435 = vpack.c.b16 %v2377, %v2375
    %v2436 = vpack.c.b16 %v2378, %v2376
    %v2437 = vpack.c.b16 %v2381, %v2379
    %v2438 = vpack.c.b16 %v2382, %v2380
    %v2439 = vpack.c.b16 %v2385, %v2383
    %v2440 = vpack.c.b16 %v2386, %v2384
    %v2441 = vpack.c.b16 %v2389, %v2387
    %v2442 = vpack.c.b16 %v2390, %v2388
    %v2443 = vpack.c.b16 %v2393, %v2391
    %v2444 = vpack.c.b16 %v2394, %v2392
    %v2445 = vpack.c.b16 %v2397, %v2395
    %v2446 = vpack.c.b16 %v2398, %v2396
    %v2447 = vpack.c.b16 %v2401, %v2399
    %v2448 = vpack.c.b16 %v2402, %v2400
    %v2449 = vpack.c.b16 %v2405, %v2403
    %v2450 = vpack.c.b16 %v2406, %v2404
    %v2451 = vpack.c.b16 %v2409, %v2407
    %v2452 = vpack.c.b16 %v2410, %v2408
    %v2453 = vpack.c.b16 %v2413, %v2411
    %v2454 = vpack.c.b16 %v2414, %v2412
    %v2455 = vpack.c.b16 %v2417, %v2415
    %v2456 = vpack.c.b16 %v2418, %v2416
    %v2457 = vpack.c.b16 %v2421, %v2419
    %v2458 = vpack.c.b16 %v2422, %v2420
    %v2459 = vpack.c.b16 %v2425, %v2423
    %v2460 = vpack.c.b16 %v2426, %v2424
    %v2461 = vpack.c.b16 %v2429, %v2427
    %v2462 = vpack.c.b16 %v2430, %v2428
    %2495 = vmatpush.bf16.msra.mxu0 %v2445
    %2496 = vmatpush.bf16.msra.mxu0 %v2443
    %2497 = vmatpush.bf16.msra.mxu0 %v2441
    %2498 = vmatpush.bf16.msra.mxu0 %v2439
    %2499 = vmatpush.bf16.msra.mxu0 %v2437
    %2500 = vmatpush.bf16.msra.mxu0 %v2435
    %2501 = vmatpush.bf16.msra.mxu0 %v2433
    %2502 = vmatpush.bf16.msra.mxu0 %v2431
    %2503 = vmatmul.bf16.gmra.mxu0 %v2328
    %v2504 = vpop.f32.mrf.mxu0
    %v2505 = vadd.f32 %v2331, %v2504
    %v2506 = vpop.f32.mrf.mxu0
    %2507 = vdwg.mxu0
    %2508 = vmatpush.bf16.msra.mxu0 %v2461
    %2509 = vmatpush.bf16.msra.mxu0 %v2459
    %2510 = vmatpush.bf16.msra.mxu0 %v2457
    %2511 = vmatpush.bf16.msra.mxu0 %v2455
    %2512 = vmatpush.bf16.msra.mxu0 %v2453
    %2513 = vmatpush.bf16.msra.mxu0 %v2451
    %2514 = vmatpush.bf16.msra.mxu0 %v2449
    %2515 = vmatpush.bf16.msra.mxu0 %v2447
    %2516 = vmatmul.bf16.gmra.mxu0 %v2329
    %v2517 = vpop.f32.mrf.mxu0
    %v2518 = vadd.f32 %v2505, %v2517
    %v2519 = vpop.f32.mrf.mxu0
    %2520 = vdwg.mxu0
    %2521 = vmatpush.bf16.msra.mxu0 %v2446
    %2522 = vmatpush.bf16.msra.mxu0 %v2444
    %2523 = vmatpush.bf16.msra.mxu0 %v2442
    %2524 = vmatpush.bf16.msra.mxu0 %v2440
    %2525 = vmatpush.bf16.msra.mxu0 %v2438
    %2526 = vmatpush.bf16.msra.mxu0 %v2436
    %2527 = vmatpush.bf16.msra.mxu0 %v2434
    %2528 = vmatpush.bf16.msra.mxu0 %v2432
    %2529 = vmatmul.bf16.gmra.mxu0 %v2328
    %v2530 = vpop.f32.mrf.mxu0
    %v2531 = vadd.f32 %v2332, %v2530
    %v2532 = vpop.f32.mrf.mxu0
    %2533 = vdwg.mxu0
    %2534 = vmatpush.bf16.msra.mxu0 %v2462
    %2535 = vmatpush.bf16.msra.mxu0 %v2460
    %2536 = vmatpush.bf16.msra.mxu0 %v2458
    %2537 = vmatpush.bf16.msra.mxu0 %v2456
    %2538 = vmatpush.bf16.msra.mxu0 %v2454
    %2539 = vmatpush.bf16.msra.mxu0 %v2452
    %2540 = vmatpush.bf16.msra.mxu0 %v2450
    %2541 = vmatpush.bf16.msra.mxu0 %v2448
    %2542 = vmatmul.bf16.gmra.mxu0 %v2329
    %v2543 = vpop.f32.mrf.mxu0
    %v2544 = vadd.f32 %v2531, %v2543
    %v2545 = vpop.f32.mrf.mxu0
    %2546 = vdwg.mxu0
    %v2547 = vadd.f32 %v2518, %v2281
    %v2548 = vadd.f32 %v2544, %v2307
    %vm2549 = vcmask 1041408
    %v2550 = vsel %vm2549, %v2547, 0.0
    %v2551 = vsel %vm2549, %v2548, 0.0
    %v2552 = vadd.f32 %v2550, %v2551
    %2553 = vadd.xlane.f32.xlu0 %v2552
    %v2554 = vpop.xlane.xlu0 %2553
    %v2555 = vrcp.pop 256.0
    %v2556 = vmul.f32 256.0, %v2555
    %v2557 = vsub.f32 1.0, %v2556
    %v2558 = vmul.f32 %v2555, %v2557
    %v2559 = vadd.f32 %v2555, %v2558
    %vm2560 = vweird.f32 %v2555
    %v2561 = vsel %vm2560, %v2555, %v2559
    %v2562 = vmul.f32 %v2554, %v2561
    %v2563 = vsub.f32 %v2547, %v2562
    %v2564 = vsub.f32 %v2548, %v2562
    %v2565 = vmul.f32 %v2563, %v2563
    %v2566 = vmul.f32 %v2564, %v2564
    %v2567 = vsel %vm2549, %v2565, 0.0
    %v2568 = vsel %vm2549, %v2566, 0.0
    %v2569 = vadd.f32 %v2567, %v2568
    %2570 = vadd.xlane.f32.xlu0 %v2569
    %v2571 = vpop.xlane.xlu0 %2570
    %v2572 = vmul.f32 %v2571, %v2561
    %v2573 = vadd.f32 %v2572, 1e-05
    %v2574 = vrsqrt.pop %v2573
    %v2575 = vmul.f32 %v2574, %v2573
    %v2576 = vmul.f32 %v2575, %v2574
    %v2577 = vmul.f32 0.5, %v2576
    %v2578 = vsub.f32 1.5, %v2577
    %v2579 = vmul.f32 %v2574, %v2578
    %vm2580 = vweird.f32 %v2573
    %vm2581 = vweird.f32 %v2574
    %vm2582 = vmor %vm2580, %vm2581
    %v2583 = vsel %vm2582, %v2574, %v2579
    %v2584 = vmul.f32 %v2563, %v2583
    %v2585 = vmul.f32 %v2564, %v2583
    %v2587 = vperm.slane %v2089, 0
    %v2588 = vperm.slane %v2089, 1
    %v2591 = vmul.f32 %v2584, %v2587
    %v2592 = vmul.f32 %v2585, %v2588
    %v2594 = vperm.slane %v2090, 0
    %v2595 = vperm.slane %v2090, 1
    %v2598 = vadd.f32 %v2591, %v2594
    %v2599 = vadd.f32 %v2592, %v2595
    %v2602 = vrot.slane %v2599, 6
    %v2603 = vsel %vm2549, %v2598, %v2602
    %2605 = vst [vmem:[#allocation2] sm:$0xf] %v2603
    // Predicated region
    $region98: #{clip_forward.3} parent=1 // pred_check
      _
    $region99: #{clip_forward.3} parent=1 // pred_check_branch
      %2607 = sbr.rel (0) target = $region101
    $region100: #{clip_forward.3} parent=1 // pred_region
      %2609 = vsyncadd [#allocation3], 0
      %s2611 = sshll.u32 [#allocation2], 4
      %s2612 = int_to_ptr.vmem [resolvable:$true] %s2611
      %s2613 = sshll.u32 %s24, 4
      %s2614 = int_to_ptr.hbm [resolvable:$true] %s2613
      %2616 = dma.vmem_to_hbm [thread:$0]  %s2612, 64, %s2614, [#allocation3]
    $region101: #{clip_forward.3} parent=1 // pred_fallthru
      _
    // Predicated region
    $region102: #{clip_forward.3} parent=1 // pred_check
      _
    $region103: #{clip_forward.3} parent=1 // pred_check_branch
      %2618 = sbr.rel (0) target = $region105
    $region104: #{clip_forward.3} parent=1 // pred_region
      %2620 = dma.done [#allocation3], 64
    $region105: #{clip_forward.3} parent=1 // pred_fallthru
      _
    %2621 = vsyncpa [#allocation3], 1

// kernel: clip_forward.2
$region0: #{clip_forward.2}
  #allocation0 [shape = 'u32[]', space=smem, size = 0x4, offset = 0x4, fixed_abs, tag = 'smem constant byte address 0x4 - core index']
  #allocation1 [shape = 'u32[72,128]{1,0:T(1,128)}', space=vmem, size = 0x9000, scoped, tag = 'internal scratch']
  %s0 = inlined_call_operand.vmem [shape: f32[8,192], index: 0, kind: input, shape index: {}]
  %s1 = inlined_call_operand.vmem [shape: bf16[192,32], index: 1, kind: input, shape index: {}]
  %s2 = inlined_call_operand.vmem [shape: f32[1,32], index: 2, kind: input, shape index: {}]
  %s3 = inlined_call_operand.vmem [shape: f32[1,32], index: 3, kind: input, shape index: {}]
  %s4 = inlined_call_operand.vmem [shape: f32[8,32], index: 4, kind: input, shape index: {}]
  %s5 = inlined_call_operand.vmem [shape: f32[2,1,32], index: 5, kind: input, shape index: {}]
  %s6 = inlined_call_operand.vmem [shape: f32[2,1,32], index: 6, kind: input, shape index: {}]
  %s7 = inlined_call_operand.vmem [shape: bf16[2,32,96], index: 7, kind: input, shape index: {}]
  %s8 = inlined_call_operand.vmem [shape: f32[2,1,96], index: 8, kind: input, shape index: {}]
  %s9 = inlined_call_operand.vmem [shape: bf16[2,32,32], index: 9, kind: input, shape index: {}]
  %s10 = inlined_call_operand.vmem [shape: f32[2,1,32], index: 10, kind: input, shape index: {}]
  %s11 = inlined_call_operand.vmem [shape: f32[2,1,32], index: 11, kind: input, shape index: {}]
  %s12 = inlined_call_operand.vmem [shape: f32[2,1,32], index: 12, kind: input, shape index: {}]
  %s13 = inlined_call_operand.vmem [shape: bf16[2,32,128], index: 13, kind: input, shape index: {}]
  %s14 = inlined_call_operand.vmem [shape: f32[2,1,128], index: 14, kind: input, shape index: {}]
  %s15 = inlined_call_operand.vmem [shape: bf16[2,128,32], index: 15, kind: input, shape index: {}]
  %s16 = inlined_call_operand.vmem [shape: f32[2,1,32], index: 16, kind: input, shape index: {}]
  %s17 = inlined_call_operand.vmem [shape: f32[1,32], index: 17, kind: input, shape index: {}]
  %s18 = inlined_call_operand.vmem [shape: f32[1,32], index: 18, kind: input, shape index: {}]
  %s19 = inlined_call_operand.vmem [shape: bf16[32,256], index: 19, kind: input, shape index: {}]
  %s20 = inlined_call_operand.vmem [shape: f32[1,256], index: 20, kind: input, shape index: {}]
  %s21 = inlined_call_operand.vmem [shape: bf16[256,256], index: 21, kind: input, shape index: {}]
  %s22 = inlined_call_operand.vmem [shape: f32[1,256], index: 22, kind: input, shape index: {}]
  %s23 = inlined_call_operand.vmem [shape: bf16[256,256], index: 23, kind: input, shape index: {}]
  %s24 = inlined_call_operand.vmem [shape: f32[1,256], index: 24, kind: input, shape index: {}]
  %s25 = inlined_call_operand.vmem [shape: f32[1,256], index: 25, kind: input, shape index: {}]
  %s26 = inlined_call_operand.vmem [shape: f32[1,256], index: 26, kind: input, shape index: {}]
  %s27 = inlined_call_operand.hbm [shape: f32[2,256], index: 27, kind: output, shape index: {}]
  %s28 = sld [smem:[#allocation0]]
  $region118: #{clip_forward.2} parent=0
    _
  %s30 = ssub.s32 1, %s28
  %s31 = scalar_select 0, %s30, %s28
  $region1: #{clip_forward.2} parent=0
    #allocation2 [shape = 'u8[2048]{0}', space=vmem, size = 0x800, scoped, tag = 'output window, operand 0, single buffered']
    #allocation3 [shape = 's32[1]{0}', space=sflag, size = 0x4, scoped, tag = 'scoped memory for clip_forward.2']
    %32 = vsyncpa [#allocation3], 0
    // Predicated region
    $region2: #{clip_forward.2} parent=1 // pred_check
      _
    $region3: #{clip_forward.2} parent=1 // pred_check_branch
      %34 = sbr.rel (0) target = $region5
    $region4: #{clip_forward.2} parent=1 // pred_region
      _
    $region5: #{clip_forward.2} parent=1 // pred_fallthru
      _
    // Predicated region
    $region6: #{clip_forward.2} parent=1 // pred_check
      _
    $region7: #{clip_forward.2} parent=1 // pred_check_branch
      %36 = sbr.rel (0) target = $region9
    $region8: #{clip_forward.2} parent=1 // pred_region
      _
    $region9: #{clip_forward.2} parent=1 // pred_fallthru
      _
    // Predicated region
    $region10: #{clip_forward.2} parent=1 // pred_check
      _
    $region11: #{clip_forward.2} parent=1 // pred_check_branch
      %38 = sbr.rel (0) target = $region13
    $region12: #{clip_forward.2} parent=1 // pred_region
      _
    $region13: #{clip_forward.2} parent=1 // pred_fallthru
      _
    // Predicated region
    $region14: #{clip_forward.2} parent=1 // pred_check
      _
    $region15: #{clip_forward.2} parent=1 // pred_check_branch
      %40 = sbr.rel (0) target = $region17
    $region16: #{clip_forward.2} parent=1 // pred_region
      _
    $region17: #{clip_forward.2} parent=1 // pred_fallthru
      _
    // Predicated region
    $region18: #{clip_forward.2} parent=1 // pred_check
      _
    $region19: #{clip_forward.2} parent=1 // pred_check_branch
      %42 = sbr.rel (0) target = $region21
    $region20: #{clip_forward.2} parent=1 // pred_region
      _
    $region21: #{clip_forward.2} parent=1 // pred_fallthru
      _
    // Predicated region
    $region22: #{clip_forward.2} parent=1 // pred_check
      _
    $region23: #{clip_forward.2} parent=1 // pred_check_branch
      %44 = sbr.rel (0) target = $region25
    $region24: #{clip_forward.2} parent=1 // pred_region
      _
    $region25: #{clip_forward.2} parent=1 // pred_fallthru
      _
    // Predicated region
    $region26: #{clip_forward.2} parent=1 // pred_check
      _
    $region27: #{clip_forward.2} parent=1 // pred_check_branch
      %46 = sbr.rel (0) target = $region29
    $region28: #{clip_forward.2} parent=1 // pred_region
      _
    $region29: #{clip_forward.2} parent=1 // pred_fallthru
      _
    // Predicated region
    $region30: #{clip_forward.2} parent=1 // pred_check
      _
    $region31: #{clip_forward.2} parent=1 // pred_check_branch
      %48 = sbr.rel (0) target = $region33
    $region32: #{clip_forward.2} parent=1 // pred_region
      _
    $region33: #{clip_forward.2} parent=1 // pred_fallthru
      _
    // Predicated region
    $region34: #{clip_forward.2} parent=1 // pred_check
      _
    $region35: #{clip_forward.2} parent=1 // pred_check_branch
      %50 = sbr.rel (0) target = $region37
    $region36: #{clip_forward.2} parent=1 // pred_region
      _
    $region37: #{clip_forward.2} parent=1 // pred_fallthru
      _
    // Predicated region
    $region38: #{clip_forward.2} parent=1 // pred_check
      _
    $region39: #{clip_forward.2} parent=1 // pred_check_branch
      %52 = sbr.rel (0) target = $region41
    $region40: #{clip_forward.2} parent=1 // pred_region
      _
    $region41: #{clip_forward.2} parent=1 // pred_fallthru
      _
    // Predicated region
    $region42: #{clip_forward.2} parent=1 // pred_check
      _
    $region43: #{clip_forward.2} parent=1 // pred_check_branch
      %54 = sbr.rel (0) target = $region45
    $region44: #{clip_forward.2} parent=1 // pred_region
      _
    $region45: #{clip_forward.2} parent=1 // pred_fallthru
      _
    // Predicated region
    $region46: #{clip_forward.2} parent=1 // pred_check
      _
    $region47: #{clip_forward.2} parent=1 // pred_check_branch
      %56 = sbr.rel (0) target = $region49
    $region48: #{clip_forward.2} parent=1 // pred_region
      _
    $region49: #{clip_forward.2} parent=1 // pred_fallthru
      _
    // Predicated region
    $region50: #{clip_forward.2} parent=1 // pred_check
      _
    $region51: #{clip_forward.2} parent=1 // pred_check_branch
      %58 = sbr.rel (0) target = $region53
    $region52: #{clip_forward.2} parent=1 // pred_region
      _
    $region53: #{clip_forward.2} parent=1 // pred_fallthru
      _
    // Predicated region
    $region54: #{clip_forward.2} parent=1 // pred_check
      _
    $region55: #{clip_forward.2} parent=1 // pred_check_branch
      %60 = sbr.rel (0) target = $region57
    $region56: #{clip_forward.2} parent=1 // pred_region
      _
    $region57: #{clip_forward.2} parent=1 // pred_fallthru
      _
    // Predicated region
    $region58: #{clip_forward.2} parent=1 // pred_check
      _
    $region59: #{clip_forward.2} parent=1 // pred_check_branch
      %62 = sbr.rel (0) target = $region61
    $region60: #{clip_forward.2} parent=1 // pred_region
      _
    $region61: #{clip_forward.2} parent=1 // pred_fallthru
      _
    // Predicated region
    $region62: #{clip_forward.2} parent=1 // pred_check
      _
    $region63: #{clip_forward.2} parent=1 // pred_check_branch
      %64 = sbr.rel (0) target = $region65
    $region64: #{clip_forward.2} parent=1 // pred_region
      _
    $region65: #{clip_forward.2} parent=1 // pred_fallthru
      _
    // Predicated region
    $region66: #{clip_forward.2} parent=1 // pred_check
      _
    $region67: #{clip_forward.2} parent=1 // pred_check_branch
      %66 = sbr.rel (0) target = $region69
    $region68: #{clip_forward.2} parent=1 // pred_region
      _
    $region69: #{clip_forward.2} parent=1 // pred_fallthru
      _
    // Predicated region
    $region70: #{clip_forward.2} parent=1 // pred_check
      _
    $region71: #{clip_forward.2} parent=1 // pred_check_branch
      %68 = sbr.rel (0) target = $region73
    $region72: #{clip_forward.2} parent=1 // pred_region
      _
    $region73: #{clip_forward.2} parent=1 // pred_fallthru
      _
    // Predicated region
    $region74: #{clip_forward.2} parent=1 // pred_check
      _
    $region75: #{clip_forward.2} parent=1 // pred_check_branch
      %70 = sbr.rel (0) target = $region77
    $region76: #{clip_forward.2} parent=1 // pred_region
      _
    $region77: #{clip_forward.2} parent=1 // pred_fallthru
      _
    // Predicated region
    $region78: #{clip_forward.2} parent=1 // pred_check
      _
    $region79: #{clip_forward.2} parent=1 // pred_check_branch
      %72 = sbr.rel (0) target = $region81
    $region80: #{clip_forward.2} parent=1 // pred_region
      _
    $region81: #{clip_forward.2} parent=1 // pred_fallthru
      _
    // Predicated region
    $region82: #{clip_forward.2} parent=1 // pred_check
      _
    $region83: #{clip_forward.2} parent=1 // pred_check_branch
      %74 = sbr.rel (0) target = $region85
    $region84: #{clip_forward.2} parent=1 // pred_region
      _
    $region85: #{clip_forward.2} parent=1 // pred_fallthru
      _
    // Predicated region
    $region86: #{clip_forward.2} parent=1 // pred_check
      _
    $region87: #{clip_forward.2} parent=1 // pred_check_branch
      %76 = sbr.rel (0) target = $region89
    $region88: #{clip_forward.2} parent=1 // pred_region
      _
    $region89: #{clip_forward.2} parent=1 // pred_fallthru
      _
    // Predicated region
    $region90: #{clip_forward.2} parent=1 // pred_check
      _
    $region91: #{clip_forward.2} parent=1 // pred_check_branch
      %78 = sbr.rel (0) target = $region93
    $region92: #{clip_forward.2} parent=1 // pred_region
      _
    $region93: #{clip_forward.2} parent=1 // pred_fallthru
      _
    // Predicated region
    $region94: #{clip_forward.2} parent=1 // pred_check
      _
    $region95: #{clip_forward.2} parent=1 // pred_check_branch
      %80 = sbr.rel (0) target = $region97
    $region96: #{clip_forward.2} parent=1 // pred_region
      _
    $region97: #{clip_forward.2} parent=1 // pred_fallthru
      _
    // Predicated region
    $region98: #{clip_forward.2} parent=1 // pred_check
      _
    $region99: #{clip_forward.2} parent=1 // pred_check_branch
      %82 = sbr.rel (0) target = $region101
    $region100: #{clip_forward.2} parent=1 // pred_region
      _
    $region101: #{clip_forward.2} parent=1 // pred_fallthru
      _
    // Predicated region
    $region102: #{clip_forward.2} parent=1 // pred_check
      _
    $region103: #{clip_forward.2} parent=1 // pred_check_branch
      %84 = sbr.rel (0) target = $region105
    $region104: #{clip_forward.2} parent=1 // pred_region
      _
    $region105: #{clip_forward.2} parent=1 // pred_fallthru
      _
    // Predicated region
    $region106: #{clip_forward.2} parent=1 // pred_check
      _
    $region107: #{clip_forward.2} parent=1 // pred_check_branch
      %86 = sbr.rel (0) target = $region109
    $region108: #{clip_forward.2} parent=1 // pred_region
      _
    $region109: #{clip_forward.2} parent=1 // pred_fallthru
      _
    %v88 = vld [vmem:[%s0] sm:$0xff]
    %v89 = vld [vmem:[%s0 + $0x8] sm:$0xff]
    %v90 = vpack.c.bf16 %v88, %v88
    %v91 = vpack.c.bf16 %v89, %v89
    %v92 = vld [vmem:[%s1] sm:$0xf]
    %v93 = vld [vmem:[%s1 + $0x4] sm:$0xf]
    %v94 = vld [vmem:[%s1 + $0x8] sm:$0xf]
    %v95 = vld [vmem:[%s1 + $0xc] sm:$0xf]
    %v96 = vld [vmem:[%s1 + $0x10] sm:$0xf]
    %v97 = vld [vmem:[%s1 + $0x14] sm:$0xf]
    %v98 = vld [vmem:[%s1 + $0x18] sm:$0xf]
    %v99 = vld [vmem:[%s1 + $0x1c] sm:$0xf]
    %v100 = vld [vmem:[%s1 + $0x20] sm:$0xf]
    %v101 = vld [vmem:[%s1 + $0x24] sm:$0xf]
    %v102 = vld [vmem:[%s1 + $0x28] sm:$0xf]
    %v103 = vld [vmem:[%s1 + $0x2c] sm:$0xf]
    %v104 = vld [vmem:[%s1 + $0x30] sm:$0xf]
    %v105 = vld [vmem:[%s1 + $0x34] sm:$0xf]
    %v106 = vld [vmem:[%s1 + $0x38] sm:$0xf]
    %v107 = vld [vmem:[%s1 + $0x3c] sm:$0xf]
    %v108 = vld [vmem:[%s1 + $0x40] sm:$0xf]
    %v109 = vld [vmem:[%s1 + $0x44] sm:$0xf]
    %v110 = vld [vmem:[%s1 + $0x48] sm:$0xf]
    %v111 = vld [vmem:[%s1 + $0x4c] sm:$0xf]
    %v112 = vld [vmem:[%s1 + $0x50] sm:$0xf]
    %v113 = vld [vmem:[%s1 + $0x54] sm:$0xf]
    %v114 = vld [vmem:[%s1 + $0x58] sm:$0xf]
    %v115 = vld [vmem:[%s1 + $0x5c] sm:$0xf]
    %v116 = vld [vmem:[%s2] sm:$0x1]
    %v118 = vperm.slane %v116, 0
    %v144 = vunpack.c.l.b16 %v92
    %v145 = vunpack.c.l.b16 %v93
    %v146 = vunpack.c.l.b16 %v94
    %v147 = vunpack.c.l.b16 %v95
    %v148 = vunpack.c.l.b16 %v96
    %v149 = vunpack.c.l.b16 %v97
    %v150 = vunpack.c.l.b16 %v98
    %v151 = vunpack.c.l.b16 %v99
    %v152 = vunpack.c.l.b16 %v100
    %v153 = vunpack.c.l.b16 %v101
    %v154 = vunpack.c.l.b16 %v102
    %v155 = vunpack.c.l.b16 %v103
    %v156 = vunpack.c.l.b16 %v104
    %v157 = vunpack.c.l.b16 %v105
    %v158 = vunpack.c.l.b16 %v106
    %v159 = vunpack.c.l.b16 %v107
    %v160 = vunpack.c.l.b16 %v108
    %v161 = vunpack.c.l.b16 %v109
    %v162 = vunpack.c.l.b16 %v110
    %v163 = vunpack.c.l.b16 %v111
    %v164 = vunpack.c.l.b16 %v112
    %v165 = vunpack.c.l.b16 %v113
    %v166 = vunpack.c.l.b16 %v114
    %v167 = vunpack.c.l.b16 %v115
    %v168 = vpack.c.b16 %v145, %v144
    %v169 = vpack.c.b16 %v147, %v146
    %v170 = vpack.c.b16 %v149, %v148
    %v171 = vpack.c.b16 %v151, %v150
    %v172 = vpack.c.b16 %v153, %v152
    %v173 = vpack.c.b16 %v155, %v154
    %v174 = vpack.c.b16 %v157, %v156
    %v175 = vpack.c.b16 %v159, %v158
    %v176 = vpack.c.b16 %v161, %v160
    %v177 = vpack.c.b16 %v163, %v162
    %v178 = vpack.c.b16 %v165, %v164
    %v179 = vpack.c.b16 %v167, %v166
    %vm192 = vcmask 523264
    %v194 = vsel %vm192, %v91, 0
    %196 = vmatpush.bf16.msra.mxu0 %v175
    %197 = vmatpush.bf16.msra.mxu0 %v174
    %198 = vmatpush.bf16.msra.mxu0 %v173
    %199 = vmatpush.bf16.msra.mxu0 %v172
    %200 = vmatpush.bf16.msra.mxu0 %v171
    %201 = vmatpush.bf16.msra.mxu0 %v170
    %202 = vmatpush.bf16.msra.mxu0 %v169
    %203 = vmatpush.bf16.msra.mxu0 %v168
    %204 = vmatmul.bf16.gmra.mxu0 %v90
    %v205 = vpop.f32.mrf.mxu0
    %v206 = vadd.f32 %v118, %v205
    %v207 = vpop.f32.mrf.mxu0
    %208 = vdwg.mxu0
    %209 = vmatpush.bf16.msra.mxu0 0
    %210 = vmatpush.bf16.msra.mxu0 0
    %211 = vmatpush.bf16.msra.mxu0 0
    %212 = vmatpush.bf16.msra.mxu0 0
    %213 = vmatpush.bf16.msra.mxu0 %v179
    %214 = vmatpush.bf16.msra.mxu0 %v178
    %215 = vmatpush.bf16.msra.mxu0 %v177
    %216 = vmatpush.bf16.msra.mxu0 %v176
    %217 = vmatmul.bf16.gmra.mxu0 %v194
    %v218 = vpop.f32.mrf.mxu0
    %v219 = vadd.f32 %v206, %v218
    %v220 = vpop.f32.mrf.mxu0
    %221 = vdwg.mxu0
    %v223 = vrot.slane %v219, 4
    %v224 = vld [vmem:[%s3] sm:$0x1]
    %225 = vst [vmem:[#allocation1] ss:$2 sm:$0xff] %v219
    %v226 = vld.sshfl [vmem:[#allocation1] sm:$0xff pattern:$0x75316420]
    %s227 = scalar_lea.vmem [#allocation1], 16
    %228 = vst [vmem:[%s227] ss:$2 sm:$0xff] %v223
    %v229 = vld.sshfl [vmem:[#allocation1 + $0x10] sm:$0xff pattern:$0x75316420]
    %v230 = vrot.slane %v226, 7
    %v231 = vrot.slane %v229, 7
    %vm234 = vcmask 1040384
    %v235 = vsel %vm234, %v224, %v230
    %v236 = vsel %vm234, %v224, %v231
    %vm237 = vcmask 1044480
    %v238 = vsel %vm237, %v235, 0.0
    %v239 = vsel %vm237, %v236, 0.0
    %v240 = vld [vmem:[%s4] sm:$0xff]
    %v241 = vadd.f32 %v238, %v240
    %v242 = vadd.f32 %v239, %v240
    %v243 = vlaneseq
    %v244 = vand.u32 %v243, 127
    %vm245 = vcmp.lt.s32.totalorder %v244, 5
    %v246 = vsel %vm245, 0.0, -1e+09
    %v247 = vld [vmem:[%s5] sm:$0x1]
    %v248 = vld [vmem:[%s6] sm:$0x1]
    %vm249 = vcmask 261120
    %v250 = vsel %vm249, %v241, 0.0
    %251 = vadd.xlane.f32.xlu0 %v250
    %v252 = vpop.xlane.xlu0 %251
    %v253 = vsel %vm249, %v242, 0.0
    %254 = vadd.xlane.f32.xlu0 %v253
    %v255 = vpop.xlane.xlu0 %254
    %v256 = vrcp.pop 32.0
    %v257 = vmul.f32 32.0, %v256
    %v258 = vsub.f32 1.0, %v257
    %v259 = vmul.f32 %v256, %v258
    %v260 = vadd.f32 %v256, %v259
    %vm261 = vweird.f32 %v256
    %v262 = vsel %vm261, %v256, %v260
    %v263 = vmul.f32 %v252, %v262
    %v264 = vmul.f32 %v255, %v262
    %v265 = vsub.f32 %v241, %v263
    %v266 = vsub.f32 %v242, %v264
    %v267 = vmul.f32 %v265, %v265
    %v268 = vmul.f32 %v266, %v266
    %v269 = vsel %vm249, %v267, 0.0
    %270 = vadd.xlane.f32.xlu0 %v269
    %v271 = vpop.xlane.xlu0 %270
    %v272 = vsel %vm249, %v268, 0.0
    %273 = vadd.xlane.f32.xlu0 %v272
    %v274 = vpop.xlane.xlu0 %273
    %v275 = vmul.f32 %v271, %v262
    %v276 = vmul.f32 %v274, %v262
    %v277 = vadd.f32 %v275, 1e-12
    %v278 = vadd.f32 %v276, 1e-12
    %v279 = vrsqrt.pop %v277
    %v280 = vmul.f32 %v279, %v277
    %v281 = vmul.f32 %v280, %v279
    %v282 = vmul.f32 0.5, %v281
    %v283 = vsub.f32 1.5, %v282
    %v284 = vmul.f32 %v279, %v283
    %vm285 = vweird.f32 %v277
    %vm286 = vweird.f32 %v279
    %vm287 = vmor %vm285, %vm286
    %v288 = vsel %vm287, %v279, %v284
    %v289 = vrsqrt.pop %v278
    %v290 = vmul.f32 %v289, %v278
    %v291 = vmul.f32 %v290, %v289
    %v292 = vmul.f32 0.5, %v291
    %v293 = vsub.f32 1.5, %v292
    %v294 = vmul.f32 %v289, %v293
    %vm295 = vweird.f32 %v278
    %vm296 = vweird.f32 %v289
    %vm297 = vmor %vm295, %vm296
    %v298 = vsel %vm297, %v289, %v294
    %v299 = vmul.f32 %v265, %v288
    %v300 = vmul.f32 %v266, %v298
    %v302 = vperm.slane %v247, 0
    %v304 = vmul.f32 %v299, %v302
    %v305 = vmul.f32 %v300, %v302
    %v307 = vperm.slane %v248, 0
    %v309 = vadd.f32 %v304, %v307
    %v310 = vadd.f32 %v305, %v307
    %v311 = vld [vmem:[%s7] sm:$0xf]
    %v312 = vld [vmem:[%s7 + $0x4] sm:$0xf]
    %v313 = vld [vmem:[%s7 + $0x8] sm:$0xf]
    %v314 = vld [vmem:[%s7 + $0xc] sm:$0xf]
    %v315 = vld [vmem:[%s8] sm:$0x1]
    %v316 = vld [vmem:[%s9] sm:$0xf]
    %v317 = vld [vmem:[%s9 + $0x4] sm:$0xf]
    %v318 = vld [vmem:[%s9 + $0x8] sm:$0xf]
    %v319 = vld [vmem:[%s9 + $0xc] sm:$0xf]
    %v320 = vld [vmem:[%s10] sm:$0x1]
    %v321 = vpack.c.bf16 %v310, %v309
    %v323 = vperm.slane %v315, 0
    %v329 = vunpack.c.l.b16 %v311
    %v330 = vunpack.c.l.b16 %v312
    %v331 = vunpack.c.l.b16 %v313
    %v332 = vunpack.c.l.b16 %v314
    %v333 = vpack.c.b16 %v330, %v329
    %v334 = vpack.c.b16 %v332, %v331
    %v338 = vsel %vm249, %v321, 0
    %340 = vmatpush.bf16.msra.mxu0 0
    %341 = vmatpush.bf16.msra.mxu0 0
    %342 = vmatpush.bf16.msra.mxu0 0
    %343 = vmatpush.bf16.msra.mxu0 0
    %344 = vmatpush.bf16.msra.mxu0 0
    %345 = vmatpush.bf16.msra.mxu0 0
    %346 = vmatpush.bf16.msra.mxu0 %v334
    %347 = vmatpush.bf16.msra.mxu0 %v333
    %348 = vmatmul.bf16.gmra.mxu0 %v338
    %v349 = vpop.f32.mrf.mxu0
    %v350 = vadd.f32 %v323, %v349
    %v351 = vpop.f32.mrf.mxu0
    %v352 = vadd.f32 %v323, %v351
    %353 = vdwg.mxu0
    %356 = vrot.lane.b32.xlu0 %v350, 120
    %v357 = vpop.permute.xlu0 %356
    %358 = vrot.lane.b32.xlu0 %v352, 120
    %v359 = vpop.permute.xlu0 %358
    %362 = vrot.lane.b32.xlu0 %v350, 112
    %v363 = vpop.permute.xlu0 %362
    %364 = vrot.lane.b32.xlu0 %v352, 112
    %v365 = vpop.permute.xlu0 %364
    %368 = vrot.lane.b32.xlu0 %v350, 104
    %v369 = vpop.permute.xlu0 %368
    %370 = vrot.lane.b32.xlu0 %v352, 104
    %v371 = vpop.permute.xlu0 %370
    %v374 = vpack.c.bf16 %v350, %v350
    %v375 = vpack.c.bf16 %v352, %v352
    %v376 = vpack.c.bf16 %v357, %v357
    %v377 = vpack.c.bf16 %v359, %v359
    %v378 = vpack.c.bf16 %v363, %v363
    %v379 = vpack.c.bf16 %v365, %v365
    %v380 = vpack.c.bf16 %v369, %v369
    %v381 = vpack.c.bf16 %v371, %v371
    %v383 = vunpack.c.l.b16 %v374
    %v384 = vpack.c.b16 %v383, %v383
    %385 = vrot.lane.b32.xlu0 %v384, 96
    %v386 = vpop.permute.xlu0 %385
    %vm387 = vcmask 64512
    %v389 = vsel %vm387, %v374, 0
    %v392 = vsel %vm387, %v386, 0
    %394 = vmatpush.bf16.xpose.msra.mxu0 0
    %395 = vmatpush.bf16.xpose.msra.mxu0 0
    %396 = vmatpush.bf16.xpose.msra.mxu0 0
    %397 = vmatpush.bf16.xpose.msra.mxu0 0
    %398 = vmatpush.bf16.xpose.msra.mxu0 0
    %399 = vmatpush.bf16.xpose.msra.mxu0 0
    %400 = vmatpush.bf16.xpose.msra.mxu0 0
    %401 = vmatpush.bf16.xpose.msra.mxu0 %v392
    %402 = vmatmul.bf16.gmra.mxu0 %v389
    %v403 = vpop.f32.mrf.mxu0
    %v404 = vadd.f32 0.0, %v403
    %v405 = vpop.f32.mrf.mxu0
    %406 = vdwg.mxu0
    %v408 = vunpack.c.l.b16 %v375
    %v409 = vpack.c.b16 %v408, %v408
    %410 = vrot.lane.b32.xlu0 %v409, 96
    %v411 = vpop.permute.xlu0 %410
    %v413 = vsel %vm387, %v375, 0
    %v416 = vsel %vm387, %v411, 0
    %418 = vmatpush.bf16.xpose.msra.mxu0 0
    %419 = vmatpush.bf16.xpose.msra.mxu0 0
    %420 = vmatpush.bf16.xpose.msra.mxu0 0
    %421 = vmatpush.bf16.xpose.msra.mxu0 0
    %422 = vmatpush.bf16.xpose.msra.mxu0 0
    %423 = vmatpush.bf16.xpose.msra.mxu0 0
    %424 = vmatpush.bf16.xpose.msra.mxu0 0
    %425 = vmatpush.bf16.xpose.msra.mxu0 %v416
    %426 = vmatmul.bf16.gmra.mxu0 %v413
    %v427 = vpop.f32.mrf.mxu0
    %v428 = vadd.f32 0.0, %v427
    %v429 = vpop.f32.mrf.mxu0
    %430 = vdwg.mxu0
    %v432 = vunpack.c.l.b16 %v376
    %v433 = vpack.c.b16 %v432, %v432
    %434 = vrot.lane.b32.xlu0 %v433, 96
    %v435 = vpop.permute.xlu0 %434
    %v437 = vsel %vm387, %v376, 0
    %v440 = vsel %vm387, %v435, 0
    %442 = vmatpush.bf16.xpose.msra.mxu0 0
    %443 = vmatpush.bf16.xpose.msra.mxu0 0
    %444 = vmatpush.bf16.xpose.msra.mxu0 0
    %445 = vmatpush.bf16.xpose.msra.mxu0 0
    %446 = vmatpush.bf16.xpose.msra.mxu0 0
    %447 = vmatpush.bf16.xpose.msra.mxu0 0
    %448 = vmatpush.bf16.xpose.msra.mxu0 0
    %449 = vmatpush.bf16.xpose.msra.mxu0 %v440
    %450 = vmatmul.bf16.gmra.mxu0 %v437
    %v451 = vpop.f32.mrf.mxu0
    %v452 = vadd.f32 0.0, %v451
    %v453 = vpop.f32.mrf.mxu0
    %454 = vdwg.mxu0
    %v456 = vunpack.c.l.b16 %v377
    %v457 = vpack.c.b16 %v456, %v456
    %458 = vrot.lane.b32.xlu0 %v457, 96
    %v459 = vpop.permute.xlu0 %458
    %v461 = vsel %vm387, %v377, 0
    %v464 = vsel %vm387, %v459, 0
    %466 = vmatpush.bf16.xpose.msra.mxu0 0
    %467 = vmatpush.bf16.xpose.msra.mxu0 0
    %468 = vmatpush.bf16.xpose.msra.mxu0 0
    %469 = vmatpush.bf16.xpose.msra.mxu0 0
    %470 = vmatpush.bf16.xpose.msra.mxu0 0
    %471 = vmatpush.bf16.xpose.msra.mxu0 0
    %472 = vmatpush.bf16.xpose.msra.mxu0 0
    %473 = vmatpush.bf16.xpose.msra.mxu0 %v464
    %474 = vmatmul.bf16.gmra.mxu0 %v461
    %v475 = vpop.f32.mrf.mxu0
    %v476 = vadd.f32 0.0, %v475
    %v477 = vpop.f32.mrf.mxu0
    %478 = vdwg.mxu0
    %v480 = vunpack.c.l.b16 %v378
    %v481 = vpack.c.b16 %v480, %v480
    %482 = vrot.lane.b32.xlu0 %v481, 96
    %v483 = vpop.permute.xlu0 %482
    %v485 = vsel %vm387, %v378, 0
    %v488 = vsel %vm387, %v483, 0
    %490 = vmatpush.bf16.xpose.msra.mxu0 0
    %491 = vmatpush.bf16.xpose.msra.mxu0 0
    %492 = vmatpush.bf16.xpose.msra.mxu0 0
    %493 = vmatpush.bf16.xpose.msra.mxu0 0
    %494 = vmatpush.bf16.xpose.msra.mxu0 0
    %495 = vmatpush.bf16.xpose.msra.mxu0 0
    %496 = vmatpush.bf16.xpose.msra.mxu0 0
    %497 = vmatpush.bf16.xpose.msra.mxu0 %v488
    %498 = vmatmul.bf16.gmra.mxu0 %v485
    %v499 = vpop.f32.mrf.mxu0
    %v500 = vadd.f32 0.0, %v499
    %v501 = vpop.f32.mrf.mxu0
    %502 = vdwg.mxu0
    %v504 = vunpack.c.l.b16 %v379
    %v505 = vpack.c.b16 %v504, %v504
    %506 = vrot.lane.b32.xlu0 %v505, 96
    %v507 = vpop.permute.xlu0 %506
    %v509 = vsel %vm387, %v379, 0
    %v512 = vsel %vm387, %v507, 0
    %514 = vmatpush.bf16.xpose.msra.mxu0 0
    %515 = vmatpush.bf16.xpose.msra.mxu0 0
    %516 = vmatpush.bf16.xpose.msra.mxu0 0
    %517 = vmatpush.bf16.xpose.msra.mxu0 0
    %518 = vmatpush.bf16.xpose.msra.mxu0 0
    %519 = vmatpush.bf16.xpose.msra.mxu0 0
    %520 = vmatpush.bf16.xpose.msra.mxu0 0
    %521 = vmatpush.bf16.xpose.msra.mxu0 %v512
    %522 = vmatmul.bf16.gmra.mxu0 %v509
    %v523 = vpop.f32.mrf.mxu0
    %v524 = vadd.f32 0.0, %v523
    %v525 = vpop.f32.mrf.mxu0
    %526 = vdwg.mxu0
    %v528 = vunpack.c.l.b16 %v380
    %v529 = vpack.c.b16 %v528, %v528
    %530 = vrot.lane.b32.xlu0 %v529, 96
    %v531 = vpop.permute.xlu0 %530
    %v533 = vsel %vm387, %v380, 0
    %v536 = vsel %vm387, %v531, 0
    %538 = vmatpush.bf16.xpose.msra.mxu0 0
    %539 = vmatpush.bf16.xpose.msra.mxu0 0
    %540 = vmatpush.bf16.xpose.msra.mxu0 0
    %541 = vmatpush.bf16.xpose.msra.mxu0 0
    %542 = vmatpush.bf16.xpose.msra.mxu0 0
    %543 = vmatpush.bf16.xpose.msra.mxu0 0
    %544 = vmatpush.bf16.xpose.msra.mxu0 0
    %545 = vmatpush.bf16.xpose.msra.mxu0 %v536
    %546 = vmatmul.bf16.gmra.mxu0 %v533
    %v547 = vpop.f32.mrf.mxu0
    %v548 = vadd.f32 0.0, %v547
    %v549 = vpop.f32.mrf.mxu0
    %550 = vdwg.mxu0
    %v552 = vunpack.c.l.b16 %v381
    %v553 = vpack.c.b16 %v552, %v552
    %554 = vrot.lane.b32.xlu0 %v553, 96
    %v555 = vpop.permute.xlu0 %554
    %v557 = vsel %vm387, %v381, 0
    %v560 = vsel %vm387, %v555, 0
    %562 = vmatpush.bf16.xpose.msra.mxu0 0
    %563 = vmatpush.bf16.xpose.msra.mxu0 0
    %564 = vmatpush.bf16.xpose.msra.mxu0 0
    %565 = vmatpush.bf16.xpose.msra.mxu0 0
    %566 = vmatpush.bf16.xpose.msra.mxu0 0
    %567 = vmatpush.bf16.xpose.msra.mxu0 0
    %568 = vmatpush.bf16.xpose.msra.mxu0 0
    %569 = vmatpush.bf16.xpose.msra.mxu0 %v560
    %570 = vmatmul.bf16.gmra.mxu0 %v557
    %v571 = vpop.f32.mrf.mxu0
    %v572 = vadd.f32 0.0, %v571
    %v573 = vpop.f32.mrf.mxu0
    %574 = vdwg.mxu0
    %v575 = vmul.f32 %v404, 0.35355338
    %v576 = vmul.f32 %v428, 0.35355338
    %v577 = vmul.f32 %v452, 0.35355338
    %v578 = vmul.f32 %v476, 0.35355338
    %v579 = vmul.f32 %v500, 0.35355338
    %v580 = vmul.f32 %v524, 0.35355338
    %v581 = vmul.f32 %v548, 0.35355338
    %v582 = vmul.f32 %v572, 0.35355338
    %v583 = vadd.f32 %v575, %v246
    %v584 = vadd.f32 %v576, %v246
    %v585 = vadd.f32 %v577, %v246
    %v586 = vadd.f32 %v578, %v246
    %v587 = vadd.f32 %v579, %v246
    %v588 = vadd.f32 %v580, %v246
    %v589 = vadd.f32 %v581, %v246
    %v590 = vadd.f32 %v582, %v246
    %v591 = vsel %vm387, %v583, -inf
    %592 = vmax.xlane.f32.xlu0 %v591
    %v593 = vpop.xlane.xlu0 %592
    %v594 = vsel %vm387, %v584, -inf
    %595 = vmax.xlane.f32.xlu0 %v594
    %v596 = vpop.xlane.xlu0 %595
    %v597 = vsel %vm387, %v585, -inf
    %598 = vmax.xlane.f32.xlu0 %v597
    %v599 = vpop.xlane.xlu0 %598
    %v600 = vsel %vm387, %v586, -inf
    %601 = vmax.xlane.f32.xlu0 %v600
    %v602 = vpop.xlane.xlu0 %601
    %v603 = vsel %vm387, %v587, -inf
    %604 = vmax.xlane.f32.xlu0 %v603
    %v605 = vpop.xlane.xlu0 %604
    %v606 = vsel %vm387, %v588, -inf
    %607 = vmax.xlane.f32.xlu0 %v606
    %v608 = vpop.xlane.xlu0 %607
    %v609 = vsel %vm387, %v589, -inf
    %610 = vmax.xlane.f32.xlu0 %v609
    %v611 = vpop.xlane.xlu0 %610
    %v612 = vsel %vm387, %v590, -inf
    %613 = vmax.xlane.f32.xlu0 %v612
    %v614 = vpop.xlane.xlu0 %613
    %v615 = vsub.f32 %v583, %v593
    %v616 = vsub.f32 %v584, %v596
    %v617 = vsub.f32 %v585, %v599
    %v618 = vsub.f32 %v586, %v602
    %v619 = vsub.f32 %v587, %v605
    %v620 = vsub.f32 %v588, %v608
    %v621 = vsub.f32 %v589, %v611
    %v622 = vsub.f32 %v590, %v614
    %v623 = vmul.f32 %v615, 1.442695
    %v624 = vpow.pop %v623
    %v625 = vmul.f32 %v616, 1.442695
    %v626 = vpow.pop %v625
    %v627 = vmul.f32 %v617, 1.442695
    %v628 = vpow.pop %v627
    %v629 = vmul.f32 %v618, 1.442695
    %v630 = vpow.pop %v629
    %v631 = vmul.f32 %v619, 1.442695
    %v632 = vpow.pop %v631
    %v633 = vmul.f32 %v620, 1.442695
    %v634 = vpow.pop %v633
    %v635 = vmul.f32 %v621, 1.442695
    %v636 = vpow.pop %v635
    %v637 = vmul.f32 %v622, 1.442695
    %v638 = vpow.pop %v637
    %v639 = vsel %vm387, %v624, 0.0
    %640 = vadd.xlane.f32.xlu0 %v639
    %v641 = vpop.xlane.xlu0 %640
    %v642 = vsel %vm387, %v626, 0.0
    %643 = vadd.xlane.f32.xlu0 %v642
    %v644 = vpop.xlane.xlu0 %643
    %v645 = vsel %vm387, %v628, 0.0
    %646 = vadd.xlane.f32.xlu0 %v645
    %v647 = vpop.xlane.xlu0 %646
    %v648 = vsel %vm387, %v630, 0.0
    %649 = vadd.xlane.f32.xlu0 %v648
    %v650 = vpop.xlane.xlu0 %649
    %v651 = vsel %vm387, %v632, 0.0
    %652 = vadd.xlane.f32.xlu0 %v651
    %v653 = vpop.xlane.xlu0 %652
    %v654 = vsel %vm387, %v634, 0.0
    %655 = vadd.xlane.f32.xlu0 %v654
    %v656 = vpop.xlane.xlu0 %655
    %v657 = vsel %vm387, %v636, 0.0
    %658 = vadd.xlane.f32.xlu0 %v657
    %v659 = vpop.xlane.xlu0 %658
    %v660 = vsel %vm387, %v638, 0.0
    %661 = vadd.xlane.f32.xlu0 %v660
    %v662 = vpop.xlane.xlu0 %661
    %v663 = vrcp.pop %v641
    %v664 = vrcp.pop %v644
    %v665 = vrcp.pop %v647
    %v666 = vrcp.pop %v650
    %v667 = vrcp.pop %v653
    %v668 = vrcp.pop %v656
    %v669 = vrcp.pop %v659
    %v670 = vrcp.pop %v662
    %v671 = vmul.f32 %v624, %v663
    %v672 = vmul.f32 %v626, %v664
    %v673 = vmul.f32 %v628, %v665
    %v674 = vmul.f32 %v630, %v666
    %v675 = vmul.f32 %v632, %v667
    %v676 = vmul.f32 %v634, %v668
    %v677 = vmul.f32 %v636, %v669
    %v678 = vmul.f32 %v638, %v670
    %v679 = vpack.c.bf16 %v671, %v671
    %v680 = vpack.c.bf16 %v672, %v672
    %v681 = vpack.c.bf16 %v673, %v673
    %v682 = vpack.c.bf16 %v674, %v674
    %v683 = vpack.c.bf16 %v675, %v675
    %v684 = vpack.c.bf16 %v676, %v676
    %v685 = vpack.c.bf16 %v677, %v677
    %v686 = vpack.c.bf16 %v678, %v678
    %687 = vrot.lane.b32.xlu0 %v384, 64
    %v688 = vpop.permute.xlu0 %687
    %v690 = vsel %vm387, %v679, 0
    %vm692 = vcmask 1043456
    %v694 = vsel %vm692, %v688, 0
    %696 = vmatpush.bf16.msra.mxu0 0
    %697 = vmatpush.bf16.msra.mxu0 0
    %698 = vmatpush.bf16.msra.mxu0 0
    %699 = vmatpush.bf16.msra.mxu0 0
    %700 = vmatpush.bf16.msra.mxu0 0
    %701 = vmatpush.bf16.msra.mxu0 0
    %702 = vmatpush.bf16.msra.mxu0 0
    %703 = vmatpush.bf16.msra.mxu0 %v694
    %704 = vmatmul.bf16.gmra.mxu0 %v690
    %v705 = vpop.f32.mrf.mxu0
    %v706 = vadd.f32 0.0, %v705
    %v707 = vpop.f32.mrf.mxu0
    %708 = vdwg.mxu0
    %709 = vrot.lane.b32.xlu0 %v409, 64
    %v710 = vpop.permute.xlu0 %709
    %v712 = vsel %vm387, %v680, 0
    %v715 = vsel %vm692, %v710, 0
    %717 = vmatpush.bf16.msra.mxu0 0
    %718 = vmatpush.bf16.msra.mxu0 0
    %719 = vmatpush.bf16.msra.mxu0 0
    %720 = vmatpush.bf16.msra.mxu0 0
    %721 = vmatpush.bf16.msra.mxu0 0
    %722 = vmatpush.bf16.msra.mxu0 0
    %723 = vmatpush.bf16.msra.mxu0 0
    %724 = vmatpush.bf16.msra.mxu0 %v715
    %725 = vmatmul.bf16.gmra.mxu0 %v712
    %v726 = vpop.f32.mrf.mxu0
    %v727 = vadd.f32 0.0, %v726
    %v728 = vpop.f32.mrf.mxu0
    %729 = vdwg.mxu0
    %730 = vrot.lane.b32.xlu0 %v433, 64
    %v731 = vpop.permute.xlu0 %730
    %v733 = vsel %vm387, %v681, 0
    %v736 = vsel %vm692, %v731, 0
    %738 = vmatpush.bf16.msra.mxu0 0
    %739 = vmatpush.bf16.msra.mxu0 0
    %740 = vmatpush.bf16.msra.mxu0 0
    %741 = vmatpush.bf16.msra.mxu0 0
    %742 = vmatpush.bf16.msra.mxu0 0
    %743 = vmatpush.bf16.msra.mxu0 0
    %744 = vmatpush.bf16.msra.mxu0 0
    %745 = vmatpush.bf16.msra.mxu0 %v736
    %746 = vmatmul.bf16.gmra.mxu0 %v733
    %v747 = vpop.f32.mrf.mxu0
    %v748 = vadd.f32 0.0, %v747
    %v749 = vpop.f32.mrf.mxu0
    %750 = vdwg.mxu0
    %751 = vrot.lane.b32.xlu0 %v457, 64
    %v752 = vpop.permute.xlu0 %751
    %v754 = vsel %vm387, %v682, 0
    %v757 = vsel %vm692, %v752, 0
    %759 = vmatpush.bf16.msra.mxu0 0
    %760 = vmatpush.bf16.msra.mxu0 0
    %761 = vmatpush.bf16.msra.mxu0 0
    %762 = vmatpush.bf16.msra.mxu0 0
    %763 = vmatpush.bf16.msra.mxu0 0
    %764 = vmatpush.bf16.msra.mxu0 0
    %765 = vmatpush.bf16.msra.mxu0 0
    %766 = vmatpush.bf16.msra.mxu0 %v757
    %767 = vmatmul.bf16.gmra.mxu0 %v754
    %v768 = vpop.f32.mrf.mxu0
    %v769 = vadd.f32 0.0, %v768
    %v770 = vpop.f32.mrf.mxu0
    %771 = vdwg.mxu0
    %772 = vrot.lane.b32.xlu0 %v481, 64
    %v773 = vpop.permute.xlu0 %772
    %v775 = vsel %vm387, %v683, 0
    %v778 = vsel %vm692, %v773, 0
    %780 = vmatpush.bf16.msra.mxu0 0
    %781 = vmatpush.bf16.msra.mxu0 0
    %782 = vmatpush.bf16.msra.mxu0 0
    %783 = vmatpush.bf16.msra.mxu0 0
    %784 = vmatpush.bf16.msra.mxu0 0
    %785 = vmatpush.bf16.msra.mxu0 0
    %786 = vmatpush.bf16.msra.mxu0 0
    %787 = vmatpush.bf16.msra.mxu0 %v778
    %788 = vmatmul.bf16.gmra.mxu0 %v775
    %v789 = vpop.f32.mrf.mxu0
    %v790 = vadd.f32 0.0, %v789
    %v791 = vpop.f32.mrf.mxu0
    %792 = vdwg.mxu0
    %793 = vrot.lane.b32.xlu0 %v505, 64
    %v794 = vpop.permute.xlu0 %793
    %v796 = vsel %vm387, %v684, 0
    %v799 = vsel %vm692, %v794, 0
    %801 = vmatpush.bf16.msra.mxu0 0
    %802 = vmatpush.bf16.msra.mxu0 0
    %803 = vmatpush.bf16.msra.mxu0 0
    %804 = vmatpush.bf16.msra.mxu0 0
    %805 = vmatpush.bf16.msra.mxu0 0
    %806 = vmatpush.bf16.msra.mxu0 0
    %807 = vmatpush.bf16.msra.mxu0 0
    %808 = vmatpush.bf16.msra.mxu0 %v799
    %809 = vmatmul.bf16.gmra.mxu0 %v796
    %v810 = vpop.f32.mrf.mxu0
    %v811 = vadd.f32 0.0, %v810
    %v812 = vpop.f32.mrf.mxu0
    %813 = vdwg.mxu0
    %814 = vrot.lane.b32.xlu0 %v529, 64
    %v815 = vpop.permute.xlu0 %814
    %v817 = vsel %vm387, %v685, 0
    %v820 = vsel %vm692, %v815, 0
    %822 = vmatpush.bf16.msra.mxu0 0
    %823 = vmatpush.bf16.msra.mxu0 0
    %824 = vmatpush.bf16.msra.mxu0 0
    %825 = vmatpush.bf16.msra.mxu0 0
    %826 = vmatpush.bf16.msra.mxu0 0
    %827 = vmatpush.bf16.msra.mxu0 0
    %828 = vmatpush.bf16.msra.mxu0 0
    %829 = vmatpush.bf16.msra.mxu0 %v820
    %830 = vmatmul.bf16.gmra.mxu0 %v817
    %v831 = vpop.f32.mrf.mxu0
    %v832 = vadd.f32 0.0, %v831
    %v833 = vpop.f32.mrf.mxu0
    %834 = vdwg.mxu0
    %835 = vrot.lane.b32.xlu0 %v553, 64
    %v836 = vpop.permute.xlu0 %835
    %v838 = vsel %vm387, %v686, 0
    %v841 = vsel %vm692, %v836, 0
    %843 = vmatpush.bf16.msra.mxu0 0
    %844 = vmatpush.bf16.msra.mxu0 0
    %845 = vmatpush.bf16.msra.mxu0 0
    %846 = vmatpush.bf16.msra.mxu0 0
    %847 = vmatpush.bf16.msra.mxu0 0
    %848 = vmatpush.bf16.msra.mxu0 0
    %849 = vmatpush.bf16.msra.mxu0 0
    %850 = vmatpush.bf16.msra.mxu0 %v841
    %851 = vmatmul.bf16.gmra.mxu0 %v838
    %v852 = vpop.f32.mrf.mxu0
    %v853 = vadd.f32 0.0, %v852
    %v854 = vpop.f32.mrf.mxu0
    %855 = vdwg.mxu0
    %v856 = vpack.c.bf16 %v727, %v706
    %v858 = vsel %vm387, %v856, 0
    %v861 = vsel %vm692, %v316, 0
    %863 = vmatpush.bf16.msra.mxu0 0
    %864 = vmatpush.bf16.msra.mxu0 0
    %865 = vmatpush.bf16.msra.mxu0 0
    %866 = vmatpush.bf16.msra.mxu0 0
    %867 = vmatpush.bf16.msra.mxu0 0
    %868 = vmatpush.bf16.msra.mxu0 0
    %869 = vmatpush.bf16.msra.mxu0 0
    %870 = vmatpush.bf16.msra.mxu0 %v861
    %871 = vmatmul.bf16.gmra.mxu0 %v858
    %v872 = vpop.f32.mrf.mxu0
    %v873 = vadd.f32 0.0, %v872
    %v874 = vpop.f32.mrf.mxu0
    %v875 = vadd.f32 0.0, %v874
    %876 = vdwg.mxu0
    %v878 = vperm.slane %v320, 0
    %v880 = vadd.f32 %v878, %v873
    %v881 = vadd.f32 %v878, %v875
    %v882 = vpack.c.bf16 %v769, %v748
    %v884 = vsel %vm387, %v882, 0
    %v887 = vsel %vm692, %v317, 0
    %889 = vmatpush.bf16.msra.mxu0 0
    %890 = vmatpush.bf16.msra.mxu0 0
    %891 = vmatpush.bf16.msra.mxu0 0
    %892 = vmatpush.bf16.msra.mxu0 0
    %893 = vmatpush.bf16.msra.mxu0 0
    %894 = vmatpush.bf16.msra.mxu0 0
    %895 = vmatpush.bf16.msra.mxu0 0
    %896 = vmatpush.bf16.msra.mxu0 %v887
    %897 = vmatmul.bf16.gmra.mxu0 %v884
    %v898 = vpop.f32.mrf.mxu0
    %v899 = vadd.f32 0.0, %v898
    %v900 = vpop.f32.mrf.mxu0
    %v901 = vadd.f32 0.0, %v900
    %902 = vdwg.mxu0
    %v903 = vadd.f32 %v880, %v899
    %v904 = vadd.f32 %v881, %v901
    %v905 = vpack.c.bf16 %v811, %v790
    %v907 = vsel %vm387, %v905, 0
    %v910 = vsel %vm692, %v318, 0
    %912 = vmatpush.bf16.msra.mxu0 0
    %913 = vmatpush.bf16.msra.mxu0 0
    %914 = vmatpush.bf16.msra.mxu0 0
    %915 = vmatpush.bf16.msra.mxu0 0
    %916 = vmatpush.bf16.msra.mxu0 0
    %917 = vmatpush.bf16.msra.mxu0 0
    %918 = vmatpush.bf16.msra.mxu0 0
    %919 = vmatpush.bf16.msra.mxu0 %v910
    %920 = vmatmul.bf16.gmra.mxu0 %v907
    %v921 = vpop.f32.mrf.mxu0
    %v922 = vadd.f32 0.0, %v921
    %v923 = vpop.f32.mrf.mxu0
    %v924 = vadd.f32 0.0, %v923
    %925 = vdwg.mxu0
    %v926 = vadd.f32 %v903, %v922
    %v927 = vadd.f32 %v904, %v924
    %v928 = vpack.c.bf16 %v853, %v832
    %v930 = vsel %vm387, %v928, 0
    %v933 = vsel %vm692, %v319, 0
    %935 = vmatpush.bf16.msra.mxu0 0
    %936 = vmatpush.bf16.msra.mxu0 0
    %937 = vmatpush.bf16.msra.mxu0 0
    %938 = vmatpush.bf16.msra.mxu0 0
    %939 = vmatpush.bf16.msra.mxu0 0
    %940 = vmatpush.bf16.msra.mxu0 0
    %941 = vmatpush.bf16.msra.mxu0 0
    %942 = vmatpush.bf16.msra.mxu0 %v933
    %943 = vmatmul.bf16.gmra.mxu0 %v930
    %v944 = vpop.f32.mrf.mxu0
    %v945 = vadd.f32 0.0, %v944
    %v946 = vpop.f32.mrf.mxu0
    %v947 = vadd.f32 0.0, %v946
    %948 = vdwg.mxu0
    %v949 = vadd.f32 %v926, %v945
    %v950 = vadd.f32 %v927, %v947
    %v951 = vadd.f32 %v241, %v949
    %v952 = vadd.f32 %v242, %v950
    %v953 = vld [vmem:[%s11] sm:$0x1]
    %v954 = vld [vmem:[%s12] sm:$0x1]
    %v955 = vsel %vm249, %v951, 0.0
    %956 = vadd.xlane.f32.xlu0 %v955
    %v957 = vpop.xlane.xlu0 %956
    %v958 = vsel %vm249, %v952, 0.0
    %959 = vadd.xlane.f32.xlu0 %v958
    %v960 = vpop.xlane.xlu0 %959
    %v961 = vmul.f32 %v957, %v262
    %v962 = vmul.f32 %v960, %v262
    %v963 = vsub.f32 %v951, %v961
    %v964 = vsub.f32 %v952, %v962
    %v965 = vmul.f32 %v963, %v963
    %v966 = vmul.f32 %v964, %v964
    %v967 = vsel %vm249, %v965, 0.0
    %968 = vadd.xlane.f32.xlu0 %v967
    %v969 = vpop.xlane.xlu0 %968
    %v970 = vsel %vm249, %v966, 0.0
    %971 = vadd.xlane.f32.xlu0 %v970
    %v972 = vpop.xlane.xlu0 %971
    %v973 = vmul.f32 %v969, %v262
    %v974 = vmul.f32 %v972, %v262
    %v975 = vadd.f32 %v973, 1e-12
    %v976 = vadd.f32 %v974, 1e-12
    %v977 = vrsqrt.pop %v975
    %v978 = vmul.f32 %v977, %v975
    %v979 = vmul.f32 %v978, %v977
    %v980 = vmul.f32 0.5, %v979
    %v981 = vsub.f32 1.5, %v980
    %v982 = vmul.f32 %v977, %v981
    %vm983 = vweird.f32 %v975
    %vm984 = vweird.f32 %v977
    %vm985 = vmor %vm983, %vm984
    %v986 = vsel %vm985, %v977, %v982
    %v987 = vrsqrt.pop %v976
    %v988 = vmul.f32 %v987, %v976
    %v989 = vmul.f32 %v988, %v987
    %v990 = vmul.f32 0.5, %v989
    %v991 = vsub.f32 1.5, %v990
    %v992 = vmul.f32 %v987, %v991
    %vm993 = vweird.f32 %v976
    %vm994 = vweird.f32 %v987
    %vm995 = vmor %vm993, %vm994
    %v996 = vsel %vm995, %v987, %v992
    %v997 = vmul.f32 %v963, %v986
    %v998 = vmul.f32 %v964, %v996
    %v1000 = vperm.slane %v953, 0
    %v1002 = vmul.f32 %v997, %v1000
    %v1003 = vmul.f32 %v998, %v1000
    %v1005 = vperm.slane %v954, 0
    %v1007 = vadd.f32 %v1002, %v1005
    %v1008 = vadd.f32 %v1003, %v1005
    %v1009 = vld [vmem:[%s13] sm:$0xf]
    %v1010 = vld [vmem:[%s13 + $0x4] sm:$0xf]
    %v1011 = vld [vmem:[%s13 + $0x8] sm:$0xf]
    %v1012 = vld [vmem:[%s13 + $0xc] sm:$0xf]
    %v1013 = vld [vmem:[%s14] sm:$0x1]
    %v1014 = vld [vmem:[%s15] sm:$0xf]
    %v1015 = vld [vmem:[%s15 + $0x4] sm:$0xf]
    %v1016 = vld [vmem:[%s15 + $0x8] sm:$0xf]
    %v1017 = vld [vmem:[%s15 + $0xc] sm:$0xf]
    %v1018 = vld [vmem:[%s15 + $0x10] sm:$0xf]
    %v1019 = vld [vmem:[%s15 + $0x14] sm:$0xf]
    %v1020 = vld [vmem:[%s15 + $0x18] sm:$0xf]
    %v1021 = vld [vmem:[%s15 + $0x1c] sm:$0xf]
    %v1022 = vld [vmem:[%s15 + $0x20] sm:$0xf]
    %v1023 = vld [vmem:[%s15 + $0x24] sm:$0xf]
    %v1024 = vld [vmem:[%s15 + $0x28] sm:$0xf]
    %v1025 = vld [vmem:[%s15 + $0x2c] sm:$0xf]
    %v1026 = vld [vmem:[%s15 + $0x30] sm:$0xf]
    %v1027 = vld [vmem:[%s15 + $0x34] sm:$0xf]
    %v1028 = vld [vmem:[%s15 + $0x38] sm:$0xf]
    %v1029 = vld [vmem:[%s15 + $0x3c] sm:$0xf]
    %v1030 = vld [vmem:[%s16] sm:$0x1]
    %v1031 = vpack.c.bf16 %v1008, %v1007
    %v1033 = vperm.slane %v1013, 0
    %v1039 = vunpack.c.l.b16 %v1009
    %v1040 = vunpack.c.l.b16 %v1010
    %v1041 = vunpack.c.l.b16 %v1011
    %v1042 = vunpack.c.l.b16 %v1012
    %v1043 = vpack.c.b16 %v1040, %v1039
    %v1044 = vpack.c.b16 %v1042, %v1041
    %v1048 = vsel %vm249, %v1031, 0
    %1050 = vmatpush.bf16.msra.mxu0 0
    %1051 = vmatpush.bf16.msra.mxu0 0
    %1052 = vmatpush.bf16.msra.mxu0 0
    %1053 = vmatpush.bf16.msra.mxu0 0
    %1054 = vmatpush.bf16.msra.mxu0 0
    %1055 = vmatpush.bf16.msra.mxu0 0
    %1056 = vmatpush.bf16.msra.mxu0 %v1044
    %1057 = vmatpush.bf16.msra.mxu0 %v1043
    %1058 = vmatmul.bf16.gmra.mxu0 %v1048
    %v1059 = vpop.f32.mrf.mxu0
    %v1060 = vadd.f32 %v1033, %v1059
    %v1061 = vpop.f32.mrf.mxu0
    %v1062 = vadd.f32 %v1033, %v1061
    %1063 = vdwg.mxu0
    %v1064 = vmul.f32 %v1060, 0.5
    %v1065 = vmul.f32 %v1062, 0.5
    %v1066 = vmul.f32 %v1060, 0.044715
    %v1067 = vmul.f32 %v1062, 0.044715
    %v1068 = vmul.f32 %v1066, %v1060
    %v1069 = vmul.f32 %v1067, %v1062
    %v1070 = vmul.f32 %v1068, %v1060
    %v1071 = vmul.f32 %v1069, %v1062
    %v1072 = vadd.f32 %v1060, %v1070
    %v1073 = vadd.f32 %v1062, %v1071
    %v1074 = vmul.f32 %v1072, 0.7978846
    %v1075 = vmul.f32 %v1073, 0.7978846
    %v1076 = vtanh.pop %v1074
    %v1077 = vtanh.pop %v1075
    %v1078 = vadd.f32 %v1076, 1.0
    %v1079 = vadd.f32 %v1077, 1.0
    %v1080 = vmul.f32 %v1064, %v1078
    %v1081 = vmul.f32 %v1065, %v1079
    %v1082 = vpack.c.bf16 %v1081, %v1080
    %v1084 = vperm.slane %v1030, 0
    %v1102 = vunpack.c.l.b16 %v1014
    %v1103 = vunpack.c.l.b16 %v1015
    %v1104 = vunpack.c.l.b16 %v1016
    %v1105 = vunpack.c.l.b16 %v1017
    %v1106 = vunpack.c.l.b16 %v1018
    %v1107 = vunpack.c.l.b16 %v1019
    %v1108 = vunpack.c.l.b16 %v1020
    %v1109 = vunpack.c.l.b16 %v1021
    %v1110 = vunpack.c.l.b16 %v1022
    %v1111 = vunpack.c.l.b16 %v1023
    %v1112 = vunpack.c.l.b16 %v1024
    %v1113 = vunpack.c.l.b16 %v1025
    %v1114 = vunpack.c.l.b16 %v1026
    %v1115 = vunpack.c.l.b16 %v1027
    %v1116 = vunpack.c.l.b16 %v1028
    %v1117 = vunpack.c.l.b16 %v1029
    %v1118 = vpack.c.b16 %v1103, %v1102
    %v1119 = vpack.c.b16 %v1105, %v1104
    %v1120 = vpack.c.b16 %v1107, %v1106
    %v1121 = vpack.c.b16 %v1109, %v1108
    %v1122 = vpack.c.b16 %v1111, %v1110
    %v1123 = vpack.c.b16 %v1113, %v1112
    %v1124 = vpack.c.b16 %v1115, %v1114
    %v1125 = vpack.c.b16 %v1117, %v1116
    %1134 = vmatpush.bf16.msra.mxu0 %v1125
    %1135 = vmatpush.bf16.msra.mxu0 %v1124
    %1136 = vmatpush.bf16.msra.mxu0 %v1123
    %1137 = vmatpush.bf16.msra.mxu0 %v1122
    %1138 = vmatpush.bf16.msra.mxu0 %v1121
    %1139 = vmatpush.bf16.msra.mxu0 %v1120
    %1140 = vmatpush.bf16.msra.mxu0 %v1119
    %1141 = vmatpush.bf16.msra.mxu0 %v1118
    %1142 = vmatmul.bf16.gmra.mxu0 %v1082
    %v1143 = vpop.f32.mrf.mxu0
    %v1144 = vadd.f32 %v1084, %v1143
    %v1145 = vpop.f32.mrf.mxu0
    %v1146 = vadd.f32 %v1084, %v1145
    %1147 = vdwg.mxu0
    %v1148 = vadd.f32 %v951, %v1144
    %v1149 = vadd.f32 %v952, %v1146
    %s1150 = scalar_lea.vmem %s5, 1
    %v1151 = vld [vmem:[%s1150] sm:$0x1]
    %s1152 = scalar_lea.vmem %s6, 1
    %v1153 = vld [vmem:[%s1152] sm:$0x1]
    %v1154 = vsel %vm249, %v1148, 0.0
    %1155 = vadd.xlane.f32.xlu0 %v1154
    %v1156 = vpop.xlane.xlu0 %1155
    %v1157 = vsel %vm249, %v1149, 0.0
    %1158 = vadd.xlane.f32.xlu0 %v1157
    %v1159 = vpop.xlane.xlu0 %1158
    %v1160 = vmul.f32 %v1156, %v262
    %v1161 = vmul.f32 %v1159, %v262
    %v1162 = vsub.f32 %v1148, %v1160
    %v1163 = vsub.f32 %v1149, %v1161
    %v1164 = vmul.f32 %v1162, %v1162
    %v1165 = vmul.f32 %v1163, %v1163
    %v1166 = vsel %vm249, %v1164, 0.0
    %1167 = vadd.xlane.f32.xlu0 %v1166
    %v1168 = vpop.xlane.xlu0 %1167
    %v1169 = vsel %vm249, %v1165, 0.0
    %1170 = vadd.xlane.f32.xlu0 %v1169
    %v1171 = vpop.xlane.xlu0 %1170
    %v1172 = vmul.f32 %v1168, %v262
    %v1173 = vmul.f32 %v1171, %v262
    %v1174 = vadd.f32 %v1172, 1e-12
    %v1175 = vadd.f32 %v1173, 1e-12
    %v1176 = vrsqrt.pop %v1174
    %v1177 = vmul.f32 %v1176, %v1174
    %v1178 = vmul.f32 %v1177, %v1176
    %v1179 = vmul.f32 0.5, %v1178
    %v1180 = vsub.f32 1.5, %v1179
    %v1181 = vmul.f32 %v1176, %v1180
    %vm1182 = vweird.f32 %v1174
    %vm1183 = vweird.f32 %v1176
    %vm1184 = vmor %vm1182, %vm1183
    %v1185 = vsel %vm1184, %v1176, %v1181
    %v1186 = vrsqrt.pop %v1175
    %v1187 = vmul.f32 %v1186, %v1175
    %v1188 = vmul.f32 %v1187, %v1186
    %v1189 = vmul.f32 0.5, %v1188
    %v1190 = vsub.f32 1.5, %v1189
    %v1191 = vmul.f32 %v1186, %v1190
    %vm1192 = vweird.f32 %v1175
    %vm1193 = vweird.f32 %v1186
    %vm1194 = vmor %vm1192, %vm1193
    %v1195 = vsel %vm1194, %v1186, %v1191
    %v1196 = vmul.f32 %v1162, %v1185
    %v1197 = vmul.f32 %v1163, %v1195
    %v1199 = vperm.slane %v1151, 0
    %v1201 = vmul.f32 %v1196, %v1199
    %v1202 = vmul.f32 %v1197, %v1199
    %v1204 = vperm.slane %v1153, 0
    %v1206 = vadd.f32 %v1201, %v1204
    %v1207 = vadd.f32 %v1202, %v1204
    %s1208 = scalar_lea.vmem %s7, 16
    %v1209 = vld [vmem:[%s1208] sm:$0xf]
    %v1210 = vld [vmem:[%s1208 + $0x4] sm:$0xf]
    %v1211 = vld [vmem:[%s1208 + $0x8] sm:$0xf]
    %v1212 = vld [vmem:[%s1208 + $0xc] sm:$0xf]
    %s1213 = scalar_lea.vmem %s8, 1
    %v1214 = vld [vmem:[%s1213] sm:$0x1]
    %s1215 = scalar_lea.vmem %s9, 16
    %v1216 = vld [vmem:[%s1215] sm:$0xf]
    %v1217 = vld [vmem:[%s1215 + $0x4] sm:$0xf]
    %v1218 = vld [vmem:[%s1215 + $0x8] sm:$0xf]
    %v1219 = vld [vmem:[%s1215 + $0xc] sm:$0xf]
    %s1220 = scalar_lea.vmem %s10, 1
    %v1221 = vld [vmem:[%s1220] sm:$0x1]
    %v1222 = vpack.c.bf16 %v1207, %v1206
    %v1224 = vperm.slane %v1214, 0
    %v1230 = vunpack.c.l.b16 %v1209
    %v1231 = vunpack.c.l.b16 %v1210
    %v1232 = vunpack.c.l.b16 %v1211
    %v1233 = vunpack.c.l.b16 %v1212
    %v1234 = vpack.c.b16 %v1231, %v1230
    %v1235 = vpack.c.b16 %v1233, %v1232
    %v1239 = vsel %vm249, %v1222, 0
    %1241 = vmatpush.bf16.msra.mxu0 0
    %1242 = vmatpush.bf16.msra.mxu0 0
    %1243 = vmatpush.bf16.msra.mxu0 0
    %1244 = vmatpush.bf16.msra.mxu0 0
    %1245 = vmatpush.bf16.msra.mxu0 0
    %1246 = vmatpush.bf16.msra.mxu0 0
    %1247 = vmatpush.bf16.msra.mxu0 %v1235
    %1248 = vmatpush.bf16.msra.mxu0 %v1234
    %1249 = vmatmul.bf16.gmra.mxu0 %v1239
    %v1250 = vpop.f32.mrf.mxu0
    %v1251 = vadd.f32 %v1224, %v1250
    %v1252 = vpop.f32.mrf.mxu0
    %v1253 = vadd.f32 %v1224, %v1252
    %1254 = vdwg.mxu0
    %1257 = vrot.lane.b32.xlu0 %v1251, 120
    %v1258 = vpop.permute.xlu0 %1257
    %1259 = vrot.lane.b32.xlu0 %v1253, 120
    %v1260 = vpop.permute.xlu0 %1259
    %1263 = vrot.lane.b32.xlu0 %v1251, 112
    %v1264 = vpop.permute.xlu0 %1263
    %1265 = vrot.lane.b32.xlu0 %v1253, 112
    %v1266 = vpop.permute.xlu0 %1265
    %1269 = vrot.lane.b32.xlu0 %v1251, 104
    %v1270 = vpop.permute.xlu0 %1269
    %1271 = vrot.lane.b32.xlu0 %v1253, 104
    %v1272 = vpop.permute.xlu0 %1271
    %v1275 = vpack.c.bf16 %v1251, %v1251
    %v1276 = vpack.c.bf16 %v1253, %v1253
    %v1277 = vpack.c.bf16 %v1258, %v1258
    %v1278 = vpack.c.bf16 %v1260, %v1260
    %v1279 = vpack.c.bf16 %v1264, %v1264
    %v1280 = vpack.c.bf16 %v1266, %v1266
    %v1281 = vpack.c.bf16 %v1270, %v1270
    %v1282 = vpack.c.bf16 %v1272, %v1272
    %v1284 = vunpack.c.l.b16 %v1275
    %v1285 = vpack.c.b16 %v1284, %v1284
    %1286 = vrot.lane.b32.xlu0 %v1285, 96
    %v1287 = vpop.permute.xlu0 %1286
    %v1289 = vsel %vm387, %v1275, 0
    %v1292 = vsel %vm387, %v1287, 0
    %1294 = vmatpush.bf16.xpose.msra.mxu0 0
    %1295 = vmatpush.bf16.xpose.msra.mxu0 0
    %1296 = vmatpush.bf16.xpose.msra.mxu0 0
    %1297 = vmatpush.bf16.xpose.msra.mxu0 0
    %1298 = vmatpush.bf16.xpose.msra.mxu0 0
    %1299 = vmatpush.bf16.xpose.msra.mxu0 0
    %1300 = vmatpush.bf16.xpose.msra.mxu0 0
    %1301 = vmatpush.bf16.xpose.msra.mxu0 %v1292
    %1302 = vmatmul.bf16.gmra.mxu0 %v1289
    %v1303 = vpop.f32.mrf.mxu0
    %v1304 = vadd.f32 0.0, %v1303
    %v1305 = vpop.f32.mrf.mxu0
    %1306 = vdwg.mxu0
    %v1308 = vunpack.c.l.b16 %v1276
    %v1309 = vpack.c.b16 %v1308, %v1308
    %1310 = vrot.lane.b32.xlu0 %v1309, 96
    %v1311 = vpop.permute.xlu0 %1310
    %v1313 = vsel %vm387, %v1276, 0
    %v1316 = vsel %vm387, %v1311, 0
    %1318 = vmatpush.bf16.xpose.msra.mxu0 0
    %1319 = vmatpush.bf16.xpose.msra.mxu0 0
    %1320 = vmatpush.bf16.xpose.msra.mxu0 0
    %1321 = vmatpush.bf16.xpose.msra.mxu0 0
    %1322 = vmatpush.bf16.xpose.msra.mxu0 0
    %1323 = vmatpush.bf16.xpose.msra.mxu0 0
    %1324 = vmatpush.bf16.xpose.msra.mxu0 0
    %1325 = vmatpush.bf16.xpose.msra.mxu0 %v1316
    %1326 = vmatmul.bf16.gmra.mxu0 %v1313
    %v1327 = vpop.f32.mrf.mxu0
    %v1328 = vadd.f32 0.0, %v1327
    %v1329 = vpop.f32.mrf.mxu0
    %1330 = vdwg.mxu0
    %v1332 = vunpack.c.l.b16 %v1277
    %v1333 = vpack.c.b16 %v1332, %v1332
    %1334 = vrot.lane.b32.xlu0 %v1333, 96
    %v1335 = vpop.permute.xlu0 %1334
    %v1337 = vsel %vm387, %v1277, 0
    %v1340 = vsel %vm387, %v1335, 0
    %1342 = vmatpush.bf16.xpose.msra.mxu0 0
    %1343 = vmatpush.bf16.xpose.msra.mxu0 0
    %1344 = vmatpush.bf16.xpose.msra.mxu0 0
    %1345 = vmatpush.bf16.xpose.msra.mxu0 0
    %1346 = vmatpush.bf16.xpose.msra.mxu0 0
    %1347 = vmatpush.bf16.xpose.msra.mxu0 0
    %1348 = vmatpush.bf16.xpose.msra.mxu0 0
    %1349 = vmatpush.bf16.xpose.msra.mxu0 %v1340
    %1350 = vmatmul.bf16.gmra.mxu0 %v1337
    %v1351 = vpop.f32.mrf.mxu0
    %v1352 = vadd.f32 0.0, %v1351
    %v1353 = vpop.f32.mrf.mxu0
    %1354 = vdwg.mxu0
    %v1356 = vunpack.c.l.b16 %v1278
    %v1357 = vpack.c.b16 %v1356, %v1356
    %1358 = vrot.lane.b32.xlu0 %v1357, 96
    %v1359 = vpop.permute.xlu0 %1358
    %v1361 = vsel %vm387, %v1278, 0
    %v1364 = vsel %vm387, %v1359, 0
    %1366 = vmatpush.bf16.xpose.msra.mxu0 0
    %1367 = vmatpush.bf16.xpose.msra.mxu0 0
    %1368 = vmatpush.bf16.xpose.msra.mxu0 0
    %1369 = vmatpush.bf16.xpose.msra.mxu0 0
    %1370 = vmatpush.bf16.xpose.msra.mxu0 0
    %1371 = vmatpush.bf16.xpose.msra.mxu0 0
    %1372 = vmatpush.bf16.xpose.msra.mxu0 0
    %1373 = vmatpush.bf16.xpose.msra.mxu0 %v1364
    %1374 = vmatmul.bf16.gmra.mxu0 %v1361
    %v1375 = vpop.f32.mrf.mxu0
    %v1376 = vadd.f32 0.0, %v1375
    %v1377 = vpop.f32.mrf.mxu0
    %1378 = vdwg.mxu0
    %v1380 = vunpack.c.l.b16 %v1279
    %v1381 = vpack.c.b16 %v1380, %v1380
    %1382 = vrot.lane.b32.xlu0 %v1381, 96
    %v1383 = vpop.permute.xlu0 %1382
    %v1385 = vsel %vm387, %v1279, 0
    %v1388 = vsel %vm387, %v1383, 0
    %1390 = vmatpush.bf16.xpose.msra.mxu0 0
    %1391 = vmatpush.bf16.xpose.msra.mxu0 0
    %1392 = vmatpush.bf16.xpose.msra.mxu0 0
    %1393 = vmatpush.bf16.xpose.msra.mxu0 0
    %1394 = vmatpush.bf16.xpose.msra.mxu0 0
    %1395 = vmatpush.bf16.xpose.msra.mxu0 0
    %1396 = vmatpush.bf16.xpose.msra.mxu0 0
    %1397 = vmatpush.bf16.xpose.msra.mxu0 %v1388
    %1398 = vmatmul.bf16.gmra.mxu0 %v1385
    %v1399 = vpop.f32.mrf.mxu0
    %v1400 = vadd.f32 0.0, %v1399
    %v1401 = vpop.f32.mrf.mxu0
    %1402 = vdwg.mxu0
    %v1404 = vunpack.c.l.b16 %v1280
    %v1405 = vpack.c.b16 %v1404, %v1404
    %1406 = vrot.lane.b32.xlu0 %v1405, 96
    %v1407 = vpop.permute.xlu0 %1406
    %v1409 = vsel %vm387, %v1280, 0
    %v1412 = vsel %vm387, %v1407, 0
    %1414 = vmatpush.bf16.xpose.msra.mxu0 0
    %1415 = vmatpush.bf16.xpose.msra.mxu0 0
    %1416 = vmatpush.bf16.xpose.msra.mxu0 0
    %1417 = vmatpush.bf16.xpose.msra.mxu0 0
    %1418 = vmatpush.bf16.xpose.msra.mxu0 0
    %1419 = vmatpush.bf16.xpose.msra.mxu0 0
    %1420 = vmatpush.bf16.xpose.msra.mxu0 0
    %1421 = vmatpush.bf16.xpose.msra.mxu0 %v1412
    %1422 = vmatmul.bf16.gmra.mxu0 %v1409
    %v1423 = vpop.f32.mrf.mxu0
    %v1424 = vadd.f32 0.0, %v1423
    %v1425 = vpop.f32.mrf.mxu0
    %1426 = vdwg.mxu0
    %v1428 = vunpack.c.l.b16 %v1281
    %v1429 = vpack.c.b16 %v1428, %v1428
    %1430 = vrot.lane.b32.xlu0 %v1429, 96
    %v1431 = vpop.permute.xlu0 %1430
    %v1433 = vsel %vm387, %v1281, 0
    %v1436 = vsel %vm387, %v1431, 0
    %1438 = vmatpush.bf16.xpose.msra.mxu0 0
    %1439 = vmatpush.bf16.xpose.msra.mxu0 0
    %1440 = vmatpush.bf16.xpose.msra.mxu0 0
    %1441 = vmatpush.bf16.xpose.msra.mxu0 0
    %1442 = vmatpush.bf16.xpose.msra.mxu0 0
    %1443 = vmatpush.bf16.xpose.msra.mxu0 0
    %1444 = vmatpush.bf16.xpose.msra.mxu0 0
    %1445 = vmatpush.bf16.xpose.msra.mxu0 %v1436
    %1446 = vmatmul.bf16.gmra.mxu0 %v1433
    %v1447 = vpop.f32.mrf.mxu0
    %v1448 = vadd.f32 0.0, %v1447
    %v1449 = vpop.f32.mrf.mxu0
    %1450 = vdwg.mxu0
    %v1452 = vunpack.c.l.b16 %v1282
    %v1453 = vpack.c.b16 %v1452, %v1452
    %1454 = vrot.lane.b32.xlu0 %v1453, 96
    %v1455 = vpop.permute.xlu0 %1454
    %v1457 = vsel %vm387, %v1282, 0
    %v1460 = vsel %vm387, %v1455, 0
    %1462 = vmatpush.bf16.xpose.msra.mxu0 0
    %1463 = vmatpush.bf16.xpose.msra.mxu0 0
    %1464 = vmatpush.bf16.xpose.msra.mxu0 0
    %1465 = vmatpush.bf16.xpose.msra.mxu0 0
    %1466 = vmatpush.bf16.xpose.msra.mxu0 0
    %1467 = vmatpush.bf16.xpose.msra.mxu0 0
    %1468 = vmatpush.bf16.xpose.msra.mxu0 0
    %1469 = vmatpush.bf16.xpose.msra.mxu0 %v1460
    %1470 = vmatmul.bf16.gmra.mxu0 %v1457
    %v1471 = vpop.f32.mrf.mxu0
    %v1472 = vadd.f32 0.0, %v1471
    %v1473 = vpop.f32.mrf.mxu0
    %1474 = vdwg.mxu0
    %v1475 = vmul.f32 %v1304, 0.35355338
    %v1476 = vmul.f32 %v1328, 0.35355338
    %v1477 = vmul.f32 %v1352, 0.35355338
    %v1478 = vmul.f32 %v1376, 0.35355338
    %v1479 = vmul.f32 %v1400, 0.35355338
    %v1480 = vmul.f32 %v1424, 0.35355338
    %v1481 = vmul.f32 %v1448, 0.35355338
    %v1482 = vmul.f32 %v1472, 0.35355338
    %v1483 = vadd.f32 %v1475, %v246
    %v1484 = vadd.f32 %v1476, %v246
    %v1485 = vadd.f32 %v1477, %v246
    %v1486 = vadd.f32 %v1478, %v246
    %v1487 = vadd.f32 %v1479, %v246
    %v1488 = vadd.f32 %v1480, %v246
    %v1489 = vadd.f32 %v1481, %v246
    %v1490 = vadd.f32 %v1482, %v246
    %v1491 = vsel %vm387, %v1483, -inf
    %1492 = vmax.xlane.f32.xlu0 %v1491
    %v1493 = vpop.xlane.xlu0 %1492
    %v1494 = vsel %vm387, %v1484, -inf
    %1495 = vmax.xlane.f32.xlu0 %v1494
    %v1496 = vpop.xlane.xlu0 %1495
    %v1497 = vsel %vm387, %v1485, -inf
    %1498 = vmax.xlane.f32.xlu0 %v1497
    %v1499 = vpop.xlane.xlu0 %1498
    %v1500 = vsel %vm387, %v1486, -inf
    %1501 = vmax.xlane.f32.xlu0 %v1500
    %v1502 = vpop.xlane.xlu0 %1501
    %v1503 = vsel %vm387, %v1487, -inf
    %1504 = vmax.xlane.f32.xlu0 %v1503
    %v1505 = vpop.xlane.xlu0 %1504
    %v1506 = vsel %vm387, %v1488, -inf
    %1507 = vmax.xlane.f32.xlu0 %v1506
    %v1508 = vpop.xlane.xlu0 %1507
    %v1509 = vsel %vm387, %v1489, -inf
    %1510 = vmax.xlane.f32.xlu0 %v1509
    %v1511 = vpop.xlane.xlu0 %1510
    %v1512 = vsel %vm387, %v1490, -inf
    %1513 = vmax.xlane.f32.xlu0 %v1512
    %v1514 = vpop.xlane.xlu0 %1513
    %v1515 = vsub.f32 %v1483, %v1493
    %v1516 = vsub.f32 %v1484, %v1496
    %v1517 = vsub.f32 %v1485, %v1499
    %v1518 = vsub.f32 %v1486, %v1502
    %v1519 = vsub.f32 %v1487, %v1505
    %v1520 = vsub.f32 %v1488, %v1508
    %v1521 = vsub.f32 %v1489, %v1511
    %v1522 = vsub.f32 %v1490, %v1514
    %v1523 = vmul.f32 %v1515, 1.442695
    %v1524 = vpow.pop %v1523
    %v1525 = vmul.f32 %v1516, 1.442695
    %v1526 = vpow.pop %v1525
    %v1527 = vmul.f32 %v1517, 1.442695
    %v1528 = vpow.pop %v1527
    %v1529 = vmul.f32 %v1518, 1.442695
    %v1530 = vpow.pop %v1529
    %v1531 = vmul.f32 %v1519, 1.442695
    %v1532 = vpow.pop %v1531
    %v1533 = vmul.f32 %v1520, 1.442695
    %v1534 = vpow.pop %v1533
    %v1535 = vmul.f32 %v1521, 1.442695
    %v1536 = vpow.pop %v1535
    %v1537 = vmul.f32 %v1522, 1.442695
    %v1538 = vpow.pop %v1537
    %v1539 = vsel %vm387, %v1524, 0.0
    %1540 = vadd.xlane.f32.xlu0 %v1539
    %v1541 = vpop.xlane.xlu0 %1540
    %v1542 = vsel %vm387, %v1526, 0.0
    %1543 = vadd.xlane.f32.xlu0 %v1542
    %v1544 = vpop.xlane.xlu0 %1543
    %v1545 = vsel %vm387, %v1528, 0.0
    %1546 = vadd.xlane.f32.xlu0 %v1545
    %v1547 = vpop.xlane.xlu0 %1546
    %v1548 = vsel %vm387, %v1530, 0.0
    %1549 = vadd.xlane.f32.xlu0 %v1548
    %v1550 = vpop.xlane.xlu0 %1549
    %v1551 = vsel %vm387, %v1532, 0.0
    %1552 = vadd.xlane.f32.xlu0 %v1551
    %v1553 = vpop.xlane.xlu0 %1552
    %v1554 = vsel %vm387, %v1534, 0.0
    %1555 = vadd.xlane.f32.xlu0 %v1554
    %v1556 = vpop.xlane.xlu0 %1555
    %v1557 = vsel %vm387, %v1536, 0.0
    %1558 = vadd.xlane.f32.xlu0 %v1557
    %v1559 = vpop.xlane.xlu0 %1558
    %v1560 = vsel %vm387, %v1538, 0.0
    %1561 = vadd.xlane.f32.xlu0 %v1560
    %v1562 = vpop.xlane.xlu0 %1561
    %v1563 = vrcp.pop %v1541
    %v1564 = vrcp.pop %v1544
    %v1565 = vrcp.pop %v1547
    %v1566 = vrcp.pop %v1550
    %v1567 = vrcp.pop %v1553
    %v1568 = vrcp.pop %v1556
    %v1569 = vrcp.pop %v1559
    %v1570 = vrcp.pop %v1562
    %v1571 = vmul.f32 %v1524, %v1563
    %v1572 = vmul.f32 %v1526, %v1564
    %v1573 = vmul.f32 %v1528, %v1565
    %v1574 = vmul.f32 %v1530, %v1566
    %v1575 = vmul.f32 %v1532, %v1567
    %v1576 = vmul.f32 %v1534, %v1568
    %v1577 = vmul.f32 %v1536, %v1569
    %v1578 = vmul.f32 %v1538, %v1570
    %v1579 = vpack.c.bf16 %v1571, %v1571
    %v1580 = vpack.c.bf16 %v1572, %v1572
    %v1581 = vpack.c.bf16 %v1573, %v1573
    %v1582 = vpack.c.bf16 %v1574, %v1574
    %v1583 = vpack.c.bf16 %v1575, %v1575
    %v1584 = vpack.c.bf16 %v1576, %v1576
    %v1585 = vpack.c.bf16 %v1577, %v1577
    %v1586 = vpack.c.bf16 %v1578, %v1578
    %1587 = vrot.lane.b32.xlu0 %v1285, 64
    %v1588 = vpop.permute.xlu0 %1587
    %v1590 = vsel %vm387, %v1579, 0
    %v1593 = vsel %vm692, %v1588, 0
    %1595 = vmatpush.bf16.msra.mxu0 0
    %1596 = vmatpush.bf16.msra.mxu0 0
    %1597 = vmatpush.bf16.msra.mxu0 0
    %1598 = vmatpush.bf16.msra.mxu0 0
    %1599 = vmatpush.bf16.msra.mxu0 0
    %1600 = vmatpush.bf16.msra.mxu0 0
    %1601 = vmatpush.bf16.msra.mxu0 0
    %1602 = vmatpush.bf16.msra.mxu0 %v1593
    %1603 = vmatmul.bf16.gmra.mxu0 %v1590
    %v1604 = vpop.f32.mrf.mxu0
    %v1605 = vadd.f32 0.0, %v1604
    %v1606 = vpop.f32.mrf.mxu0
    %1607 = vdwg.mxu0
    %1608 = vrot.lane.b32.xlu0 %v1309, 64
    %v1609 = vpop.permute.xlu0 %1608
    %v1611 = vsel %vm387, %v1580, 0
    %v1614 = vsel %vm692, %v1609, 0
    %1616 = vmatpush.bf16.msra.mxu0 0
    %1617 = vmatpush.bf16.msra.mxu0 0
    %1618 = vmatpush.bf16.msra.mxu0 0
    %1619 = vmatpush.bf16.msra.mxu0 0
    %1620 = vmatpush.bf16.msra.mxu0 0
    %1621 = vmatpush.bf16.msra.mxu0 0
    %1622 = vmatpush.bf16.msra.mxu0 0
    %1623 = vmatpush.bf16.msra.mxu0 %v1614
    %1624 = vmatmul.bf16.gmra.mxu0 %v1611
    %v1625 = vpop.f32.mrf.mxu0
    %v1626 = vadd.f32 0.0, %v1625
    %v1627 = vpop.f32.mrf.mxu0
    %1628 = vdwg.mxu0
    %1629 = vrot.lane.b32.xlu0 %v1333, 64
    %v1630 = vpop.permute.xlu0 %1629
    %v1632 = vsel %vm387, %v1581, 0
    %v1635 = vsel %vm692, %v1630, 0
    %1637 = vmatpush.bf16.msra.mxu0 0
    %1638 = vmatpush.bf16.msra.mxu0 0
    %1639 = vmatpush.bf16.msra.mxu0 0
    %1640 = vmatpush.bf16.msra.mxu0 0
    %1641 = vmatpush.bf16.msra.mxu0 0
    %1642 = vmatpush.bf16.msra.mxu0 0
    %1643 = vmatpush.bf16.msra.mxu0 0
    %1644 = vmatpush.bf16.msra.mxu0 %v1635
    %1645 = vmatmul.bf16.gmra.mxu0 %v1632
    %v1646 = vpop.f32.mrf.mxu0
    %v1647 = vadd.f32 0.0, %v1646
    %v1648 = vpop.f32.mrf.mxu0
    %1649 = vdwg.mxu0
    %1650 = vrot.lane.b32.xlu0 %v1357, 64
    %v1651 = vpop.permute.xlu0 %1650
    %v1653 = vsel %vm387, %v1582, 0
    %v1656 = vsel %vm692, %v1651, 0
    %1658 = vmatpush.bf16.msra.mxu0 0
    %1659 = vmatpush.bf16.msra.mxu0 0
    %1660 = vmatpush.bf16.msra.mxu0 0
    %1661 = vmatpush.bf16.msra.mxu0 0
    %1662 = vmatpush.bf16.msra.mxu0 0
    %1663 = vmatpush.bf16.msra.mxu0 0
    %1664 = vmatpush.bf16.msra.mxu0 0
    %1665 = vmatpush.bf16.msra.mxu0 %v1656
    %1666 = vmatmul.bf16.gmra.mxu0 %v1653
    %v1667 = vpop.f32.mrf.mxu0
    %v1668 = vadd.f32 0.0, %v1667
    %v1669 = vpop.f32.mrf.mxu0
    %1670 = vdwg.mxu0
    %1671 = vrot.lane.b32.xlu0 %v1381, 64
    %v1672 = vpop.permute.xlu0 %1671
    %v1674 = vsel %vm387, %v1583, 0
    %v1677 = vsel %vm692, %v1672, 0
    %1679 = vmatpush.bf16.msra.mxu0 0
    %1680 = vmatpush.bf16.msra.mxu0 0
    %1681 = vmatpush.bf16.msra.mxu0 0
    %1682 = vmatpush.bf16.msra.mxu0 0
    %1683 = vmatpush.bf16.msra.mxu0 0
    %1684 = vmatpush.bf16.msra.mxu0 0
    %1685 = vmatpush.bf16.msra.mxu0 0
    %1686 = vmatpush.bf16.msra.mxu0 %v1677
    %1687 = vmatmul.bf16.gmra.mxu0 %v1674
    %v1688 = vpop.f32.mrf.mxu0
    %v1689 = vadd.f32 0.0, %v1688
    %v1690 = vpop.f32.mrf.mxu0
    %1691 = vdwg.mxu0
    %1692 = vrot.lane.b32.xlu0 %v1405, 64
    %v1693 = vpop.permute.xlu0 %1692
    %v1695 = vsel %vm387, %v1584, 0
    %v1698 = vsel %vm692, %v1693, 0
    %1700 = vmatpush.bf16.msra.mxu0 0
    %1701 = vmatpush.bf16.msra.mxu0 0
    %1702 = vmatpush.bf16.msra.mxu0 0
    %1703 = vmatpush.bf16.msra.mxu0 0
    %1704 = vmatpush.bf16.msra.mxu0 0
    %1705 = vmatpush.bf16.msra.mxu0 0
    %1706 = vmatpush.bf16.msra.mxu0 0
    %1707 = vmatpush.bf16.msra.mxu0 %v1698
    %1708 = vmatmul.bf16.gmra.mxu0 %v1695
    %v1709 = vpop.f32.mrf.mxu0
    %v1710 = vadd.f32 0.0, %v1709
    %v1711 = vpop.f32.mrf.mxu0
    %1712 = vdwg.mxu0
    %1713 = vrot.lane.b32.xlu0 %v1429, 64
    %v1714 = vpop.permute.xlu0 %1713
    %v1716 = vsel %vm387, %v1585, 0
    %v1719 = vsel %vm692, %v1714, 0
    %1721 = vmatpush.bf16.msra.mxu0 0
    %1722 = vmatpush.bf16.msra.mxu0 0
    %1723 = vmatpush.bf16.msra.mxu0 0
    %1724 = vmatpush.bf16.msra.mxu0 0
    %1725 = vmatpush.bf16.msra.mxu0 0
    %1726 = vmatpush.bf16.msra.mxu0 0
    %1727 = vmatpush.bf16.msra.mxu0 0
    %1728 = vmatpush.bf16.msra.mxu0 %v1719
    %1729 = vmatmul.bf16.gmra.mxu0 %v1716
    %v1730 = vpop.f32.mrf.mxu0
    %v1731 = vadd.f32 0.0, %v1730
    %v1732 = vpop.f32.mrf.mxu0
    %1733 = vdwg.mxu0
    %1734 = vrot.lane.b32.xlu0 %v1453, 64
    %v1735 = vpop.permute.xlu0 %1734
    %v1737 = vsel %vm387, %v1586, 0
    %v1740 = vsel %vm692, %v1735, 0
    %1742 = vmatpush.bf16.msra.mxu0 0
    %1743 = vmatpush.bf16.msra.mxu0 0
    %1744 = vmatpush.bf16.msra.mxu0 0
    %1745 = vmatpush.bf16.msra.mxu0 0
    %1746 = vmatpush.bf16.msra.mxu0 0
    %1747 = vmatpush.bf16.msra.mxu0 0
    %1748 = vmatpush.bf16.msra.mxu0 0
    %1749 = vmatpush.bf16.msra.mxu0 %v1740
    %1750 = vmatmul.bf16.gmra.mxu0 %v1737
    %v1751 = vpop.f32.mrf.mxu0
    %v1752 = vadd.f32 0.0, %v1751
    %v1753 = vpop.f32.mrf.mxu0
    %1754 = vdwg.mxu0
    %v1755 = vpack.c.bf16 %v1626, %v1605
    %v1757 = vsel %vm387, %v1755, 0
    %v1760 = vsel %vm692, %v1216, 0
    %1762 = vmatpush.bf16.msra.mxu0 0
    %1763 = vmatpush.bf16.msra.mxu0 0
    %1764 = vmatpush.bf16.msra.mxu0 0
    %1765 = vmatpush.bf16.msra.mxu0 0
    %1766 = vmatpush.bf16.msra.mxu0 0
    %1767 = vmatpush.bf16.msra.mxu0 0
    %1768 = vmatpush.bf16.msra.mxu0 0
    %1769 = vmatpush.bf16.msra.mxu0 %v1760
    %1770 = vmatmul.bf16.gmra.mxu0 %v1757
    %v1771 = vpop.f32.mrf.mxu0
    %v1772 = vadd.f32 0.0, %v1771
    %v1773 = vpop.f32.mrf.mxu0
    %v1774 = vadd.f32 0.0, %v1773
    %1775 = vdwg.mxu0
    %v1777 = vperm.slane %v1221, 0
    %v1779 = vadd.f32 %v1777, %v1772
    %v1780 = vadd.f32 %v1777, %v1774
    %v1781 = vpack.c.bf16 %v1668, %v1647
    %v1783 = vsel %vm387, %v1781, 0
    %v1786 = vsel %vm692, %v1217, 0
    %1788 = vmatpush.bf16.msra.mxu0 0
    %1789 = vmatpush.bf16.msra.mxu0 0
    %1790 = vmatpush.bf16.msra.mxu0 0
    %1791 = vmatpush.bf16.msra.mxu0 0
    %1792 = vmatpush.bf16.msra.mxu0 0
    %1793 = vmatpush.bf16.msra.mxu0 0
    %1794 = vmatpush.bf16.msra.mxu0 0
    %1795 = vmatpush.bf16.msra.mxu0 %v1786
    %1796 = vmatmul.bf16.gmra.mxu0 %v1783
    %v1797 = vpop.f32.mrf.mxu0
    %v1798 = vadd.f32 0.0, %v1797
    %v1799 = vpop.f32.mrf.mxu0
    %v1800 = vadd.f32 0.0, %v1799
    %1801 = vdwg.mxu0
    %v1802 = vadd.f32 %v1779, %v1798
    %v1803 = vadd.f32 %v1780, %v1800
    %v1804 = vpack.c.bf16 %v1710, %v1689
    %v1806 = vsel %vm387, %v1804, 0
    %v1809 = vsel %vm692, %v1218, 0
    %1811 = vmatpush.bf16.msra.mxu0 0
    %1812 = vmatpush.bf16.msra.mxu0 0
    %1813 = vmatpush.bf16.msra.mxu0 0
    %1814 = vmatpush.bf16.msra.mxu0 0
    %1815 = vmatpush.bf16.msra.mxu0 0
    %1816 = vmatpush.bf16.msra.mxu0 0
    %1817 = vmatpush.bf16.msra.mxu0 0
    %1818 = vmatpush.bf16.msra.mxu0 %v1809
    %1819 = vmatmul.bf16.gmra.mxu0 %v1806
    %v1820 = vpop.f32.mrf.mxu0
    %v1821 = vadd.f32 0.0, %v1820
    %v1822 = vpop.f32.mrf.mxu0
    %v1823 = vadd.f32 0.0, %v1822
    %1824 = vdwg.mxu0
    %v1825 = vadd.f32 %v1802, %v1821
    %v1826 = vadd.f32 %v1803, %v1823
    %v1827 = vpack.c.bf16 %v1752, %v1731
    %v1829 = vsel %vm387, %v1827, 0
    %v1832 = vsel %vm692, %v1219, 0
    %1834 = vmatpush.bf16.msra.mxu0 0
    %1835 = vmatpush.bf16.msra.mxu0 0
    %1836 = vmatpush.bf16.msra.mxu0 0
    %1837 = vmatpush.bf16.msra.mxu0 0
    %1838 = vmatpush.bf16.msra.mxu0 0
    %1839 = vmatpush.bf16.msra.mxu0 0
    %1840 = vmatpush.bf16.msra.mxu0 0
    %1841 = vmatpush.bf16.msra.mxu0 %v1832
    %1842 = vmatmul.bf16.gmra.mxu0 %v1829
    %v1843 = vpop.f32.mrf.mxu0
    %v1844 = vadd.f32 0.0, %v1843
    %v1845 = vpop.f32.mrf.mxu0
    %v1846 = vadd.f32 0.0, %v1845
    %1847 = vdwg.mxu0
    %v1848 = vadd.f32 %v1825, %v1844
    %v1849 = vadd.f32 %v1826, %v1846
    %v1850 = vadd.f32 %v1148, %v1848
    %v1851 = vadd.f32 %v1149, %v1849
    %s1852 = scalar_lea.vmem %s11, 1
    %v1853 = vld [vmem:[%s1852] sm:$0x1]
    %s1854 = scalar_lea.vmem %s12, 1
    %v1855 = vld [vmem:[%s1854] sm:$0x1]
    %v1856 = vsel %vm249, %v1850, 0.0
    %1857 = vadd.xlane.f32.xlu0 %v1856
    %v1858 = vpop.xlane.xlu0 %1857
    %v1859 = vsel %vm249, %v1851, 0.0
    %1860 = vadd.xlane.f32.xlu0 %v1859
    %v1861 = vpop.xlane.xlu0 %1860
    %v1862 = vmul.f32 %v1858, %v262
    %v1863 = vmul.f32 %v1861, %v262
    %v1864 = vsub.f32 %v1850, %v1862
    %v1865 = vsub.f32 %v1851, %v1863
    %v1866 = vmul.f32 %v1864, %v1864
    %v1867 = vmul.f32 %v1865, %v1865
    %v1868 = vsel %vm249, %v1866, 0.0
    %1869 = vadd.xlane.f32.xlu0 %v1868
    %v1870 = vpop.xlane.xlu0 %1869
    %v1871 = vsel %vm249, %v1867, 0.0
    %1872 = vadd.xlane.f32.xlu0 %v1871
    %v1873 = vpop.xlane.xlu0 %1872
    %v1874 = vmul.f32 %v1870, %v262
    %v1875 = vmul.f32 %v1873, %v262
    %v1876 = vadd.f32 %v1874, 1e-12
    %v1877 = vadd.f32 %v1875, 1e-12
    %v1878 = vrsqrt.pop %v1876
    %v1879 = vmul.f32 %v1878, %v1876
    %v1880 = vmul.f32 %v1879, %v1878
    %v1881 = vmul.f32 0.5, %v1880
    %v1882 = vsub.f32 1.5, %v1881
    %v1883 = vmul.f32 %v1878, %v1882
    %vm1884 = vweird.f32 %v1876
    %vm1885 = vweird.f32 %v1878
    %vm1886 = vmor %vm1884, %vm1885
    %v1887 = vsel %vm1886, %v1878, %v1883
    %v1888 = vrsqrt.pop %v1877
    %v1889 = vmul.f32 %v1888, %v1877
    %v1890 = vmul.f32 %v1889, %v1888
    %v1891 = vmul.f32 0.5, %v1890
    %v1892 = vsub.f32 1.5, %v1891
    %v1893 = vmul.f32 %v1888, %v1892
    %vm1894 = vweird.f32 %v1877
    %vm1895 = vweird.f32 %v1888
    %vm1896 = vmor %vm1894, %vm1895
    %v1897 = vsel %vm1896, %v1888, %v1893
    %v1898 = vmul.f32 %v1864, %v1887
    %v1899 = vmul.f32 %v1865, %v1897
    %v1901 = vperm.slane %v1853, 0
    %v1903 = vmul.f32 %v1898, %v1901
    %v1904 = vmul.f32 %v1899, %v1901
    %v1906 = vperm.slane %v1855, 0
    %v1908 = vadd.f32 %v1903, %v1906
    %v1909 = vadd.f32 %v1904, %v1906
    %s1910 = scalar_lea.vmem %s13, 16
    %v1911 = vld [vmem:[%s1910] sm:$0xf]
    %v1912 = vld [vmem:[%s1910 + $0x4] sm:$0xf]
    %v1913 = vld [vmem:[%s1910 + $0x8] sm:$0xf]
    %v1914 = vld [vmem:[%s1910 + $0xc] sm:$0xf]
    %s1915 = scalar_lea.vmem %s14, 1
    %v1916 = vld [vmem:[%s1915] sm:$0x1]
    %s1917 = scalar_lea.vmem %s15, 64
    %v1918 = vld [vmem:[%s1917] sm:$0xf]
    %v1919 = vld [vmem:[%s1917 + $0x4] sm:$0xf]
    %v1920 = vld [vmem:[%s1917 + $0x8] sm:$0xf]
    %v1921 = vld [vmem:[%s1917 + $0xc] sm:$0xf]
    %v1922 = vld [vmem:[%s1917 + $0x10] sm:$0xf]
    %v1923 = vld [vmem:[%s1917 + $0x14] sm:$0xf]
    %v1924 = vld [vmem:[%s1917 + $0x18] sm:$0xf]
    %v1925 = vld [vmem:[%s1917 + $0x1c] sm:$0xf]
    %v1926 = vld [vmem:[%s1917 + $0x20] sm:$0xf]
    %v1927 = vld [vmem:[%s1917 + $0x24] sm:$0xf]
    %v1928 = vld [vmem:[%s1917 + $0x28] sm:$0xf]
    %v1929 = vld [vmem:[%s1917 + $0x2c] sm:$0xf]
    %v1930 = vld [vmem:[%s1917 + $0x30] sm:$0xf]
    %v1931 = vld [vmem:[%s1917 + $0x34] sm:$0xf]
    %v1932 = vld [vmem:[%s1917 + $0x38] sm:$0xf]
    %v1933 = vld [vmem:[%s1917 + $0x3c] sm:$0xf]
    %s1934 = scalar_lea.vmem %s16, 1
    %v1935 = vld [vmem:[%s1934] sm:$0x1]
    %v1936 = vpack.c.bf16 %v1909, %v1908
    %v1938 = vperm.slane %v1916, 0
    %v1944 = vunpack.c.l.b16 %v1911
    %v1945 = vunpack.c.l.b16 %v1912
    %v1946 = vunpack.c.l.b16 %v1913
    %v1947 = vunpack.c.l.b16 %v1914
    %v1948 = vpack.c.b16 %v1945, %v1944
    %v1949 = vpack.c.b16 %v1947, %v1946
    %v1953 = vsel %vm249, %v1936, 0
    %1955 = vmatpush.bf16.msra.mxu0 0
    %1956 = vmatpush.bf16.msra.mxu0 0
    %1957 = vmatpush.bf16.msra.mxu0 0
    %1958 = vmatpush.bf16.msra.mxu0 0
    %1959 = vmatpush.bf16.msra.mxu0 0
    %1960 = vmatpush.bf16.msra.mxu0 0
    %1961 = vmatpush.bf16.msra.mxu0 %v1949
    %1962 = vmatpush.bf16.msra.mxu0 %v1948
    %1963 = vmatmul.bf16.gmra.mxu0 %v1953
    %v1964 = vpop.f32.mrf.mxu0
    %v1965 = vadd.f32 %v1938, %v1964
    %v1966 = vpop.f32.mrf.mxu0
    %v1967 = vadd.f32 %v1938, %v1966
    %1968 = vdwg.mxu0
    %v1969 = vmul.f32 %v1965, 0.5
    %v1970 = vmul.f32 %v1967, 0.5
    %v1971 = vmul.f32 %v1965, 0.044715
    %v1972 = vmul.f32 %v1967, 0.044715
    %v1973 = vmul.f32 %v1971, %v1965
    %v1974 = vmul.f32 %v1972, %v1967
    %v1975 = vmul.f32 %v1973, %v1965
    %v1976 = vmul.f32 %v1974, %v1967
    %v1977 = vadd.f32 %v1965, %v1975
    %v1978 = vadd.f32 %v1967, %v1976
    %v1979 = vmul.f32 %v1977, 0.7978846
    %v1980 = vmul.f32 %v1978, 0.7978846
    %v1981 = vtanh.pop %v1979
    %v1982 = vtanh.pop %v1980
    %v1983 = vadd.f32 %v1981, 1.0
    %v1984 = vadd.f32 %v1982, 1.0
    %v1985 = vmul.f32 %v1969, %v1983
    %v1986 = vmul.f32 %v1970, %v1984
    %v1987 = vpack.c.bf16 %v1986, %v1985
    %v1989 = vperm.slane %v1935, 0
    %v2007 = vunpack.c.l.b16 %v1918
    %v2008 = vunpack.c.l.b16 %v1919
    %v2009 = vunpack.c.l.b16 %v1920
    %v2010 = vunpack.c.l.b16 %v1921
    %v2011 = vunpack.c.l.b16 %v1922
    %v2012 = vunpack.c.l.b16 %v1923
    %v2013 = vunpack.c.l.b16 %v1924
    %v2014 = vunpack.c.l.b16 %v1925
    %v2015 = vunpack.c.l.b16 %v1926
    %v2016 = vunpack.c.l.b16 %v1927
    %v2017 = vunpack.c.l.b16 %v1928
    %v2018 = vunpack.c.l.b16 %v1929
    %v2019 = vunpack.c.l.b16 %v1930
    %v2020 = vunpack.c.l.b16 %v1931
    %v2021 = vunpack.c.l.b16 %v1932
    %v2022 = vunpack.c.l.b16 %v1933
    %v2023 = vpack.c.b16 %v2008, %v2007
    %v2024 = vpack.c.b16 %v2010, %v2009
    %v2025 = vpack.c.b16 %v2012, %v2011
    %v2026 = vpack.c.b16 %v2014, %v2013
    %v2027 = vpack.c.b16 %v2016, %v2015
    %v2028 = vpack.c.b16 %v2018, %v2017
    %v2029 = vpack.c.b16 %v2020, %v2019
    %v2030 = vpack.c.b16 %v2022, %v2021
    %2039 = vmatpush.bf16.msra.mxu0 %v2030
    %2040 = vmatpush.bf16.msra.mxu0 %v2029
    %2041 = vmatpush.bf16.msra.mxu0 %v2028
    %2042 = vmatpush.bf16.msra.mxu0 %v2027
    %2043 = vmatpush.bf16.msra.mxu0 %v2026
    %2044 = vmatpush.bf16.msra.mxu0 %v2025
    %2045 = vmatpush.bf16.msra.mxu0 %v2024
    %2046 = vmatpush.bf16.msra.mxu0 %v2023
    %2047 = vmatmul.bf16.gmra.mxu0 %v1987
    %v2048 = vpop.f32.mrf.mxu0
    %v2049 = vadd.f32 %v1989, %v2048
    %v2050 = vpop.f32.mrf.mxu0
    %v2051 = vadd.f32 %v1989, %v2050
    %2052 = vdwg.mxu0
    %v2053 = vadd.f32 %v1850, %v2049
    %v2054 = vadd.f32 %v1851, %v2051
    %v2055 = vld [vmem:[%s17] sm:$0x1]
    %v2056 = vld [vmem:[%s18] sm:$0x1]
    %v2059 = vrot.slane %v2054, 7
    %vm2060 = vcmask 1041409
    %v2061 = vsel %vm2060, %v2059, %v2053
    %vm2063 = vcmask 254976
    %v2064 = vsel %vm2063, %v2061, 0.0
    %2065 = vadd.xlane.f32.xlu0 %v2064
    %v2066 = vpop.xlane.xlu0 %2065
    %v2067 = vmul.f32 %v2066, %v262
    %v2069 = vrot.slane %v2067, 1
    %v2072 = vsub.f32 %v2053, %v2067
    %v2073 = vsub.f32 %v2054, %v2069
    %v2074 = vmul.f32 %v2072, %v2072
    %v2075 = vmul.f32 %v2073, %v2073
    %v2078 = vrot.slane %v2075, 7
    %v2079 = vsel %vm2060, %v2078, %v2074
    %v2081 = vsel %vm2063, %v2079, 0.0
    %2082 = vadd.xlane.f32.xlu0 %v2081
    %v2083 = vpop.xlane.xlu0 %2082
    %v2084 = vmul.f32 %v2083, %v262
    %v2085 = vadd.f32 %v2084, 1e-12
    %v2086 = vrsqrt.pop %v2085
    %v2087 = vmul.f32 %v2086, %v2085
    %v2088 = vmul.f32 %v2087, %v2086
    %v2089 = vmul.f32 0.5, %v2088
    %v2090 = vsub.f32 1.5, %v2089
    %v2091 = vmul.f32 %v2086, %v2090
    %vm2092 = vweird.f32 %v2085
    %vm2093 = vweird.f32 %v2086
    %vm2094 = vmor %vm2092, %vm2093
    %v2095 = vsel %vm2094, %v2086, %v2091
    %v2097 = vrot.slane %v2095, 1
    %v2100 = vmul.f32 %v2072, %v2095
    %v2101 = vmul.f32 %v2073, %v2097
    %v2103 = vperm.slane %v2055, 0
    %v2105 = vmul.f32 %v2100, %v2103
    %v2106 = vmul.f32 %v2101, %v2103
    %v2108 = vperm.slane %v2056, 0
    %v2110 = vadd.f32 %v2105, %v2108
    %v2111 = vadd.f32 %v2106, %v2108
    %v2112 = vpack.c.bf16 %v2110, %v2110
    %v2113 = vpack.c.bf16 %v2111, %v2111
    %v2114 = vld [vmem:[%s19] sm:$0xff]
    %v2115 = vld [vmem:[%s19 + $0x8] sm:$0xff]
    %v2116 = vld [vmem:[%s19 + $0x10] sm:$0xff]
    %v2117 = vld [vmem:[%s19 + $0x18] sm:$0xff]
    %v2118 = vld [vmem:[%s20] sm:$0x3]
    %v2120 = vperm.slane %v2118, 0
    %v2121 = vperm.slane %v2118, 1
    %v2126 = vunpack.c.l.b16 %v2112
    %v2127 = vunpack.c.l.b16 %v2113
    %v2128 = vrot.slane %v2127, 7
    %v2129 = vsel %vm2060, %v2128, %v2126
    %v2130 = vpack.c.b16 %v2129, %v2129
    %v2135 = vunpack.c.l.b16 %v2114
    %v2136 = vunpack.c.h.b16 %v2114
    %v2137 = vunpack.c.l.b16 %v2115
    %v2138 = vunpack.c.h.b16 %v2115
    %v2139 = vunpack.c.l.b16 %v2116
    %v2140 = vunpack.c.h.b16 %v2116
    %v2141 = vunpack.c.l.b16 %v2117
    %v2142 = vunpack.c.h.b16 %v2117
    %v2143 = vpack.c.b16 %v2137, %v2135
    %v2144 = vpack.c.b16 %v2138, %v2136
    %v2145 = vpack.c.b16 %v2141, %v2139
    %v2146 = vpack.c.b16 %v2142, %v2140
    %v2152 = vsel %vm249, %v2130, 0
    %2154 = vmatpush.bf16.msra.mxu0 0
    %2155 = vmatpush.bf16.msra.mxu0 0
    %2156 = vmatpush.bf16.msra.mxu0 0
    %2157 = vmatpush.bf16.msra.mxu0 0
    %2158 = vmatpush.bf16.msra.mxu0 0
    %2159 = vmatpush.bf16.msra.mxu0 0
    %2160 = vmatpush.bf16.msra.mxu0 %v2145
    %2161 = vmatpush.bf16.msra.mxu0 %v2143
    %2162 = vmatmul.bf16.gmra.mxu0 %v2152
    %v2163 = vpop.f32.mrf.mxu0
    %v2164 = vadd.f32 %v2120, %v2163
    %v2165 = vpop.f32.mrf.mxu0
    %2166 = vdwg.mxu0
    %2167 = vmatpush.bf16.msra.mxu0 0
    %2168 = vmatpush.bf16.msra.mxu0 0
    %2169 = vmatpush.bf16.msra.mxu0 0
    %2170 = vmatpush.bf16.msra.mxu0 0
    %2171 = vmatpush.bf16.msra.mxu0 0
    %2172 = vmatpush.bf16.msra.mxu0 0
    %2173 = vmatpush.bf16.msra.mxu0 %v2146
    %2174 = vmatpush.bf16.msra.mxu0 %v2144
    %2175 = vmatmul.bf16.gmra.mxu0 %v2152
    %v2176 = vpop.f32.mrf.mxu0
    %v2177 = vadd.f32 %v2121, %v2176
    %v2178 = vpop.f32.mrf.mxu0
    %2179 = vdwg.mxu0
    %v2180 = vld [vmem:[%s21] sm:$0xff]
    %v2181 = vld [vmem:[%s21 + $0x8] sm:$0xff]
    %v2182 = vld [vmem:[%s21 + $0x10] sm:$0xff]
    %v2183 = vld [vmem:[%s21 + $0x18] sm:$0xff]
    %v2184 = vld [vmem:[%s21 + $0x20] sm:$0xff]
    %v2185 = vld [vmem:[%s21 + $0x28] sm:$0xff]
    %v2186 = vld [vmem:[%s21 + $0x30] sm:$0xff]
    %v2187 = vld [vmem:[%s21 + $0x38] sm:$0xff]
    %v2188 = vld [vmem:[%s21 + $0x40] sm:$0xff]
    %v2189 = vld [vmem:[%s21 + $0x48] sm:$0xff]
    %v2190 = vld [vmem:[%s21 + $0x50] sm:$0xff]
    %v2191 = vld [vmem:[%s21 + $0x58] sm:$0xff]
    %v2192 = vld [vmem:[%s21 + $0x60] sm:$0xff]
    %v2193 = vld [vmem:[%s21 + $0x68] sm:$0xff]
    %v2194 = vld [vmem:[%s21 + $0x70] sm:$0xff]
    %v2195 = vld [vmem:[%s21 + $0x78] sm:$0xff]
    %v2196 = vld [vmem:[%s21 + $0x80] sm:$0xff]
    %v2197 = vld [vmem:[%s21 + $0x88] sm:$0xff]
    %v2198 = vld [vmem:[%s21 + $0x90] sm:$0xff]
    %v2199 = vld [vmem:[%s21 + $0x98] sm:$0xff]
    %v2200 = vld [vmem:[%s21 + $0xa0] sm:$0xff]
    %v2201 = vld [vmem:[%s21 + $0xa8] sm:$0xff]
    %v2202 = vld [vmem:[%s21 + $0xb0] sm:$0xff]
    %v2203 = vld [vmem:[%s21 + $0xb8] sm:$0xff]
    %v2204 = vld [vmem:[%s21 + $0xc0] sm:$0xff]
    %v2205 = vld [vmem:[%s21 + $0xc8] sm:$0xff]
    %v2206 = vld [vmem:[%s21 + $0xd0] sm:$0xff]
    %v2207 = vld [vmem:[%s21 + $0xd8] sm:$0xff]
    %v2208 = vld [vmem:[%s21 + $0xe0] sm:$0xff]
    %v2209 = vld [vmem:[%s21 + $0xe8] sm:$0xff]
    %v2210 = vld [vmem:[%s21 + $0xf0] sm:$0xff]
    %v2211 = vld [vmem:[%s21 + $0xf8] sm:$0xff]
    %v2212 = vld [vmem:[%s22] sm:$0x3]
    %v2213 = vld [vmem:[%s23] sm:$0xff]
    %v2214 = vld [vmem:[%s23 + $0x8] sm:$0xff]
    %v2215 = vld [vmem:[%s23 + $0x10] sm:$0xff]
    %v2216 = vld [vmem:[%s23 + $0x18] sm:$0xff]
    %v2217 = vld [vmem:[%s23 + $0x20] sm:$0xff]
    %v2218 = vld [vmem:[%s23 + $0x28] sm:$0xff]
    %v2219 = vld [vmem:[%s23 + $0x30] sm:$0xff]
    %v2220 = vld [vmem:[%s23 + $0x38] sm:$0xff]
    %v2221 = vld [vmem:[%s23 + $0x40] sm:$0xff]
    %v2222 = vld [vmem:[%s23 + $0x48] sm:$0xff]
    %v2223 = vld [vmem:[%s23 + $0x50] sm:$0xff]
    %v2224 = vld [vmem:[%s23 + $0x58] sm:$0xff]
    %v2225 = vld [vmem:[%s23 + $0x60] sm:$0xff]
    %v2226 = vld [vmem:[%s23 + $0x68] sm:$0xff]
    %v2227 = vld [vmem:[%s23 + $0x70] sm:$0xff]
    %v2228 = vld [vmem:[%s23 + $0x78] sm:$0xff]
    %v2229 = vld [vmem:[%s23 + $0x80] sm:$0xff]
    %v2230 = vld [vmem:[%s23 + $0x88] sm:$0xff]
    %v2231 = vld [vmem:[%s23 + $0x90] sm:$0xff]
    %v2232 = vld [vmem:[%s23 + $0x98] sm:$0xff]
    %v2233 = vld [vmem:[%s23 + $0xa0] sm:$0xff]
    %v2234 = vld [vmem:[%s23 + $0xa8] sm:$0xff]
    %v2235 = vld [vmem:[%s23 + $0xb0] sm:$0xff]
    %v2236 = vld [vmem:[%s23 + $0xb8] sm:$0xff]
    %v2237 = vld [vmem:[%s23 + $0xc0] sm:$0xff]
    %v2238 = vld [vmem:[%s23 + $0xc8] sm:$0xff]
    %v2239 = vld [vmem:[%s23 + $0xd0] sm:$0xff]
    %v2240 = vld [vmem:[%s23 + $0xd8] sm:$0xff]
    %v2241 = vld [vmem:[%s23 + $0xe0] sm:$0xff]
    %v2242 = vld [vmem:[%s23 + $0xe8] sm:$0xff]
    %v2243 = vld [vmem:[%s23 + $0xf0] sm:$0xff]
    %v2244 = vld [vmem:[%s23 + $0xf8] sm:$0xff]
    %v2245 = vld [vmem:[%s24] sm:$0x3]
    %v2246 = vld [vmem:[%s25] sm:$0x3]
    %v2247 = vld [vmem:[%s26] sm:$0x3]
    %v2248 = vpack.c.bf16 %v2164, %v2164
    %v2249 = vpack.c.bf16 %v2177, %v2177
    %v2251 = vperm.slane %v2212, 0
    %v2252 = vperm.slane %v2212, 1
    %v2287 = vunpack.c.l.b16 %v2180
    %v2288 = vunpack.c.h.b16 %v2180
    %v2289 = vunpack.c.l.b16 %v2181
    %v2290 = vunpack.c.h.b16 %v2181
    %v2291 = vunpack.c.l.b16 %v2182
    %v2292 = vunpack.c.h.b16 %v2182
    %v2293 = vunpack.c.l.b16 %v2183
    %v2294 = vunpack.c.h.b16 %v2183
    %v2295 = vunpack.c.l.b16 %v2184
    %v2296 = vunpack.c.h.b16 %v2184
    %v2297 = vunpack.c.l.b16 %v2185
    %v2298 = vunpack.c.h.b16 %v2185
    %v2299 = vunpack.c.l.b16 %v2186
    %v2300 = vunpack.c.h.b16 %v2186
    %v2301 = vunpack.c.l.b16 %v2187
    %v2302 = vunpack.c.h.b16 %v2187
    %v2303 = vunpack.c.l.b16 %v2188
    %v2304 = vunpack.c.h.b16 %v2188
    %v2305 = vunpack.c.l.b16 %v2189
    %v2306 = vunpack.c.h.b16 %v2189
    %v2307 = vunpack.c.l.b16 %v2190
    %v2308 = vunpack.c.h.b16 %v2190
    %v2309 = vunpack.c.l.b16 %v2191
    %v2310 = vunpack.c.h.b16 %v2191
    %v2311 = vunpack.c.l.b16 %v2192
    %v2312 = vunpack.c.h.b16 %v2192
    %v2313 = vunpack.c.l.b16 %v2193
    %v2314 = vunpack.c.h.b16 %v2193
    %v2315 = vunpack.c.l.b16 %v2194
    %v2316 = vunpack.c.h.b16 %v2194
    %v2317 = vunpack.c.l.b16 %v2195
    %v2318 = vunpack.c.h.b16 %v2195
    %v2319 = vunpack.c.l.b16 %v2196
    %v2320 = vunpack.c.h.b16 %v2196
    %v2321 = vunpack.c.l.b16 %v2197
    %v2322 = vunpack.c.h.b16 %v2197
    %v2323 = vunpack.c.l.b16 %v2198
    %v2324 = vunpack.c.h.b16 %v2198
    %v2325 = vunpack.c.l.b16 %v2199
    %v2326 = vunpack.c.h.b16 %v2199
    %v2327 = vunpack.c.l.b16 %v2200
    %v2328 = vunpack.c.h.b16 %v2200
    %v2329 = vunpack.c.l.b16 %v2201
    %v2330 = vunpack.c.h.b16 %v2201
    %v2331 = vunpack.c.l.b16 %v2202
    %v2332 = vunpack.c.h.b16 %v2202
    %v2333 = vunpack.c.l.b16 %v2203
    %v2334 = vunpack.c.h.b16 %v2203
    %v2335 = vunpack.c.l.b16 %v2204
    %v2336 = vunpack.c.h.b16 %v2204
    %v2337 = vunpack.c.l.b16 %v2205
    %v2338 = vunpack.c.h.b16 %v2205
    %v2339 = vunpack.c.l.b16 %v2206
    %v2340 = vunpack.c.h.b16 %v2206
    %v2341 = vunpack.c.l.b16 %v2207
    %v2342 = vunpack.c.h.b16 %v2207
    %v2343 = vunpack.c.l.b16 %v2208
    %v2344 = vunpack.c.h.b16 %v2208
    %v2345 = vunpack.c.l.b16 %v2209
    %v2346 = vunpack.c.h.b16 %v2209
    %v2347 = vunpack.c.l.b16 %v2210
    %v2348 = vunpack.c.h.b16 %v2210
    %v2349 = vunpack.c.l.b16 %v2211
    %v2350 = vunpack.c.h.b16 %v2211
    %v2351 = vpack.c.b16 %v2289, %v2287
    %v2352 = vpack.c.b16 %v2290, %v2288
    %v2353 = vpack.c.b16 %v2293, %v2291
    %v2354 = vpack.c.b16 %v2294, %v2292
    %v2355 = vpack.c.b16 %v2297, %v2295
    %v2356 = vpack.c.b16 %v2298, %v2296
    %v2357 = vpack.c.b16 %v2301, %v2299
    %v2358 = vpack.c.b16 %v2302, %v2300
    %v2359 = vpack.c.b16 %v2305, %v2303
    %v2360 = vpack.c.b16 %v2306, %v2304
    %v2361 = vpack.c.b16 %v2309, %v2307
    %v2362 = vpack.c.b16 %v2310, %v2308
    %v2363 = vpack.c.b16 %v2313, %v2311
    %v2364 = vpack.c.b16 %v2314, %v2312
    %v2365 = vpack.c.b16 %v2317, %v2315
    %v2366 = vpack.c.b16 %v2318, %v2316
    %v2367 = vpack.c.b16 %v2321, %v2319
    %v2368 = vpack.c.b16 %v2322, %v2320
    %v2369 = vpack.c.b16 %v2325, %v2323
    %v2370 = vpack.c.b16 %v2326, %v2324
    %v2371 = vpack.c.b16 %v2329, %v2327
    %v2372 = vpack.c.b16 %v2330, %v2328
    %v2373 = vpack.c.b16 %v2333, %v2331
    %v2374 = vpack.c.b16 %v2334, %v2332
    %v2375 = vpack.c.b16 %v2337, %v2335
    %v2376 = vpack.c.b16 %v2338, %v2336
    %v2377 = vpack.c.b16 %v2341, %v2339
    %v2378 = vpack.c.b16 %v2342, %v2340
    %v2379 = vpack.c.b16 %v2345, %v2343
    %v2380 = vpack.c.b16 %v2346, %v2344
    %v2381 = vpack.c.b16 %v2349, %v2347
    %v2382 = vpack.c.b16 %v2350, %v2348
    %2415 = vmatpush.bf16.msra.mxu0 %v2365
    %2416 = vmatpush.bf16.msra.mxu0 %v2363
    %2417 = vmatpush.bf16.msra.mxu0 %v2361
    %2418 = vmatpush.bf16.msra.mxu0 %v2359
    %2419 = vmatpush.bf16.msra.mxu0 %v2357
    %2420 = vmatpush.bf16.msra.mxu0 %v2355
    %2421 = vmatpush.bf16.msra.mxu0 %v2353
    %2422 = vmatpush.bf16.msra.mxu0 %v2351
    %2423 = vmatmul.bf16.gmra.mxu0 %v2248
    %v2424 = vpop.f32.mrf.mxu0
    %v2425 = vadd.f32 %v2251, %v2424
    %v2426 = vpop.f32.mrf.mxu0
    %2427 = vdwg.mxu0
    %2428 = vmatpush.bf16.msra.mxu0 %v2381
    %2429 = vmatpush.bf16.msra.mxu0 %v2379
    %2430 = vmatpush.bf16.msra.mxu0 %v2377
    %2431 = vmatpush.bf16.msra.mxu0 %v2375
    %2432 = vmatpush.bf16.msra.mxu0 %v2373
    %2433 = vmatpush.bf16.msra.mxu0 %v2371
    %2434 = vmatpush.bf16.msra.mxu0 %v2369
    %2435 = vmatpush.bf16.msra.mxu0 %v2367
    %2436 = vmatmul.bf16.gmra.mxu0 %v2249
    %v2437 = vpop.f32.mrf.mxu0
    %v2438 = vadd.f32 %v2425, %v2437
    %v2439 = vpop.f32.mrf.mxu0
    %2440 = vdwg.mxu0
    %2441 = vmatpush.bf16.msra.mxu0 %v2366
    %2442 = vmatpush.bf16.msra.mxu0 %v2364
    %2443 = vmatpush.bf16.msra.mxu0 %v2362
    %2444 = vmatpush.bf16.msra.mxu0 %v2360
    %2445 = vmatpush.bf16.msra.mxu0 %v2358
    %2446 = vmatpush.bf16.msra.mxu0 %v2356
    %2447 = vmatpush.bf16.msra.mxu0 %v2354
    %2448 = vmatpush.bf16.msra.mxu0 %v2352
    %2449 = vmatmul.bf16.gmra.mxu0 %v2248
    %v2450 = vpop.f32.mrf.mxu0
    %v2451 = vadd.f32 %v2252, %v2450
    %v2452 = vpop.f32.mrf.mxu0
    %2453 = vdwg.mxu0
    %2454 = vmatpush.bf16.msra.mxu0 %v2382
    %2455 = vmatpush.bf16.msra.mxu0 %v2380
    %2456 = vmatpush.bf16.msra.mxu0 %v2378
    %2457 = vmatpush.bf16.msra.mxu0 %v2376
    %2458 = vmatpush.bf16.msra.mxu0 %v2374
    %2459 = vmatpush.bf16.msra.mxu0 %v2372
    %2460 = vmatpush.bf16.msra.mxu0 %v2370
    %2461 = vmatpush.bf16.msra.mxu0 %v2368
    %2462 = vmatmul.bf16.gmra.mxu0 %v2249
    %v2463 = vpop.f32.mrf.mxu0
    %v2464 = vadd.f32 %v2451, %v2463
    %v2465 = vpop.f32.mrf.mxu0
    %2466 = vdwg.mxu0
    %v2467 = vmul.f32 %v2438, 0.5
    %v2468 = vmul.f32 %v2464, 0.5
    %v2469 = vmul.f32 %v2438, 0.044715
    %v2470 = vmul.f32 %v2464, 0.044715
    %v2471 = vmul.f32 %v2469, %v2438
    %v2472 = vmul.f32 %v2470, %v2464
    %v2473 = vmul.f32 %v2471, %v2438
    %v2474 = vmul.f32 %v2472, %v2464
    %v2475 = vadd.f32 %v2438, %v2473
    %v2476 = vadd.f32 %v2464, %v2474
    %v2477 = vmul.f32 %v2475, 0.7978846
    %v2478 = vmul.f32 %v2476, 0.7978846
    %v2479 = vtanh.pop %v2477
    %v2480 = vtanh.pop %v2478
    %v2481 = vadd.f32 %v2479, 1.0
    %v2482 = vadd.f32 %v2480, 1.0
    %v2483 = vmul.f32 %v2467, %v2481
    %v2484 = vmul.f32 %v2468, %v2482
    %v2485 = vpack.c.bf16 %v2483, %v2483
    %v2486 = vpack.c.bf16 %v2484, %v2484
    %v2488 = vperm.slane %v2245, 0
    %v2489 = vperm.slane %v2245, 1
    %v2524 = vunpack.c.l.b16 %v2213
    %v2525 = vunpack.c.h.b16 %v2213
    %v2526 = vunpack.c.l.b16 %v2214
    %v2527 = vunpack.c.h.b16 %v2214
    %v2528 = vunpack.c.l.b16 %v2215
    %v2529 = vunpack.c.h.b16 %v2215
    %v2530 = vunpack.c.l.b16 %v2216
    %v2531 = vunpack.c.h.b16 %v2216
    %v2532 = vunpack.c.l.b16 %v2217
    %v2533 = vunpack.c.h.b16 %v2217
    %v2534 = vunpack.c.l.b16 %v2218
    %v2535 = vunpack.c.h.b16 %v2218
    %v2536 = vunpack.c.l.b16 %v2219
    %v2537 = vunpack.c.h.b16 %v2219
    %v2538 = vunpack.c.l.b16 %v2220
    %v2539 = vunpack.c.h.b16 %v2220
    %v2540 = vunpack.c.l.b16 %v2221
    %v2541 = vunpack.c.h.b16 %v2221
    %v2542 = vunpack.c.l.b16 %v2222
    %v2543 = vunpack.c.h.b16 %v2222
    %v2544 = vunpack.c.l.b16 %v2223
    %v2545 = vunpack.c.h.b16 %v2223
    %v2546 = vunpack.c.l.b16 %v2224
    %v2547 = vunpack.c.h.b16 %v2224
    %v2548 = vunpack.c.l.b16 %v2225
    %v2549 = vunpack.c.h.b16 %v2225
    %v2550 = vunpack.c.l.b16 %v2226
    %v2551 = vunpack.c.h.b16 %v2226
    %v2552 = vunpack.c.l.b16 %v2227
    %v2553 = vunpack.c.h.b16 %v2227
    %v2554 = vunpack.c.l.b16 %v2228
    %v2555 = vunpack.c.h.b16 %v2228
    %v2556 = vunpack.c.l.b16 %v2229
    %v2557 = vunpack.c.h.b16 %v2229
    %v2558 = vunpack.c.l.b16 %v2230
    %v2559 = vunpack.c.h.b16 %v2230
    %v2560 = vunpack.c.l.b16 %v2231
    %v2561 = vunpack.c.h.b16 %v2231
    %v2562 = vunpack.c.l.b16 %v2232
    %v2563 = vunpack.c.h.b16 %v2232
    %v2564 = vunpack.c.l.b16 %v2233
    %v2565 = vunpack.c.h.b16 %v2233
    %v2566 = vunpack.c.l.b16 %v2234
    %v2567 = vunpack.c.h.b16 %v2234
    %v2568 = vunpack.c.l.b16 %v2235
    %v2569 = vunpack.c.h.b16 %v2235
    %v2570 = vunpack.c.l.b16 %v2236
    %v2571 = vunpack.c.h.b16 %v2236
    %v2572 = vunpack.c.l.b16 %v2237
    %v2573 = vunpack.c.h.b16 %v2237
    %v2574 = vunpack.c.l.b16 %v2238
    %v2575 = vunpack.c.h.b16 %v2238
    %v2576 = vunpack.c.l.b16 %v2239
    %v2577 = vunpack.c.h.b16 %v2239
    %v2578 = vunpack.c.l.b16 %v2240
    %v2579 = vunpack.c.h.b16 %v2240
    %v2580 = vunpack.c.l.b16 %v2241
    %v2581 = vunpack.c.h.b16 %v2241
    %v2582 = vunpack.c.l.b16 %v2242
    %v2583 = vunpack.c.h.b16 %v2242
    %v2584 = vunpack.c.l.b16 %v2243
    %v2585 = vunpack.c.h.b16 %v2243
    %v2586 = vunpack.c.l.b16 %v2244
    %v2587 = vunpack.c.h.b16 %v2244
    %v2588 = vpack.c.b16 %v2526, %v2524
    %v2589 = vpack.c.b16 %v2527, %v2525
    %v2590 = vpack.c.b16 %v2530, %v2528
    %v2591 = vpack.c.b16 %v2531, %v2529
    %v2592 = vpack.c.b16 %v2534, %v2532
    %v2593 = vpack.c.b16 %v2535, %v2533
    %v2594 = vpack.c.b16 %v2538, %v2536
    %v2595 = vpack.c.b16 %v2539, %v2537
    %v2596 = vpack.c.b16 %v2542, %v2540
    %v2597 = vpack.c.b16 %v2543, %v2541
    %v2598 = vpack.c.b16 %v2546, %v2544
    %v2599 = vpack.c.b16 %v2547, %v2545
    %v2600 = vpack.c.b16 %v2550, %v2548
    %v2601 = vpack.c.b16 %v2551, %v2549
    %v2602 = vpack.c.b16 %v2554, %v2552
    %v2603 = vpack.c.b16 %v2555, %v2553
    %v2604 = vpack.c.b16 %v2558, %v2556
    %v2605 = vpack.c.b16 %v2559, %v2557
    %v2606 = vpack.c.b16 %v2562, %v2560
    %v2607 = vpack.c.b16 %v2563, %v2561
    %v2608 = vpack.c.b16 %v2566, %v2564
    %v2609 = vpack.c.b16 %v2567, %v2565
    %v2610 = vpack.c.b16 %v2570, %v2568
    %v2611 = vpack.c.b16 %v2571, %v2569
    %v2612 = vpack.c.b16 %v2574, %v2572
    %v2613 = vpack.c.b16 %v2575, %v2573
    %v2614 = vpack.c.b16 %v2578, %v2576
    %v2615 = vpack.c.b16 %v2579, %v2577
    %v2616 = vpack.c.b16 %v2582, %v2580
    %v2617 = vpack.c.b16 %v2583, %v2581
    %v2618 = vpack.c.b16 %v2586, %v2584
    %v2619 = vpack.c.b16 %v2587, %v2585
    %2652 = vmatpush.bf16.msra.mxu0 %v2602
    %2653 = vmatpush.bf16.msra.mxu0 %v2600
    %2654 = vmatpush.bf16.msra.mxu0 %v2598
    %2655 = vmatpush.bf16.msra.mxu0 %v2596
    %2656 = vmatpush.bf16.msra.mxu0 %v2594
    %2657 = vmatpush.bf16.msra.mxu0 %v2592
    %2658 = vmatpush.bf16.msra.mxu0 %v2590
    %2659 = vmatpush.bf16.msra.mxu0 %v2588
    %2660 = vmatmul.bf16.gmra.mxu0 %v2485
    %v2661 = vpop.f32.mrf.mxu0
    %v2662 = vadd.f32 %v2488, %v2661
    %v2663 = vpop.f32.mrf.mxu0
    %2664 = vdwg.mxu0
    %2665 = vmatpush.bf16.msra.mxu0 %v2618
    %2666 = vmatpush.bf16.msra.mxu0 %v2616
    %2667 = vmatpush.bf16.msra.mxu0 %v2614
    %2668 = vmatpush.bf16.msra.mxu0 %v2612
    %2669 = vmatpush.bf16.msra.mxu0 %v2610
    %2670 = vmatpush.bf16.msra.mxu0 %v2608
    %2671 = vmatpush.bf16.msra.mxu0 %v2606
    %2672 = vmatpush.bf16.msra.mxu0 %v2604
    %2673 = vmatmul.bf16.gmra.mxu0 %v2486
    %v2674 = vpop.f32.mrf.mxu0
    %v2675 = vadd.f32 %v2662, %v2674
    %v2676 = vpop.f32.mrf.mxu0
    %2677 = vdwg.mxu0
    %2678 = vmatpush.bf16.msra.mxu0 %v2603
    %2679 = vmatpush.bf16.msra.mxu0 %v2601
    %2680 = vmatpush.bf16.msra.mxu0 %v2599
    %2681 = vmatpush.bf16.msra.mxu0 %v2597
    %2682 = vmatpush.bf16.msra.mxu0 %v2595
    %2683 = vmatpush.bf16.msra.mxu0 %v2593
    %2684 = vmatpush.bf16.msra.mxu0 %v2591
    %2685 = vmatpush.bf16.msra.mxu0 %v2589
    %2686 = vmatmul.bf16.gmra.mxu0 %v2485
    %v2687 = vpop.f32.mrf.mxu0
    %v2688 = vadd.f32 %v2489, %v2687
    %v2689 = vpop.f32.mrf.mxu0
    %2690 = vdwg.mxu0
    %2691 = vmatpush.bf16.msra.mxu0 %v2619
    %2692 = vmatpush.bf16.msra.mxu0 %v2617
    %2693 = vmatpush.bf16.msra.mxu0 %v2615
    %2694 = vmatpush.bf16.msra.mxu0 %v2613
    %2695 = vmatpush.bf16.msra.mxu0 %v2611
    %2696 = vmatpush.bf16.msra.mxu0 %v2609
    %2697 = vmatpush.bf16.msra.mxu0 %v2607
    %2698 = vmatpush.bf16.msra.mxu0 %v2605
    %2699 = vmatmul.bf16.gmra.mxu0 %v2486
    %v2700 = vpop.f32.mrf.mxu0
    %v2701 = vadd.f32 %v2688, %v2700
    %v2702 = vpop.f32.mrf.mxu0
    %2703 = vdwg.mxu0
    %v2704 = vadd.f32 %v2675, %v2438
    %v2705 = vadd.f32 %v2701, %v2464
    %vm2706 = vcmask 1041408
    %v2707 = vsel %vm2706, %v2704, 0.0
    %v2708 = vsel %vm2706, %v2705, 0.0
    %v2709 = vadd.f32 %v2707, %v2708
    %2710 = vadd.xlane.f32.xlu0 %v2709
    %v2711 = vpop.xlane.xlu0 %2710
    %v2712 = vrcp.pop 256.0
    %v2713 = vmul.f32 256.0, %v2712
    %v2714 = vsub.f32 1.0, %v2713
    %v2715 = vmul.f32 %v2712, %v2714
    %v2716 = vadd.f32 %v2712, %v2715
    %vm2717 = vweird.f32 %v2712
    %v2718 = vsel %vm2717, %v2712, %v2716
    %v2719 = vmul.f32 %v2711, %v2718
    %v2720 = vsub.f32 %v2704, %v2719
    %v2721 = vsub.f32 %v2705, %v2719
    %v2722 = vmul.f32 %v2720, %v2720
    %v2723 = vmul.f32 %v2721, %v2721
    %v2724 = vsel %vm2706, %v2722, 0.0
    %v2725 = vsel %vm2706, %v2723, 0.0
    %v2726 = vadd.f32 %v2724, %v2725
    %2727 = vadd.xlane.f32.xlu0 %v2726
    %v2728 = vpop.xlane.xlu0 %2727
    %v2729 = vmul.f32 %v2728, %v2718
    %v2730 = vadd.f32 %v2729, 1e-05
    %v2731 = vrsqrt.pop %v2730
    %v2732 = vmul.f32 %v2731, %v2730
    %v2733 = vmul.f32 %v2732, %v2731
    %v2734 = vmul.f32 0.5, %v2733
    %v2735 = vsub.f32 1.5, %v2734
    %v2736 = vmul.f32 %v2731, %v2735
    %vm2737 = vweird.f32 %v2730
    %vm2738 = vweird.f32 %v2731
    %vm2739 = vmor %vm2737, %vm2738
    %v2740 = vsel %vm2739, %v2731, %v2736
    %v2741 = vmul.f32 %v2720, %v2740
    %v2742 = vmul.f32 %v2721, %v2740
    %v2744 = vperm.slane %v2246, 0
    %v2745 = vperm.slane %v2246, 1
    %v2748 = vmul.f32 %v2741, %v2744
    %v2749 = vmul.f32 %v2742, %v2745
    %v2751 = vperm.slane %v2247, 0
    %v2752 = vperm.slane %v2247, 1
    %v2755 = vadd.f32 %v2748, %v2751
    %v2756 = vadd.f32 %v2749, %v2752
    %v2759 = vrot.slane %v2756, 6
    %v2760 = vsel %vm2706, %v2755, %v2759
    %2762 = vst [vmem:[#allocation2] sm:$0xf] %v2760
    // Predicated region
    $region110: #{clip_forward.2} parent=1 // pred_check
      _
    $region111: #{clip_forward.2} parent=1 // pred_check_branch
      %2764 = sbr.rel (0) target = $region113
    $region112: #{clip_forward.2} parent=1 // pred_region
      %2766 = vsyncadd [#allocation3], 0
      %s2768 = sshll.u32 [#allocation2], 4
      %s2769 = int_to_ptr.vmem [resolvable:$true] %s2768
      %s2770 = sshll.u32 %s27, 4
      %s2771 = int_to_ptr.hbm [resolvable:$true] %s2770
      %2773 = dma.vmem_to_hbm [thread:$0]  %s2769, 64, %s2771, [#allocation3]
    $region113: #{clip_forward.2} parent=1 // pred_fallthru
      _
    // Predicated region
    $region114: #{clip_forward.2} parent=1 // pred_check
      _
    $region115: #{clip_forward.2} parent=1 // pred_check_branch
      %2775 = sbr.rel (0) target = $region117
    $region116: #{clip_forward.2} parent=1 // pred_region
      %2777 = dma.done [#allocation3], 64
    $region117: #{clip_forward.2} parent=1 // pred_fallthru
      _
    %2778 = vsyncpa [#allocation3], 1

</llo_original>
